<compile_context>
chip_gen: v7x
topology: tpu7x:2x2x1
jax: 0.10.0
libtpu: 0.0.40
codegen_flags: <defaults>
</compile_context>

<pallas_src>
import jax
import jax.numpy as jnp
from jax.experimental import pallas as pl
from jax.experimental.pallas import tpu as pltpu


def _round_up(x, m):
    return ((x + m - 1) // m) * m


_WEIGHT_ORDER = ('w1', 'b1', 'w2', 'b2', 'w3', 'b3', 'wfc', 'bfc', 'wmv', 'bmv',
                 'wdf1', 'bdf1', 'wdf2', 'bdf2', 'wdc1', 'bdc1', 'wdc2', 'bdc2',
                 'wdc3', 'bdc3')


# ----------------------------------------------------------------------------
# The single fused Pallas kernel: one batch tile, 10 matmuls, 2 dense stores.
# ----------------------------------------------------------------------------
def _vae_kernel(x_ref,
                w1, b1, w2, b2, w3, b3, wfc, bfc, wmv, bmv,
                wdf1, bdf1, wdf2, bdf2, wdc1, bdc1, wdc2, bdc2, wdc3, bdc3,
                mu_var_ref, xrec_ref):

    def layer(x, w_ref, b_ref, act=True):
        y = jnp.dot(x, w_ref[...], preferred_element_type=jnp.float32) + b_ref[...]
        return jnp.tanh(y) if act else y

    h = layer(x_ref[...], w1, b1)            # conv1 (Hx1) + BN + tanh
    h = layer(h, w2, b2)                     # conv2 (1x3,s2) + BN + tanh
    h = layer(h, w3, b3)                     # conv3 (1x2,s2) + BN + tanh
    h = layer(h, wfc, bfc)                   # encoder_fc + BN + tanh
    mv = layer(h, wmv, bmv, act=False)       # merged mu|var heads (128-lane padded)
    mu_var_ref[...] = mv.astype(mu_var_ref.dtype)
    d = layer(mv, wdf1, bdf1)                # decoder fc1 (eval reparam: z = mu)
    d = layer(d, wdf2, bdf2)                 # decoder fc2 + BN + tanh
    d = layer(d, wdc1, bdc1)                 # deconv1 (1x2,s2) + BN + tanh
    d = layer(d, wdc2, bdc2)                 # deconv2 (1x3,s2) + BN + tanh
    xrec_ref[...] = layer(d, wdc3, bdc3, act=False).astype(xrec_ref.dtype)  # deconv3


# ----------------------------------------------------------------------------
# One-time parameter preprocessing (BN folding, block-structured weights)
# ----------------------------------------------------------------------------
def _bn_fold(bn, eps=1e-5):
    gamma, beta, mean, var = bn
    sc = gamma / jnp.sqrt(var + eps)
    return sc, beta - mean * sc


def prepare_kernel_params(p, n_band, n_ctx, code_size):
    f32 = jnp.float32
    H, W = n_band, n_ctx
    W2o = (W - 3) // 2 + 1
    W3o = (W2o - 2) // 2 + 1
    Wd1o = 2 * W3o
    Wd2o = 2 * Wd1o + 1
    flat = 256 * W3o
    F0 = W * H
    F0p = _round_up(F0, 128)
    MVp = _round_up(2 * code_size, 128)
    Hout = Wd2o * H
    Hout_pad = _round_up(Hout, 128)
    kp = {}

    # conv1 (H x 1) + bn1 : block-diagonal over width positions
    sc, sh = _bn_fold(p['bn1'])
    core = p['conv1_w'][:, 0, :, 0].T.astype(f32) * sc[None, :]          # (H, 64)
    w1 = jnp.zeros((F0p, W * 64), f32)
    for w in range(W):
        w1 = w1.at[w * H:(w + 1) * H, w * 64:(w + 1) * 64].set(core)
    kp['w1'] = w1
    kp['b1'] = jnp.tile(p['conv1_b'] * sc + sh, (W,)).reshape(1, W * 64)

    # conv2 (1x3, stride 2) + bn2
    sc, sh = _bn_fold(p['bn2'])
    taps = [p['conv2_w'][:, :, 0, k].T.astype(f32) * sc[None, :] for k in range(3)]
    w2 = jnp.zeros((W * 64, W2o * 128), f32)
    for wo in range(W2o):
        for k in range(3):
            wi = 2 * wo + k
            w2 = w2.at[wi * 64:(wi + 1) * 64, wo * 128:(wo + 1) * 128].set(taps[k])
    kp['w2'] = w2
    kp['b2'] = jnp.tile(p['conv2_b'] * sc + sh, (W2o,)).reshape(1, W2o * 128)

    # conv3 (1x2, stride 2) + bn3
    sc, sh = _bn_fold(p['bn3'])
    taps = [p['conv3_w'][:, :, 0, k].T.astype(f32) * sc[None, :] for k in range(2)]
    w3 = jnp.zeros((W2o * 128, W3o * 256), f32)
    for wo in range(W3o):
        for k in range(2):
            wi = 2 * wo + k
            w3 = w3.at[wi * 128:(wi + 1) * 128, wo * 256:(wo + 1) * 256].set(taps[k])
    kp['w3'] = w3
    kp['b3'] = jnp.tile(p['conv3_b'] * sc + sh, (W3o,)).reshape(1, W3o * 256)

    # encoder_fc + bn_fc (torch flatten index = c*W3o + w ; ours = w*256 + c)
    sc, sh = _bn_fold(p['bn_fc'])
    my_w = jnp.arange(flat) // 256
    my_c = jnp.arange(flat) % 256
    perm = my_c * W3o + my_w                                            # ours -> torch
    kp['wfc'] = p['enc_fc_w'].T.astype(f32)[perm, :] * sc[None, :]      # (flat, 512)
    kp['bfc'] = (p['enc_fc_b'] * sc + sh).reshape(1, 512)

    # merged mu/var heads, zero-padded to 128 output lanes
    wmv = jnp.concatenate([p['mu_w'].T, p['var_w'].T], axis=1).astype(f32)
    bmv = jnp.concatenate([p['mu_b'], p['var_b']]).astype(f32)
    kp['wmv'] = jnp.zeros((512, MVp), f32).at[:, :2 * code_size].set(wmv)
    kp['bmv'] = jnp.zeros((1, MVp), f32).at[0, :2 * code_size].set(bmv)

    # decoder fc1 + bn_dfc1 ; eval reparam z = mu -> only the mu lanes are used
    sc, sh = _bn_fold(p['bn_dfc1'])
    kp['wdf1'] = jnp.zeros((MVp, 512), f32).at[:code_size, :].set(
        p['dec_fc1_w'].T.astype(f32) * sc[None, :])
    kp['bdf1'] = (p['dec_fc1_b'] * sc + sh).reshape(1, 512)

    # decoder fc2 + bn_dfc2 ; columns reordered from torch (c,w) to ours (w,c)
    sc, sh = _bn_fold(p['bn_dfc2'])
    wdf2_t = p['dec_fc2_w'].T.astype(f32) * sc[None, :]                 # (512, flat)
    bdf2_t = p['dec_fc2_b'] * sc + sh
    kp['wdf2'] = wdf2_t[:, perm]
    kp['bdf2'] = bdf2_t[perm].reshape(1, flat)

    # deconv1 (1x2, stride 2) + bn_d1  (ConvTranspose weight is (C_in, C_out, 1, K))
    sc, sh = _bn_fold(p['bn_d1'])
    taps = [p['deconv1_w'][:, :, 0, k].astype(f32) * sc[None, :] for k in range(2)]
    wdc1 = jnp.zeros((W3o * 256, Wd1o * 128), f32)
    for w in range(W3o):
        for k in range(2):
            wo = 2 * w + k
            wdc1 = wdc1.at[w * 256:(w + 1) * 256, wo * 128:(wo + 1) * 128].set(taps[k])
    kp['wdc1'] = wdc1
    kp['bdc1'] = jnp.tile(p['deconv1_b'] * sc + sh, (Wd1o,)).reshape(1, Wd1o * 128)

    # deconv2 (1x3, stride 2) + bn_d2  (overlapping taps land in distinct blocks)
    sc, sh = _bn_fold(p['bn_d2'])
    taps = [p['deconv2_w'][:, :, 0, k].astype(f32) * sc[None, :] for k in range(3)]
    wdc2 = jnp.zeros((Wd1o * 128, Wd2o * 64), f32)
    for w in range(Wd1o):
        for k in range(3):
            wo = 2 * w + k
            wdc2 = wdc2.at[w * 128:(w + 1) * 128, wo * 64:(wo + 1) * 64].set(taps[k])
    kp['wdc2'] = wdc2
    kp['bdc2'] = jnp.tile(p['deconv2_b'] * sc + sh, (Wd2o,)).reshape(1, Wd2o * 64)

    # deconv3 (H x 1, no BN / no tanh); lane-padded to a multiple of 128.
    # NOTE: final ConvTranspose has C_out == 1, so the scalar bias broadcasts.
    core = p['deconv3_w'][:, 0, :, 0].astype(f32)                       # (64, H)
    wdc3 = jnp.zeros((Wd2o * 64, Hout_pad), f32)
    for wo in range(Wd2o):
        wdc3 = wdc3.at[wo * 64:(wo + 1) * 64, wo * H:(wo + 1) * H].set(core)
    kp['wdc3'] = wdc3
    kp['bdc3'] = jnp.zeros((1, Hout_pad), f32).at[0, :Hout].set(
        jnp.full((Hout,), p['deconv3_b'][0], f32))

    dims = dict(H=H, W=W, W2o=W2o, W3o=W3o, Wd1o=Wd1o, Wd2o=Wd2o, flat=flat,
                F0=F0, F0p=F0p, MVp=MVp, Hout=Hout, Hout_pad=Hout_pad,
                code=code_size)
    return kp, dims


# ----------------------------------------------------------------------------
# Deterministic synthetic parameters (no checkpoint), PyTorch layouts.
# ----------------------------------------------------------------------------
def init_params(key, n_band, n_ctx, code_size):
    w2o = (n_ctx - 3) // 2 + 1
    w3o = (w2o - 2) // 2 + 1
    flat = 256 * w3o
    keys = iter(jax.random.split(key, 64))

    def w(shape, s=0.1):
        return s * jax.random.normal(next(keys), shape, jnp.float32)

    def bn(c):
        gamma = 1.0 + 0.1 * jax.random.normal(next(keys), (c,), jnp.float32)
        beta = 0.1 * jax.random.normal(next(keys), (c,), jnp.float32)
        mean = 0.1 * jax.random.normal(next(keys), (c,), jnp.float32)
        var = 1.0 + 0.1 * jnp.abs(jax.random.normal(next(keys), (c,), jnp.float32))
        return (gamma, beta, mean, var)

    p = {}
    p['conv1_w'] = w((64, 1, n_band, 1));    p['conv1_b'] = w((64,), 0.01)
    p['bn1'] = bn(64)
    p['conv2_w'] = w((128, 64, 1, 3));       p['conv2_b'] = w((128,), 0.01)
    p['bn2'] = bn(128)
    p['conv3_w'] = w((256, 128, 1, 2));      p['conv3_b'] = w((256,), 0.01)
    p['bn3'] = bn(256)
    p['enc_fc_w'] = w((512, flat));          p['enc_fc_b'] = w((512,), 0.01)
    p['bn_fc'] = bn(512)
    p['mu_w'] = w((code_size, 512));         p['mu_b'] = w((code_size,), 0.01)
    p['var_w'] = w((code_size, 512));        p['var_b'] = w((code_size,), 0.01)
    p['dec_fc1_w'] = w((512, code_size));    p['dec_fc1_b'] = w((512,), 0.01)
    p['bn_dfc1'] = bn(512)
    p['dec_fc2_w'] = w((flat, 512));         p['dec_fc2_b'] = w((flat,), 0.01)
    p['bn_dfc2'] = bn(flat)
    p['deconv1_w'] = w((256, 128, 1, 2));    p['deconv1_b'] = w((128,), 0.01)
    p['bn_d1'] = bn(128)
    p['deconv2_w'] = w((128, 64, 1, 3));     p['deconv2_b'] = w((64,), 0.01)
    p['bn_d2'] = bn(64)
    p['deconv3_w'] = w((64, 1, n_band, 1));  p['deconv3_b'] = w((1,), 0.01)
    return p


# ----------------------------------------------------------------------------
# Forward pass (eval mode): returns (x_recon, mu, var)
# ----------------------------------------------------------------------------
def _to_lanes(x, dims):
    # (N, 1, H, W) -> (N, W*H) with lanes (w-major, h), zero-padded to F0p lanes.
    N = x.shape[0]
    x2 = jnp.transpose(x[:, 0].astype(jnp.float32), (0, 2, 1)).reshape(N, dims['F0'])
    return jnp.pad(x2, ((0, 0), (0, dims['F0p'] - dims['F0'])))


def cnn_vae_forward(kp, dims, x, tile_n=None):
    N = x.shape[0]
    H, Wd2o = dims['H'], dims['Wd2o']
    code, MVp = dims['code'], dims['MVp']
    Hout_pad, F0p = dims['Hout_pad'], dims['F0p']

    if tile_n is None:
        # TODO(synk): use >=256-row tiles (bf16) on v6e/v7x, 128 on v5e.
        tile_n = min(_round_up(N, 8), 128)
    Np = _round_up(N, tile_n)

    x_lanes = _to_lanes(x, dims)
    if Np != N:
        x_lanes = jnp.pad(x_lanes, ((0, Np - N), (0, 0)))

    weights = [kp[name] for name in _WEIGHT_ORDER]
    # Weights/biases: full-array blocks, constant index_map -> VMEM-resident
    # across all batch-tile grid steps.
    w_specs = [pl.BlockSpec(w.shape, lambda i: (0, 0)) for w in weights]

    mu_var, xrec = pl.pallas_call(
        _vae_kernel,
        out_shape=(jax.ShapeDtypeStruct((Np, MVp), jnp.float32),
                   jax.ShapeDtypeStruct((Np, Hout_pad), jnp.float32)),
        grid=(Np // tile_n,),
        in_specs=[pl.BlockSpec((tile_n, F0p), lambda i: (i, 0))] + w_specs,
        out_specs=(pl.BlockSpec((tile_n, MVp), lambda i: (i, 0)),
                   pl.BlockSpec((tile_n, Hout_pad), lambda i: (i, 0))),
        compiler_params=pltpu.CompilerParams(
            dimension_semantics=("parallel",),
            vmem_limit_bytes=48 * 1024 * 1024),
    )(x_lanes, *weights)

    mu = mu_var[:N, :code]
    var = mu_var[:N, code:2 * code]
    xr = xrec[:N, :Wd2o * H].reshape(N, Wd2o, H)
    x_recon = jnp.transpose(xr, (0, 2, 1))[:, None, :, :]
    return x_recon, mu, var


# Pure-JAX reference using the same folded parameters (validates the kernel).
def reference_forward(kp, dims, x):
    hi = jax.lax.Precision.HIGHEST

    def layer(h, w, b, act=True):
        y = jnp.dot(h, w, precision=hi) + b
        return jnp.tanh(y) if act else y

    h = _to_lanes(x, dims)
    h = layer(h, kp['w1'], kp['b1'])
    h = layer(h, kp['w2'], kp['b2'])
    h = layer(h, kp['w3'], kp['b3'])
    h = layer(h, kp['wfc'], kp['bfc'])
    mv = layer(h, kp['wmv'], kp['bmv'], act=False)
    d = layer(mv, kp['wdf1'], kp['bdf1'])
    d = layer(d, kp['wdf2'], kp['bdf2'])
    d = layer(d, kp['wdc1'], kp['bdc1'])
    d = layer(d, kp['wdc2'], kp['bdc2'])
    xrec = layer(d, kp['wdc3'], kp['bdc3'], act=False)
    N = x.shape[0]
    code, H, Wd2o = dims['code'], dims['H'], dims['Wd2o']
    mu = mv[:, :code]
    var = mv[:, code:2 * code]
    xr = xrec[:, :Wd2o * H].reshape(N, Wd2o, H)
    return jnp.transpose(xr, (0, 2, 1))[:, None, :, :], mu, var


# ----------------------------------------------------------------------------
if __name__ == "__main__":
    key = jax.random.PRNGKey(0)
    n_band, n_ctx, code_size, batch = 16, 9, 32, 16   # small input_size=(1,16,9)

    pkey, xkey = jax.random.split(key)
    params = init_params(pkey, n_band, n_ctx, code_size)
    kp, dims = prepare_kernel_params(params, n_band, n_ctx, code_size)  # hoisted prep
    x = jax.random.normal(xkey, (batch, 1, n_band, n_ctx), jnp.float32)

    # tile_n=8 -> grid=(2,) batch tiles ("parallel" axis), weights stay resident.
    fwd = jax.jit(lambda kp_, x_: cnn_vae_forward(kp_, dims, x_, tile_n=8))
    x_recon, mu, var = fwd(kp, x)
    jax.block_until_ready((x_recon, mu, var))

    assert x_recon.shape == (batch, 1, n_band, n_ctx), x_recon.shape
    assert mu.shape == (batch, code_size), mu.shape
    assert var.shape == (batch, code_size), var.shape
    assert bool(jnp.all(jnp.isfinite(x_recon)))
    assert bool(jnp.all(jnp.isfinite(mu))) and bool(jnp.all(jnp.isfinite(var)))

    # Numerical check against a plain-JAX evaluation of the same folded math.
    xr_ref, mu_ref, var_ref = reference_forward(kp, dims, x)
    assert bool(jnp.allclose(x_recon, xr_ref, atol=2e-2, rtol=2e-2))
    assert bool(jnp.allclose(mu, mu_ref, atol=2e-2, rtol=2e-2))
    assert bool(jnp.allclose(var, var_ref, atol=2e-2, rtol=2e-2))

    print("KERNEL_OK")
</pallas_src>

<mosaic_0001>
module attributes {stable_mosaic.version = 11 : i64} {
  func.func @_vae_kernel(%arg0: i32, %arg1: memref<8x256xf32, #tpu.memory_space<vmem>>, %arg2: memref<256x576xf32, #tpu.memory_space<vmem>>, %arg3: memref<1x576xf32, #tpu.memory_space<vmem>>, %arg4: memref<576x512xf32, #tpu.memory_space<vmem>>, %arg5: memref<1x512xf32, #tpu.memory_space<vmem>>, %arg6: memref<512x512xf32, #tpu.memory_space<vmem>>, %arg7: memref<1x512xf32, #tpu.memory_space<vmem>>, %arg8: memref<512x512xf32, #tpu.memory_space<vmem>>, %arg9: memref<1x512xf32, #tpu.memory_space<vmem>>, %arg10: memref<512x128xf32, #tpu.memory_space<vmem>>, %arg11: memref<1x128xf32, #tpu.memory_space<vmem>>, %arg12: memref<128x512xf32, #tpu.memory_space<vmem>>, %arg13: memref<1x512xf32, #tpu.memory_space<vmem>>, %arg14: memref<512x512xf32, #tpu.memory_space<vmem>>, %arg15: memref<1x512xf32, #tpu.memory_space<vmem>>, %arg16: memref<512x512xf32, #tpu.memory_space<vmem>>, %arg17: memref<1x512xf32, #tpu.memory_space<vmem>>, %arg18: memref<512x576xf32, #tpu.memory_space<vmem>>, %arg19: memref<1x576xf32, #tpu.memory_space<vmem>>, %arg20: memref<576x256xf32, #tpu.memory_space<vmem>>, %arg21: memref<1x256xf32, #tpu.memory_space<vmem>>, %arg22: memref<8x128xf32, #tpu.memory_space<vmem>>, %arg23: memref<8x256xf32, #tpu.memory_space<vmem>>) attributes {dimension_semantics = [#tpu.dimension_semantics<parallel>], iteration_bounds = array<i64: 2>, scalar_prefetch = 0 : i64, scratch_operands = 0 : i64, tpu.core_type = #tpu.core_type<tc>, window_params = [{transform_indices = @transform_0, window_bounds = array<i64: 8, 256>}, {pipeline_mode = #tpu.pipeline_mode<synchronous>, transform_indices = @transform_1, window_bounds = array<i64: 256, 576>}, {pipeline_mode = #tpu.pipeline_mode<synchronous>, transform_indices = @transform_2, window_bounds = array<i64: 1, 576>}, {pipeline_mode = #tpu.pipeline_mode<synchronous>, transform_indices = @transform_3, window_bounds = array<i64: 576, 512>}, {pipeline_mode = #tpu.pipeline_mode<synchronous>, transform_indices = @transform_4, window_bounds = array<i64: 1, 512>}, {pipeline_mode = #tpu.pipeline_mode<synchronous>, transform_indices = @transform_5, window_bounds = array<i64: 512, 512>}, {pipeline_mode = #tpu.pipeline_mode<synchronous>, transform_indices = @transform_6, window_bounds = array<i64: 1, 512>}, {pipeline_mode = #tpu.pipeline_mode<synchronous>, transform_indices = @transform_7, window_bounds = array<i64: 512, 512>}, {pipeline_mode = #tpu.pipeline_mode<synchronous>, transform_indices = @transform_8, window_bounds = array<i64: 1, 512>}, {pipeline_mode = #tpu.pipeline_mode<synchronous>, transform_indices = @transform_9, window_bounds = array<i64: 512, 128>}, {pipeline_mode = #tpu.pipeline_mode<synchronous>, transform_indices = @transform_10, window_bounds = array<i64: 1, 128>}, {pipeline_mode = #tpu.pipeline_mode<synchronous>, transform_indices = @transform_11, window_bounds = array<i64: 128, 512>}, {pipeline_mode = #tpu.pipeline_mode<synchronous>, transform_indices = @transform_12, window_bounds = array<i64: 1, 512>}, {pipeline_mode = #tpu.pipeline_mode<synchronous>, transform_indices = @transform_13, window_bounds = array<i64: 512, 512>}, {pipeline_mode = #tpu.pipeline_mode<synchronous>, transform_indices = @transform_14, window_bounds = array<i64: 1, 512>}, {pipeline_mode = #tpu.pipeline_mode<synchronous>, transform_indices = @transform_15, window_bounds = array<i64: 512, 512>}, {pipeline_mode = #tpu.pipeline_mode<synchronous>, transform_indices = @transform_16, window_bounds = array<i64: 1, 512>}, {pipeline_mode = #tpu.pipeline_mode<synchronous>, transform_indices = @transform_17, window_bounds = array<i64: 512, 576>}, {pipeline_mode = #tpu.pipeline_mode<synchronous>, transform_indices = @transform_18, window_bounds = array<i64: 1, 576>}, {pipeline_mode = #tpu.pipeline_mode<synchronous>, transform_indices = @transform_19, window_bounds = array<i64: 576, 256>}, {pipeline_mode = #tpu.pipeline_mode<synchronous>, transform_indices = @transform_20, window_bounds = array<i64: 1, 256>}, {transform_indices = @transform_21, window_bounds = array<i64: 8, 128>}, {transform_indices = @transform_22, window_bounds = array<i64: 8, 256>}]} {
    %c0 = arith.constant 0 : index
    %c0_0 = arith.constant 0 : index
    %0 = vector.load %arg1[%c0, %c0_0] : memref<8x256xf32, #tpu.memory_space<vmem>>, vector<8x256xf32>
    %c0_1 = arith.constant 0 : index
    %c0_2 = arith.constant 0 : index
    %1 = vector.load %arg2[%c0_1, %c0_2] : memref<256x576xf32, #tpu.memory_space<vmem>>, vector<256x576xf32>
    %cst = arith.constant dense<0.000000e+00> : vector<8x576xf32>
    %2 = tpu.matmul %0, %1, %cst {dimension_numbers = #tpu.dot_dimension_numbers<[1], [0], [0], [1], [0, 0, 1, 1], [], []>} : vector<8x256xf32>, vector<256x576xf32>, vector<8x576xf32> -> vector<8x576xf32>
    %c0_3 = arith.constant 0 : index
    %c0_4 = arith.constant 0 : index
    %3 = vector.load %arg3[%c0_3, %c0_4] : memref<1x576xf32, #tpu.memory_space<vmem>>, vector<1x576xf32>
    %4 = vector.broadcast %3 : vector<1x576xf32> to vector<8x576xf32>
    %5 = arith.addf %2, %4 : vector<8x576xf32>
    %6 = math.tanh %5 : vector<8x576xf32>
    %c0_5 = arith.constant 0 : index
    %c0_6 = arith.constant 0 : index
    %7 = vector.load %arg4[%c0_5, %c0_6] : memref<576x512xf32, #tpu.memory_space<vmem>>, vector<576x512xf32>
    %cst_7 = arith.constant dense<0.000000e+00> : vector<8x512xf32>
    %8 = tpu.matmul %6, %7, %cst_7 {dimension_numbers = #tpu.dot_dimension_numbers<[1], [0], [0], [1], [0, 0, 1, 1], [], []>} : vector<8x576xf32>, vector<576x512xf32>, vector<8x512xf32> -> vector<8x512xf32>
    %c0_8 = arith.constant 0 : index
    %c0_9 = arith.constant 0 : index
    %9 = vector.load %arg5[%c0_8, %c0_9] : memref<1x512xf32, #tpu.memory_space<vmem>>, vector<1x512xf32>
    %10 = vector.broadcast %9 : vector<1x512xf32> to vector<8x512xf32>
    %11 = arith.addf %8, %10 : vector<8x512xf32>
    %12 = math.tanh %11 : vector<8x512xf32>
    %c0_10 = arith.constant 0 : index
    %c0_11 = arith.constant 0 : index
    %13 = vector.load %arg6[%c0_10, %c0_11] : memref<512x512xf32, #tpu.memory_space<vmem>>, vector<512x512xf32>
    %cst_12 = arith.constant dense<0.000000e+00> : vector<8x512xf32>
    %14 = tpu.matmul %12, %13, %cst_12 {dimension_numbers = #tpu.dot_dimension_numbers<[1], [0], [0], [1], [0, 0, 1, 1], [], []>} : vector<8x512xf32>, vector<512x512xf32>, vector<8x512xf32> -> vector<8x512xf32>
    %c0_13 = arith.constant 0 : index
    %c0_14 = arith.constant 0 : index
    %15 = vector.load %arg7[%c0_13, %c0_14] : memref<1x512xf32, #tpu.memory_space<vmem>>, vector<1x512xf32>
    %16 = vector.broadcast %15 : vector<1x512xf32> to vector<8x512xf32>
    %17 = arith.addf %14, %16 : vector<8x512xf32>
    %18 = math.tanh %17 : vector<8x512xf32>
    %c0_15 = arith.constant 0 : index
    %c0_16 = arith.constant 0 : index
    %19 = vector.load %arg8[%c0_15, %c0_16] : memref<512x512xf32, #tpu.memory_space<vmem>>, vector<512x512xf32>
    %cst_17 = arith.constant dense<0.000000e+00> : vector<8x512xf32>
    %20 = tpu.matmul %18, %19, %cst_17 {dimension_numbers = #tpu.dot_dimension_numbers<[1], [0], [0], [1], [0, 0, 1, 1], [], []>} : vector<8x512xf32>, vector<512x512xf32>, vector<8x512xf32> -> vector<8x512xf32>
    %c0_18 = arith.constant 0 : index
    %c0_19 = arith.constant 0 : index
    %21 = vector.load %arg9[%c0_18, %c0_19] : memref<1x512xf32, #tpu.memory_space<vmem>>, vector<1x512xf32>
    %22 = vector.broadcast %21 : vector<1x512xf32> to vector<8x512xf32>
    %23 = arith.addf %20, %22 : vector<8x512xf32>
    %24 = math.tanh %23 : vector<8x512xf32>
    %c0_20 = arith.constant 0 : index
    %c0_21 = arith.constant 0 : index
    %25 = vector.load %arg10[%c0_20, %c0_21] : memref<512x128xf32, #tpu.memory_space<vmem>>, vector<512x128xf32>
    %cst_22 = arith.constant dense<0.000000e+00> : vector<8x128xf32>
    %26 = tpu.matmul %24, %25, %cst_22 {dimension_numbers = #tpu.dot_dimension_numbers<[1], [0], [0], [1], [0, 0, 1, 1], [], []>} : vector<8x512xf32>, vector<512x128xf32>, vector<8x128xf32> -> vector<8x128xf32>
    %c0_23 = arith.constant 0 : index
    %c0_24 = arith.constant 0 : index
    %27 = vector.load %arg11[%c0_23, %c0_24] : memref<1x128xf32, #tpu.memory_space<vmem>>, vector<1x128xf32>
    %28 = vector.broadcast %27 : vector<1x128xf32> to vector<8x128xf32>
    %29 = arith.addf %26, %28 : vector<8x128xf32>
    %c0_25 = arith.constant 0 : index
    %c0_26 = arith.constant 0 : index
    %30 = vector.load %arg22[%c0_25, %c0_26] : memref<8x128xf32, #tpu.memory_space<vmem>>, vector<8x128xf32>
    tpu.vector_store %arg22[%c0_25, %c0_26], %29 {strides = array<i32>} : memref<8x128xf32, #tpu.memory_space<vmem>>, vector<8x128xf32>,
    %c0_27 = arith.constant 0 : index
    %c0_28 = arith.constant 0 : index
    %31 = vector.load %arg12[%c0_27, %c0_28] : memref<128x512xf32, #tpu.memory_space<vmem>>, vector<128x512xf32>
    %cst_29 = arith.constant dense<0.000000e+00> : vector<8x512xf32>
    %32 = tpu.matmul %29, %31, %cst_29 {dimension_numbers = #tpu.dot_dimension_numbers<[1], [0], [0], [1], [0, 0, 1, 1], [], []>} : vector<8x128xf32>, vector<128x512xf32>, vector<8x512xf32> -> vector<8x512xf32>
    %c0_30 = arith.constant 0 : index
    %c0_31 = arith.constant 0 : index
    %33 = vector.load %arg13[%c0_30, %c0_31] : memref<1x512xf32, #tpu.memory_space<vmem>>, vector<1x512xf32>
    %34 = vector.broadcast %33 : vector<1x512xf32> to vector<8x512xf32>
    %35 = arith.addf %32, %34 : vector<8x512xf32>
    %36 = math.tanh %35 : vector<8x512xf32>
    %c0_32 = arith.constant 0 : index
    %c0_33 = arith.constant 0 : index
    %37 = vector.load %arg14[%c0_32, %c0_33] : memref<512x512xf32, #tpu.memory_space<vmem>>, vector<512x512xf32>
    %cst_34 = arith.constant dense<0.000000e+00> : vector<8x512xf32>
    %38 = tpu.matmul %36, %37, %cst_34 {dimension_numbers = #tpu.dot_dimension_numbers<[1], [0], [0], [1], [0, 0, 1, 1], [], []>} : vector<8x512xf32>, vector<512x512xf32>, vector<8x512xf32> -> vector<8x512xf32>
    %c0_35 = arith.constant 0 : index
    %c0_36 = arith.constant 0 : index
    %39 = vector.load %arg15[%c0_35, %c0_36] : memref<1x512xf32, #tpu.memory_space<vmem>>, vector<1x512xf32>
    %40 = vector.broadcast %39 : vector<1x512xf32> to vector<8x512xf32>
    %41 = arith.addf %38, %40 : vector<8x512xf32>
    %42 = math.tanh %41 : vector<8x512xf32>
    %c0_37 = arith.constant 0 : index
    %c0_38 = arith.constant 0 : index
    %43 = vector.load %arg16[%c0_37, %c0_38] : memref<512x512xf32, #tpu.memory_space<vmem>>, vector<512x512xf32>
    %cst_39 = arith.constant dense<0.000000e+00> : vector<8x512xf32>
    %44 = tpu.matmul %42, %43, %cst_39 {dimension_numbers = #tpu.dot_dimension_numbers<[1], [0], [0], [1], [0, 0, 1, 1], [], []>} : vector<8x512xf32>, vector<512x512xf32>, vector<8x512xf32> -> vector<8x512xf32>
    %c0_40 = arith.constant 0 : index
    %c0_41 = arith.constant 0 : index
    %45 = vector.load %arg17[%c0_40, %c0_41] : memref<1x512xf32, #tpu.memory_space<vmem>>, vector<1x512xf32>
    %46 = vector.broadcast %45 : vector<1x512xf32> to vector<8x512xf32>
    %47 = arith.addf %44, %46 : vector<8x512xf32>
    %48 = math.tanh %47 : vector<8x512xf32>
    %c0_42 = arith.constant 0 : index
    %c0_43 = arith.constant 0 : index
    %49 = vector.load %arg18[%c0_42, %c0_43] : memref<512x576xf32, #tpu.memory_space<vmem>>, vector<512x576xf32>
    %cst_44 = arith.constant dense<0.000000e+00> : vector<8x576xf32>
    %50 = tpu.matmul %48, %49, %cst_44 {dimension_numbers = #tpu.dot_dimension_numbers<[1], [0], [0], [1], [0, 0, 1, 1], [], []>} : vector<8x512xf32>, vector<512x576xf32>, vector<8x576xf32> -> vector<8x576xf32>
    %c0_45 = arith.constant 0 : index
    %c0_46 = arith.constant 0 : index
    %51 = vector.load %arg19[%c0_45, %c0_46] : memref<1x576xf32, #tpu.memory_space<vmem>>, vector<1x576xf32>
    %52 = vector.broadcast %51 : vector<1x576xf32> to vector<8x576xf32>
    %53 = arith.addf %50, %52 : vector<8x576xf32>
    %54 = math.tanh %53 : vector<8x576xf32>
    %c0_47 = arith.constant 0 : index
    %c0_48 = arith.constant 0 : index
    %55 = vector.load %arg20[%c0_47, %c0_48] : memref<576x256xf32, #tpu.memory_space<vmem>>, vector<576x256xf32>
    %cst_49 = arith.constant dense<0.000000e+00> : vector<8x256xf32>
    %56 = tpu.matmul %54, %55, %cst_49 {dimension_numbers = #tpu.dot_dimension_numbers<[1], [0], [0], [1], [0, 0, 1, 1], [], []>} : vector<8x576xf32>, vector<576x256xf32>, vector<8x256xf32> -> vector<8x256xf32>
    %c0_50 = arith.constant 0 : index
    %c0_51 = arith.constant 0 : index
    %57 = vector.load %arg21[%c0_50, %c0_51] : memref<1x256xf32, #tpu.memory_space<vmem>>, vector<1x256xf32>
    %58 = vector.broadcast %57 : vector<1x256xf32> to vector<8x256xf32>
    %59 = arith.addf %56, %58 : vector<8x256xf32>
    %c0_52 = arith.constant 0 : index
    %c0_53 = arith.constant 0 : index
    %60 = vector.load %arg23[%c0_52, %c0_53] : memref<8x256xf32, #tpu.memory_space<vmem>>, vector<8x256xf32>
    tpu.vector_store %arg23[%c0_52, %c0_53], %59 {strides = array<i32>} : memref<8x256xf32, #tpu.memory_space<vmem>>, vector<8x256xf32>,
    return
  }
  func.func @transform_0(%arg0: i32) -> (i32, i32) {
    %c0_i32 = arith.constant 0 : i32
    %c0_i32_0 = arith.constant 0 : i32
    return %arg0, %c0_i32 : i32, i32
  }
  func.func @transform_1(%arg0: i32) -> (i32, i32) {
    %c0_i32 = arith.constant 0 : i32
    %c0_i32_0 = arith.constant 0 : i32
    %c0_i32_1 = arith.constant 0 : i32
    return %c0_i32, %c0_i32_0 : i32, i32
  }
  func.func @transform_2(%arg0: i32) -> (i32, i32) {
    %c0_i32 = arith.constant 0 : i32
    %c0_i32_0 = arith.constant 0 : i32
    %c0_i32_1 = arith.constant 0 : i32
    return %c0_i32, %c0_i32_0 : i32, i32
  }
  func.func @transform_3(%arg0: i32) -> (i32, i32) {
    %c0_i32 = arith.constant 0 : i32
    %c0_i32_0 = arith.constant 0 : i32
    %c0_i32_1 = arith.constant 0 : i32
    return %c0_i32, %c0_i32_0 : i32, i32
  }
  func.func @transform_4(%arg0: i32) -> (i32, i32) {
    %c0_i32 = arith.constant 0 : i32
    %c0_i32_0 = arith.constant 0 : i32
    %c0_i32_1 = arith.constant 0 : i32
    return %c0_i32, %c0_i32_0 : i32, i32
  }
  func.func @transform_5(%arg0: i32) -> (i32, i32) {
    %c0_i32 = arith.constant 0 : i32
    %c0_i32_0 = arith.constant 0 : i32
    %c0_i32_1 = arith.constant 0 : i32
    return %c0_i32, %c0_i32_0 : i32, i32
  }
  func.func @transform_6(%arg0: i32) -> (i32, i32) {
    %c0_i32 = arith.constant 0 : i32
    %c0_i32_0 = arith.constant 0 : i32
    %c0_i32_1 = arith.constant 0 : i32
    return %c0_i32, %c0_i32_0 : i32, i32
  }
  func.func @transform_7(%arg0: i32) -> (i32, i32) {
    %c0_i32 = arith.constant 0 : i32
    %c0_i32_0 = arith.constant 0 : i32
    %c0_i32_1 = arith.constant 0 : i32
    return %c0_i32, %c0_i32_0 : i32, i32
  }
  func.func @transform_8(%arg0: i32) -> (i32, i32) {
    %c0_i32 = arith.constant 0 : i32
    %c0_i32_0 = arith.constant 0 : i32
    %c0_i32_1 = arith.constant 0 : i32
    return %c0_i32, %c0_i32_0 : i32, i32
  }
  func.func @transform_9(%arg0: i32) -> (i32, i32) {
    %c0_i32 = arith.constant 0 : i32
    %c0_i32_0 = arith.constant 0 : i32
    %c0_i32_1 = arith.constant 0 : i32
    return %c0_i32, %c0_i32_0 : i32, i32
  }
  func.func @transform_10(%arg0: i32) -> (i32, i32) {
    %c0_i32 = arith.constant 0 : i32
    %c0_i32_0 = arith.constant 0 : i32
    %c0_i32_1 = arith.constant 0 : i32
    return %c0_i32, %c0_i32_0 : i32, i32
  }
  func.func @transform_11(%arg0: i32) -> (i32, i32) {
    %c0_i32 = arith.constant 0 : i32
    %c0_i32_0 = arith.constant 0 : i32
    %c0_i32_1 = arith.constant 0 : i32
    return %c0_i32, %c0_i32_0 : i32, i32
  }
  func.func @transform_12(%arg0: i32) -> (i32, i32) {
    %c0_i32 = arith.constant 0 : i32
    %c0_i32_0 = arith.constant 0 : i32
    %c0_i32_1 = arith.constant 0 : i32
    return %c0_i32, %c0_i32_0 : i32, i32
  }
  func.func @transform_13(%arg0: i32) -> (i32, i32) {
    %c0_i32 = arith.constant 0 : i32
    %c0_i32_0 = arith.constant 0 : i32
    %c0_i32_1 = arith.constant 0 : i32
    return %c0_i32, %c0_i32_0 : i32, i32
  }
  func.func @transform_14(%arg0: i32) -> (i32, i32) {
    %c0_i32 = arith.constant 0 : i32
    %c0_i32_0 = arith.constant 0 : i32
    %c0_i32_1 = arith.constant 0 : i32
    return %c0_i32, %c0_i32_0 : i32, i32
  }
  func.func @transform_15(%arg0: i32) -> (i32, i32) {
    %c0_i32 = arith.constant 0 : i32
    %c0_i32_0 = arith.constant 0 : i32
    %c0_i32_1 = arith.constant 0 : i32
    return %c0_i32, %c0_i32_0 : i32, i32
  }
  func.func @transform_16(%arg0: i32) -> (i32, i32) {
    %c0_i32 = arith.constant 0 : i32
    %c0_i32_0 = arith.constant 0 : i32
    %c0_i32_1 = arith.constant 0 : i32
    return %c0_i32, %c0_i32_0 : i32, i32
  }
  func.func @transform_17(%arg0: i32) -> (i32, i32) {
    %c0_i32 = arith.constant 0 : i32
    %c0_i32_0 = arith.constant 0 : i32
    %c0_i32_1 = arith.constant 0 : i32
    return %c0_i32, %c0_i32_0 : i32, i32
  }
  func.func @transform_18(%arg0: i32) -> (i32, i32) {
    %c0_i32 = arith.constant 0 : i32
    %c0_i32_0 = arith.constant 0 : i32
    %c0_i32_1 = arith.constant 0 : i32
    return %c0_i32, %c0_i32_0 : i32, i32
  }
  func.func @transform_19(%arg0: i32) -> (i32, i32) {
    %c0_i32 = arith.constant 0 : i32
    %c0_i32_0 = arith.constant 0 : i32
    %c0_i32_1 = arith.constant 0 : i32
    return %c0_i32, %c0_i32_0 : i32, i32
  }
  func.func @transform_20(%arg0: i32) -> (i32, i32) {
    %c0_i32 = arith.constant 0 : i32
    %c0_i32_0 = arith.constant 0 : i32
    %c0_i32_1 = arith.constant 0 : i32
    return %c0_i32, %c0_i32_0 : i32, i32
  }
  func.func @transform_21(%arg0: i32) -> (i32, i32) {
    %c0_i32 = arith.constant 0 : i32
    %c0_i32_0 = arith.constant 0 : i32
    return %arg0, %c0_i32 : i32, i32
  }
  func.func @transform_22(%arg0: i32) -> (i32, i32) {
    %c0_i32 = arith.constant 0 : i32
    %c0_i32_0 = arith.constant 0 : i32
    return %arg0, %c0_i32 : i32, i32
  }
}

</mosaic_0001>

<llo_original>
// kernel: _lambda_.1
$region0: #{_lambda_.1}
  #allocation0 [shape = 'u32[]', space=smem, size = 0x4, offset = 0x4, fixed_abs, tag = 'smem constant byte address 0x4 - core index']
  #allocation1 [shape = 'u32[144,128]{1,0:T(1,128)}', space=vmem, size = 0x12000, scoped, tag = 'internal scratch']
  %s0 = inlined_call_operand.vmem [shape: f32[16,256], index: 0, kind: input, shape index: {}]
  %s1 = inlined_call_operand.vmem [shape: f32[256,576], index: 1, kind: input, shape index: {}]
  %s2 = inlined_call_operand.vmem [shape: f32[1,576], index: 2, kind: input, shape index: {}]
  %s3 = inlined_call_operand.vmem [shape: f32[576,512], index: 3, kind: input, shape index: {}]
  %s4 = inlined_call_operand.vmem [shape: f32[1,512], index: 4, kind: input, shape index: {}]
  %s5 = inlined_call_operand.vmem [shape: f32[512,512], index: 5, kind: input, shape index: {}]
  %s6 = inlined_call_operand.vmem [shape: f32[1,512], index: 6, kind: input, shape index: {}]
  %s7 = inlined_call_operand.hbm [shape: f32[512,512], index: 7, kind: input, shape index: {}]
  %s8 = inlined_call_operand.vmem [shape: f32[1,512], index: 8, kind: input, shape index: {}]
  %s9 = inlined_call_operand.hbm [shape: f32[512,128], index: 9, kind: input, shape index: {}]
  %s10 = inlined_call_operand.vmem [shape: f32[1,128], index: 10, kind: input, shape index: {}]
  %s11 = inlined_call_operand.hbm [shape: f32[128,512], index: 11, kind: input, shape index: {}]
  %s12 = inlined_call_operand.vmem [shape: f32[1,512], index: 12, kind: input, shape index: {}]
  %s13 = inlined_call_operand.hbm [shape: f32[512,512], index: 13, kind: input, shape index: {}]
  %s14 = inlined_call_operand.vmem [shape: f32[1,512], index: 14, kind: input, shape index: {}]
  %s15 = inlined_call_operand.hbm [shape: f32[512,512], index: 15, kind: input, shape index: {}]
  %s16 = inlined_call_operand.vmem [shape: f32[1,512], index: 16, kind: input, shape index: {}]
  %s17 = inlined_call_operand.vmem [shape: f32[512,576], index: 17, kind: input, shape index: {}]
  %s18 = inlined_call_operand.vmem [shape: f32[1,576], index: 18, kind: input, shape index: {}]
  %s19 = inlined_call_operand.vmem [shape: f32[576,256], index: 19, kind: input, shape index: {}]
  %s20 = inlined_call_operand.vmem [shape: f32[1,256], index: 20, kind: input, shape index: {}]
  %s21 = inlined_call_operand.vmem [shape: f32[16,128], index: 21, kind: output, shape index: {0}]
  %s22 = inlined_call_operand.vmem [shape: f32[16,256], index: 22, kind: output, shape index: {1}]
  %23 = xla_tuple %s21, %s22
  %s24 = sld [smem:[#allocation0]]
  $region145: #{_lambda_.1} parent=0
    _
  %s26 = ssub.s32 1, %s24
  %s27 = scalar_select 0, %s26, %s24
  $region1: #{_lambda_.1} parent=0
    #allocation2 [shape = 'u8[1048576]{0}', space=vmem, size = 0x100000, scoped, tag = 'input window, operand 7, single buffered']
    #allocation3 [shape = 's32[2]{0}', space=sflag, size = 0x8, scoped, tag = 'scoped memory for _lambda_.1']
    #allocation4 [shape = 'u8[262144]{0}', space=vmem, size = 0x40000, scoped, tag = 'input window, operand 9, single buffered']
    #allocation5 [shape = 's32[1]{0}', space=sflag, size = 0x4, scoped, tag = 'scoped memory for _lambda_.1']
    #allocation6 [shape = 'u8[262144]{0}', space=vmem, size = 0x40000, scoped, tag = 'input window, operand 11, single buffered']
    #allocation7 [shape = 'u8[1048576]{0}', space=vmem, size = 0x100000, scoped, tag = 'input window, operand 13, single buffered']
    #allocation8 [shape = 's32[1]{0}', space=sflag, size = 0x4, scoped, tag = 'scoped memory for _lambda_.1']
    #allocation9 [shape = 'u8[1048576]{0}', space=vmem, size = 0x100000, scoped, tag = 'input window, operand 15, single buffered']
    %28 = vsyncpa [#allocation3], 0
    %29 = vsyncpa [#allocation5], 0
    %30 = vsyncpa [#allocation8], 0
    loop: start=0, step=1, limit=4
    $region2: #{_lambda_.1} parent=1 // loop_pre_header
      _
    $region3: #{_lambda_.1} parent=1 // loop_header
      %s32 = sphi 0, %s36
      %p33 = scmp.ge.s32.totalorder %s32, 4
      %s42 = sphi 0, %s44
      %s45 = sphi 0, %s42
      %s46 = sphi 0, %s45
      %s62 = sphi 0, %s46
      %s66 = sphi 0, %s66
      %s68 = sphi 0, %s66
      %s69 = sphi 0, %s68
      %s83 = sphi 0, %s69
      %s87 = sphi 0, %s87
      %s89 = sphi 0, %s87
      %s90 = sphi 0, %s89
      %s104 = sphi 0, %s90
      %s108 = sphi 0, %s108
      %s110 = sphi 0, %s108
      %s111 = sphi 0, %s110
      %s125 = sphi 0, %s111
      %s129 = sphi 0, %s129
      %s131 = sphi 0, %s129
      %s132 = sphi 0, %s131
      %s146 = sphi 0, %s132
      %s150 = sphi 0, %s150
      %s152 = sphi 0, %s150
      %s153 = sphi 0, %s152
      %s167 = sphi 0, %s153
      %s171 = sphi 0, %s171
      %s173 = sphi 0, %s171
      %s174 = sphi 0, %s173
      %s188 = sphi 0, %s174
      %s192 = sphi 0, %s192
      %s194 = sphi 0, %s192
      %s195 = sphi 0, %s194
      %s209 = sphi 0, %s195
      %s213 = sphi 0, %s213
      %s215 = sphi 0, %s213
      %s216 = sphi 0, %s215
      %s230 = sphi 0, %s216
      %s234 = sphi 0, %s234
      %s236 = sphi 0, %s234
      %s237 = sphi 0, %s236
      %s251 = sphi 0, %s237
      %s255 = sphi 0, %s255
      %s257 = sphi 0, %s255
      %s258 = sphi 0, %s257
      %s272 = sphi 0, %s258
      %s276 = sphi 0, %s276
      %s278 = sphi 0, %s276
      %s279 = sphi 0, %s278
      %s293 = sphi 0, %s279
      %s297 = sphi 0, %s297
      %s299 = sphi 0, %s297
      %s300 = sphi 0, %s299
      %s314 = sphi 0, %s300
      %s318 = sphi 0, %s318
      %s320 = sphi 0, %s318
      %s321 = sphi 0, %s320
      %s335 = sphi 0, %s321
      %s339 = sphi 0, %s339
      %s341 = sphi 0, %s339
      %s342 = sphi 0, %s341
      %s356 = sphi 0, %s342
      %s360 = sphi 0, %s360
      %s362 = sphi 0, %s360
      %s363 = sphi 0, %s362
      %s377 = sphi 0, %s363
      %s381 = sphi 0, %s381
      %s383 = sphi 0, %s381
      %s384 = sphi 0, %s383
      %s398 = sphi 0, %s384
      %s402 = sphi 0, %s402
      %s404 = sphi 0, %s402
      %s405 = sphi 0, %s404
      %s419 = sphi 0, %s405
      %s423 = sphi 0, %s423
      %s425 = sphi 0, %s423
      %s426 = sphi 0, %s425
      %s440 = sphi 0, %s426
      %s444 = sphi 0, %s444
      %s446 = sphi 0, %s444
      %s447 = sphi 0, %s446
      %s461 = sphi 0, %s447
      %s465 = sphi 0, %s465
      %s467 = sphi 0, %s465
      %s468 = sphi 0, %s467
      %s482 = sphi 0, %s468
      %s488 = sphi 0, %s490
      %s491 = sphi 0, %s488
      %s492 = sphi 0, %s491
      %s508 = sphi 0, %s492
      %s514 = sphi 0, %s516
      %s517 = sphi 0, %s514
      %s518 = sphi 0, %s517
      %s534 = sphi 0, %s518
    $region4: #{_lambda_.1} parent=1 // loop_header_branch
      %35 = sbr.rel (%p33) target = $region8
    $region5: #{_lambda_.1} parent=1 // loop_body
      %s37 = ssub.s32 %s32, 1
      %s38 = ssub.s32 %s32, 2
      %s39 = sadd.s32 %s32, 1
      %s40 = ssub.s32 %s32, %s39
      %p41 = scmp.eq.s32.totalorder %s40, 0
      %s43 = sadd.s32 %s42, 1
      %s44 = scalar_select %p41, %s42, %s43
      %p47 = pneg %p41
      %p48 = scmp.eq.s32.totalorder %s32, 1
      %p49 = por %p47, %p48
      %p50 = scmp.ne.s32.totalorder %s42, %s45
      %p51 = scmp.eq.s32.totalorder %s32, 0
      %p52 = por %p50, %p51
      %p53 = scmp.ne.s32.totalorder %s42, %s45
      %p54 = scmp.eq.s32.totalorder %s37, 1
      %p55 = por %p53, %p54
      %p56 = scmp.ne.s32.totalorder %s45, %s46
      %p57 = scmp.eq.s32.totalorder %s37, 0
      %p58 = por %p56, %p57
      %p59 = scmp.ne.s32.totalorder %s45, %s46
      %p60 = scmp.eq.s32.totalorder %s38, 1
      %p61 = por %p59, %p60
      %p63 = scmp.ne.s32.totalorder %s46, %s62
      %p64 = scmp.eq.s32.totalorder %s38, 0
      %p65 = por %p63, %p64
      %s67 = sadd.s32 %s66, 1
      %p70 = scmp.eq.s32.totalorder %s32, 1
      %p71 = scmp.ne.s32.totalorder %s66, %s68
      %p72 = scmp.eq.s32.totalorder %s32, 0
      %p73 = por %p71, %p72
      %p74 = scmp.ne.s32.totalorder %s66, %s68
      %p75 = scmp.eq.s32.totalorder %s37, 1
      %p76 = por %p74, %p75
      %p77 = scmp.ne.s32.totalorder %s68, %s69
      %p78 = scmp.eq.s32.totalorder %s37, 0
      %p79 = por %p77, %p78
      %p80 = scmp.ne.s32.totalorder %s68, %s69
      %p81 = scmp.eq.s32.totalorder %s38, 1
      %p82 = por %p80, %p81
      %p84 = scmp.ne.s32.totalorder %s69, %s83
      %p85 = scmp.eq.s32.totalorder %s38, 0
      %p86 = por %p84, %p85
      %s88 = sadd.s32 %s87, 1
      %p91 = scmp.eq.s32.totalorder %s32, 1
      %p92 = scmp.ne.s32.totalorder %s87, %s89
      %p93 = scmp.eq.s32.totalorder %s32, 0
      %p94 = por %p92, %p93
      %p95 = scmp.ne.s32.totalorder %s87, %s89
      %p96 = scmp.eq.s32.totalorder %s37, 1
      %p97 = por %p95, %p96
      %p98 = scmp.ne.s32.totalorder %s89, %s90
      %p99 = scmp.eq.s32.totalorder %s37, 0
      %p100 = por %p98, %p99
      %p101 = scmp.ne.s32.totalorder %s89, %s90
      %p102 = scmp.eq.s32.totalorder %s38, 1
      %p103 = por %p101, %p102
      %p105 = scmp.ne.s32.totalorder %s90, %s104
      %p106 = scmp.eq.s32.totalorder %s38, 0
      %p107 = por %p105, %p106
      %s109 = sadd.s32 %s108, 1
      %p112 = scmp.eq.s32.totalorder %s32, 1
      %p113 = scmp.ne.s32.totalorder %s108, %s110
      %p114 = scmp.eq.s32.totalorder %s32, 0
      %p115 = por %p113, %p114
      %p116 = scmp.ne.s32.totalorder %s108, %s110
      %p117 = scmp.eq.s32.totalorder %s37, 1
      %p118 = por %p116, %p117
      %p119 = scmp.ne.s32.totalorder %s110, %s111
      %p120 = scmp.eq.s32.totalorder %s37, 0
      %p121 = por %p119, %p120
      %p122 = scmp.ne.s32.totalorder %s110, %s111
      %p123 = scmp.eq.s32.totalorder %s38, 1
      %p124 = por %p122, %p123
      %p126 = scmp.ne.s32.totalorder %s111, %s125
      %p127 = scmp.eq.s32.totalorder %s38, 0
      %p128 = por %p126, %p127
      %s130 = sadd.s32 %s129, 1
      %p133 = scmp.eq.s32.totalorder %s32, 1
      %p134 = scmp.ne.s32.totalorder %s129, %s131
      %p135 = scmp.eq.s32.totalorder %s32, 0
      %p136 = por %p134, %p135
      %p137 = scmp.ne.s32.totalorder %s129, %s131
      %p138 = scmp.eq.s32.totalorder %s37, 1
      %p139 = por %p137, %p138
      %p140 = scmp.ne.s32.totalorder %s131, %s132
      %p141 = scmp.eq.s32.totalorder %s37, 0
      %p142 = por %p140, %p141
      %p143 = scmp.ne.s32.totalorder %s131, %s132
      %p144 = scmp.eq.s32.totalorder %s38, 1
      %p145 = por %p143, %p144
      %p147 = scmp.ne.s32.totalorder %s132, %s146
      %p148 = scmp.eq.s32.totalorder %s38, 0
      %p149 = por %p147, %p148
      %s151 = sadd.s32 %s150, 1
      %p154 = scmp.eq.s32.totalorder %s32, 1
      %p155 = scmp.ne.s32.totalorder %s150, %s152
      %p156 = scmp.eq.s32.totalorder %s32, 0
      %p157 = por %p155, %p156
      %p158 = scmp.ne.s32.totalorder %s150, %s152
      %p159 = scmp.eq.s32.totalorder %s37, 1
      %p160 = por %p158, %p159
      %p161 = scmp.ne.s32.totalorder %s152, %s153
      %p162 = scmp.eq.s32.totalorder %s37, 0
      %p163 = por %p161, %p162
      %p164 = scmp.ne.s32.totalorder %s152, %s153
      %p165 = scmp.eq.s32.totalorder %s38, 1
      %p166 = por %p164, %p165
      %p168 = scmp.ne.s32.totalorder %s153, %s167
      %p169 = scmp.eq.s32.totalorder %s38, 0
      %p170 = por %p168, %p169
      %s172 = sadd.s32 %s171, 1
      %p175 = scmp.eq.s32.totalorder %s32, 1
      %p176 = scmp.ne.s32.totalorder %s171, %s173
      %p177 = scmp.eq.s32.totalorder %s32, 0
      %p178 = por %p176, %p177
      %p179 = scmp.ne.s32.totalorder %s171, %s173
      %p180 = scmp.eq.s32.totalorder %s37, 1
      %p181 = por %p179, %p180
      %p182 = scmp.ne.s32.totalorder %s173, %s174
      %p183 = scmp.eq.s32.totalorder %s37, 0
      %p184 = por %p182, %p183
      %p185 = scmp.ne.s32.totalorder %s173, %s174
      %p186 = scmp.eq.s32.totalorder %s38, 1
      %p187 = por %p185, %p186
      %p189 = scmp.ne.s32.totalorder %s174, %s188
      %p190 = scmp.eq.s32.totalorder %s38, 0
      %p191 = por %p189, %p190
      %s193 = sadd.s32 %s192, 1
      %p196 = scmp.eq.s32.totalorder %s32, 1
      %p197 = scmp.ne.s32.totalorder %s192, %s194
      %p198 = scmp.eq.s32.totalorder %s32, 0
      %p199 = por %p197, %p198
      %p200 = scmp.ne.s32.totalorder %s192, %s194
      %p201 = scmp.eq.s32.totalorder %s37, 1
      %p202 = por %p200, %p201
      %p203 = scmp.ne.s32.totalorder %s194, %s195
      %p204 = scmp.eq.s32.totalorder %s37, 0
      %p205 = por %p203, %p204
      %p206 = scmp.ne.s32.totalorder %s194, %s195
      %p207 = scmp.eq.s32.totalorder %s38, 1
      %p208 = por %p206, %p207
      %p210 = scmp.ne.s32.totalorder %s195, %s209
      %p211 = scmp.eq.s32.totalorder %s38, 0
      %p212 = por %p210, %p211
      %s214 = sadd.s32 %s213, 1
      %p217 = scmp.eq.s32.totalorder %s32, 1
      %p218 = scmp.ne.s32.totalorder %s213, %s215
      %p219 = scmp.eq.s32.totalorder %s32, 0
      %p220 = por %p218, %p219
      %p221 = scmp.ne.s32.totalorder %s213, %s215
      %p222 = scmp.eq.s32.totalorder %s37, 1
      %p223 = por %p221, %p222
      %p224 = scmp.ne.s32.totalorder %s215, %s216
      %p225 = scmp.eq.s32.totalorder %s37, 0
      %p226 = por %p224, %p225
      %p227 = scmp.ne.s32.totalorder %s215, %s216
      %p228 = scmp.eq.s32.totalorder %s38, 1
      %p229 = por %p227, %p228
      %p231 = scmp.ne.s32.totalorder %s216, %s230
      %p232 = scmp.eq.s32.totalorder %s38, 0
      %p233 = por %p231, %p232
      %s235 = sadd.s32 %s234, 1
      %p238 = scmp.eq.s32.totalorder %s32, 1
      %p239 = scmp.ne.s32.totalorder %s234, %s236
      %p240 = scmp.eq.s32.totalorder %s32, 0
      %p241 = por %p239, %p240
      %p242 = scmp.ne.s32.totalorder %s234, %s236
      %p243 = scmp.eq.s32.totalorder %s37, 1
      %p244 = por %p242, %p243
      %p245 = scmp.ne.s32.totalorder %s236, %s237
      %p246 = scmp.eq.s32.totalorder %s37, 0
      %p247 = por %p245, %p246
      %p248 = scmp.ne.s32.totalorder %s236, %s237
      %p249 = scmp.eq.s32.totalorder %s38, 1
      %p250 = por %p248, %p249
      %p252 = scmp.ne.s32.totalorder %s237, %s251
      %p253 = scmp.eq.s32.totalorder %s38, 0
      %p254 = por %p252, %p253
      %s256 = sadd.s32 %s255, 1
      %p259 = scmp.eq.s32.totalorder %s32, 1
      %p260 = scmp.ne.s32.totalorder %s255, %s257
      %p261 = scmp.eq.s32.totalorder %s32, 0
      %p262 = por %p260, %p261
      %p263 = scmp.ne.s32.totalorder %s255, %s257
      %p264 = scmp.eq.s32.totalorder %s37, 1
      %p265 = por %p263, %p264
      %p266 = scmp.ne.s32.totalorder %s257, %s258
      %p267 = scmp.eq.s32.totalorder %s37, 0
      %p268 = por %p266, %p267
      %p269 = scmp.ne.s32.totalorder %s257, %s258
      %p270 = scmp.eq.s32.totalorder %s38, 1
      %p271 = por %p269, %p270
      %p273 = scmp.ne.s32.totalorder %s258, %s272
      %p274 = scmp.eq.s32.totalorder %s38, 0
      %p275 = por %p273, %p274
      %s277 = sadd.s32 %s276, 1
      %p280 = scmp.eq.s32.totalorder %s32, 1
      %p281 = scmp.ne.s32.totalorder %s276, %s278
      %p282 = scmp.eq.s32.totalorder %s32, 0
      %p283 = por %p281, %p282
      %p284 = scmp.ne.s32.totalorder %s276, %s278
      %p285 = scmp.eq.s32.totalorder %s37, 1
      %p286 = por %p284, %p285
      %p287 = scmp.ne.s32.totalorder %s278, %s279
      %p288 = scmp.eq.s32.totalorder %s37, 0
      %p289 = por %p287, %p288
      %p290 = scmp.ne.s32.totalorder %s278, %s279
      %p291 = scmp.eq.s32.totalorder %s38, 1
      %p292 = por %p290, %p291
      %p294 = scmp.ne.s32.totalorder %s279, %s293
      %p295 = scmp.eq.s32.totalorder %s38, 0
      %p296 = por %p294, %p295
      %s298 = sadd.s32 %s297, 1
      %p301 = scmp.eq.s32.totalorder %s32, 1
      %p302 = scmp.ne.s32.totalorder %s297, %s299
      %p303 = scmp.eq.s32.totalorder %s32, 0
      %p304 = por %p302, %p303
      %p305 = scmp.ne.s32.totalorder %s297, %s299
      %p306 = scmp.eq.s32.totalorder %s37, 1
      %p307 = por %p305, %p306
      %p308 = scmp.ne.s32.totalorder %s299, %s300
      %p309 = scmp.eq.s32.totalorder %s37, 0
      %p310 = por %p308, %p309
      %p311 = scmp.ne.s32.totalorder %s299, %s300
      %p312 = scmp.eq.s32.totalorder %s38, 1
      %p313 = por %p311, %p312
      %p315 = scmp.ne.s32.totalorder %s300, %s314
      %p316 = scmp.eq.s32.totalorder %s38, 0
      %p317 = por %p315, %p316
      %s319 = sadd.s32 %s318, 1
      %p322 = scmp.eq.s32.totalorder %s32, 1
      %p323 = scmp.ne.s32.totalorder %s318, %s320
      %p324 = scmp.eq.s32.totalorder %s32, 0
      %p325 = por %p323, %p324
      %p326 = scmp.ne.s32.totalorder %s318, %s320
      %p327 = scmp.eq.s32.totalorder %s37, 1
      %p328 = por %p326, %p327
      %p329 = scmp.ne.s32.totalorder %s320, %s321
      %p330 = scmp.eq.s32.totalorder %s37, 0
      %p331 = por %p329, %p330
      %p332 = scmp.ne.s32.totalorder %s320, %s321
      %p333 = scmp.eq.s32.totalorder %s38, 1
      %p334 = por %p332, %p333
      %p336 = scmp.ne.s32.totalorder %s321, %s335
      %p337 = scmp.eq.s32.totalorder %s38, 0
      %p338 = por %p336, %p337
      %s340 = sadd.s32 %s339, 1
      %p343 = scmp.eq.s32.totalorder %s32, 1
      %p344 = scmp.ne.s32.totalorder %s339, %s341
      %p345 = scmp.eq.s32.totalorder %s32, 0
      %p346 = por %p344, %p345
      %p347 = scmp.ne.s32.totalorder %s339, %s341
      %p348 = scmp.eq.s32.totalorder %s37, 1
      %p349 = por %p347, %p348
      %p350 = scmp.ne.s32.totalorder %s341, %s342
      %p351 = scmp.eq.s32.totalorder %s37, 0
      %p352 = por %p350, %p351
      %p353 = scmp.ne.s32.totalorder %s341, %s342
      %p354 = scmp.eq.s32.totalorder %s38, 1
      %p355 = por %p353, %p354
      %p357 = scmp.ne.s32.totalorder %s342, %s356
      %p358 = scmp.eq.s32.totalorder %s38, 0
      %p359 = por %p357, %p358
      %s361 = sadd.s32 %s360, 1
      %p364 = scmp.eq.s32.totalorder %s32, 1
      %p365 = scmp.ne.s32.totalorder %s360, %s362
      %p366 = scmp.eq.s32.totalorder %s32, 0
      %p367 = por %p365, %p366
      %p368 = scmp.ne.s32.totalorder %s360, %s362
      %p369 = scmp.eq.s32.totalorder %s37, 1
      %p370 = por %p368, %p369
      %p371 = scmp.ne.s32.totalorder %s362, %s363
      %p372 = scmp.eq.s32.totalorder %s37, 0
      %p373 = por %p371, %p372
      %p374 = scmp.ne.s32.totalorder %s362, %s363
      %p375 = scmp.eq.s32.totalorder %s38, 1
      %p376 = por %p374, %p375
      %p378 = scmp.ne.s32.totalorder %s363, %s377
      %p379 = scmp.eq.s32.totalorder %s38, 0
      %p380 = por %p378, %p379
      %s382 = sadd.s32 %s381, 1
      %p385 = scmp.eq.s32.totalorder %s32, 1
      %p386 = scmp.ne.s32.totalorder %s381, %s383
      %p387 = scmp.eq.s32.totalorder %s32, 0
      %p388 = por %p386, %p387
      %p389 = scmp.ne.s32.totalorder %s381, %s383
      %p390 = scmp.eq.s32.totalorder %s37, 1
      %p391 = por %p389, %p390
      %p392 = scmp.ne.s32.totalorder %s383, %s384
      %p393 = scmp.eq.s32.totalorder %s37, 0
      %p394 = por %p392, %p393
      %p395 = scmp.ne.s32.totalorder %s383, %s384
      %p396 = scmp.eq.s32.totalorder %s38, 1
      %p397 = por %p395, %p396
      %p399 = scmp.ne.s32.totalorder %s384, %s398
      %p400 = scmp.eq.s32.totalorder %s38, 0
      %p401 = por %p399, %p400
      %s403 = sadd.s32 %s402, 1
      %p406 = scmp.eq.s32.totalorder %s32, 1
      %p407 = scmp.ne.s32.totalorder %s402, %s404
      %p408 = scmp.eq.s32.totalorder %s32, 0
      %p409 = por %p407, %p408
      %p410 = scmp.ne.s32.totalorder %s402, %s404
      %p411 = scmp.eq.s32.totalorder %s37, 1
      %p412 = por %p410, %p411
      %p413 = scmp.ne.s32.totalorder %s404, %s405
      %p414 = scmp.eq.s32.totalorder %s37, 0
      %p415 = por %p413, %p414
      %p416 = scmp.ne.s32.totalorder %s404, %s405
      %p417 = scmp.eq.s32.totalorder %s38, 1
      %p418 = por %p416, %p417
      %p420 = scmp.ne.s32.totalorder %s405, %s419
      %p421 = scmp.eq.s32.totalorder %s38, 0
      %p422 = por %p420, %p421
      %s424 = sadd.s32 %s423, 1
      %p427 = scmp.eq.s32.totalorder %s32, 1
      %p428 = scmp.ne.s32.totalorder %s423, %s425
      %p429 = scmp.eq.s32.totalorder %s32, 0
      %p430 = por %p428, %p429
      %p431 = scmp.ne.s32.totalorder %s423, %s425
      %p432 = scmp.eq.s32.totalorder %s37, 1
      %p433 = por %p431, %p432
      %p434 = scmp.ne.s32.totalorder %s425, %s426
      %p435 = scmp.eq.s32.totalorder %s37, 0
      %p436 = por %p434, %p435
      %p437 = scmp.ne.s32.totalorder %s425, %s426
      %p438 = scmp.eq.s32.totalorder %s38, 1
      %p439 = por %p437, %p438
      %p441 = scmp.ne.s32.totalorder %s426, %s440
      %p442 = scmp.eq.s32.totalorder %s38, 0
      %p443 = por %p441, %p442
      %s445 = sadd.s32 %s444, 1
      %p448 = scmp.eq.s32.totalorder %s32, 1
      %p449 = scmp.ne.s32.totalorder %s444, %s446
      %p450 = scmp.eq.s32.totalorder %s32, 0
      %p451 = por %p449, %p450
      %p452 = scmp.ne.s32.totalorder %s444, %s446
      %p453 = scmp.eq.s32.totalorder %s37, 1
      %p454 = por %p452, %p453
      %p455 = scmp.ne.s32.totalorder %s446, %s447
      %p456 = scmp.eq.s32.totalorder %s37, 0
      %p457 = por %p455, %p456
      %p458 = scmp.ne.s32.totalorder %s446, %s447
      %p459 = scmp.eq.s32.totalorder %s38, 1
      %p460 = por %p458, %p459
      %p462 = scmp.ne.s32.totalorder %s447, %s461
      %p463 = scmp.eq.s32.totalorder %s38, 0
      %p464 = por %p462, %p463
      %s466 = sadd.s32 %s465, 1
      %p469 = scmp.eq.s32.totalorder %s32, 1
      %p470 = scmp.ne.s32.totalorder %s465, %s467
      %p471 = scmp.eq.s32.totalorder %s32, 0
      %p472 = por %p470, %p471
      %p473 = scmp.ne.s32.totalorder %s465, %s467
      %p474 = scmp.eq.s32.totalorder %s37, 1
      %p475 = por %p473, %p474
      %p476 = scmp.ne.s32.totalorder %s467, %s468
      %p477 = scmp.eq.s32.totalorder %s37, 0
      %p478 = por %p476, %p477
      %p479 = scmp.ne.s32.totalorder %s467, %s468
      %p480 = scmp.eq.s32.totalorder %s38, 1
      %p481 = por %p479, %p480
      %p483 = scmp.ne.s32.totalorder %s468, %s482
      %p484 = scmp.eq.s32.totalorder %s38, 0
      %p485 = por %p483, %p484
      %s486 = ssub.s32 %s32, %s39
      %p487 = scmp.eq.s32.totalorder %s486, 0
      %s489 = sadd.s32 %s488, 1
      %s490 = scalar_select %p487, %s488, %s489
      %p493 = pneg %p487
      %p494 = scmp.eq.s32.totalorder %s32, 1
      %p495 = por %p493, %p494
      %p496 = scmp.ne.s32.totalorder %s488, %s491
      %p497 = scmp.eq.s32.totalorder %s32, 0
      %p498 = por %p496, %p497
      %p499 = scmp.ne.s32.totalorder %s488, %s491
      %p500 = scmp.eq.s32.totalorder %s37, 1
      %p501 = por %p499, %p500
      %p502 = scmp.ne.s32.totalorder %s491, %s492
      %p503 = scmp.eq.s32.totalorder %s37, 0
      %p504 = por %p502, %p503
      %p505 = scmp.ne.s32.totalorder %s491, %s492
      %p506 = scmp.eq.s32.totalorder %s38, 1
      %p507 = por %p505, %p506
      %p509 = scmp.ne.s32.totalorder %s492, %s508
      %p510 = scmp.eq.s32.totalorder %s38, 0
      %p511 = por %p509, %p510
      %s512 = ssub.s32 %s32, %s39
      %p513 = scmp.eq.s32.totalorder %s512, 0
      %s515 = sadd.s32 %s514, 1
      %s516 = scalar_select %p513, %s514, %s515
      %p519 = pneg %p513
      %p520 = scmp.eq.s32.totalorder %s32, 1
      %p521 = por %p519, %p520
      %p522 = scmp.ne.s32.totalorder %s514, %s517
      %p523 = scmp.eq.s32.totalorder %s32, 0
      %p524 = por %p522, %p523
      %p525 = scmp.ne.s32.totalorder %s514, %s517
      %p526 = scmp.eq.s32.totalorder %s37, 1
      %p527 = por %p525, %p526
      %p528 = scmp.ne.s32.totalorder %s517, %s518
      %p529 = scmp.eq.s32.totalorder %s37, 0
      %p530 = por %p528, %p529
      %p531 = scmp.ne.s32.totalorder %s517, %s518
      %p532 = scmp.eq.s32.totalorder %s38, 1
      %p533 = por %p531, %p532
      %p535 = scmp.ne.s32.totalorder %s518, %s534
      %p536 = scmp.eq.s32.totalorder %s38, 0
      %p537 = por %p535, %p536
      %p538 = scmp.le.s32.totalorder 1, %s32
      %p539 = scmp.lt.s32.totalorder %s32, 3
      %p540 = pnand %p538, %p539
      %p541 = pneg %p540
      // Predicated region
      $region9: #{_lambda_.1} parent=5 // pred_check
        _
      $region10: #{_lambda_.1} parent=5 // pred_check_branch
        %543 = sbr.rel (%p540) target = $region12
      $region11: #{_lambda_.1} parent=5 // pred_region
        %s544 = ssub.s32 %s32, 1
        // Predicated region
        $region13: #{_lambda_.1} parent=11 // pred_check
          %p545 = pneg %p79
        $region14: #{_lambda_.1} parent=11 // pred_check_branch
          %547 = sbr.rel (%p545) target = $region16
        $region15: #{_lambda_.1} parent=11 // pred_region
          _
        $region16: #{_lambda_.1} parent=11 // pred_fallthru
          _
        // Predicated region
        $region17: #{_lambda_.1} parent=11 // pred_check
          %p548 = pneg %p100
        $region18: #{_lambda_.1} parent=11 // pred_check_branch
          %550 = sbr.rel (%p548) target = $region20
        $region19: #{_lambda_.1} parent=11 // pred_region
          _
        $region20: #{_lambda_.1} parent=11 // pred_fallthru
          _
        // Predicated region
        $region21: #{_lambda_.1} parent=11 // pred_check
          %p551 = pneg %p121
        $region22: #{_lambda_.1} parent=11 // pred_check_branch
          %553 = sbr.rel (%p551) target = $region24
        $region23: #{_lambda_.1} parent=11 // pred_region
          _
        $region24: #{_lambda_.1} parent=11 // pred_fallthru
          _
        // Predicated region
        $region25: #{_lambda_.1} parent=11 // pred_check
          %p554 = pneg %p142
        $region26: #{_lambda_.1} parent=11 // pred_check_branch
          %556 = sbr.rel (%p554) target = $region28
        $region27: #{_lambda_.1} parent=11 // pred_region
          _
        $region28: #{_lambda_.1} parent=11 // pred_fallthru
          _
        // Predicated region
        $region29: #{_lambda_.1} parent=11 // pred_check
          %p557 = pneg %p163
        $region30: #{_lambda_.1} parent=11 // pred_check_branch
          %559 = sbr.rel (%p557) target = $region32
        $region31: #{_lambda_.1} parent=11 // pred_region
          _
        $region32: #{_lambda_.1} parent=11 // pred_fallthru
          _
        // Predicated region
        $region33: #{_lambda_.1} parent=11 // pred_check
          %p560 = pneg %p184
        $region34: #{_lambda_.1} parent=11 // pred_check_branch
          %562 = sbr.rel (%p560) target = $region36
        $region35: #{_lambda_.1} parent=11 // pred_region
          _
        $region36: #{_lambda_.1} parent=11 // pred_fallthru
          _
        // Predicated region
        $region37: #{_lambda_.1} parent=11 // pred_check
          %p563 = pneg %p205
        $region38: #{_lambda_.1} parent=11 // pred_check_branch
          %565 = sbr.rel (%p563) target = $region40
        $region39: #{_lambda_.1} parent=11 // pred_region
          %s567 = ssub.s32 32768, 32768
          %568 = vsyncadd [#allocation3], %s567
          %s569 = sshll.u32 [#allocation2], 4
          %s570 = int_to_ptr.vmem [resolvable:$true] %s569
          %575 = dma.hbm_to_vmem [thread:$0]  %s7, 32768, %s570, [#allocation3], 512, 512, 32
        $region40: #{_lambda_.1} parent=11 // pred_fallthru
          _
        // Predicated region
        $region41: #{_lambda_.1} parent=11 // pred_check
          %p576 = pneg %p226
        $region42: #{_lambda_.1} parent=11 // pred_check_branch
          %578 = sbr.rel (%p576) target = $region44
        $region43: #{_lambda_.1} parent=11 // pred_region
          _
        $region44: #{_lambda_.1} parent=11 // pred_fallthru
          _
        // Predicated region
        $region45: #{_lambda_.1} parent=11 // pred_check
          %p579 = pneg %p247
        $region46: #{_lambda_.1} parent=11 // pred_check_branch
          %581 = sbr.rel (%p579) target = $region48
        $region47: #{_lambda_.1} parent=11 // pred_region
          %s583 = ssub.s32 8192, 8192
          %584 = vsyncadd [#allocation5], %s583
          %s585 = sshll.u32 [#allocation4], 4
          %s586 = int_to_ptr.vmem [resolvable:$true] %s585
          %591 = dma.hbm_to_vmem [thread:$0]  %s9, 8192, %s586, [#allocation5], 128, 128, 8
        $region48: #{_lambda_.1} parent=11 // pred_fallthru
          _
        // Predicated region
        $region49: #{_lambda_.1} parent=11 // pred_check
          %p592 = pneg %p268
        $region50: #{_lambda_.1} parent=11 // pred_check_branch
          %594 = sbr.rel (%p592) target = $region52
        $region51: #{_lambda_.1} parent=11 // pred_region
          _
        $region52: #{_lambda_.1} parent=11 // pred_fallthru
          _
        // Predicated region
        $region53: #{_lambda_.1} parent=11 // pred_check
          %p595 = pneg %p289
        $region54: #{_lambda_.1} parent=11 // pred_check_branch
          %597 = sbr.rel (%p595) target = $region56
        $region55: #{_lambda_.1} parent=11 // pred_region
          %s599 = ssub.s32 8192, 8192
          %600 = vsyncadd [#allocation5], %s599
          %s601 = sshll.u32 [#allocation6], 4
          %s602 = int_to_ptr.vmem [resolvable:$true] %s601
          %607 = dma.hbm_to_vmem [thread:$0]  %s11, 8192, %s602, [#allocation5], 512, 512, 32
        $region56: #{_lambda_.1} parent=11 // pred_fallthru
          _
        // Predicated region
        $region57: #{_lambda_.1} parent=11 // pred_check
          %p608 = pneg %p310
        $region58: #{_lambda_.1} parent=11 // pred_check_branch
          %610 = sbr.rel (%p608) target = $region60
        $region59: #{_lambda_.1} parent=11 // pred_region
          _
        $region60: #{_lambda_.1} parent=11 // pred_fallthru
          _
        // Predicated region
        $region61: #{_lambda_.1} parent=11 // pred_check
          %p611 = pneg %p331
        $region62: #{_lambda_.1} parent=11 // pred_check_branch
          %613 = sbr.rel (%p611) target = $region64
        $region63: #{_lambda_.1} parent=11 // pred_region
          %s615 = ssub.s32 32768, 32768
          %616 = vsyncadd [#allocation8], %s615
          %s617 = sshll.u32 [#allocation7], 4
          %s618 = int_to_ptr.vmem [resolvable:$true] %s617
          %623 = dma.hbm_to_vmem [thread:$0]  %s13, 32768, %s618, [#allocation8], 512, 512, 32
        $region64: #{_lambda_.1} parent=11 // pred_fallthru
          _
        // Predicated region
        $region65: #{_lambda_.1} parent=11 // pred_check
          %p624 = pneg %p352
        $region66: #{_lambda_.1} parent=11 // pred_check_branch
          %626 = sbr.rel (%p624) target = $region68
        $region67: #{_lambda_.1} parent=11 // pred_region
          _
        $region68: #{_lambda_.1} parent=11 // pred_fallthru
          _
        // Predicated region
        $region69: #{_lambda_.1} parent=11 // pred_check
          %p627 = pneg %p373
        $region70: #{_lambda_.1} parent=11 // pred_check_branch
          %629 = sbr.rel (%p627) target = $region72
        $region71: #{_lambda_.1} parent=11 // pred_region
          %s631 = ssub.s32 32768, 32768
          %632 = vsyncadd [#allocation8], %s631
          %s633 = sshll.u32 [#allocation9], 4
          %s634 = int_to_ptr.vmem [resolvable:$true] %s633
          %639 = dma.hbm_to_vmem [thread:$0]  %s15, 32768, %s634, [#allocation8], 512, 512, 32
        $region72: #{_lambda_.1} parent=11 // pred_fallthru
          _
        // Predicated region
        $region73: #{_lambda_.1} parent=11 // pred_check
          %p640 = pneg %p394
        $region74: #{_lambda_.1} parent=11 // pred_check_branch
          %642 = sbr.rel (%p640) target = $region76
        $region75: #{_lambda_.1} parent=11 // pred_region
          _
        $region76: #{_lambda_.1} parent=11 // pred_fallthru
          _
        // Predicated region
        $region77: #{_lambda_.1} parent=11 // pred_check
          %p643 = pneg %p415
        $region78: #{_lambda_.1} parent=11 // pred_check_branch
          %645 = sbr.rel (%p643) target = $region80
        $region79: #{_lambda_.1} parent=11 // pred_region
          _
        $region80: #{_lambda_.1} parent=11 // pred_fallthru
          _
        // Predicated region
        $region81: #{_lambda_.1} parent=11 // pred_check
          %p646 = pneg %p436
        $region82: #{_lambda_.1} parent=11 // pred_check_branch
          %648 = sbr.rel (%p646) target = $region84
        $region83: #{_lambda_.1} parent=11 // pred_region
          _
        $region84: #{_lambda_.1} parent=11 // pred_fallthru
          _
        // Predicated region
        $region85: #{_lambda_.1} parent=11 // pred_check
          %p649 = pneg %p457
        $region86: #{_lambda_.1} parent=11 // pred_check_branch
          %651 = sbr.rel (%p649) target = $region88
        $region87: #{_lambda_.1} parent=11 // pred_region
          _
        $region88: #{_lambda_.1} parent=11 // pred_fallthru
          _
        // Predicated region
        $region89: #{_lambda_.1} parent=11 // pred_check
          %p652 = pneg %p478
        $region90: #{_lambda_.1} parent=11 // pred_check_branch
          %654 = sbr.rel (%p652) target = $region92
        $region91: #{_lambda_.1} parent=11 // pred_region
          _
        $region92: #{_lambda_.1} parent=11 // pred_fallthru
          _
      $region12: #{_lambda_.1} parent=5 // pred_fallthru
        _
      %p655 = scmp.lt.s32.totalorder %s32, 2
      // Predicated region
      $region93: #{_lambda_.1} parent=5 // pred_check
        %p656 = pneg %p655
      $region94: #{_lambda_.1} parent=5 // pred_check_branch
        %658 = sbr.rel (%p656) target = $region96
      $region95: #{_lambda_.1} parent=5 // pred_region
        // Predicated region
        $region97: #{_lambda_.1} parent=95 // pred_check
          %p659 = pneg %p52
        $region98: #{_lambda_.1} parent=95 // pred_check_branch
          %661 = sbr.rel (%p659) target = $region100
        $region99: #{_lambda_.1} parent=95 // pred_region
          %p662 = scmp.lt.s32.totalorder %s32, 1
          %s663 = scalar_select %p662, %s32, 1
          %s664 = smul.addr %s663, 2
          %s665 = smul.addr %s664, 8
          %s666 = scalar_lea.vmem %s0, %s665
        $region100: #{_lambda_.1} parent=95 // pred_fallthru
          _
      $region96: #{_lambda_.1} parent=5 // pred_fallthru
        _
      %p667 = scmp.le.s32.totalorder 1, %s32
      %p668 = scmp.lt.s32.totalorder %s32, 3
      %p669 = pnand %p667, %p668
      %p670 = pneg %p669
      // Predicated region
      $region101: #{_lambda_.1} parent=5 // pred_check
        _
      $region102: #{_lambda_.1} parent=5 // pred_check_branch
        %672 = sbr.rel (%p669) target = $region104
      $region103: #{_lambda_.1} parent=5 // pred_region
        %s673 = ssub.s32 %s32, 1
        // Predicated region
        $region105: #{_lambda_.1} parent=103 // pred_check
          %p674 = pneg %p205
        $region106: #{_lambda_.1} parent=103 // pred_check_branch
          %676 = sbr.rel (%p674) target = $region108
        $region107: #{_lambda_.1} parent=103 // pred_region
          %677 = dma.done [#allocation3], 32768
        $region108: #{_lambda_.1} parent=103 // pred_fallthru
          _
        // Predicated region
        $region109: #{_lambda_.1} parent=103 // pred_check
          %p678 = pneg %p247
        $region110: #{_lambda_.1} parent=103 // pred_check_branch
          %680 = sbr.rel (%p678) target = $region112
        $region111: #{_lambda_.1} parent=103 // pred_region
          %681 = dma.done [#allocation5], 8192
        $region112: #{_lambda_.1} parent=103 // pred_fallthru
          _
        // Predicated region
        $region113: #{_lambda_.1} parent=103 // pred_check
          %p682 = pneg %p289
        $region114: #{_lambda_.1} parent=103 // pred_check_branch
          %684 = sbr.rel (%p682) target = $region116
        $region115: #{_lambda_.1} parent=103 // pred_region
          %685 = dma.done [#allocation5], 8192
        $region116: #{_lambda_.1} parent=103 // pred_fallthru
          _
        // Predicated region
        $region117: #{_lambda_.1} parent=103 // pred_check
          %p686 = pneg %p331
        $region118: #{_lambda_.1} parent=103 // pred_check_branch
          %688 = sbr.rel (%p686) target = $region120
        $region119: #{_lambda_.1} parent=103 // pred_region
          %689 = dma.done [#allocation8], 32768
        $region120: #{_lambda_.1} parent=103 // pred_fallthru
          _
        // Predicated region
        $region121: #{_lambda_.1} parent=103 // pred_check
          %p690 = pneg %p373
        $region122: #{_lambda_.1} parent=103 // pred_check_branch
          %692 = sbr.rel (%p690) target = $region124
        $region123: #{_lambda_.1} parent=103 // pred_region
          %693 = dma.done [#allocation8], 32768
        $region124: #{_lambda_.1} parent=103 // pred_fallthru
          _
        %p694 = scmp.lt.s32.totalorder %s37, 1
        %s695 = scalar_select %p694, %s37, 1
        %s696 = smul.addr %s695, 2
        %s697 = smul.addr %s696, 8
        %s698 = scalar_lea.vmem %s0, %s697
        %p699 = pneg %p58
        %p700 = pneg %p55
        %p701 = pneg %p79
        %p702 = pneg %p76
        %p703 = pneg %p100
        %p704 = pneg %p97
        %p705 = pneg %p121
        %p706 = pneg %p118
        %p707 = pneg %p142
        %p708 = pneg %p139
        %p709 = pneg %p163
        %p710 = pneg %p160
        %p711 = pneg %p184
        %p712 = pneg %p181
        %p713 = pneg %p205
        %p714 = pneg %p202
        %p715 = pneg %p226
        %p716 = pneg %p223
        %p717 = pneg %p247
        %p718 = pneg %p244
        %p719 = pneg %p268
        %p720 = pneg %p265
        %p721 = pneg %p289
        %p722 = pneg %p286
        %p723 = pneg %p310
        %p724 = pneg %p307
        %p725 = pneg %p331
        %p726 = pneg %p328
        %p727 = pneg %p352
        %p728 = pneg %p349
        %p729 = pneg %p373
        %p730 = pneg %p370
        %p731 = pneg %p394
        %p732 = pneg %p391
        %p733 = pneg %p415
        %p734 = pneg %p412
        %p735 = pneg %p436
        %p736 = pneg %p433
        %p737 = pneg %p457
        %p738 = pneg %p454
        %p739 = pneg %p478
        %p740 = pneg %p475
        %p741 = pneg %p504
        %p742 = pneg %p501
        %p743 = scmp.lt.s32.totalorder %s37, 1
        %s744 = scalar_select %p743, %s37, 1
        %s745 = smul.addr %s744, 8
        %s746 = scalar_lea.vmem %s21, %s745
        %p747 = pneg %p530
        %p748 = pneg %p527
        %p749 = scmp.lt.s32.totalorder %s37, 1
        %s750 = scalar_select %p749, %s37, 1
        %s751 = smul.addr %s750, 2
        %s752 = smul.addr %s751, 8
        %s753 = scalar_lea.vmem %s22, %s752
        %p754 = scmp.lt.s32.totalorder %s37, 1
        %s755 = scalar_select %p754, %s37, 1
        %s756 = smul.addr %s755, 2
        %s757 = smul.addr %s756, 8
        %s758 = scalar_lea.vmem %s0, %s757
        %p759 = scmp.lt.s32.totalorder %s37, 1
        %s760 = scalar_select %p759, %s37, 1
        %s761 = smul.addr %s760, 8
        %s762 = scalar_lea.vmem %s21, %s761
        %p763 = scmp.lt.s32.totalorder %s37, 1
        %s764 = scalar_select %p763, %s37, 1
        %s765 = smul.addr %s764, 2
        %s766 = smul.addr %s765, 8
        %s767 = scalar_lea.vmem %s22, %s766
        %v768 = vld [vmem:[%s758] sm:$0xff]
        %v769 = vld [vmem:[%s758 + $0x8] sm:$0xff]
        %v770 = vld [vmem:[%s1] sm:$0xff]
        %v771 = vld [vmem:[%s1 + $0x8] sm:$0xff]
        %v772 = vld [vmem:[%s1 + $0x10] sm:$0xff]
        %v773 = vld [vmem:[%s1 + $0x18] sm:$0xff]
        %v774 = vld [vmem:[%s1 + $0x20] sm:$0xff]
        %v775 = vld [vmem:[%s1 + $0x28] sm:$0xff]
        %v776 = vld [vmem:[%s1 + $0x30] sm:$0xff]
        %v777 = vld [vmem:[%s1 + $0x38] sm:$0xff]
        %v778 = vld [vmem:[%s1 + $0x40] sm:$0xff]
        %v779 = vld [vmem:[%s1 + $0x48] sm:$0xff]
        %v780 = vld [vmem:[%s1 + $0x50] sm:$0xff]
        %v781 = vld [vmem:[%s1 + $0x58] sm:$0xff]
        %v782 = vld [vmem:[%s1 + $0x60] sm:$0xff]
        %v783 = vld [vmem:[%s1 + $0x68] sm:$0xff]
        %v784 = vld [vmem:[%s1 + $0x70] sm:$0xff]
        %v785 = vld [vmem:[%s1 + $0x78] sm:$0xff]
        %v786 = vld [vmem:[%s1 + $0x80] sm:$0xff]
        %v787 = vld [vmem:[%s1 + $0x88] sm:$0xff]
        %v788 = vld [vmem:[%s1 + $0x90] sm:$0xff]
        %v789 = vld [vmem:[%s1 + $0x98] sm:$0xff]
        %v790 = vld [vmem:[%s1 + $0xa0] sm:$0xff]
        %v791 = vld [vmem:[%s1 + $0xa8] sm:$0xff]
        %v792 = vld [vmem:[%s1 + $0xb0] sm:$0xff]
        %v793 = vld [vmem:[%s1 + $0xb8] sm:$0xff]
        %v794 = vld [vmem:[%s1 + $0xc0] sm:$0xff]
        %v795 = vld [vmem:[%s1 + $0xc8] sm:$0xff]
        %v796 = vld [vmem:[%s1 + $0xd0] sm:$0xff]
        %v797 = vld [vmem:[%s1 + $0xd8] sm:$0xff]
        %v798 = vld [vmem:[%s1 + $0xe0] sm:$0xff]
        %v799 = vld [vmem:[%s1 + $0xe8] sm:$0xff]
        %v800 = vld [vmem:[%s1 + $0xf0] sm:$0xff]
        %v801 = vld [vmem:[%s1 + $0xf8] sm:$0xff]
        %v802 = vld [vmem:[%s1 + $0x100] sm:$0xff]
        %v803 = vld [vmem:[%s1 + $0x108] sm:$0xff]
        %v804 = vld [vmem:[%s1 + $0x110] sm:$0xff]
        %v805 = vld [vmem:[%s1 + $0x118] sm:$0xff]
        %v806 = vld [vmem:[%s1 + $0x120] sm:$0xff]
        %v807 = vld [vmem:[%s1 + $0x128] sm:$0xff]
        %v808 = vld [vmem:[%s1 + $0x130] sm:$0xff]
        %v809 = vld [vmem:[%s1 + $0x138] sm:$0xff]
        %v810 = vld [vmem:[%s1 + $0x140] sm:$0xff]
        %v811 = vld [vmem:[%s1 + $0x148] sm:$0xff]
        %v812 = vld [vmem:[%s1 + $0x150] sm:$0xff]
        %v813 = vld [vmem:[%s1 + $0x158] sm:$0xff]
        %v814 = vld [vmem:[%s1 + $0x160] sm:$0xff]
        %v815 = vld [vmem:[%s1 + $0x168] sm:$0xff]
        %v816 = vld [vmem:[%s1 + $0x170] sm:$0xff]
        %v817 = vld [vmem:[%s1 + $0x178] sm:$0xff]
        %v818 = vld [vmem:[%s1 + $0x180] sm:$0xff]
        %v819 = vld [vmem:[%s1 + $0x188] sm:$0xff]
        %v820 = vld [vmem:[%s1 + $0x190] sm:$0xff]
        %v821 = vld [vmem:[%s1 + $0x198] sm:$0xff]
        %v822 = vld [vmem:[%s1 + $0x1a0] sm:$0xff]
        %v823 = vld [vmem:[%s1 + $0x1a8] sm:$0xff]
        %v824 = vld [vmem:[%s1 + $0x1b0] sm:$0xff]
        %v825 = vld [vmem:[%s1 + $0x1b8] sm:$0xff]
        %v826 = vld [vmem:[%s1 + $0x1c0] sm:$0xff]
        %v827 = vld [vmem:[%s1 + $0x1c8] sm:$0xff]
        %v828 = vld [vmem:[%s1 + $0x1d0] sm:$0xff]
        %v829 = vld [vmem:[%s1 + $0x1d8] sm:$0xff]
        %v830 = vld [vmem:[%s1 + $0x1e0] sm:$0xff]
        %v831 = vld [vmem:[%s1 + $0x1e8] sm:$0xff]
        %v832 = vld [vmem:[%s1 + $0x1f0] sm:$0xff]
        %v833 = vld [vmem:[%s1 + $0x1f8] sm:$0xff]
        %v834 = vld [vmem:[%s1 + $0x200] sm:$0xff]
        %v835 = vld [vmem:[%s1 + $0x208] sm:$0xff]
        %v836 = vld [vmem:[%s1 + $0x210] sm:$0xff]
        %v837 = vld [vmem:[%s1 + $0x218] sm:$0xff]
        %v838 = vld [vmem:[%s1 + $0x220] sm:$0xff]
        %v839 = vld [vmem:[%s1 + $0x228] sm:$0xff]
        %v840 = vld [vmem:[%s1 + $0x230] sm:$0xff]
        %v841 = vld [vmem:[%s1 + $0x238] sm:$0xff]
        %v842 = vld [vmem:[%s1 + $0x240] sm:$0xff]
        %v843 = vld [vmem:[%s1 + $0x248] sm:$0xff]
        %v844 = vld [vmem:[%s1 + $0x250] sm:$0xff]
        %v845 = vld [vmem:[%s1 + $0x258] sm:$0xff]
        %v846 = vld [vmem:[%s1 + $0x260] sm:$0xff]
        %v847 = vld [vmem:[%s1 + $0x268] sm:$0xff]
        %v848 = vld [vmem:[%s1 + $0x270] sm:$0xff]
        %v849 = vld [vmem:[%s1 + $0x278] sm:$0xff]
        %v850 = vld [vmem:[%s1 + $0x280] sm:$0xff]
        %v851 = vld [vmem:[%s1 + $0x288] sm:$0xff]
        %v852 = vld [vmem:[%s1 + $0x290] sm:$0xff]
        %v853 = vld [vmem:[%s1 + $0x298] sm:$0xff]
        %v854 = vld [vmem:[%s1 + $0x2a0] sm:$0xff]
        %v855 = vld [vmem:[%s1 + $0x2a8] sm:$0xff]
        %v856 = vld [vmem:[%s1 + $0x2b0] sm:$0xff]
        %v857 = vld [vmem:[%s1 + $0x2b8] sm:$0xff]
        %v858 = vld [vmem:[%s1 + $0x2c0] sm:$0xff]
        %v859 = vld [vmem:[%s1 + $0x2c8] sm:$0xff]
        %v860 = vld [vmem:[%s1 + $0x2d0] sm:$0xff]
        %v861 = vld [vmem:[%s1 + $0x2d8] sm:$0xff]
        %v862 = vld [vmem:[%s1 + $0x2e0] sm:$0xff]
        %v863 = vld [vmem:[%s1 + $0x2e8] sm:$0xff]
        %v864 = vld [vmem:[%s1 + $0x2f0] sm:$0xff]
        %v865 = vld [vmem:[%s1 + $0x2f8] sm:$0xff]
        %v866 = vld [vmem:[%s1 + $0x300] sm:$0xff]
        %v867 = vld [vmem:[%s1 + $0x308] sm:$0xff]
        %v868 = vld [vmem:[%s1 + $0x310] sm:$0xff]
        %v869 = vld [vmem:[%s1 + $0x318] sm:$0xff]
        %v870 = vld [vmem:[%s1 + $0x320] sm:$0xff]
        %v871 = vld [vmem:[%s1 + $0x328] sm:$0xff]
        %v872 = vld [vmem:[%s1 + $0x330] sm:$0xff]
        %v873 = vld [vmem:[%s1 + $0x338] sm:$0xff]
        %v874 = vld [vmem:[%s1 + $0x340] sm:$0xff]
        %v875 = vld [vmem:[%s1 + $0x348] sm:$0xff]
        %v876 = vld [vmem:[%s1 + $0x350] sm:$0xff]
        %v877 = vld [vmem:[%s1 + $0x358] sm:$0xff]
        %v878 = vld [vmem:[%s1 + $0x360] sm:$0xff]
        %v879 = vld [vmem:[%s1 + $0x368] sm:$0xff]
        %v880 = vld [vmem:[%s1 + $0x370] sm:$0xff]
        %v881 = vld [vmem:[%s1 + $0x378] sm:$0xff]
        %v882 = vld [vmem:[%s1 + $0x380] sm:$0xff]
        %v883 = vld [vmem:[%s1 + $0x388] sm:$0xff]
        %v884 = vld [vmem:[%s1 + $0x390] sm:$0xff]
        %v885 = vld [vmem:[%s1 + $0x398] sm:$0xff]
        %v886 = vld [vmem:[%s1 + $0x3a0] sm:$0xff]
        %v887 = vld [vmem:[%s1 + $0x3a8] sm:$0xff]
        %v888 = vld [vmem:[%s1 + $0x3b0] sm:$0xff]
        %v889 = vld [vmem:[%s1 + $0x3b8] sm:$0xff]
        %v890 = vld [vmem:[%s1 + $0x3c0] sm:$0xff]
        %v891 = vld [vmem:[%s1 + $0x3c8] sm:$0xff]
        %v892 = vld [vmem:[%s1 + $0x3d0] sm:$0xff]
        %v893 = vld [vmem:[%s1 + $0x3d8] sm:$0xff]
        %v894 = vld [vmem:[%s1 + $0x3e0] sm:$0xff]
        %v895 = vld [vmem:[%s1 + $0x3e8] sm:$0xff]
        %v896 = vld [vmem:[%s1 + $0x3f0] sm:$0xff]
        %v897 = vld [vmem:[%s1 + $0x3f8] sm:$0xff]
        %v898 = vld [vmem:[%s1 + $0x400] sm:$0xff]
        %v899 = vld [vmem:[%s1 + $0x408] sm:$0xff]
        %v900 = vld [vmem:[%s1 + $0x410] sm:$0xff]
        %v901 = vld [vmem:[%s1 + $0x418] sm:$0xff]
        %v902 = vld [vmem:[%s1 + $0x420] sm:$0xff]
        %v903 = vld [vmem:[%s1 + $0x428] sm:$0xff]
        %v904 = vld [vmem:[%s1 + $0x430] sm:$0xff]
        %v905 = vld [vmem:[%s1 + $0x438] sm:$0xff]
        %v906 = vld [vmem:[%s1 + $0x440] sm:$0xff]
        %v907 = vld [vmem:[%s1 + $0x448] sm:$0xff]
        %v908 = vld [vmem:[%s1 + $0x450] sm:$0xff]
        %v909 = vld [vmem:[%s1 + $0x458] sm:$0xff]
        %v910 = vld [vmem:[%s1 + $0x460] sm:$0xff]
        %v911 = vld [vmem:[%s1 + $0x468] sm:$0xff]
        %v912 = vld [vmem:[%s1 + $0x470] sm:$0xff]
        %v913 = vld [vmem:[%s1 + $0x478] sm:$0xff]
        %v914 = vld [vmem:[%s1 + $0x480] sm:$0xff]
        %v915 = vld [vmem:[%s1 + $0x488] sm:$0xff]
        %v916 = vld [vmem:[%s1 + $0x490] sm:$0xff]
        %v917 = vld [vmem:[%s1 + $0x498] sm:$0xff]
        %v918 = vld [vmem:[%s1 + $0x4a0] sm:$0xff]
        %v919 = vld [vmem:[%s1 + $0x4a8] sm:$0xff]
        %v920 = vld [vmem:[%s1 + $0x4b0] sm:$0xff]
        %v921 = vld [vmem:[%s1 + $0x4b8] sm:$0xff]
        %v922 = vld [vmem:[%s1 + $0x4c0] sm:$0xff]
        %v923 = vld [vmem:[%s1 + $0x4c8] sm:$0xff]
        %v924 = vld [vmem:[%s1 + $0x4d0] sm:$0xff]
        %v925 = vld [vmem:[%s1 + $0x4d8] sm:$0xff]
        %v926 = vld [vmem:[%s1 + $0x4e0] sm:$0xff]
        %v927 = vld [vmem:[%s1 + $0x4e8] sm:$0xff]
        %v928 = vld [vmem:[%s1 + $0x4f0] sm:$0xff]
        %v929 = vld [vmem:[%s1 + $0x4f8] sm:$0xff]
        %v930 = vld [vmem:[%s2] sm:$0x1f]
        %v932 = vlaneseq
        %v933 = vshrl.u32 %v932, 7
        %v934 = vsub.s32 0, %v933
        %v935 = vrot.slane %v930, %v934
        %v936 = vlaneseq
        %v937 = vshrl.u32 %v936, 7
        %v938 = vsub.s32 1, %v937
        %v939 = vrot.slane %v930, %v938
        %v940 = vlaneseq
        %v941 = vshrl.u32 %v940, 7
        %v942 = vsub.s32 2, %v941
        %v943 = vrot.slane %v930, %v942
        %v944 = vlaneseq
        %v945 = vshrl.u32 %v944, 7
        %v946 = vsub.s32 3, %v945
        %v947 = vrot.slane %v930, %v946
        %v948 = vlaneseq
        %v949 = vshrl.u32 %v948, 7
        %v950 = vsub.s32 4, %v949
        %v951 = vrot.slane %v930, %v950
        %957 = vmatprep.subr.mxu0 %v771
        %958 = vmatpush1.msra.mxu0 %v770
        %959 = vmatprep.subr.mxu0 %v776
        %960 = vmatpush1.msra.mxu0 %v775
        %961 = vmatprep.subr.mxu0 %v781
        %962 = vmatpush1.msra.mxu0 %v780
        %963 = vmatprep.subr.mxu0 %v786
        %964 = vmatpush1.msra.mxu0 %v785
        %965 = vmatprep.subr.mxu0 %v791
        %966 = vmatpush1.msra.mxu0 %v790
        %967 = vmatprep.subr.mxu0 %v796
        %968 = vmatpush1.msra.mxu0 %v795
        %969 = vmatprep.subr.mxu0 %v801
        %970 = vmatpush1.msra.mxu0 %v800
        %971 = vmatprep.subr.mxu0 %v806
        %972 = vmatpush1.msra.mxu0 %v805
        %973 = vmatprep.subr.mxu0 %v811
        %974 = vmatpush1.msra.mxu0 %v810
        %975 = vmatprep.subr.mxu0 %v816
        %976 = vmatpush1.msra.mxu0 %v815
        %977 = vmatprep.subr.mxu0 %v821
        %978 = vmatpush1.msra.mxu0 %v820
        %979 = vmatprep.subr.mxu0 %v826
        %980 = vmatpush1.msra.mxu0 %v825
        %981 = vmatprep.subr.mxu0 %v831
        %982 = vmatpush1.msra.mxu0 %v830
        %983 = vmatprep.subr.mxu0 %v836
        %984 = vmatpush1.msra.mxu0 %v835
        %985 = vmatprep.subr.mxu0 %v841
        %986 = vmatpush1.msra.mxu0 %v840
        %987 = vmatprep.subr.mxu0 %v846
        %988 = vmatpush1.msra.mxu0 %v845
        %989 = vmatprep.subr.mxu0 %v851
        %990 = vmatpush1.msra.mxu0 %v850
        %991 = vmatprep.subr.mxu0 %v856
        %992 = vmatpush1.msra.mxu0 %v855
        %993 = vmatprep.subr.mxu0 %v861
        %994 = vmatpush1.msra.mxu0 %v860
        %995 = vmatprep.subr.mxu0 %v866
        %996 = vmatpush1.msra.mxu0 %v865
        %997 = vmatprep.subr.mxu0 %v871
        %998 = vmatpush1.msra.mxu0 %v870
        %999 = vmatprep.subr.mxu0 %v876
        %1000 = vmatpush1.msra.mxu0 %v875
        %1001 = vmatprep.subr.mxu0 %v881
        %1002 = vmatpush1.msra.mxu0 %v880
        %1003 = vmatprep.subr.mxu0 %v886
        %1004 = vmatpush1.msra.mxu0 %v885
        %1005 = vmatprep.subr.mxu0 %v891
        %1006 = vmatpush1.msra.mxu0 %v890
        %1007 = vmatprep.subr.mxu0 %v896
        %1008 = vmatpush1.msra.mxu0 %v895
        %1009 = vmatprep.subr.mxu0 %v901
        %1010 = vmatpush1.msra.mxu0 %v900
        %1011 = vmatprep.subr.mxu0 %v906
        %1012 = vmatpush1.msra.mxu0 %v905
        %1013 = vmatprep.subr.mxu0 %v911
        %1014 = vmatpush1.msra.mxu0 %v910
        %1015 = vmatprep.subr.mxu0 %v916
        %1016 = vmatpush1.msra.mxu0 %v915
        %1017 = vmatprep.subr.mxu0 %v921
        %1018 = vmatpush1.msra.mxu0 %v920
        %1019 = vmatprep.subr.mxu0 %v926
        %1020 = vmatpush1.msra.mxu0 %v925
        %1021 = vmatprep.mubr.f32.mxu0 %v769
        %1022 = vmatmul.mubr.f32.gmra.mrb[0].mxu0 %v768
        %v1023 = vpop.f32.mrb[0].mxu0
        %v1024 = vadd.f32 %v935, %v1023
        %v1025 = vpop.f32.mrb[0].mxu0
        %v1026 = vadd.f32 %v939, %v1025
        %1027 = vdwg.mxu0
        %1028 = vmatprep.subr.mxu0 %v773
        %1029 = vmatpush1.msra.mxu0 %v772
        %1030 = vmatprep.subr.mxu0 %v778
        %1031 = vmatpush1.msra.mxu0 %v777
        %1032 = vmatprep.subr.mxu0 %v783
        %1033 = vmatpush1.msra.mxu0 %v782
        %1034 = vmatprep.subr.mxu0 %v788
        %1035 = vmatpush1.msra.mxu0 %v787
        %1036 = vmatprep.subr.mxu0 %v793
        %1037 = vmatpush1.msra.mxu0 %v792
        %1038 = vmatprep.subr.mxu0 %v798
        %1039 = vmatpush1.msra.mxu0 %v797
        %1040 = vmatprep.subr.mxu0 %v803
        %1041 = vmatpush1.msra.mxu0 %v802
        %1042 = vmatprep.subr.mxu0 %v808
        %1043 = vmatpush1.msra.mxu0 %v807
        %1044 = vmatprep.subr.mxu0 %v813
        %1045 = vmatpush1.msra.mxu0 %v812
        %1046 = vmatprep.subr.mxu0 %v818
        %1047 = vmatpush1.msra.mxu0 %v817
        %1048 = vmatprep.subr.mxu0 %v823
        %1049 = vmatpush1.msra.mxu0 %v822
        %1050 = vmatprep.subr.mxu0 %v828
        %1051 = vmatpush1.msra.mxu0 %v827
        %1052 = vmatprep.subr.mxu0 %v833
        %1053 = vmatpush1.msra.mxu0 %v832
        %1054 = vmatprep.subr.mxu0 %v838
        %1055 = vmatpush1.msra.mxu0 %v837
        %1056 = vmatprep.subr.mxu0 %v843
        %1057 = vmatpush1.msra.mxu0 %v842
        %1058 = vmatprep.subr.mxu0 %v848
        %1059 = vmatpush1.msra.mxu0 %v847
        %1060 = vmatprep.subr.mxu0 %v853
        %1061 = vmatpush1.msra.mxu0 %v852
        %1062 = vmatprep.subr.mxu0 %v858
        %1063 = vmatpush1.msra.mxu0 %v857
        %1064 = vmatprep.subr.mxu0 %v863
        %1065 = vmatpush1.msra.mxu0 %v862
        %1066 = vmatprep.subr.mxu0 %v868
        %1067 = vmatpush1.msra.mxu0 %v867
        %1068 = vmatprep.subr.mxu0 %v873
        %1069 = vmatpush1.msra.mxu0 %v872
        %1070 = vmatprep.subr.mxu0 %v878
        %1071 = vmatpush1.msra.mxu0 %v877
        %1072 = vmatprep.subr.mxu0 %v883
        %1073 = vmatpush1.msra.mxu0 %v882
        %1074 = vmatprep.subr.mxu0 %v888
        %1075 = vmatpush1.msra.mxu0 %v887
        %1076 = vmatprep.subr.mxu0 %v893
        %1077 = vmatpush1.msra.mxu0 %v892
        %1078 = vmatprep.subr.mxu0 %v898
        %1079 = vmatpush1.msra.mxu0 %v897
        %1080 = vmatprep.subr.mxu0 %v903
        %1081 = vmatpush1.msra.mxu0 %v902
        %1082 = vmatprep.subr.mxu0 %v908
        %1083 = vmatpush1.msra.mxu0 %v907
        %1084 = vmatprep.subr.mxu0 %v913
        %1085 = vmatpush1.msra.mxu0 %v912
        %1086 = vmatprep.subr.mxu0 %v918
        %1087 = vmatpush1.msra.mxu0 %v917
        %1088 = vmatprep.subr.mxu0 %v923
        %1089 = vmatpush1.msra.mxu0 %v922
        %1090 = vmatprep.subr.mxu0 %v928
        %1091 = vmatpush1.msra.mxu0 %v927
        %1092 = vmatprep.mubr.f32.mxu0 %v769
        %1093 = vmatmul.mubr.f32.gmra.mrb[0].mxu0 %v768
        %v1094 = vpop.f32.mrb[0].mxu0
        %v1095 = vadd.f32 %v943, %v1094
        %v1096 = vpop.f32.mrb[0].mxu0
        %v1097 = vadd.f32 %v947, %v1096
        %1098 = vdwg.mxu0
        %1099 = vmatprep.subr.mxu0 0.0
        %1100 = vmatpush1.msra.mxu0 %v774
        %1101 = vmatprep.subr.mxu0 0.0
        %1102 = vmatpush1.msra.mxu0 %v779
        %1103 = vmatprep.subr.mxu0 0.0
        %1104 = vmatpush1.msra.mxu0 %v784
        %1105 = vmatprep.subr.mxu0 0.0
        %1106 = vmatpush1.msra.mxu0 %v789
        %1107 = vmatprep.subr.mxu0 0.0
        %1108 = vmatpush1.msra.mxu0 %v794
        %1109 = vmatprep.subr.mxu0 0.0
        %1110 = vmatpush1.msra.mxu0 %v799
        %1111 = vmatprep.subr.mxu0 0.0
        %1112 = vmatpush1.msra.mxu0 %v804
        %1113 = vmatprep.subr.mxu0 0.0
        %1114 = vmatpush1.msra.mxu0 %v809
        %1115 = vmatprep.subr.mxu0 0.0
        %1116 = vmatpush1.msra.mxu0 %v814
        %1117 = vmatprep.subr.mxu0 0.0
        %1118 = vmatpush1.msra.mxu0 %v819
        %1119 = vmatprep.subr.mxu0 0.0
        %1120 = vmatpush1.msra.mxu0 %v824
        %1121 = vmatprep.subr.mxu0 0.0
        %1122 = vmatpush1.msra.mxu0 %v829
        %1123 = vmatprep.subr.mxu0 0.0
        %1124 = vmatpush1.msra.mxu0 %v834
        %1125 = vmatprep.subr.mxu0 0.0
        %1126 = vmatpush1.msra.mxu0 %v839
        %1127 = vmatprep.subr.mxu0 0.0
        %1128 = vmatpush1.msra.mxu0 %v844
        %1129 = vmatprep.subr.mxu0 0.0
        %1130 = vmatpush1.msra.mxu0 %v849
        %1131 = vmatprep.subr.mxu0 0.0
        %1132 = vmatpush1.msra.mxu0 %v854
        %1133 = vmatprep.subr.mxu0 0.0
        %1134 = vmatpush1.msra.mxu0 %v859
        %1135 = vmatprep.subr.mxu0 0.0
        %1136 = vmatpush1.msra.mxu0 %v864
        %1137 = vmatprep.subr.mxu0 0.0
        %1138 = vmatpush1.msra.mxu0 %v869
        %1139 = vmatprep.subr.mxu0 0.0
        %1140 = vmatpush1.msra.mxu0 %v874
        %1141 = vmatprep.subr.mxu0 0.0
        %1142 = vmatpush1.msra.mxu0 %v879
        %1143 = vmatprep.subr.mxu0 0.0
        %1144 = vmatpush1.msra.mxu0 %v884
        %1145 = vmatprep.subr.mxu0 0.0
        %1146 = vmatpush1.msra.mxu0 %v889
        %1147 = vmatprep.subr.mxu0 0.0
        %1148 = vmatpush1.msra.mxu0 %v894
        %1149 = vmatprep.subr.mxu0 0.0
        %1150 = vmatpush1.msra.mxu0 %v899
        %1151 = vmatprep.subr.mxu0 0.0
        %1152 = vmatpush1.msra.mxu0 %v904
        %1153 = vmatprep.subr.mxu0 0.0
        %1154 = vmatpush1.msra.mxu0 %v909
        %1155 = vmatprep.subr.mxu0 0.0
        %1156 = vmatpush1.msra.mxu0 %v914
        %1157 = vmatprep.subr.mxu0 0.0
        %1158 = vmatpush1.msra.mxu0 %v919
        %1159 = vmatprep.subr.mxu0 0.0
        %1160 = vmatpush1.msra.mxu0 %v924
        %1161 = vmatprep.subr.mxu0 0.0
        %1162 = vmatpush1.msra.mxu0 %v929
        %1163 = vmatprep.mubr.f32.mxu0 %v769
        %1164 = vmatmul.mubr.f32.gmra.mrb[0].mxu0 %v768
        %v1165 = vpop.f32.mrb[0].mxu0
        %v1166 = vadd.f32 %v951, %v1165
        %v1167 = vpop.f32.mrb[0].mxu0
        %1168 = vdwg.mxu0
        %v1169 = vtanh.pop %v1024
        %v1170 = vtanh.pop %v1026
        %v1171 = vtanh.pop %v1095
        %v1172 = vtanh.pop %v1097
        %v1173 = vtanh.pop %v1166
        %v1174 = vld [vmem:[%s3] sm:$0xff]
        %v1175 = vld [vmem:[%s3 + $0x8] sm:$0xff]
        %v1176 = vld [vmem:[%s3 + $0x10] sm:$0xff]
        %v1177 = vld [vmem:[%s3 + $0x18] sm:$0xff]
        %v1178 = vld [vmem:[%s3 + $0x20] sm:$0xff]
        %v1179 = vld [vmem:[%s3 + $0x28] sm:$0xff]
        %v1180 = vld [vmem:[%s3 + $0x30] sm:$0xff]
        %v1181 = vld [vmem:[%s3 + $0x38] sm:$0xff]
        %v1182 = vld [vmem:[%s3 + $0x40] sm:$0xff]
        %v1183 = vld [vmem:[%s3 + $0x48] sm:$0xff]
        %v1184 = vld [vmem:[%s3 + $0x50] sm:$0xff]
        %v1185 = vld [vmem:[%s3 + $0x58] sm:$0xff]
        %v1186 = vld [vmem:[%s3 + $0x60] sm:$0xff]
        %v1187 = vld [vmem:[%s3 + $0x68] sm:$0xff]
        %v1188 = vld [vmem:[%s3 + $0x70] sm:$0xff]
        %v1189 = vld [vmem:[%s3 + $0x78] sm:$0xff]
        %v1190 = vld [vmem:[%s3 + $0x80] sm:$0xff]
        %v1191 = vld [vmem:[%s3 + $0x88] sm:$0xff]
        %v1192 = vld [vmem:[%s3 + $0x90] sm:$0xff]
        %v1193 = vld [vmem:[%s3 + $0x98] sm:$0xff]
        %v1194 = vld [vmem:[%s3 + $0xa0] sm:$0xff]
        %v1195 = vld [vmem:[%s3 + $0xa8] sm:$0xff]
        %v1196 = vld [vmem:[%s3 + $0xb0] sm:$0xff]
        %v1197 = vld [vmem:[%s3 + $0xb8] sm:$0xff]
        %v1198 = vld [vmem:[%s3 + $0xc0] sm:$0xff]
        %v1199 = vld [vmem:[%s3 + $0xc8] sm:$0xff]
        %v1200 = vld [vmem:[%s3 + $0xd0] sm:$0xff]
        %v1201 = vld [vmem:[%s3 + $0xd8] sm:$0xff]
        %v1202 = vld [vmem:[%s3 + $0xe0] sm:$0xff]
        %v1203 = vld [vmem:[%s3 + $0xe8] sm:$0xff]
        %v1204 = vld [vmem:[%s3 + $0xf0] sm:$0xff]
        %v1205 = vld [vmem:[%s3 + $0xf8] sm:$0xff]
        %v1206 = vld [vmem:[%s3 + $0x100] sm:$0xff]
        %v1207 = vld [vmem:[%s3 + $0x108] sm:$0xff]
        %v1208 = vld [vmem:[%s3 + $0x110] sm:$0xff]
        %v1209 = vld [vmem:[%s3 + $0x118] sm:$0xff]
        %v1210 = vld [vmem:[%s3 + $0x120] sm:$0xff]
        %v1211 = vld [vmem:[%s3 + $0x128] sm:$0xff]
        %v1212 = vld [vmem:[%s3 + $0x130] sm:$0xff]
        %v1213 = vld [vmem:[%s3 + $0x138] sm:$0xff]
        %v1214 = vld [vmem:[%s3 + $0x140] sm:$0xff]
        %v1215 = vld [vmem:[%s3 + $0x148] sm:$0xff]
        %v1216 = vld [vmem:[%s3 + $0x150] sm:$0xff]
        %v1217 = vld [vmem:[%s3 + $0x158] sm:$0xff]
        %v1218 = vld [vmem:[%s3 + $0x160] sm:$0xff]
        %v1219 = vld [vmem:[%s3 + $0x168] sm:$0xff]
        %v1220 = vld [vmem:[%s3 + $0x170] sm:$0xff]
        %v1221 = vld [vmem:[%s3 + $0x178] sm:$0xff]
        %v1222 = vld [vmem:[%s3 + $0x180] sm:$0xff]
        %v1223 = vld [vmem:[%s3 + $0x188] sm:$0xff]
        %v1224 = vld [vmem:[%s3 + $0x190] sm:$0xff]
        %v1225 = vld [vmem:[%s3 + $0x198] sm:$0xff]
        %v1226 = vld [vmem:[%s3 + $0x1a0] sm:$0xff]
        %v1227 = vld [vmem:[%s3 + $0x1a8] sm:$0xff]
        %v1228 = vld [vmem:[%s3 + $0x1b0] sm:$0xff]
        %v1229 = vld [vmem:[%s3 + $0x1b8] sm:$0xff]
        %v1230 = vld [vmem:[%s3 + $0x1c0] sm:$0xff]
        %v1231 = vld [vmem:[%s3 + $0x1c8] sm:$0xff]
        %v1232 = vld [vmem:[%s3 + $0x1d0] sm:$0xff]
        %v1233 = vld [vmem:[%s3 + $0x1d8] sm:$0xff]
        %v1234 = vld [vmem:[%s3 + $0x1e0] sm:$0xff]
        %v1235 = vld [vmem:[%s3 + $0x1e8] sm:$0xff]
        %v1236 = vld [vmem:[%s3 + $0x1f0] sm:$0xff]
        %v1237 = vld [vmem:[%s3 + $0x1f8] sm:$0xff]
        %v1238 = vld [vmem:[%s3 + $0x200] sm:$0xff]
        %v1239 = vld [vmem:[%s3 + $0x208] sm:$0xff]
        %v1240 = vld [vmem:[%s3 + $0x210] sm:$0xff]
        %v1241 = vld [vmem:[%s3 + $0x218] sm:$0xff]
        %v1242 = vld [vmem:[%s3 + $0x220] sm:$0xff]
        %v1243 = vld [vmem:[%s3 + $0x228] sm:$0xff]
        %v1244 = vld [vmem:[%s3 + $0x230] sm:$0xff]
        %v1245 = vld [vmem:[%s3 + $0x238] sm:$0xff]
        %v1246 = vld [vmem:[%s3 + $0x240] sm:$0xff]
        %v1247 = vld [vmem:[%s3 + $0x248] sm:$0xff]
        %v1248 = vld [vmem:[%s3 + $0x250] sm:$0xff]
        %v1249 = vld [vmem:[%s3 + $0x258] sm:$0xff]
        %v1250 = vld [vmem:[%s3 + $0x260] sm:$0xff]
        %v1251 = vld [vmem:[%s3 + $0x268] sm:$0xff]
        %v1252 = vld [vmem:[%s3 + $0x270] sm:$0xff]
        %v1253 = vld [vmem:[%s3 + $0x278] sm:$0xff]
        %v1254 = vld [vmem:[%s3 + $0x280] sm:$0xff]
        %v1255 = vld [vmem:[%s3 + $0x288] sm:$0xff]
        %v1256 = vld [vmem:[%s3 + $0x290] sm:$0xff]
        %v1257 = vld [vmem:[%s3 + $0x298] sm:$0xff]
        %v1258 = vld [vmem:[%s3 + $0x2a0] sm:$0xff]
        %v1259 = vld [vmem:[%s3 + $0x2a8] sm:$0xff]
        %v1260 = vld [vmem:[%s3 + $0x2b0] sm:$0xff]
        %v1261 = vld [vmem:[%s3 + $0x2b8] sm:$0xff]
        %v1262 = vld [vmem:[%s3 + $0x2c0] sm:$0xff]
        %v1263 = vld [vmem:[%s3 + $0x2c8] sm:$0xff]
        %v1264 = vld [vmem:[%s3 + $0x2d0] sm:$0xff]
        %v1265 = vld [vmem:[%s3 + $0x2d8] sm:$0xff]
        %v1266 = vld [vmem:[%s3 + $0x2e0] sm:$0xff]
        %v1267 = vld [vmem:[%s3 + $0x2e8] sm:$0xff]
        %v1268 = vld [vmem:[%s3 + $0x2f0] sm:$0xff]
        %v1269 = vld [vmem:[%s3 + $0x2f8] sm:$0xff]
        %v1270 = vld [vmem:[%s3 + $0x300] sm:$0xff]
        %v1271 = vld [vmem:[%s3 + $0x308] sm:$0xff]
        %v1272 = vld [vmem:[%s3 + $0x310] sm:$0xff]
        %v1273 = vld [vmem:[%s3 + $0x318] sm:$0xff]
        %v1274 = vld [vmem:[%s3 + $0x320] sm:$0xff]
        %v1275 = vld [vmem:[%s3 + $0x328] sm:$0xff]
        %v1276 = vld [vmem:[%s3 + $0x330] sm:$0xff]
        %v1277 = vld [vmem:[%s3 + $0x338] sm:$0xff]
        %v1278 = vld [vmem:[%s3 + $0x340] sm:$0xff]
        %v1279 = vld [vmem:[%s3 + $0x348] sm:$0xff]
        %v1280 = vld [vmem:[%s3 + $0x350] sm:$0xff]
        %v1281 = vld [vmem:[%s3 + $0x358] sm:$0xff]
        %v1282 = vld [vmem:[%s3 + $0x360] sm:$0xff]
        %v1283 = vld [vmem:[%s3 + $0x368] sm:$0xff]
        %v1284 = vld [vmem:[%s3 + $0x370] sm:$0xff]
        %v1285 = vld [vmem:[%s3 + $0x378] sm:$0xff]
        %v1286 = vld [vmem:[%s3 + $0x380] sm:$0xff]
        %v1287 = vld [vmem:[%s3 + $0x388] sm:$0xff]
        %v1288 = vld [vmem:[%s3 + $0x390] sm:$0xff]
        %v1289 = vld [vmem:[%s3 + $0x398] sm:$0xff]
        %v1290 = vld [vmem:[%s3 + $0x3a0] sm:$0xff]
        %v1291 = vld [vmem:[%s3 + $0x3a8] sm:$0xff]
        %v1292 = vld [vmem:[%s3 + $0x3b0] sm:$0xff]
        %v1293 = vld [vmem:[%s3 + $0x3b8] sm:$0xff]
        %v1294 = vld [vmem:[%s3 + $0x3c0] sm:$0xff]
        %v1295 = vld [vmem:[%s3 + $0x3c8] sm:$0xff]
        %v1296 = vld [vmem:[%s3 + $0x3d0] sm:$0xff]
        %v1297 = vld [vmem:[%s3 + $0x3d8] sm:$0xff]
        %v1298 = vld [vmem:[%s3 + $0x3e0] sm:$0xff]
        %v1299 = vld [vmem:[%s3 + $0x3e8] sm:$0xff]
        %v1300 = vld [vmem:[%s3 + $0x3f0] sm:$0xff]
        %v1301 = vld [vmem:[%s3 + $0x3f8] sm:$0xff]
        %v1302 = vld [vmem:[%s3 + $0x400] sm:$0xff]
        %v1303 = vld [vmem:[%s3 + $0x408] sm:$0xff]
        %v1304 = vld [vmem:[%s3 + $0x410] sm:$0xff]
        %v1305 = vld [vmem:[%s3 + $0x418] sm:$0xff]
        %v1306 = vld [vmem:[%s3 + $0x420] sm:$0xff]
        %v1307 = vld [vmem:[%s3 + $0x428] sm:$0xff]
        %v1308 = vld [vmem:[%s3 + $0x430] sm:$0xff]
        %v1309 = vld [vmem:[%s3 + $0x438] sm:$0xff]
        %v1310 = vld [vmem:[%s3 + $0x440] sm:$0xff]
        %v1311 = vld [vmem:[%s3 + $0x448] sm:$0xff]
        %v1312 = vld [vmem:[%s3 + $0x450] sm:$0xff]
        %v1313 = vld [vmem:[%s3 + $0x458] sm:$0xff]
        %v1314 = vld [vmem:[%s3 + $0x460] sm:$0xff]
        %v1315 = vld [vmem:[%s3 + $0x468] sm:$0xff]
        %v1316 = vld [vmem:[%s3 + $0x470] sm:$0xff]
        %v1317 = vld [vmem:[%s3 + $0x478] sm:$0xff]
        %v1318 = vld [vmem:[%s3 + $0x480] sm:$0xff]
        %v1319 = vld [vmem:[%s3 + $0x488] sm:$0xff]
        %v1320 = vld [vmem:[%s3 + $0x490] sm:$0xff]
        %v1321 = vld [vmem:[%s3 + $0x498] sm:$0xff]
        %v1322 = vld [vmem:[%s3 + $0x4a0] sm:$0xff]
        %v1323 = vld [vmem:[%s3 + $0x4a8] sm:$0xff]
        %v1324 = vld [vmem:[%s3 + $0x4b0] sm:$0xff]
        %v1325 = vld [vmem:[%s3 + $0x4b8] sm:$0xff]
        %v1326 = vld [vmem:[%s3 + $0x4c0] sm:$0xff]
        %v1327 = vld [vmem:[%s3 + $0x4c8] sm:$0xff]
        %v1328 = vld [vmem:[%s3 + $0x4d0] sm:$0xff]
        %v1329 = vld [vmem:[%s3 + $0x4d8] sm:$0xff]
        %v1330 = vld [vmem:[%s3 + $0x4e0] sm:$0xff]
        %v1331 = vld [vmem:[%s3 + $0x4e8] sm:$0xff]
        %v1332 = vld [vmem:[%s3 + $0x4f0] sm:$0xff]
        %v1333 = vld [vmem:[%s3 + $0x4f8] sm:$0xff]
        %v1334 = vld [vmem:[%s3 + $0x500] sm:$0xff]
        %v1335 = vld [vmem:[%s3 + $0x508] sm:$0xff]
        %v1336 = vld [vmem:[%s3 + $0x510] sm:$0xff]
        %v1337 = vld [vmem:[%s3 + $0x518] sm:$0xff]
        %v1338 = vld [vmem:[%s3 + $0x520] sm:$0xff]
        %v1339 = vld [vmem:[%s3 + $0x528] sm:$0xff]
        %v1340 = vld [vmem:[%s3 + $0x530] sm:$0xff]
        %v1341 = vld [vmem:[%s3 + $0x538] sm:$0xff]
        %v1342 = vld [vmem:[%s3 + $0x540] sm:$0xff]
        %v1343 = vld [vmem:[%s3 + $0x548] sm:$0xff]
        %v1344 = vld [vmem:[%s3 + $0x550] sm:$0xff]
        %v1345 = vld [vmem:[%s3 + $0x558] sm:$0xff]
        %v1346 = vld [vmem:[%s3 + $0x560] sm:$0xff]
        %v1347 = vld [vmem:[%s3 + $0x568] sm:$0xff]
        %v1348 = vld [vmem:[%s3 + $0x570] sm:$0xff]
        %v1349 = vld [vmem:[%s3 + $0x578] sm:$0xff]
        %v1350 = vld [vmem:[%s3 + $0x580] sm:$0xff]
        %v1351 = vld [vmem:[%s3 + $0x588] sm:$0xff]
        %v1352 = vld [vmem:[%s3 + $0x590] sm:$0xff]
        %v1353 = vld [vmem:[%s3 + $0x598] sm:$0xff]
        %v1354 = vld [vmem:[%s3 + $0x5a0] sm:$0xff]
        %v1355 = vld [vmem:[%s3 + $0x5a8] sm:$0xff]
        %v1356 = vld [vmem:[%s3 + $0x5b0] sm:$0xff]
        %v1357 = vld [vmem:[%s3 + $0x5b8] sm:$0xff]
        %v1358 = vld [vmem:[%s3 + $0x5c0] sm:$0xff]
        %v1359 = vld [vmem:[%s3 + $0x5c8] sm:$0xff]
        %v1360 = vld [vmem:[%s3 + $0x5d0] sm:$0xff]
        %v1361 = vld [vmem:[%s3 + $0x5d8] sm:$0xff]
        %v1362 = vld [vmem:[%s3 + $0x5e0] sm:$0xff]
        %v1363 = vld [vmem:[%s3 + $0x5e8] sm:$0xff]
        %v1364 = vld [vmem:[%s3 + $0x5f0] sm:$0xff]
        %v1365 = vld [vmem:[%s3 + $0x5f8] sm:$0xff]
        %v1366 = vld [vmem:[%s3 + $0x600] sm:$0xff]
        %v1367 = vld [vmem:[%s3 + $0x608] sm:$0xff]
        %v1368 = vld [vmem:[%s3 + $0x610] sm:$0xff]
        %v1369 = vld [vmem:[%s3 + $0x618] sm:$0xff]
        %v1370 = vld [vmem:[%s3 + $0x620] sm:$0xff]
        %v1371 = vld [vmem:[%s3 + $0x628] sm:$0xff]
        %v1372 = vld [vmem:[%s3 + $0x630] sm:$0xff]
        %v1373 = vld [vmem:[%s3 + $0x638] sm:$0xff]
        %v1374 = vld [vmem:[%s3 + $0x640] sm:$0xff]
        %v1375 = vld [vmem:[%s3 + $0x648] sm:$0xff]
        %v1376 = vld [vmem:[%s3 + $0x650] sm:$0xff]
        %v1377 = vld [vmem:[%s3 + $0x658] sm:$0xff]
        %v1378 = vld [vmem:[%s3 + $0x660] sm:$0xff]
        %v1379 = vld [vmem:[%s3 + $0x668] sm:$0xff]
        %v1380 = vld [vmem:[%s3 + $0x670] sm:$0xff]
        %v1381 = vld [vmem:[%s3 + $0x678] sm:$0xff]
        %v1382 = vld [vmem:[%s3 + $0x680] sm:$0xff]
        %v1383 = vld [vmem:[%s3 + $0x688] sm:$0xff]
        %v1384 = vld [vmem:[%s3 + $0x690] sm:$0xff]
        %v1385 = vld [vmem:[%s3 + $0x698] sm:$0xff]
        %v1386 = vld [vmem:[%s3 + $0x6a0] sm:$0xff]
        %v1387 = vld [vmem:[%s3 + $0x6a8] sm:$0xff]
        %v1388 = vld [vmem:[%s3 + $0x6b0] sm:$0xff]
        %v1389 = vld [vmem:[%s3 + $0x6b8] sm:$0xff]
        %v1390 = vld [vmem:[%s3 + $0x6c0] sm:$0xff]
        %v1391 = vld [vmem:[%s3 + $0x6c8] sm:$0xff]
        %v1392 = vld [vmem:[%s3 + $0x6d0] sm:$0xff]
        %v1393 = vld [vmem:[%s3 + $0x6d8] sm:$0xff]
        %v1394 = vld [vmem:[%s3 + $0x6e0] sm:$0xff]
        %v1395 = vld [vmem:[%s3 + $0x6e8] sm:$0xff]
        %v1396 = vld [vmem:[%s3 + $0x6f0] sm:$0xff]
        %v1397 = vld [vmem:[%s3 + $0x6f8] sm:$0xff]
        %v1398 = vld [vmem:[%s3 + $0x700] sm:$0xff]
        %v1399 = vld [vmem:[%s3 + $0x708] sm:$0xff]
        %v1400 = vld [vmem:[%s3 + $0x710] sm:$0xff]
        %v1401 = vld [vmem:[%s3 + $0x718] sm:$0xff]
        %v1402 = vld [vmem:[%s3 + $0x720] sm:$0xff]
        %v1403 = vld [vmem:[%s3 + $0x728] sm:$0xff]
        %v1404 = vld [vmem:[%s3 + $0x730] sm:$0xff]
        %v1405 = vld [vmem:[%s3 + $0x738] sm:$0xff]
        %v1406 = vld [vmem:[%s3 + $0x740] sm:$0xff]
        %v1407 = vld [vmem:[%s3 + $0x748] sm:$0xff]
        %v1408 = vld [vmem:[%s3 + $0x750] sm:$0xff]
        %v1409 = vld [vmem:[%s3 + $0x758] sm:$0xff]
        %v1410 = vld [vmem:[%s3 + $0x760] sm:$0xff]
        %v1411 = vld [vmem:[%s3 + $0x768] sm:$0xff]
        %v1412 = vld [vmem:[%s3 + $0x770] sm:$0xff]
        %v1413 = vld [vmem:[%s3 + $0x778] sm:$0xff]
        %v1414 = vld [vmem:[%s3 + $0x780] sm:$0xff]
        %v1415 = vld [vmem:[%s3 + $0x788] sm:$0xff]
        %v1416 = vld [vmem:[%s3 + $0x790] sm:$0xff]
        %v1417 = vld [vmem:[%s3 + $0x798] sm:$0xff]
        %v1418 = vld [vmem:[%s3 + $0x7a0] sm:$0xff]
        %v1419 = vld [vmem:[%s3 + $0x7a8] sm:$0xff]
        %v1420 = vld [vmem:[%s3 + $0x7b0] sm:$0xff]
        %v1421 = vld [vmem:[%s3 + $0x7b8] sm:$0xff]
        %v1422 = vld [vmem:[%s3 + $0x7c0] sm:$0xff]
        %v1423 = vld [vmem:[%s3 + $0x7c8] sm:$0xff]
        %v1424 = vld [vmem:[%s3 + $0x7d0] sm:$0xff]
        %v1425 = vld [vmem:[%s3 + $0x7d8] sm:$0xff]
        %v1426 = vld [vmem:[%s3 + $0x7e0] sm:$0xff]
        %v1427 = vld [vmem:[%s3 + $0x7e8] sm:$0xff]
        %v1428 = vld [vmem:[%s3 + $0x7f0] sm:$0xff]
        %v1429 = vld [vmem:[%s3 + $0x7f8] sm:$0xff]
        %v1430 = vld [vmem:[%s3 + $0x800] sm:$0xff]
        %v1431 = vld [vmem:[%s3 + $0x808] sm:$0xff]
        %v1432 = vld [vmem:[%s3 + $0x810] sm:$0xff]
        %v1433 = vld [vmem:[%s3 + $0x818] sm:$0xff]
        %v1434 = vld [vmem:[%s3 + $0x820] sm:$0xff]
        %v1435 = vld [vmem:[%s3 + $0x828] sm:$0xff]
        %v1436 = vld [vmem:[%s3 + $0x830] sm:$0xff]
        %v1437 = vld [vmem:[%s3 + $0x838] sm:$0xff]
        %v1438 = vld [vmem:[%s3 + $0x840] sm:$0xff]
        %v1439 = vld [vmem:[%s3 + $0x848] sm:$0xff]
        %v1440 = vld [vmem:[%s3 + $0x850] sm:$0xff]
        %v1441 = vld [vmem:[%s3 + $0x858] sm:$0xff]
        %v1442 = vld [vmem:[%s3 + $0x860] sm:$0xff]
        %v1443 = vld [vmem:[%s3 + $0x868] sm:$0xff]
        %v1444 = vld [vmem:[%s3 + $0x870] sm:$0xff]
        %v1445 = vld [vmem:[%s3 + $0x878] sm:$0xff]
        %v1446 = vld [vmem:[%s3 + $0x880] sm:$0xff]
        %v1447 = vld [vmem:[%s3 + $0x888] sm:$0xff]
        %v1448 = vld [vmem:[%s3 + $0x890] sm:$0xff]
        %v1449 = vld [vmem:[%s3 + $0x898] sm:$0xff]
        %v1450 = vld [vmem:[%s3 + $0x8a0] sm:$0xff]
        %v1451 = vld [vmem:[%s3 + $0x8a8] sm:$0xff]
        %v1452 = vld [vmem:[%s3 + $0x8b0] sm:$0xff]
        %v1453 = vld [vmem:[%s3 + $0x8b8] sm:$0xff]
        %v1454 = vld [vmem:[%s3 + $0x8c0] sm:$0xff]
        %v1455 = vld [vmem:[%s3 + $0x8c8] sm:$0xff]
        %v1456 = vld [vmem:[%s3 + $0x8d0] sm:$0xff]
        %v1457 = vld [vmem:[%s3 + $0x8d8] sm:$0xff]
        %v1458 = vld [vmem:[%s3 + $0x8e0] sm:$0xff]
        %v1459 = vld [vmem:[%s3 + $0x8e8] sm:$0xff]
        %v1460 = vld [vmem:[%s3 + $0x8f0] sm:$0xff]
        %v1461 = vld [vmem:[%s3 + $0x8f8] sm:$0xff]
        %v1462 = vld [vmem:[%s4] sm:$0xf]
        %v1464 = vlaneseq
        %v1465 = vshrl.u32 %v1464, 7
        %v1466 = vsub.s32 0, %v1465
        %v1467 = vrot.slane %v1462, %v1466
        %v1468 = vlaneseq
        %v1469 = vshrl.u32 %v1468, 7
        %v1470 = vsub.s32 1, %v1469
        %v1471 = vrot.slane %v1462, %v1470
        %v1472 = vlaneseq
        %v1473 = vshrl.u32 %v1472, 7
        %v1474 = vsub.s32 2, %v1473
        %v1475 = vrot.slane %v1462, %v1474
        %v1476 = vlaneseq
        %v1477 = vshrl.u32 %v1476, 7
        %v1478 = vsub.s32 3, %v1477
        %v1479 = vrot.slane %v1462, %v1478
        %vm1484 = vcmask 523264
        %v1486 = vsel %vm1484, %v1173, 0
        %1488 = vmatprep.subr.mxu0 %v1175
        %1489 = vmatpush1.msra.mxu0 %v1174
        %1490 = vmatprep.subr.mxu0 %v1179
        %1491 = vmatpush1.msra.mxu0 %v1178
        %1492 = vmatprep.subr.mxu0 %v1183
        %1493 = vmatpush1.msra.mxu0 %v1182
        %1494 = vmatprep.subr.mxu0 %v1187
        %1495 = vmatpush1.msra.mxu0 %v1186
        %1496 = vmatprep.subr.mxu0 %v1191
        %1497 = vmatpush1.msra.mxu0 %v1190
        %1498 = vmatprep.subr.mxu0 %v1195
        %1499 = vmatpush1.msra.mxu0 %v1194
        %1500 = vmatprep.subr.mxu0 %v1199
        %1501 = vmatpush1.msra.mxu0 %v1198
        %1502 = vmatprep.subr.mxu0 %v1203
        %1503 = vmatpush1.msra.mxu0 %v1202
        %1504 = vmatprep.subr.mxu0 %v1207
        %1505 = vmatpush1.msra.mxu0 %v1206
        %1506 = vmatprep.subr.mxu0 %v1211
        %1507 = vmatpush1.msra.mxu0 %v1210
        %1508 = vmatprep.subr.mxu0 %v1215
        %1509 = vmatpush1.msra.mxu0 %v1214
        %1510 = vmatprep.subr.mxu0 %v1219
        %1511 = vmatpush1.msra.mxu0 %v1218
        %1512 = vmatprep.subr.mxu0 %v1223
        %1513 = vmatpush1.msra.mxu0 %v1222
        %1514 = vmatprep.subr.mxu0 %v1227
        %1515 = vmatpush1.msra.mxu0 %v1226
        %1516 = vmatprep.subr.mxu0 %v1231
        %1517 = vmatpush1.msra.mxu0 %v1230
        %1518 = vmatprep.subr.mxu0 %v1235
        %1519 = vmatpush1.msra.mxu0 %v1234
        %1520 = vmatprep.subr.mxu0 %v1239
        %1521 = vmatpush1.msra.mxu0 %v1238
        %1522 = vmatprep.subr.mxu0 %v1243
        %1523 = vmatpush1.msra.mxu0 %v1242
        %1524 = vmatprep.subr.mxu0 %v1247
        %1525 = vmatpush1.msra.mxu0 %v1246
        %1526 = vmatprep.subr.mxu0 %v1251
        %1527 = vmatpush1.msra.mxu0 %v1250
        %1528 = vmatprep.subr.mxu0 %v1255
        %1529 = vmatpush1.msra.mxu0 %v1254
        %1530 = vmatprep.subr.mxu0 %v1259
        %1531 = vmatpush1.msra.mxu0 %v1258
        %1532 = vmatprep.subr.mxu0 %v1263
        %1533 = vmatpush1.msra.mxu0 %v1262
        %1534 = vmatprep.subr.mxu0 %v1267
        %1535 = vmatpush1.msra.mxu0 %v1266
        %1536 = vmatprep.subr.mxu0 %v1271
        %1537 = vmatpush1.msra.mxu0 %v1270
        %1538 = vmatprep.subr.mxu0 %v1275
        %1539 = vmatpush1.msra.mxu0 %v1274
        %1540 = vmatprep.subr.mxu0 %v1279
        %1541 = vmatpush1.msra.mxu0 %v1278
        %1542 = vmatprep.subr.mxu0 %v1283
        %1543 = vmatpush1.msra.mxu0 %v1282
        %1544 = vmatprep.subr.mxu0 %v1287
        %1545 = vmatpush1.msra.mxu0 %v1286
        %1546 = vmatprep.subr.mxu0 %v1291
        %1547 = vmatpush1.msra.mxu0 %v1290
        %1548 = vmatprep.subr.mxu0 %v1295
        %1549 = vmatpush1.msra.mxu0 %v1294
        %1550 = vmatprep.subr.mxu0 %v1299
        %1551 = vmatpush1.msra.mxu0 %v1298
        %1552 = vmatprep.mubr.f32.mxu0 %v1170
        %1553 = vmatmul.mubr.f32.gmra.mrb[0].mxu0 %v1169
        %v1554 = vpop.f32.mrb[0].mxu0
        %v1555 = vadd.f32 %v1467, %v1554
        %v1556 = vpop.f32.mrb[0].mxu0
        %v1557 = vadd.f32 %v1471, %v1556
        %1558 = vdwg.mxu0
        %1559 = vmatprep.subr.mxu0 %v1303
        %1560 = vmatpush1.msra.mxu0 %v1302
        %1561 = vmatprep.subr.mxu0 %v1307
        %1562 = vmatpush1.msra.mxu0 %v1306
        %1563 = vmatprep.subr.mxu0 %v1311
        %1564 = vmatpush1.msra.mxu0 %v1310
        %1565 = vmatprep.subr.mxu0 %v1315
        %1566 = vmatpush1.msra.mxu0 %v1314
        %1567 = vmatprep.subr.mxu0 %v1319
        %1568 = vmatpush1.msra.mxu0 %v1318
        %1569 = vmatprep.subr.mxu0 %v1323
        %1570 = vmatpush1.msra.mxu0 %v1322
        %1571 = vmatprep.subr.mxu0 %v1327
        %1572 = vmatpush1.msra.mxu0 %v1326
        %1573 = vmatprep.subr.mxu0 %v1331
        %1574 = vmatpush1.msra.mxu0 %v1330
        %1575 = vmatprep.subr.mxu0 %v1335
        %1576 = vmatpush1.msra.mxu0 %v1334
        %1577 = vmatprep.subr.mxu0 %v1339
        %1578 = vmatpush1.msra.mxu0 %v1338
        %1579 = vmatprep.subr.mxu0 %v1343
        %1580 = vmatpush1.msra.mxu0 %v1342
        %1581 = vmatprep.subr.mxu0 %v1347
        %1582 = vmatpush1.msra.mxu0 %v1346
        %1583 = vmatprep.subr.mxu0 %v1351
        %1584 = vmatpush1.msra.mxu0 %v1350
        %1585 = vmatprep.subr.mxu0 %v1355
        %1586 = vmatpush1.msra.mxu0 %v1354
        %1587 = vmatprep.subr.mxu0 %v1359
        %1588 = vmatpush1.msra.mxu0 %v1358
        %1589 = vmatprep.subr.mxu0 %v1363
        %1590 = vmatpush1.msra.mxu0 %v1362
        %1591 = vmatprep.subr.mxu0 %v1367
        %1592 = vmatpush1.msra.mxu0 %v1366
        %1593 = vmatprep.subr.mxu0 %v1371
        %1594 = vmatpush1.msra.mxu0 %v1370
        %1595 = vmatprep.subr.mxu0 %v1375
        %1596 = vmatpush1.msra.mxu0 %v1374
        %1597 = vmatprep.subr.mxu0 %v1379
        %1598 = vmatpush1.msra.mxu0 %v1378
        %1599 = vmatprep.subr.mxu0 %v1383
        %1600 = vmatpush1.msra.mxu0 %v1382
        %1601 = vmatprep.subr.mxu0 %v1387
        %1602 = vmatpush1.msra.mxu0 %v1386
        %1603 = vmatprep.subr.mxu0 %v1391
        %1604 = vmatpush1.msra.mxu0 %v1390
        %1605 = vmatprep.subr.mxu0 %v1395
        %1606 = vmatpush1.msra.mxu0 %v1394
        %1607 = vmatprep.subr.mxu0 %v1399
        %1608 = vmatpush1.msra.mxu0 %v1398
        %1609 = vmatprep.subr.mxu0 %v1403
        %1610 = vmatpush1.msra.mxu0 %v1402
        %1611 = vmatprep.subr.mxu0 %v1407
        %1612 = vmatpush1.msra.mxu0 %v1406
        %1613 = vmatprep.subr.mxu0 %v1411
        %1614 = vmatpush1.msra.mxu0 %v1410
        %1615 = vmatprep.subr.mxu0 %v1415
        %1616 = vmatpush1.msra.mxu0 %v1414
        %1617 = vmatprep.subr.mxu0 %v1419
        %1618 = vmatpush1.msra.mxu0 %v1418
        %1619 = vmatprep.subr.mxu0 %v1423
        %1620 = vmatpush1.msra.mxu0 %v1422
        %1621 = vmatprep.subr.mxu0 %v1427
        %1622 = vmatpush1.msra.mxu0 %v1426
        %1623 = vmatprep.mubr.f32.mxu0 %v1172
        %1624 = vmatmul.mubr.f32.gmra.mrb[0].mxu0 %v1171
        %v1625 = vpop.f32.mrb[0].mxu0
        %v1626 = vadd.f32 %v1555, %v1625
        %v1627 = vpop.f32.mrb[0].mxu0
        %v1628 = vadd.f32 %v1557, %v1627
        %1629 = vdwg.mxu0
        %1630 = vmatprep.subr.mxu0 %v1431
        %1631 = vmatpush1.msra.mxu0 %v1430
        %1632 = vmatprep.subr.mxu0 %v1435
        %1633 = vmatpush1.msra.mxu0 %v1434
        %1634 = vmatprep.subr.mxu0 %v1439
        %1635 = vmatpush1.msra.mxu0 %v1438
        %1636 = vmatprep.subr.mxu0 %v1443
        %1637 = vmatpush1.msra.mxu0 %v1442
        %1638 = vmatprep.subr.mxu0 %v1447
        %1639 = vmatpush1.msra.mxu0 %v1446
        %1640 = vmatprep.subr.mxu0 %v1451
        %1641 = vmatpush1.msra.mxu0 %v1450
        %1642 = vmatprep.subr.mxu0 %v1455
        %1643 = vmatpush1.msra.mxu0 %v1454
        %1644 = vmatprep.subr.mxu0 %v1459
        %1645 = vmatpush1.msra.mxu0 %v1458
        %1646 = vmatprep.subr.mxu0 0.0
        %1647 = vmatpush1.msra.mxu0 0.0
        %1648 = vmatprep.subr.mxu0 0.0
        %1649 = vmatpush1.msra.mxu0 0.0
        %1650 = vmatprep.subr.mxu0 0.0
        %1651 = vmatpush1.msra.mxu0 0.0
        %1652 = vmatprep.subr.mxu0 0.0
        %1653 = vmatpush1.msra.mxu0 0.0
        %1654 = vmatprep.subr.mxu0 0.0
        %1655 = vmatpush1.msra.mxu0 0.0
        %1656 = vmatprep.subr.mxu0 0.0
        %1657 = vmatpush1.msra.mxu0 0.0
        %1658 = vmatprep.subr.mxu0 0.0
        %1659 = vmatpush1.msra.mxu0 0.0
        %1660 = vmatprep.subr.mxu0 0.0
        %1661 = vmatpush1.msra.mxu0 0.0
        %1662 = vmatprep.subr.mxu0 0.0
        %1663 = vmatpush1.msra.mxu0 0.0
        %1664 = vmatprep.subr.mxu0 0.0
        %1665 = vmatpush1.msra.mxu0 0.0
        %1666 = vmatprep.subr.mxu0 0.0
        %1667 = vmatpush1.msra.mxu0 0.0
        %1668 = vmatprep.subr.mxu0 0.0
        %1669 = vmatpush1.msra.mxu0 0.0
        %1670 = vmatprep.subr.mxu0 0.0
        %1671 = vmatpush1.msra.mxu0 0.0
        %1672 = vmatprep.subr.mxu0 0.0
        %1673 = vmatpush1.msra.mxu0 0.0
        %1674 = vmatprep.subr.mxu0 0.0
        %1675 = vmatpush1.msra.mxu0 0.0
        %1676 = vmatprep.subr.mxu0 0.0
        %1677 = vmatpush1.msra.mxu0 0.0
        %1678 = vmatprep.subr.mxu0 0.0
        %1679 = vmatpush1.msra.mxu0 0.0
        %1680 = vmatprep.subr.mxu0 0.0
        %1681 = vmatpush1.msra.mxu0 0.0
        %1682 = vmatprep.subr.mxu0 0.0
        %1683 = vmatpush1.msra.mxu0 0.0
        %1684 = vmatprep.subr.mxu0 0.0
        %1685 = vmatpush1.msra.mxu0 0.0
        %1686 = vmatprep.subr.mxu0 0.0
        %1687 = vmatpush1.msra.mxu0 0.0
        %1688 = vmatprep.subr.mxu0 0.0
        %1689 = vmatpush1.msra.mxu0 0.0
        %1690 = vmatprep.subr.mxu0 0.0
        %1691 = vmatpush1.msra.mxu0 0.0
        %1692 = vmatprep.subr.mxu0 0.0
        %1693 = vmatpush1.msra.mxu0 0.0
        %1694 = vmatprep.mubr.f32.mxu0 0.0
        %1695 = vmatmul.mubr.f32.gmra.mrb[0].mxu0 %v1486
        %v1696 = vpop.f32.mrb[0].mxu0
        %v1697 = vadd.f32 %v1626, %v1696
        %v1698 = vpop.f32.mrb[0].mxu0
        %v1699 = vadd.f32 %v1628, %v1698
        %1700 = vdwg.mxu0
        %1701 = vmatprep.subr.mxu0 %v1177
        %1702 = vmatpush1.msra.mxu0 %v1176
        %1703 = vmatprep.subr.mxu0 %v1181
        %1704 = vmatpush1.msra.mxu0 %v1180
        %1705 = vmatprep.subr.mxu0 %v1185
        %1706 = vmatpush1.msra.mxu0 %v1184
        %1707 = vmatprep.subr.mxu0 %v1189
        %1708 = vmatpush1.msra.mxu0 %v1188
        %1709 = vmatprep.subr.mxu0 %v1193
        %1710 = vmatpush1.msra.mxu0 %v1192
        %1711 = vmatprep.subr.mxu0 %v1197
        %1712 = vmatpush1.msra.mxu0 %v1196
        %1713 = vmatprep.subr.mxu0 %v1201
        %1714 = vmatpush1.msra.mxu0 %v1200
        %1715 = vmatprep.subr.mxu0 %v1205
        %1716 = vmatpush1.msra.mxu0 %v1204
        %1717 = vmatprep.subr.mxu0 %v1209
        %1718 = vmatpush1.msra.mxu0 %v1208
        %1719 = vmatprep.subr.mxu0 %v1213
        %1720 = vmatpush1.msra.mxu0 %v1212
        %1721 = vmatprep.subr.mxu0 %v1217
        %1722 = vmatpush1.msra.mxu0 %v1216
        %1723 = vmatprep.subr.mxu0 %v1221
        %1724 = vmatpush1.msra.mxu0 %v1220
        %1725 = vmatprep.subr.mxu0 %v1225
        %1726 = vmatpush1.msra.mxu0 %v1224
        %1727 = vmatprep.subr.mxu0 %v1229
        %1728 = vmatpush1.msra.mxu0 %v1228
        %1729 = vmatprep.subr.mxu0 %v1233
        %1730 = vmatpush1.msra.mxu0 %v1232
        %1731 = vmatprep.subr.mxu0 %v1237
        %1732 = vmatpush1.msra.mxu0 %v1236
        %1733 = vmatprep.subr.mxu0 %v1241
        %1734 = vmatpush1.msra.mxu0 %v1240
        %1735 = vmatprep.subr.mxu0 %v1245
        %1736 = vmatpush1.msra.mxu0 %v1244
        %1737 = vmatprep.subr.mxu0 %v1249
        %1738 = vmatpush1.msra.mxu0 %v1248
        %1739 = vmatprep.subr.mxu0 %v1253
        %1740 = vmatpush1.msra.mxu0 %v1252
        %1741 = vmatprep.subr.mxu0 %v1257
        %1742 = vmatpush1.msra.mxu0 %v1256
        %1743 = vmatprep.subr.mxu0 %v1261
        %1744 = vmatpush1.msra.mxu0 %v1260
        %1745 = vmatprep.subr.mxu0 %v1265
        %1746 = vmatpush1.msra.mxu0 %v1264
        %1747 = vmatprep.subr.mxu0 %v1269
        %1748 = vmatpush1.msra.mxu0 %v1268
        %1749 = vmatprep.subr.mxu0 %v1273
        %1750 = vmatpush1.msra.mxu0 %v1272
        %1751 = vmatprep.subr.mxu0 %v1277
        %1752 = vmatpush1.msra.mxu0 %v1276
        %1753 = vmatprep.subr.mxu0 %v1281
        %1754 = vmatpush1.msra.mxu0 %v1280
        %1755 = vmatprep.subr.mxu0 %v1285
        %1756 = vmatpush1.msra.mxu0 %v1284
        %1757 = vmatprep.subr.mxu0 %v1289
        %1758 = vmatpush1.msra.mxu0 %v1288
        %1759 = vmatprep.subr.mxu0 %v1293
        %1760 = vmatpush1.msra.mxu0 %v1292
        %1761 = vmatprep.subr.mxu0 %v1297
        %1762 = vmatpush1.msra.mxu0 %v1296
        %1763 = vmatprep.subr.mxu0 %v1301
        %1764 = vmatpush1.msra.mxu0 %v1300
        %1765 = vmatprep.mubr.f32.mxu0 %v1170
        %1766 = vmatmul.mubr.f32.gmra.mrb[0].mxu0 %v1169
        %v1767 = vpop.f32.mrb[0].mxu0
        %v1768 = vadd.f32 %v1475, %v1767
        %v1769 = vpop.f32.mrb[0].mxu0
        %v1770 = vadd.f32 %v1479, %v1769
        %1771 = vdwg.mxu0
        %1772 = vmatprep.subr.mxu0 %v1305
        %1773 = vmatpush1.msra.mxu0 %v1304
        %1774 = vmatprep.subr.mxu0 %v1309
        %1775 = vmatpush1.msra.mxu0 %v1308
        %1776 = vmatprep.subr.mxu0 %v1313
        %1777 = vmatpush1.msra.mxu0 %v1312
        %1778 = vmatprep.subr.mxu0 %v1317
        %1779 = vmatpush1.msra.mxu0 %v1316
        %1780 = vmatprep.subr.mxu0 %v1321
        %1781 = vmatpush1.msra.mxu0 %v1320
        %1782 = vmatprep.subr.mxu0 %v1325
        %1783 = vmatpush1.msra.mxu0 %v1324
        %1784 = vmatprep.subr.mxu0 %v1329
        %1785 = vmatpush1.msra.mxu0 %v1328
        %1786 = vmatprep.subr.mxu0 %v1333
        %1787 = vmatpush1.msra.mxu0 %v1332
        %1788 = vmatprep.subr.mxu0 %v1337
        %1789 = vmatpush1.msra.mxu0 %v1336
        %1790 = vmatprep.subr.mxu0 %v1341
        %1791 = vmatpush1.msra.mxu0 %v1340
        %1792 = vmatprep.subr.mxu0 %v1345
        %1793 = vmatpush1.msra.mxu0 %v1344
        %1794 = vmatprep.subr.mxu0 %v1349
        %1795 = vmatpush1.msra.mxu0 %v1348
        %1796 = vmatprep.subr.mxu0 %v1353
        %1797 = vmatpush1.msra.mxu0 %v1352
        %1798 = vmatprep.subr.mxu0 %v1357
        %1799 = vmatpush1.msra.mxu0 %v1356
        %1800 = vmatprep.subr.mxu0 %v1361
        %1801 = vmatpush1.msra.mxu0 %v1360
        %1802 = vmatprep.subr.mxu0 %v1365
        %1803 = vmatpush1.msra.mxu0 %v1364
        %1804 = vmatprep.subr.mxu0 %v1369
        %1805 = vmatpush1.msra.mxu0 %v1368
        %1806 = vmatprep.subr.mxu0 %v1373
        %1807 = vmatpush1.msra.mxu0 %v1372
        %1808 = vmatprep.subr.mxu0 %v1377
        %1809 = vmatpush1.msra.mxu0 %v1376
        %1810 = vmatprep.subr.mxu0 %v1381
        %1811 = vmatpush1.msra.mxu0 %v1380
        %1812 = vmatprep.subr.mxu0 %v1385
        %1813 = vmatpush1.msra.mxu0 %v1384
        %1814 = vmatprep.subr.mxu0 %v1389
        %1815 = vmatpush1.msra.mxu0 %v1388
        %1816 = vmatprep.subr.mxu0 %v1393
        %1817 = vmatpush1.msra.mxu0 %v1392
        %1818 = vmatprep.subr.mxu0 %v1397
        %1819 = vmatpush1.msra.mxu0 %v1396
        %1820 = vmatprep.subr.mxu0 %v1401
        %1821 = vmatpush1.msra.mxu0 %v1400
        %1822 = vmatprep.subr.mxu0 %v1405
        %1823 = vmatpush1.msra.mxu0 %v1404
        %1824 = vmatprep.subr.mxu0 %v1409
        %1825 = vmatpush1.msra.mxu0 %v1408
        %1826 = vmatprep.subr.mxu0 %v1413
        %1827 = vmatpush1.msra.mxu0 %v1412
        %1828 = vmatprep.subr.mxu0 %v1417
        %1829 = vmatpush1.msra.mxu0 %v1416
        %1830 = vmatprep.subr.mxu0 %v1421
        %1831 = vmatpush1.msra.mxu0 %v1420
        %1832 = vmatprep.subr.mxu0 %v1425
        %1833 = vmatpush1.msra.mxu0 %v1424
        %1834 = vmatprep.subr.mxu0 %v1429
        %1835 = vmatpush1.msra.mxu0 %v1428
        %1836 = vmatprep.mubr.f32.mxu0 %v1172
        %1837 = vmatmul.mubr.f32.gmra.mrb[0].mxu0 %v1171
        %v1838 = vpop.f32.mrb[0].mxu0
        %v1839 = vadd.f32 %v1768, %v1838
        %v1840 = vpop.f32.mrb[0].mxu0
        %v1841 = vadd.f32 %v1770, %v1840
        %1842 = vdwg.mxu0
        %1843 = vmatprep.subr.mxu0 %v1433
        %1844 = vmatpush1.msra.mxu0 %v1432
        %1845 = vmatprep.subr.mxu0 %v1437
        %1846 = vmatpush1.msra.mxu0 %v1436
        %1847 = vmatprep.subr.mxu0 %v1441
        %1848 = vmatpush1.msra.mxu0 %v1440
        %1849 = vmatprep.subr.mxu0 %v1445
        %1850 = vmatpush1.msra.mxu0 %v1444
        %1851 = vmatprep.subr.mxu0 %v1449
        %1852 = vmatpush1.msra.mxu0 %v1448
        %1853 = vmatprep.subr.mxu0 %v1453
        %1854 = vmatpush1.msra.mxu0 %v1452
        %1855 = vmatprep.subr.mxu0 %v1457
        %1856 = vmatpush1.msra.mxu0 %v1456
        %1857 = vmatprep.subr.mxu0 %v1461
        %1858 = vmatpush1.msra.mxu0 %v1460
        %1859 = vmatprep.subr.mxu0 0.0
        %1860 = vmatpush1.msra.mxu0 0.0
        %1861 = vmatprep.subr.mxu0 0.0
        %1862 = vmatpush1.msra.mxu0 0.0
        %1863 = vmatprep.subr.mxu0 0.0
        %1864 = vmatpush1.msra.mxu0 0.0
        %1865 = vmatprep.subr.mxu0 0.0
        %1866 = vmatpush1.msra.mxu0 0.0
        %1867 = vmatprep.subr.mxu0 0.0
        %1868 = vmatpush1.msra.mxu0 0.0
        %1869 = vmatprep.subr.mxu0 0.0
        %1870 = vmatpush1.msra.mxu0 0.0
        %1871 = vmatprep.subr.mxu0 0.0
        %1872 = vmatpush1.msra.mxu0 0.0
        %1873 = vmatprep.subr.mxu0 0.0
        %1874 = vmatpush1.msra.mxu0 0.0
        %1875 = vmatprep.subr.mxu0 0.0
        %1876 = vmatpush1.msra.mxu0 0.0
        %1877 = vmatprep.subr.mxu0 0.0
        %1878 = vmatpush1.msra.mxu0 0.0
        %1879 = vmatprep.subr.mxu0 0.0
        %1880 = vmatpush1.msra.mxu0 0.0
        %1881 = vmatprep.subr.mxu0 0.0
        %1882 = vmatpush1.msra.mxu0 0.0
        %1883 = vmatprep.subr.mxu0 0.0
        %1884 = vmatpush1.msra.mxu0 0.0
        %1885 = vmatprep.subr.mxu0 0.0
        %1886 = vmatpush1.msra.mxu0 0.0
        %1887 = vmatprep.subr.mxu0 0.0
        %1888 = vmatpush1.msra.mxu0 0.0
        %1889 = vmatprep.subr.mxu0 0.0
        %1890 = vmatpush1.msra.mxu0 0.0
        %1891 = vmatprep.subr.mxu0 0.0
        %1892 = vmatpush1.msra.mxu0 0.0
        %1893 = vmatprep.subr.mxu0 0.0
        %1894 = vmatpush1.msra.mxu0 0.0
        %1895 = vmatprep.subr.mxu0 0.0
        %1896 = vmatpush1.msra.mxu0 0.0
        %1897 = vmatprep.subr.mxu0 0.0
        %1898 = vmatpush1.msra.mxu0 0.0
        %1899 = vmatprep.subr.mxu0 0.0
        %1900 = vmatpush1.msra.mxu0 0.0
        %1901 = vmatprep.subr.mxu0 0.0
        %1902 = vmatpush1.msra.mxu0 0.0
        %1903 = vmatprep.subr.mxu0 0.0
        %1904 = vmatpush1.msra.mxu0 0.0
        %1905 = vmatprep.subr.mxu0 0.0
        %1906 = vmatpush1.msra.mxu0 0.0
        %1907 = vmatprep.mubr.f32.mxu0 0.0
        %1908 = vmatmul.mubr.f32.gmra.mrb[0].mxu0 %v1486
        %v1909 = vpop.f32.mrb[0].mxu0
        %v1910 = vadd.f32 %v1839, %v1909
        %v1911 = vpop.f32.mrb[0].mxu0
        %v1912 = vadd.f32 %v1841, %v1911
        %1913 = vdwg.mxu0
        %v1914 = vtanh.pop %v1697
        %v1915 = vtanh.pop %v1699
        %v1916 = vtanh.pop %v1910
        %v1917 = vtanh.pop %v1912
        %v1918 = vld [vmem:[%s5] sm:$0xff]
        %v1919 = vld [vmem:[%s5 + $0x8] sm:$0xff]
        %v1920 = vld [vmem:[%s5 + $0x10] sm:$0xff]
        %v1921 = vld [vmem:[%s5 + $0x18] sm:$0xff]
        %v1922 = vld [vmem:[%s5 + $0x20] sm:$0xff]
        %v1923 = vld [vmem:[%s5 + $0x28] sm:$0xff]
        %v1924 = vld [vmem:[%s5 + $0x30] sm:$0xff]
        %v1925 = vld [vmem:[%s5 + $0x38] sm:$0xff]
        %v1926 = vld [vmem:[%s5 + $0x40] sm:$0xff]
        %v1927 = vld [vmem:[%s5 + $0x48] sm:$0xff]
        %v1928 = vld [vmem:[%s5 + $0x50] sm:$0xff]
        %v1929 = vld [vmem:[%s5 + $0x58] sm:$0xff]
        %v1930 = vld [vmem:[%s5 + $0x60] sm:$0xff]
        %v1931 = vld [vmem:[%s5 + $0x68] sm:$0xff]
        %v1932 = vld [vmem:[%s5 + $0x70] sm:$0xff]
        %v1933 = vld [vmem:[%s5 + $0x78] sm:$0xff]
        %v1934 = vld [vmem:[%s5 + $0x80] sm:$0xff]
        %v1935 = vld [vmem:[%s5 + $0x88] sm:$0xff]
        %v1936 = vld [vmem:[%s5 + $0x90] sm:$0xff]
        %v1937 = vld [vmem:[%s5 + $0x98] sm:$0xff]
        %v1938 = vld [vmem:[%s5 + $0xa0] sm:$0xff]
        %v1939 = vld [vmem:[%s5 + $0xa8] sm:$0xff]
        %v1940 = vld [vmem:[%s5 + $0xb0] sm:$0xff]
        %v1941 = vld [vmem:[%s5 + $0xb8] sm:$0xff]
        %v1942 = vld [vmem:[%s5 + $0xc0] sm:$0xff]
        %v1943 = vld [vmem:[%s5 + $0xc8] sm:$0xff]
        %v1944 = vld [vmem:[%s5 + $0xd0] sm:$0xff]
        %v1945 = vld [vmem:[%s5 + $0xd8] sm:$0xff]
        %v1946 = vld [vmem:[%s5 + $0xe0] sm:$0xff]
        %v1947 = vld [vmem:[%s5 + $0xe8] sm:$0xff]
        %v1948 = vld [vmem:[%s5 + $0xf0] sm:$0xff]
        %v1949 = vld [vmem:[%s5 + $0xf8] sm:$0xff]
        %v1950 = vld [vmem:[%s5 + $0x100] sm:$0xff]
        %v1951 = vld [vmem:[%s5 + $0x108] sm:$0xff]
        %v1952 = vld [vmem:[%s5 + $0x110] sm:$0xff]
        %v1953 = vld [vmem:[%s5 + $0x118] sm:$0xff]
        %v1954 = vld [vmem:[%s5 + $0x120] sm:$0xff]
        %v1955 = vld [vmem:[%s5 + $0x128] sm:$0xff]
        %v1956 = vld [vmem:[%s5 + $0x130] sm:$0xff]
        %v1957 = vld [vmem:[%s5 + $0x138] sm:$0xff]
        %v1958 = vld [vmem:[%s5 + $0x140] sm:$0xff]
        %v1959 = vld [vmem:[%s5 + $0x148] sm:$0xff]
        %v1960 = vld [vmem:[%s5 + $0x150] sm:$0xff]
        %v1961 = vld [vmem:[%s5 + $0x158] sm:$0xff]
        %v1962 = vld [vmem:[%s5 + $0x160] sm:$0xff]
        %v1963 = vld [vmem:[%s5 + $0x168] sm:$0xff]
        %v1964 = vld [vmem:[%s5 + $0x170] sm:$0xff]
        %v1965 = vld [vmem:[%s5 + $0x178] sm:$0xff]
        %v1966 = vld [vmem:[%s5 + $0x180] sm:$0xff]
        %v1967 = vld [vmem:[%s5 + $0x188] sm:$0xff]
        %v1968 = vld [vmem:[%s5 + $0x190] sm:$0xff]
        %v1969 = vld [vmem:[%s5 + $0x198] sm:$0xff]
        %v1970 = vld [vmem:[%s5 + $0x1a0] sm:$0xff]
        %v1971 = vld [vmem:[%s5 + $0x1a8] sm:$0xff]
        %v1972 = vld [vmem:[%s5 + $0x1b0] sm:$0xff]
        %v1973 = vld [vmem:[%s5 + $0x1b8] sm:$0xff]
        %v1974 = vld [vmem:[%s5 + $0x1c0] sm:$0xff]
        %v1975 = vld [vmem:[%s5 + $0x1c8] sm:$0xff]
        %v1976 = vld [vmem:[%s5 + $0x1d0] sm:$0xff]
        %v1977 = vld [vmem:[%s5 + $0x1d8] sm:$0xff]
        %v1978 = vld [vmem:[%s5 + $0x1e0] sm:$0xff]
        %v1979 = vld [vmem:[%s5 + $0x1e8] sm:$0xff]
        %v1980 = vld [vmem:[%s5 + $0x1f0] sm:$0xff]
        %v1981 = vld [vmem:[%s5 + $0x1f8] sm:$0xff]
        %v1982 = vld [vmem:[%s5 + $0x200] sm:$0xff]
        %v1983 = vld [vmem:[%s5 + $0x208] sm:$0xff]
        %v1984 = vld [vmem:[%s5 + $0x210] sm:$0xff]
        %v1985 = vld [vmem:[%s5 + $0x218] sm:$0xff]
        %v1986 = vld [vmem:[%s5 + $0x220] sm:$0xff]
        %v1987 = vld [vmem:[%s5 + $0x228] sm:$0xff]
        %v1988 = vld [vmem:[%s5 + $0x230] sm:$0xff]
        %v1989 = vld [vmem:[%s5 + $0x238] sm:$0xff]
        %v1990 = vld [vmem:[%s5 + $0x240] sm:$0xff]
        %v1991 = vld [vmem:[%s5 + $0x248] sm:$0xff]
        %v1992 = vld [vmem:[%s5 + $0x250] sm:$0xff]
        %v1993 = vld [vmem:[%s5 + $0x258] sm:$0xff]
        %v1994 = vld [vmem:[%s5 + $0x260] sm:$0xff]
        %v1995 = vld [vmem:[%s5 + $0x268] sm:$0xff]
        %v1996 = vld [vmem:[%s5 + $0x270] sm:$0xff]
        %v1997 = vld [vmem:[%s5 + $0x278] sm:$0xff]
        %v1998 = vld [vmem:[%s5 + $0x280] sm:$0xff]
        %v1999 = vld [vmem:[%s5 + $0x288] sm:$0xff]
        %v2000 = vld [vmem:[%s5 + $0x290] sm:$0xff]
        %v2001 = vld [vmem:[%s5 + $0x298] sm:$0xff]
        %v2002 = vld [vmem:[%s5 + $0x2a0] sm:$0xff]
        %v2003 = vld [vmem:[%s5 + $0x2a8] sm:$0xff]
        %v2004 = vld [vmem:[%s5 + $0x2b0] sm:$0xff]
        %v2005 = vld [vmem:[%s5 + $0x2b8] sm:$0xff]
        %v2006 = vld [vmem:[%s5 + $0x2c0] sm:$0xff]
        %v2007 = vld [vmem:[%s5 + $0x2c8] sm:$0xff]
        %v2008 = vld [vmem:[%s5 + $0x2d0] sm:$0xff]
        %v2009 = vld [vmem:[%s5 + $0x2d8] sm:$0xff]
        %v2010 = vld [vmem:[%s5 + $0x2e0] sm:$0xff]
        %v2011 = vld [vmem:[%s5 + $0x2e8] sm:$0xff]
        %v2012 = vld [vmem:[%s5 + $0x2f0] sm:$0xff]
        %v2013 = vld [vmem:[%s5 + $0x2f8] sm:$0xff]
        %v2014 = vld [vmem:[%s5 + $0x300] sm:$0xff]
        %v2015 = vld [vmem:[%s5 + $0x308] sm:$0xff]
        %v2016 = vld [vmem:[%s5 + $0x310] sm:$0xff]
        %v2017 = vld [vmem:[%s5 + $0x318] sm:$0xff]
        %v2018 = vld [vmem:[%s5 + $0x320] sm:$0xff]
        %v2019 = vld [vmem:[%s5 + $0x328] sm:$0xff]
        %v2020 = vld [vmem:[%s5 + $0x330] sm:$0xff]
        %v2021 = vld [vmem:[%s5 + $0x338] sm:$0xff]
        %v2022 = vld [vmem:[%s5 + $0x340] sm:$0xff]
        %v2023 = vld [vmem:[%s5 + $0x348] sm:$0xff]
        %v2024 = vld [vmem:[%s5 + $0x350] sm:$0xff]
        %v2025 = vld [vmem:[%s5 + $0x358] sm:$0xff]
        %v2026 = vld [vmem:[%s5 + $0x360] sm:$0xff]
        %v2027 = vld [vmem:[%s5 + $0x368] sm:$0xff]
        %v2028 = vld [vmem:[%s5 + $0x370] sm:$0xff]
        %v2029 = vld [vmem:[%s5 + $0x378] sm:$0xff]
        %v2030 = vld [vmem:[%s5 + $0x380] sm:$0xff]
        %v2031 = vld [vmem:[%s5 + $0x388] sm:$0xff]
        %v2032 = vld [vmem:[%s5 + $0x390] sm:$0xff]
        %v2033 = vld [vmem:[%s5 + $0x398] sm:$0xff]
        %v2034 = vld [vmem:[%s5 + $0x3a0] sm:$0xff]
        %v2035 = vld [vmem:[%s5 + $0x3a8] sm:$0xff]
        %v2036 = vld [vmem:[%s5 + $0x3b0] sm:$0xff]
        %v2037 = vld [vmem:[%s5 + $0x3b8] sm:$0xff]
        %v2038 = vld [vmem:[%s5 + $0x3c0] sm:$0xff]
        %v2039 = vld [vmem:[%s5 + $0x3c8] sm:$0xff]
        %v2040 = vld [vmem:[%s5 + $0x3d0] sm:$0xff]
        %v2041 = vld [vmem:[%s5 + $0x3d8] sm:$0xff]
        %v2042 = vld [vmem:[%s5 + $0x3e0] sm:$0xff]
        %v2043 = vld [vmem:[%s5 + $0x3e8] sm:$0xff]
        %v2044 = vld [vmem:[%s5 + $0x3f0] sm:$0xff]
        %v2045 = vld [vmem:[%s5 + $0x3f8] sm:$0xff]
        %v2046 = vld [vmem:[%s5 + $0x400] sm:$0xff]
        %v2047 = vld [vmem:[%s5 + $0x408] sm:$0xff]
        %v2048 = vld [vmem:[%s5 + $0x410] sm:$0xff]
        %v2049 = vld [vmem:[%s5 + $0x418] sm:$0xff]
        %v2050 = vld [vmem:[%s5 + $0x420] sm:$0xff]
        %v2051 = vld [vmem:[%s5 + $0x428] sm:$0xff]
        %v2052 = vld [vmem:[%s5 + $0x430] sm:$0xff]
        %v2053 = vld [vmem:[%s5 + $0x438] sm:$0xff]
        %v2054 = vld [vmem:[%s5 + $0x440] sm:$0xff]
        %v2055 = vld [vmem:[%s5 + $0x448] sm:$0xff]
        %v2056 = vld [vmem:[%s5 + $0x450] sm:$0xff]
        %v2057 = vld [vmem:[%s5 + $0x458] sm:$0xff]
        %v2058 = vld [vmem:[%s5 + $0x460] sm:$0xff]
        %v2059 = vld [vmem:[%s5 + $0x468] sm:$0xff]
        %v2060 = vld [vmem:[%s5 + $0x470] sm:$0xff]
        %v2061 = vld [vmem:[%s5 + $0x478] sm:$0xff]
        %v2062 = vld [vmem:[%s5 + $0x480] sm:$0xff]
        %v2063 = vld [vmem:[%s5 + $0x488] sm:$0xff]
        %v2064 = vld [vmem:[%s5 + $0x490] sm:$0xff]
        %v2065 = vld [vmem:[%s5 + $0x498] sm:$0xff]
        %v2066 = vld [vmem:[%s5 + $0x4a0] sm:$0xff]
        %v2067 = vld [vmem:[%s5 + $0x4a8] sm:$0xff]
        %v2068 = vld [vmem:[%s5 + $0x4b0] sm:$0xff]
        %v2069 = vld [vmem:[%s5 + $0x4b8] sm:$0xff]
        %v2070 = vld [vmem:[%s5 + $0x4c0] sm:$0xff]
        %v2071 = vld [vmem:[%s5 + $0x4c8] sm:$0xff]
        %v2072 = vld [vmem:[%s5 + $0x4d0] sm:$0xff]
        %v2073 = vld [vmem:[%s5 + $0x4d8] sm:$0xff]
        %v2074 = vld [vmem:[%s5 + $0x4e0] sm:$0xff]
        %v2075 = vld [vmem:[%s5 + $0x4e8] sm:$0xff]
        %v2076 = vld [vmem:[%s5 + $0x4f0] sm:$0xff]
        %v2077 = vld [vmem:[%s5 + $0x4f8] sm:$0xff]
        %v2078 = vld [vmem:[%s5 + $0x500] sm:$0xff]
        %v2079 = vld [vmem:[%s5 + $0x508] sm:$0xff]
        %v2080 = vld [vmem:[%s5 + $0x510] sm:$0xff]
        %v2081 = vld [vmem:[%s5 + $0x518] sm:$0xff]
        %v2082 = vld [vmem:[%s5 + $0x520] sm:$0xff]
        %v2083 = vld [vmem:[%s5 + $0x528] sm:$0xff]
        %v2084 = vld [vmem:[%s5 + $0x530] sm:$0xff]
        %v2085 = vld [vmem:[%s5 + $0x538] sm:$0xff]
        %v2086 = vld [vmem:[%s5 + $0x540] sm:$0xff]
        %v2087 = vld [vmem:[%s5 + $0x548] sm:$0xff]
        %v2088 = vld [vmem:[%s5 + $0x550] sm:$0xff]
        %v2089 = vld [vmem:[%s5 + $0x558] sm:$0xff]
        %v2090 = vld [vmem:[%s5 + $0x560] sm:$0xff]
        %v2091 = vld [vmem:[%s5 + $0x568] sm:$0xff]
        %v2092 = vld [vmem:[%s5 + $0x570] sm:$0xff]
        %v2093 = vld [vmem:[%s5 + $0x578] sm:$0xff]
        %v2094 = vld [vmem:[%s5 + $0x580] sm:$0xff]
        %v2095 = vld [vmem:[%s5 + $0x588] sm:$0xff]
        %v2096 = vld [vmem:[%s5 + $0x590] sm:$0xff]
        %v2097 = vld [vmem:[%s5 + $0x598] sm:$0xff]
        %v2098 = vld [vmem:[%s5 + $0x5a0] sm:$0xff]
        %v2099 = vld [vmem:[%s5 + $0x5a8] sm:$0xff]
        %v2100 = vld [vmem:[%s5 + $0x5b0] sm:$0xff]
        %v2101 = vld [vmem:[%s5 + $0x5b8] sm:$0xff]
        %v2102 = vld [vmem:[%s5 + $0x5c0] sm:$0xff]
        %v2103 = vld [vmem:[%s5 + $0x5c8] sm:$0xff]
        %v2104 = vld [vmem:[%s5 + $0x5d0] sm:$0xff]
        %v2105 = vld [vmem:[%s5 + $0x5d8] sm:$0xff]
        %v2106 = vld [vmem:[%s5 + $0x5e0] sm:$0xff]
        %v2107 = vld [vmem:[%s5 + $0x5e8] sm:$0xff]
        %v2108 = vld [vmem:[%s5 + $0x5f0] sm:$0xff]
        %v2109 = vld [vmem:[%s5 + $0x5f8] sm:$0xff]
        %v2110 = vld [vmem:[%s5 + $0x600] sm:$0xff]
        %v2111 = vld [vmem:[%s5 + $0x608] sm:$0xff]
        %v2112 = vld [vmem:[%s5 + $0x610] sm:$0xff]
        %v2113 = vld [vmem:[%s5 + $0x618] sm:$0xff]
        %v2114 = vld [vmem:[%s5 + $0x620] sm:$0xff]
        %v2115 = vld [vmem:[%s5 + $0x628] sm:$0xff]
        %v2116 = vld [vmem:[%s5 + $0x630] sm:$0xff]
        %v2117 = vld [vmem:[%s5 + $0x638] sm:$0xff]
        %v2118 = vld [vmem:[%s5 + $0x640] sm:$0xff]
        %v2119 = vld [vmem:[%s5 + $0x648] sm:$0xff]
        %v2120 = vld [vmem:[%s5 + $0x650] sm:$0xff]
        %v2121 = vld [vmem:[%s5 + $0x658] sm:$0xff]
        %v2122 = vld [vmem:[%s5 + $0x660] sm:$0xff]
        %v2123 = vld [vmem:[%s5 + $0x668] sm:$0xff]
        %v2124 = vld [vmem:[%s5 + $0x670] sm:$0xff]
        %v2125 = vld [vmem:[%s5 + $0x678] sm:$0xff]
        %v2126 = vld [vmem:[%s5 + $0x680] sm:$0xff]
        %v2127 = vld [vmem:[%s5 + $0x688] sm:$0xff]
        %v2128 = vld [vmem:[%s5 + $0x690] sm:$0xff]
        %v2129 = vld [vmem:[%s5 + $0x698] sm:$0xff]
        %v2130 = vld [vmem:[%s5 + $0x6a0] sm:$0xff]
        %v2131 = vld [vmem:[%s5 + $0x6a8] sm:$0xff]
        %v2132 = vld [vmem:[%s5 + $0x6b0] sm:$0xff]
        %v2133 = vld [vmem:[%s5 + $0x6b8] sm:$0xff]
        %v2134 = vld [vmem:[%s5 + $0x6c0] sm:$0xff]
        %v2135 = vld [vmem:[%s5 + $0x6c8] sm:$0xff]
        %v2136 = vld [vmem:[%s5 + $0x6d0] sm:$0xff]
        %v2137 = vld [vmem:[%s5 + $0x6d8] sm:$0xff]
        %v2138 = vld [vmem:[%s5 + $0x6e0] sm:$0xff]
        %v2139 = vld [vmem:[%s5 + $0x6e8] sm:$0xff]
        %v2140 = vld [vmem:[%s5 + $0x6f0] sm:$0xff]
        %v2141 = vld [vmem:[%s5 + $0x6f8] sm:$0xff]
        %v2142 = vld [vmem:[%s5 + $0x700] sm:$0xff]
        %v2143 = vld [vmem:[%s5 + $0x708] sm:$0xff]
        %v2144 = vld [vmem:[%s5 + $0x710] sm:$0xff]
        %v2145 = vld [vmem:[%s5 + $0x718] sm:$0xff]
        %v2146 = vld [vmem:[%s5 + $0x720] sm:$0xff]
        %v2147 = vld [vmem:[%s5 + $0x728] sm:$0xff]
        %v2148 = vld [vmem:[%s5 + $0x730] sm:$0xff]
        %v2149 = vld [vmem:[%s5 + $0x738] sm:$0xff]
        %v2150 = vld [vmem:[%s5 + $0x740] sm:$0xff]
        %v2151 = vld [vmem:[%s5 + $0x748] sm:$0xff]
        %v2152 = vld [vmem:[%s5 + $0x750] sm:$0xff]
        %v2153 = vld [vmem:[%s5 + $0x758] sm:$0xff]
        %v2154 = vld [vmem:[%s5 + $0x760] sm:$0xff]
        %v2155 = vld [vmem:[%s5 + $0x768] sm:$0xff]
        %v2156 = vld [vmem:[%s5 + $0x770] sm:$0xff]
        %v2157 = vld [vmem:[%s5 + $0x778] sm:$0xff]
        %v2158 = vld [vmem:[%s5 + $0x780] sm:$0xff]
        %v2159 = vld [vmem:[%s5 + $0x788] sm:$0xff]
        %v2160 = vld [vmem:[%s5 + $0x790] sm:$0xff]
        %v2161 = vld [vmem:[%s5 + $0x798] sm:$0xff]
        %v2162 = vld [vmem:[%s5 + $0x7a0] sm:$0xff]
        %v2163 = vld [vmem:[%s5 + $0x7a8] sm:$0xff]
        %v2164 = vld [vmem:[%s5 + $0x7b0] sm:$0xff]
        %v2165 = vld [vmem:[%s5 + $0x7b8] sm:$0xff]
        %v2166 = vld [vmem:[%s5 + $0x7c0] sm:$0xff]
        %v2167 = vld [vmem:[%s5 + $0x7c8] sm:$0xff]
        %v2168 = vld [vmem:[%s5 + $0x7d0] sm:$0xff]
        %v2169 = vld [vmem:[%s5 + $0x7d8] sm:$0xff]
        %v2170 = vld [vmem:[%s5 + $0x7e0] sm:$0xff]
        %v2171 = vld [vmem:[%s5 + $0x7e8] sm:$0xff]
        %v2172 = vld [vmem:[%s5 + $0x7f0] sm:$0xff]
        %v2173 = vld [vmem:[%s5 + $0x7f8] sm:$0xff]
        %v2174 = vld [vmem:[%s6] sm:$0xf]
        %v2176 = vlaneseq
        %v2177 = vshrl.u32 %v2176, 7
        %v2178 = vsub.s32 0, %v2177
        %v2179 = vrot.slane %v2174, %v2178
        %v2180 = vlaneseq
        %v2181 = vshrl.u32 %v2180, 7
        %v2182 = vsub.s32 1, %v2181
        %v2183 = vrot.slane %v2174, %v2182
        %v2184 = vlaneseq
        %v2185 = vshrl.u32 %v2184, 7
        %v2186 = vsub.s32 2, %v2185
        %v2187 = vrot.slane %v2174, %v2186
        %v2188 = vlaneseq
        %v2189 = vshrl.u32 %v2188, 7
        %v2190 = vsub.s32 3, %v2189
        %v2191 = vrot.slane %v2174, %v2190
        %2196 = vmatprep.subr.mxu0 %v1919
        %2197 = vmatpush1.msra.mxu0 %v1918
        %2198 = vmatprep.subr.mxu0 %v1923
        %2199 = vmatpush1.msra.mxu0 %v1922
        %2200 = vmatprep.subr.mxu0 %v1927
        %2201 = vmatpush1.msra.mxu0 %v1926
        %2202 = vmatprep.subr.mxu0 %v1931
        %2203 = vmatpush1.msra.mxu0 %v1930
        %2204 = vmatprep.subr.mxu0 %v1935
        %2205 = vmatpush1.msra.mxu0 %v1934
        %2206 = vmatprep.subr.mxu0 %v1939
        %2207 = vmatpush1.msra.mxu0 %v1938
        %2208 = vmatprep.subr.mxu0 %v1943
        %2209 = vmatpush1.msra.mxu0 %v1942
        %2210 = vmatprep.subr.mxu0 %v1947
        %2211 = vmatpush1.msra.mxu0 %v1946
        %2212 = vmatprep.subr.mxu0 %v1951
        %2213 = vmatpush1.msra.mxu0 %v1950
        %2214 = vmatprep.subr.mxu0 %v1955
        %2215 = vmatpush1.msra.mxu0 %v1954
        %2216 = vmatprep.subr.mxu0 %v1959
        %2217 = vmatpush1.msra.mxu0 %v1958
        %2218 = vmatprep.subr.mxu0 %v1963
        %2219 = vmatpush1.msra.mxu0 %v1962
        %2220 = vmatprep.subr.mxu0 %v1967
        %2221 = vmatpush1.msra.mxu0 %v1966
        %2222 = vmatprep.subr.mxu0 %v1971
        %2223 = vmatpush1.msra.mxu0 %v1970
        %2224 = vmatprep.subr.mxu0 %v1975
        %2225 = vmatpush1.msra.mxu0 %v1974
        %2226 = vmatprep.subr.mxu0 %v1979
        %2227 = vmatpush1.msra.mxu0 %v1978
        %2228 = vmatprep.subr.mxu0 %v1983
        %2229 = vmatpush1.msra.mxu0 %v1982
        %2230 = vmatprep.subr.mxu0 %v1987
        %2231 = vmatpush1.msra.mxu0 %v1986
        %2232 = vmatprep.subr.mxu0 %v1991
        %2233 = vmatpush1.msra.mxu0 %v1990
        %2234 = vmatprep.subr.mxu0 %v1995
        %2235 = vmatpush1.msra.mxu0 %v1994
        %2236 = vmatprep.subr.mxu0 %v1999
        %2237 = vmatpush1.msra.mxu0 %v1998
        %2238 = vmatprep.subr.mxu0 %v2003
        %2239 = vmatpush1.msra.mxu0 %v2002
        %2240 = vmatprep.subr.mxu0 %v2007
        %2241 = vmatpush1.msra.mxu0 %v2006
        %2242 = vmatprep.subr.mxu0 %v2011
        %2243 = vmatpush1.msra.mxu0 %v2010
        %2244 = vmatprep.subr.mxu0 %v2015
        %2245 = vmatpush1.msra.mxu0 %v2014
        %2246 = vmatprep.subr.mxu0 %v2019
        %2247 = vmatpush1.msra.mxu0 %v2018
        %2248 = vmatprep.subr.mxu0 %v2023
        %2249 = vmatpush1.msra.mxu0 %v2022
        %2250 = vmatprep.subr.mxu0 %v2027
        %2251 = vmatpush1.msra.mxu0 %v2026
        %2252 = vmatprep.subr.mxu0 %v2031
        %2253 = vmatpush1.msra.mxu0 %v2030
        %2254 = vmatprep.subr.mxu0 %v2035
        %2255 = vmatpush1.msra.mxu0 %v2034
        %2256 = vmatprep.subr.mxu0 %v2039
        %2257 = vmatpush1.msra.mxu0 %v2038
        %2258 = vmatprep.subr.mxu0 %v2043
        %2259 = vmatpush1.msra.mxu0 %v2042
        %2260 = vmatprep.mubr.f32.mxu0 %v1915
        %2261 = vmatmul.mubr.f32.gmra.mrb[0].mxu0 %v1914
        %v2262 = vpop.f32.mrb[0].mxu0
        %v2263 = vadd.f32 %v2179, %v2262
        %v2264 = vpop.f32.mrb[0].mxu0
        %v2265 = vadd.f32 %v2183, %v2264
        %2266 = vdwg.mxu0
        %2267 = vmatprep.subr.mxu0 %v2047
        %2268 = vmatpush1.msra.mxu0 %v2046
        %2269 = vmatprep.subr.mxu0 %v2051
        %2270 = vmatpush1.msra.mxu0 %v2050
        %2271 = vmatprep.subr.mxu0 %v2055
        %2272 = vmatpush1.msra.mxu0 %v2054
        %2273 = vmatprep.subr.mxu0 %v2059
        %2274 = vmatpush1.msra.mxu0 %v2058
        %2275 = vmatprep.subr.mxu0 %v2063
        %2276 = vmatpush1.msra.mxu0 %v2062
        %2277 = vmatprep.subr.mxu0 %v2067
        %2278 = vmatpush1.msra.mxu0 %v2066
        %2279 = vmatprep.subr.mxu0 %v2071
        %2280 = vmatpush1.msra.mxu0 %v2070
        %2281 = vmatprep.subr.mxu0 %v2075
        %2282 = vmatpush1.msra.mxu0 %v2074
        %2283 = vmatprep.subr.mxu0 %v2079
        %2284 = vmatpush1.msra.mxu0 %v2078
        %2285 = vmatprep.subr.mxu0 %v2083
        %2286 = vmatpush1.msra.mxu0 %v2082
        %2287 = vmatprep.subr.mxu0 %v2087
        %2288 = vmatpush1.msra.mxu0 %v2086
        %2289 = vmatprep.subr.mxu0 %v2091
        %2290 = vmatpush1.msra.mxu0 %v2090
        %2291 = vmatprep.subr.mxu0 %v2095
        %2292 = vmatpush1.msra.mxu0 %v2094
        %2293 = vmatprep.subr.mxu0 %v2099
        %2294 = vmatpush1.msra.mxu0 %v2098
        %2295 = vmatprep.subr.mxu0 %v2103
        %2296 = vmatpush1.msra.mxu0 %v2102
        %2297 = vmatprep.subr.mxu0 %v2107
        %2298 = vmatpush1.msra.mxu0 %v2106
        %2299 = vmatprep.subr.mxu0 %v2111
        %2300 = vmatpush1.msra.mxu0 %v2110
        %2301 = vmatprep.subr.mxu0 %v2115
        %2302 = vmatpush1.msra.mxu0 %v2114
        %2303 = vmatprep.subr.mxu0 %v2119
        %2304 = vmatpush1.msra.mxu0 %v2118
        %2305 = vmatprep.subr.mxu0 %v2123
        %2306 = vmatpush1.msra.mxu0 %v2122
        %2307 = vmatprep.subr.mxu0 %v2127
        %2308 = vmatpush1.msra.mxu0 %v2126
        %2309 = vmatprep.subr.mxu0 %v2131
        %2310 = vmatpush1.msra.mxu0 %v2130
        %2311 = vmatprep.subr.mxu0 %v2135
        %2312 = vmatpush1.msra.mxu0 %v2134
        %2313 = vmatprep.subr.mxu0 %v2139
        %2314 = vmatpush1.msra.mxu0 %v2138
        %2315 = vmatprep.subr.mxu0 %v2143
        %2316 = vmatpush1.msra.mxu0 %v2142
        %2317 = vmatprep.subr.mxu0 %v2147
        %2318 = vmatpush1.msra.mxu0 %v2146
        %2319 = vmatprep.subr.mxu0 %v2151
        %2320 = vmatpush1.msra.mxu0 %v2150
        %2321 = vmatprep.subr.mxu0 %v2155
        %2322 = vmatpush1.msra.mxu0 %v2154
        %2323 = vmatprep.subr.mxu0 %v2159
        %2324 = vmatpush1.msra.mxu0 %v2158
        %2325 = vmatprep.subr.mxu0 %v2163
        %2326 = vmatpush1.msra.mxu0 %v2162
        %2327 = vmatprep.subr.mxu0 %v2167
        %2328 = vmatpush1.msra.mxu0 %v2166
        %2329 = vmatprep.subr.mxu0 %v2171
        %2330 = vmatpush1.msra.mxu0 %v2170
        %2331 = vmatprep.mubr.f32.mxu0 %v1917
        %2332 = vmatmul.mubr.f32.gmra.mrb[0].mxu0 %v1916
        %v2333 = vpop.f32.mrb[0].mxu0
        %v2334 = vadd.f32 %v2263, %v2333
        %v2335 = vpop.f32.mrb[0].mxu0
        %v2336 = vadd.f32 %v2265, %v2335
        %2337 = vdwg.mxu0
        %2338 = vmatprep.subr.mxu0 %v1921
        %2339 = vmatpush1.msra.mxu0 %v1920
        %2340 = vmatprep.subr.mxu0 %v1925
        %2341 = vmatpush1.msra.mxu0 %v1924
        %2342 = vmatprep.subr.mxu0 %v1929
        %2343 = vmatpush1.msra.mxu0 %v1928
        %2344 = vmatprep.subr.mxu0 %v1933
        %2345 = vmatpush1.msra.mxu0 %v1932
        %2346 = vmatprep.subr.mxu0 %v1937
        %2347 = vmatpush1.msra.mxu0 %v1936
        %2348 = vmatprep.subr.mxu0 %v1941
        %2349 = vmatpush1.msra.mxu0 %v1940
        %2350 = vmatprep.subr.mxu0 %v1945
        %2351 = vmatpush1.msra.mxu0 %v1944
        %2352 = vmatprep.subr.mxu0 %v1949
        %2353 = vmatpush1.msra.mxu0 %v1948
        %2354 = vmatprep.subr.mxu0 %v1953
        %2355 = vmatpush1.msra.mxu0 %v1952
        %2356 = vmatprep.subr.mxu0 %v1957
        %2357 = vmatpush1.msra.mxu0 %v1956
        %2358 = vmatprep.subr.mxu0 %v1961
        %2359 = vmatpush1.msra.mxu0 %v1960
        %2360 = vmatprep.subr.mxu0 %v1965
        %2361 = vmatpush1.msra.mxu0 %v1964
        %2362 = vmatprep.subr.mxu0 %v1969
        %2363 = vmatpush1.msra.mxu0 %v1968
        %2364 = vmatprep.subr.mxu0 %v1973
        %2365 = vmatpush1.msra.mxu0 %v1972
        %2366 = vmatprep.subr.mxu0 %v1977
        %2367 = vmatpush1.msra.mxu0 %v1976
        %2368 = vmatprep.subr.mxu0 %v1981
        %2369 = vmatpush1.msra.mxu0 %v1980
        %2370 = vmatprep.subr.mxu0 %v1985
        %2371 = vmatpush1.msra.mxu0 %v1984
        %2372 = vmatprep.subr.mxu0 %v1989
        %2373 = vmatpush1.msra.mxu0 %v1988
        %2374 = vmatprep.subr.mxu0 %v1993
        %2375 = vmatpush1.msra.mxu0 %v1992
        %2376 = vmatprep.subr.mxu0 %v1997
        %2377 = vmatpush1.msra.mxu0 %v1996
        %2378 = vmatprep.subr.mxu0 %v2001
        %2379 = vmatpush1.msra.mxu0 %v2000
        %2380 = vmatprep.subr.mxu0 %v2005
        %2381 = vmatpush1.msra.mxu0 %v2004
        %2382 = vmatprep.subr.mxu0 %v2009
        %2383 = vmatpush1.msra.mxu0 %v2008
        %2384 = vmatprep.subr.mxu0 %v2013
        %2385 = vmatpush1.msra.mxu0 %v2012
        %2386 = vmatprep.subr.mxu0 %v2017
        %2387 = vmatpush1.msra.mxu0 %v2016
        %2388 = vmatprep.subr.mxu0 %v2021
        %2389 = vmatpush1.msra.mxu0 %v2020
        %2390 = vmatprep.subr.mxu0 %v2025
        %2391 = vmatpush1.msra.mxu0 %v2024
        %2392 = vmatprep.subr.mxu0 %v2029
        %2393 = vmatpush1.msra.mxu0 %v2028
        %2394 = vmatprep.subr.mxu0 %v2033
        %2395 = vmatpush1.msra.mxu0 %v2032
        %2396 = vmatprep.subr.mxu0 %v2037
        %2397 = vmatpush1.msra.mxu0 %v2036
        %2398 = vmatprep.subr.mxu0 %v2041
        %2399 = vmatpush1.msra.mxu0 %v2040
        %2400 = vmatprep.subr.mxu0 %v2045
        %2401 = vmatpush1.msra.mxu0 %v2044
        %2402 = vmatprep.mubr.f32.mxu0 %v1915
        %2403 = vmatmul.mubr.f32.gmra.mrb[0].mxu0 %v1914
        %v2404 = vpop.f32.mrb[0].mxu0
        %v2405 = vadd.f32 %v2187, %v2404
        %v2406 = vpop.f32.mrb[0].mxu0
        %v2407 = vadd.f32 %v2191, %v2406
        %2408 = vdwg.mxu0
        %2409 = vmatprep.subr.mxu0 %v2049
        %2410 = vmatpush1.msra.mxu0 %v2048
        %2411 = vmatprep.subr.mxu0 %v2053
        %2412 = vmatpush1.msra.mxu0 %v2052
        %2413 = vmatprep.subr.mxu0 %v2057
        %2414 = vmatpush1.msra.mxu0 %v2056
        %2415 = vmatprep.subr.mxu0 %v2061
        %2416 = vmatpush1.msra.mxu0 %v2060
        %2417 = vmatprep.subr.mxu0 %v2065
        %2418 = vmatpush1.msra.mxu0 %v2064
        %2419 = vmatprep.subr.mxu0 %v2069
        %2420 = vmatpush1.msra.mxu0 %v2068
        %2421 = vmatprep.subr.mxu0 %v2073
        %2422 = vmatpush1.msra.mxu0 %v2072
        %2423 = vmatprep.subr.mxu0 %v2077
        %2424 = vmatpush1.msra.mxu0 %v2076
        %2425 = vmatprep.subr.mxu0 %v2081
        %2426 = vmatpush1.msra.mxu0 %v2080
        %2427 = vmatprep.subr.mxu0 %v2085
        %2428 = vmatpush1.msra.mxu0 %v2084
        %2429 = vmatprep.subr.mxu0 %v2089
        %2430 = vmatpush1.msra.mxu0 %v2088
        %2431 = vmatprep.subr.mxu0 %v2093
        %2432 = vmatpush1.msra.mxu0 %v2092
        %2433 = vmatprep.subr.mxu0 %v2097
        %2434 = vmatpush1.msra.mxu0 %v2096
        %2435 = vmatprep.subr.mxu0 %v2101
        %2436 = vmatpush1.msra.mxu0 %v2100
        %2437 = vmatprep.subr.mxu0 %v2105
        %2438 = vmatpush1.msra.mxu0 %v2104
        %2439 = vmatprep.subr.mxu0 %v2109
        %2440 = vmatpush1.msra.mxu0 %v2108
        %2441 = vmatprep.subr.mxu0 %v2113
        %2442 = vmatpush1.msra.mxu0 %v2112
        %2443 = vmatprep.subr.mxu0 %v2117
        %2444 = vmatpush1.msra.mxu0 %v2116
        %2445 = vmatprep.subr.mxu0 %v2121
        %2446 = vmatpush1.msra.mxu0 %v2120
        %2447 = vmatprep.subr.mxu0 %v2125
        %2448 = vmatpush1.msra.mxu0 %v2124
        %2449 = vmatprep.subr.mxu0 %v2129
        %2450 = vmatpush1.msra.mxu0 %v2128
        %2451 = vmatprep.subr.mxu0 %v2133
        %2452 = vmatpush1.msra.mxu0 %v2132
        %2453 = vmatprep.subr.mxu0 %v2137
        %2454 = vmatpush1.msra.mxu0 %v2136
        %2455 = vmatprep.subr.mxu0 %v2141
        %2456 = vmatpush1.msra.mxu0 %v2140
        %2457 = vmatprep.subr.mxu0 %v2145
        %2458 = vmatpush1.msra.mxu0 %v2144
        %2459 = vmatprep.subr.mxu0 %v2149
        %2460 = vmatpush1.msra.mxu0 %v2148
        %2461 = vmatprep.subr.mxu0 %v2153
        %2462 = vmatpush1.msra.mxu0 %v2152
        %2463 = vmatprep.subr.mxu0 %v2157
        %2464 = vmatpush1.msra.mxu0 %v2156
        %2465 = vmatprep.subr.mxu0 %v2161
        %2466 = vmatpush1.msra.mxu0 %v2160
        %2467 = vmatprep.subr.mxu0 %v2165
        %2468 = vmatpush1.msra.mxu0 %v2164
        %2469 = vmatprep.subr.mxu0 %v2169
        %2470 = vmatpush1.msra.mxu0 %v2168
        %2471 = vmatprep.subr.mxu0 %v2173
        %2472 = vmatpush1.msra.mxu0 %v2172
        %2473 = vmatprep.mubr.f32.mxu0 %v1917
        %2474 = vmatmul.mubr.f32.gmra.mrb[0].mxu0 %v1916
        %v2475 = vpop.f32.mrb[0].mxu0
        %v2476 = vadd.f32 %v2405, %v2475
        %v2477 = vpop.f32.mrb[0].mxu0
        %v2478 = vadd.f32 %v2407, %v2477
        %2479 = vdwg.mxu0
        %v2480 = vtanh.pop %v2334
        %v2481 = vtanh.pop %v2336
        %v2482 = vtanh.pop %v2476
        %v2483 = vtanh.pop %v2478
        %v2484 = vld [vmem:[#allocation2] sm:$0xff]
        %v2485 = vld [vmem:[#allocation2 + $0x8] sm:$0xff]
        %v2486 = vld [vmem:[#allocation2 + $0x10] sm:$0xff]
        %v2487 = vld [vmem:[#allocation2 + $0x18] sm:$0xff]
        %v2488 = vld [vmem:[#allocation2 + $0x20] sm:$0xff]
        %v2489 = vld [vmem:[#allocation2 + $0x28] sm:$0xff]
        %v2490 = vld [vmem:[#allocation2 + $0x30] sm:$0xff]
        %v2491 = vld [vmem:[#allocation2 + $0x38] sm:$0xff]
        %v2492 = vld [vmem:[#allocation2 + $0x40] sm:$0xff]
        %v2493 = vld [vmem:[#allocation2 + $0x48] sm:$0xff]
        %v2494 = vld [vmem:[#allocation2 + $0x50] sm:$0xff]
        %v2495 = vld [vmem:[#allocation2 + $0x58] sm:$0xff]
        %v2496 = vld [vmem:[#allocation2 + $0x60] sm:$0xff]
        %v2497 = vld [vmem:[#allocation2 + $0x68] sm:$0xff]
        %v2498 = vld [vmem:[#allocation2 + $0x70] sm:$0xff]
        %v2499 = vld [vmem:[#allocation2 + $0x78] sm:$0xff]
        %v2500 = vld [vmem:[#allocation2 + $0x80] sm:$0xff]
        %v2501 = vld [vmem:[#allocation2 + $0x88] sm:$0xff]
        %v2502 = vld [vmem:[#allocation2 + $0x90] sm:$0xff]
        %v2503 = vld [vmem:[#allocation2 + $0x98] sm:$0xff]
        %v2504 = vld [vmem:[#allocation2 + $0xa0] sm:$0xff]
        %v2505 = vld [vmem:[#allocation2 + $0xa8] sm:$0xff]
        %v2506 = vld [vmem:[#allocation2 + $0xb0] sm:$0xff]
        %v2507 = vld [vmem:[#allocation2 + $0xb8] sm:$0xff]
        %v2508 = vld [vmem:[#allocation2 + $0xc0] sm:$0xff]
        %v2509 = vld [vmem:[#allocation2 + $0xc8] sm:$0xff]
        %v2510 = vld [vmem:[#allocation2 + $0xd0] sm:$0xff]
        %v2511 = vld [vmem:[#allocation2 + $0xd8] sm:$0xff]
        %v2512 = vld [vmem:[#allocation2 + $0xe0] sm:$0xff]
        %v2513 = vld [vmem:[#allocation2 + $0xe8] sm:$0xff]
        %v2514 = vld [vmem:[#allocation2 + $0xf0] sm:$0xff]
        %v2515 = vld [vmem:[#allocation2 + $0xf8] sm:$0xff]
        %v2516 = vld [vmem:[#allocation2 + $0x100] sm:$0xff]
        %v2517 = vld [vmem:[#allocation2 + $0x108] sm:$0xff]
        %v2518 = vld [vmem:[#allocation2 + $0x110] sm:$0xff]
        %v2519 = vld [vmem:[#allocation2 + $0x118] sm:$0xff]
        %v2520 = vld [vmem:[#allocation2 + $0x120] sm:$0xff]
        %v2521 = vld [vmem:[#allocation2 + $0x128] sm:$0xff]
        %v2522 = vld [vmem:[#allocation2 + $0x130] sm:$0xff]
        %v2523 = vld [vmem:[#allocation2 + $0x138] sm:$0xff]
        %v2524 = vld [vmem:[#allocation2 + $0x140] sm:$0xff]
        %v2525 = vld [vmem:[#allocation2 + $0x148] sm:$0xff]
        %v2526 = vld [vmem:[#allocation2 + $0x150] sm:$0xff]
        %v2527 = vld [vmem:[#allocation2 + $0x158] sm:$0xff]
        %v2528 = vld [vmem:[#allocation2 + $0x160] sm:$0xff]
        %v2529 = vld [vmem:[#allocation2 + $0x168] sm:$0xff]
        %v2530 = vld [vmem:[#allocation2 + $0x170] sm:$0xff]
        %v2531 = vld [vmem:[#allocation2 + $0x178] sm:$0xff]
        %v2532 = vld [vmem:[#allocation2 + $0x180] sm:$0xff]
        %v2533 = vld [vmem:[#allocation2 + $0x188] sm:$0xff]
        %v2534 = vld [vmem:[#allocation2 + $0x190] sm:$0xff]
        %v2535 = vld [vmem:[#allocation2 + $0x198] sm:$0xff]
        %v2536 = vld [vmem:[#allocation2 + $0x1a0] sm:$0xff]
        %v2537 = vld [vmem:[#allocation2 + $0x1a8] sm:$0xff]
        %v2538 = vld [vmem:[#allocation2 + $0x1b0] sm:$0xff]
        %v2539 = vld [vmem:[#allocation2 + $0x1b8] sm:$0xff]
        %v2540 = vld [vmem:[#allocation2 + $0x1c0] sm:$0xff]
        %v2541 = vld [vmem:[#allocation2 + $0x1c8] sm:$0xff]
        %v2542 = vld [vmem:[#allocation2 + $0x1d0] sm:$0xff]
        %v2543 = vld [vmem:[#allocation2 + $0x1d8] sm:$0xff]
        %v2544 = vld [vmem:[#allocation2 + $0x1e0] sm:$0xff]
        %v2545 = vld [vmem:[#allocation2 + $0x1e8] sm:$0xff]
        %v2546 = vld [vmem:[#allocation2 + $0x1f0] sm:$0xff]
        %v2547 = vld [vmem:[#allocation2 + $0x1f8] sm:$0xff]
        %v2548 = vld [vmem:[#allocation2 + $0x200] sm:$0xff]
        %v2549 = vld [vmem:[#allocation2 + $0x208] sm:$0xff]
        %v2550 = vld [vmem:[#allocation2 + $0x210] sm:$0xff]
        %v2551 = vld [vmem:[#allocation2 + $0x218] sm:$0xff]
        %v2552 = vld [vmem:[#allocation2 + $0x220] sm:$0xff]
        %v2553 = vld [vmem:[#allocation2 + $0x228] sm:$0xff]
        %v2554 = vld [vmem:[#allocation2 + $0x230] sm:$0xff]
        %v2555 = vld [vmem:[#allocation2 + $0x238] sm:$0xff]
        %v2556 = vld [vmem:[#allocation2 + $0x240] sm:$0xff]
        %v2557 = vld [vmem:[#allocation2 + $0x248] sm:$0xff]
        %v2558 = vld [vmem:[#allocation2 + $0x250] sm:$0xff]
        %v2559 = vld [vmem:[#allocation2 + $0x258] sm:$0xff]
        %v2560 = vld [vmem:[#allocation2 + $0x260] sm:$0xff]
        %v2561 = vld [vmem:[#allocation2 + $0x268] sm:$0xff]
        %v2562 = vld [vmem:[#allocation2 + $0x270] sm:$0xff]
        %v2563 = vld [vmem:[#allocation2 + $0x278] sm:$0xff]
        %v2564 = vld [vmem:[#allocation2 + $0x280] sm:$0xff]
        %v2565 = vld [vmem:[#allocation2 + $0x288] sm:$0xff]
        %v2566 = vld [vmem:[#allocation2 + $0x290] sm:$0xff]
        %v2567 = vld [vmem:[#allocation2 + $0x298] sm:$0xff]
        %v2568 = vld [vmem:[#allocation2 + $0x2a0] sm:$0xff]
        %v2569 = vld [vmem:[#allocation2 + $0x2a8] sm:$0xff]
        %v2570 = vld [vmem:[#allocation2 + $0x2b0] sm:$0xff]
        %v2571 = vld [vmem:[#allocation2 + $0x2b8] sm:$0xff]
        %v2572 = vld [vmem:[#allocation2 + $0x2c0] sm:$0xff]
        %v2573 = vld [vmem:[#allocation2 + $0x2c8] sm:$0xff]
        %v2574 = vld [vmem:[#allocation2 + $0x2d0] sm:$0xff]
        %v2575 = vld [vmem:[#allocation2 + $0x2d8] sm:$0xff]
        %v2576 = vld [vmem:[#allocation2 + $0x2e0] sm:$0xff]
        %v2577 = vld [vmem:[#allocation2 + $0x2e8] sm:$0xff]
        %v2578 = vld [vmem:[#allocation2 + $0x2f0] sm:$0xff]
        %v2579 = vld [vmem:[#allocation2 + $0x2f8] sm:$0xff]
        %v2580 = vld [vmem:[#allocation2 + $0x300] sm:$0xff]
        %v2581 = vld [vmem:[#allocation2 + $0x308] sm:$0xff]
        %v2582 = vld [vmem:[#allocation2 + $0x310] sm:$0xff]
        %v2583 = vld [vmem:[#allocation2 + $0x318] sm:$0xff]
        %v2584 = vld [vmem:[#allocation2 + $0x320] sm:$0xff]
        %v2585 = vld [vmem:[#allocation2 + $0x328] sm:$0xff]
        %v2586 = vld [vmem:[#allocation2 + $0x330] sm:$0xff]
        %v2587 = vld [vmem:[#allocation2 + $0x338] sm:$0xff]
        %v2588 = vld [vmem:[#allocation2 + $0x340] sm:$0xff]
        %v2589 = vld [vmem:[#allocation2 + $0x348] sm:$0xff]
        %v2590 = vld [vmem:[#allocation2 + $0x350] sm:$0xff]
        %v2591 = vld [vmem:[#allocation2 + $0x358] sm:$0xff]
        %v2592 = vld [vmem:[#allocation2 + $0x360] sm:$0xff]
        %v2593 = vld [vmem:[#allocation2 + $0x368] sm:$0xff]
        %v2594 = vld [vmem:[#allocation2 + $0x370] sm:$0xff]
        %v2595 = vld [vmem:[#allocation2 + $0x378] sm:$0xff]
        %v2596 = vld [vmem:[#allocation2 + $0x380] sm:$0xff]
        %v2597 = vld [vmem:[#allocation2 + $0x388] sm:$0xff]
        %v2598 = vld [vmem:[#allocation2 + $0x390] sm:$0xff]
        %v2599 = vld [vmem:[#allocation2 + $0x398] sm:$0xff]
        %v2600 = vld [vmem:[#allocation2 + $0x3a0] sm:$0xff]
        %v2601 = vld [vmem:[#allocation2 + $0x3a8] sm:$0xff]
        %v2602 = vld [vmem:[#allocation2 + $0x3b0] sm:$0xff]
        %v2603 = vld [vmem:[#allocation2 + $0x3b8] sm:$0xff]
        %v2604 = vld [vmem:[#allocation2 + $0x3c0] sm:$0xff]
        %v2605 = vld [vmem:[#allocation2 + $0x3c8] sm:$0xff]
        %v2606 = vld [vmem:[#allocation2 + $0x3d0] sm:$0xff]
        %v2607 = vld [vmem:[#allocation2 + $0x3d8] sm:$0xff]
        %v2608 = vld [vmem:[#allocation2 + $0x3e0] sm:$0xff]
        %v2609 = vld [vmem:[#allocation2 + $0x3e8] sm:$0xff]
        %v2610 = vld [vmem:[#allocation2 + $0x3f0] sm:$0xff]
        %v2611 = vld [vmem:[#allocation2 + $0x3f8] sm:$0xff]
        %v2612 = vld [vmem:[#allocation2 + $0x400] sm:$0xff]
        %v2613 = vld [vmem:[#allocation2 + $0x408] sm:$0xff]
        %v2614 = vld [vmem:[#allocation2 + $0x410] sm:$0xff]
        %v2615 = vld [vmem:[#allocation2 + $0x418] sm:$0xff]
        %v2616 = vld [vmem:[#allocation2 + $0x420] sm:$0xff]
        %v2617 = vld [vmem:[#allocation2 + $0x428] sm:$0xff]
        %v2618 = vld [vmem:[#allocation2 + $0x430] sm:$0xff]
        %v2619 = vld [vmem:[#allocation2 + $0x438] sm:$0xff]
        %v2620 = vld [vmem:[#allocation2 + $0x440] sm:$0xff]
        %v2621 = vld [vmem:[#allocation2 + $0x448] sm:$0xff]
        %v2622 = vld [vmem:[#allocation2 + $0x450] sm:$0xff]
        %v2623 = vld [vmem:[#allocation2 + $0x458] sm:$0xff]
        %v2624 = vld [vmem:[#allocation2 + $0x460] sm:$0xff]
        %v2625 = vld [vmem:[#allocation2 + $0x468] sm:$0xff]
        %v2626 = vld [vmem:[#allocation2 + $0x470] sm:$0xff]
        %v2627 = vld [vmem:[#allocation2 + $0x478] sm:$0xff]
        %v2628 = vld [vmem:[#allocation2 + $0x480] sm:$0xff]
        %v2629 = vld [vmem:[#allocation2 + $0x488] sm:$0xff]
        %v2630 = vld [vmem:[#allocation2 + $0x490] sm:$0xff]
        %v2631 = vld [vmem:[#allocation2 + $0x498] sm:$0xff]
        %v2632 = vld [vmem:[#allocation2 + $0x4a0] sm:$0xff]
        %v2633 = vld [vmem:[#allocation2 + $0x4a8] sm:$0xff]
        %v2634 = vld [vmem:[#allocation2 + $0x4b0] sm:$0xff]
        %v2635 = vld [vmem:[#allocation2 + $0x4b8] sm:$0xff]
        %v2636 = vld [vmem:[#allocation2 + $0x4c0] sm:$0xff]
        %v2637 = vld [vmem:[#allocation2 + $0x4c8] sm:$0xff]
        %v2638 = vld [vmem:[#allocation2 + $0x4d0] sm:$0xff]
        %v2639 = vld [vmem:[#allocation2 + $0x4d8] sm:$0xff]
        %v2640 = vld [vmem:[#allocation2 + $0x4e0] sm:$0xff]
        %v2641 = vld [vmem:[#allocation2 + $0x4e8] sm:$0xff]
        %v2642 = vld [vmem:[#allocation2 + $0x4f0] sm:$0xff]
        %v2643 = vld [vmem:[#allocation2 + $0x4f8] sm:$0xff]
        %v2644 = vld [vmem:[#allocation2 + $0x500] sm:$0xff]
        %v2645 = vld [vmem:[#allocation2 + $0x508] sm:$0xff]
        %v2646 = vld [vmem:[#allocation2 + $0x510] sm:$0xff]
        %v2647 = vld [vmem:[#allocation2 + $0x518] sm:$0xff]
        %v2648 = vld [vmem:[#allocation2 + $0x520] sm:$0xff]
        %v2649 = vld [vmem:[#allocation2 + $0x528] sm:$0xff]
        %v2650 = vld [vmem:[#allocation2 + $0x530] sm:$0xff]
        %v2651 = vld [vmem:[#allocation2 + $0x538] sm:$0xff]
        %v2652 = vld [vmem:[#allocation2 + $0x540] sm:$0xff]
        %v2653 = vld [vmem:[#allocation2 + $0x548] sm:$0xff]
        %v2654 = vld [vmem:[#allocation2 + $0x550] sm:$0xff]
        %v2655 = vld [vmem:[#allocation2 + $0x558] sm:$0xff]
        %v2656 = vld [vmem:[#allocation2 + $0x560] sm:$0xff]
        %v2657 = vld [vmem:[#allocation2 + $0x568] sm:$0xff]
        %v2658 = vld [vmem:[#allocation2 + $0x570] sm:$0xff]
        %v2659 = vld [vmem:[#allocation2 + $0x578] sm:$0xff]
        %v2660 = vld [vmem:[#allocation2 + $0x580] sm:$0xff]
        %v2661 = vld [vmem:[#allocation2 + $0x588] sm:$0xff]
        %v2662 = vld [vmem:[#allocation2 + $0x590] sm:$0xff]
        %v2663 = vld [vmem:[#allocation2 + $0x598] sm:$0xff]
        %v2664 = vld [vmem:[#allocation2 + $0x5a0] sm:$0xff]
        %v2665 = vld [vmem:[#allocation2 + $0x5a8] sm:$0xff]
        %v2666 = vld [vmem:[#allocation2 + $0x5b0] sm:$0xff]
        %v2667 = vld [vmem:[#allocation2 + $0x5b8] sm:$0xff]
        %v2668 = vld [vmem:[#allocation2 + $0x5c0] sm:$0xff]
        %v2669 = vld [vmem:[#allocation2 + $0x5c8] sm:$0xff]
        %v2670 = vld [vmem:[#allocation2 + $0x5d0] sm:$0xff]
        %v2671 = vld [vmem:[#allocation2 + $0x5d8] sm:$0xff]
        %v2672 = vld [vmem:[#allocation2 + $0x5e0] sm:$0xff]
        %v2673 = vld [vmem:[#allocation2 + $0x5e8] sm:$0xff]
        %v2674 = vld [vmem:[#allocation2 + $0x5f0] sm:$0xff]
        %v2675 = vld [vmem:[#allocation2 + $0x5f8] sm:$0xff]
        %v2676 = vld [vmem:[#allocation2 + $0x600] sm:$0xff]
        %v2677 = vld [vmem:[#allocation2 + $0x608] sm:$0xff]
        %v2678 = vld [vmem:[#allocation2 + $0x610] sm:$0xff]
        %v2679 = vld [vmem:[#allocation2 + $0x618] sm:$0xff]
        %v2680 = vld [vmem:[#allocation2 + $0x620] sm:$0xff]
        %v2681 = vld [vmem:[#allocation2 + $0x628] sm:$0xff]
        %v2682 = vld [vmem:[#allocation2 + $0x630] sm:$0xff]
        %v2683 = vld [vmem:[#allocation2 + $0x638] sm:$0xff]
        %v2684 = vld [vmem:[#allocation2 + $0x640] sm:$0xff]
        %v2685 = vld [vmem:[#allocation2 + $0x648] sm:$0xff]
        %v2686 = vld [vmem:[#allocation2 + $0x650] sm:$0xff]
        %v2687 = vld [vmem:[#allocation2 + $0x658] sm:$0xff]
        %v2688 = vld [vmem:[#allocation2 + $0x660] sm:$0xff]
        %v2689 = vld [vmem:[#allocation2 + $0x668] sm:$0xff]
        %v2690 = vld [vmem:[#allocation2 + $0x670] sm:$0xff]
        %v2691 = vld [vmem:[#allocation2 + $0x678] sm:$0xff]
        %v2692 = vld [vmem:[#allocation2 + $0x680] sm:$0xff]
        %v2693 = vld [vmem:[#allocation2 + $0x688] sm:$0xff]
        %v2694 = vld [vmem:[#allocation2 + $0x690] sm:$0xff]
        %v2695 = vld [vmem:[#allocation2 + $0x698] sm:$0xff]
        %v2696 = vld [vmem:[#allocation2 + $0x6a0] sm:$0xff]
        %v2697 = vld [vmem:[#allocation2 + $0x6a8] sm:$0xff]
        %v2698 = vld [vmem:[#allocation2 + $0x6b0] sm:$0xff]
        %v2699 = vld [vmem:[#allocation2 + $0x6b8] sm:$0xff]
        %v2700 = vld [vmem:[#allocation2 + $0x6c0] sm:$0xff]
        %v2701 = vld [vmem:[#allocation2 + $0x6c8] sm:$0xff]
        %v2702 = vld [vmem:[#allocation2 + $0x6d0] sm:$0xff]
        %v2703 = vld [vmem:[#allocation2 + $0x6d8] sm:$0xff]
        %v2704 = vld [vmem:[#allocation2 + $0x6e0] sm:$0xff]
        %v2705 = vld [vmem:[#allocation2 + $0x6e8] sm:$0xff]
        %v2706 = vld [vmem:[#allocation2 + $0x6f0] sm:$0xff]
        %v2707 = vld [vmem:[#allocation2 + $0x6f8] sm:$0xff]
        %v2708 = vld [vmem:[#allocation2 + $0x700] sm:$0xff]
        %v2709 = vld [vmem:[#allocation2 + $0x708] sm:$0xff]
        %v2710 = vld [vmem:[#allocation2 + $0x710] sm:$0xff]
        %v2711 = vld [vmem:[#allocation2 + $0x718] sm:$0xff]
        %v2712 = vld [vmem:[#allocation2 + $0x720] sm:$0xff]
        %v2713 = vld [vmem:[#allocation2 + $0x728] sm:$0xff]
        %v2714 = vld [vmem:[#allocation2 + $0x730] sm:$0xff]
        %v2715 = vld [vmem:[#allocation2 + $0x738] sm:$0xff]
        %v2716 = vld [vmem:[#allocation2 + $0x740] sm:$0xff]
        %v2717 = vld [vmem:[#allocation2 + $0x748] sm:$0xff]
        %v2718 = vld [vmem:[#allocation2 + $0x750] sm:$0xff]
        %v2719 = vld [vmem:[#allocation2 + $0x758] sm:$0xff]
        %v2720 = vld [vmem:[#allocation2 + $0x760] sm:$0xff]
        %v2721 = vld [vmem:[#allocation2 + $0x768] sm:$0xff]
        %v2722 = vld [vmem:[#allocation2 + $0x770] sm:$0xff]
        %v2723 = vld [vmem:[#allocation2 + $0x778] sm:$0xff]
        %v2724 = vld [vmem:[#allocation2 + $0x780] sm:$0xff]
        %v2725 = vld [vmem:[#allocation2 + $0x788] sm:$0xff]
        %v2726 = vld [vmem:[#allocation2 + $0x790] sm:$0xff]
        %v2727 = vld [vmem:[#allocation2 + $0x798] sm:$0xff]
        %v2728 = vld [vmem:[#allocation2 + $0x7a0] sm:$0xff]
        %v2729 = vld [vmem:[#allocation2 + $0x7a8] sm:$0xff]
        %v2730 = vld [vmem:[#allocation2 + $0x7b0] sm:$0xff]
        %v2731 = vld [vmem:[#allocation2 + $0x7b8] sm:$0xff]
        %v2732 = vld [vmem:[#allocation2 + $0x7c0] sm:$0xff]
        %v2733 = vld [vmem:[#allocation2 + $0x7c8] sm:$0xff]
        %v2734 = vld [vmem:[#allocation2 + $0x7d0] sm:$0xff]
        %v2735 = vld [vmem:[#allocation2 + $0x7d8] sm:$0xff]
        %v2736 = vld [vmem:[#allocation2 + $0x7e0] sm:$0xff]
        %v2737 = vld [vmem:[#allocation2 + $0x7e8] sm:$0xff]
        %v2738 = vld [vmem:[#allocation2 + $0x7f0] sm:$0xff]
        %v2739 = vld [vmem:[#allocation2 + $0x7f8] sm:$0xff]
        %v2740 = vld [vmem:[%s8] sm:$0xf]
        %v2742 = vlaneseq
        %v2743 = vshrl.u32 %v2742, 7
        %v2744 = vsub.s32 0, %v2743
        %v2745 = vrot.slane %v2740, %v2744
        %v2746 = vlaneseq
        %v2747 = vshrl.u32 %v2746, 7
        %v2748 = vsub.s32 1, %v2747
        %v2749 = vrot.slane %v2740, %v2748
        %v2750 = vlaneseq
        %v2751 = vshrl.u32 %v2750, 7
        %v2752 = vsub.s32 2, %v2751
        %v2753 = vrot.slane %v2740, %v2752
        %v2754 = vlaneseq
        %v2755 = vshrl.u32 %v2754, 7
        %v2756 = vsub.s32 3, %v2755
        %v2757 = vrot.slane %v2740, %v2756
        %2762 = vmatprep.subr.mxu0 %v2485
        %2763 = vmatpush1.msra.mxu0 %v2484
        %2764 = vmatprep.subr.mxu0 %v2489
        %2765 = vmatpush1.msra.mxu0 %v2488
        %2766 = vmatprep.subr.mxu0 %v2493
        %2767 = vmatpush1.msra.mxu0 %v2492
        %2768 = vmatprep.subr.mxu0 %v2497
        %2769 = vmatpush1.msra.mxu0 %v2496
        %2770 = vmatprep.subr.mxu0 %v2501
        %2771 = vmatpush1.msra.mxu0 %v2500
        %2772 = vmatprep.subr.mxu0 %v2505
        %2773 = vmatpush1.msra.mxu0 %v2504
        %2774 = vmatprep.subr.mxu0 %v2509
        %2775 = vmatpush1.msra.mxu0 %v2508
        %2776 = vmatprep.subr.mxu0 %v2513
        %2777 = vmatpush1.msra.mxu0 %v2512
        %2778 = vmatprep.subr.mxu0 %v2517
        %2779 = vmatpush1.msra.mxu0 %v2516
        %2780 = vmatprep.subr.mxu0 %v2521
        %2781 = vmatpush1.msra.mxu0 %v2520
        %2782 = vmatprep.subr.mxu0 %v2525
        %2783 = vmatpush1.msra.mxu0 %v2524
        %2784 = vmatprep.subr.mxu0 %v2529
        %2785 = vmatpush1.msra.mxu0 %v2528
        %2786 = vmatprep.subr.mxu0 %v2533
        %2787 = vmatpush1.msra.mxu0 %v2532
        %2788 = vmatprep.subr.mxu0 %v2537
        %2789 = vmatpush1.msra.mxu0 %v2536
        %2790 = vmatprep.subr.mxu0 %v2541
        %2791 = vmatpush1.msra.mxu0 %v2540
        %2792 = vmatprep.subr.mxu0 %v2545
        %2793 = vmatpush1.msra.mxu0 %v2544
        %2794 = vmatprep.subr.mxu0 %v2549
        %2795 = vmatpush1.msra.mxu0 %v2548
        %2796 = vmatprep.subr.mxu0 %v2553
        %2797 = vmatpush1.msra.mxu0 %v2552
        %2798 = vmatprep.subr.mxu0 %v2557
        %2799 = vmatpush1.msra.mxu0 %v2556
        %2800 = vmatprep.subr.mxu0 %v2561
        %2801 = vmatpush1.msra.mxu0 %v2560
        %2802 = vmatprep.subr.mxu0 %v2565
        %2803 = vmatpush1.msra.mxu0 %v2564
        %2804 = vmatprep.subr.mxu0 %v2569
        %2805 = vmatpush1.msra.mxu0 %v2568
        %2806 = vmatprep.subr.mxu0 %v2573
        %2807 = vmatpush1.msra.mxu0 %v2572
        %2808 = vmatprep.subr.mxu0 %v2577
        %2809 = vmatpush1.msra.mxu0 %v2576
        %2810 = vmatprep.subr.mxu0 %v2581
        %2811 = vmatpush1.msra.mxu0 %v2580
        %2812 = vmatprep.subr.mxu0 %v2585
        %2813 = vmatpush1.msra.mxu0 %v2584
        %2814 = vmatprep.subr.mxu0 %v2589
        %2815 = vmatpush1.msra.mxu0 %v2588
        %2816 = vmatprep.subr.mxu0 %v2593
        %2817 = vmatpush1.msra.mxu0 %v2592
        %2818 = vmatprep.subr.mxu0 %v2597
        %2819 = vmatpush1.msra.mxu0 %v2596
        %2820 = vmatprep.subr.mxu0 %v2601
        %2821 = vmatpush1.msra.mxu0 %v2600
        %2822 = vmatprep.subr.mxu0 %v2605
        %2823 = vmatpush1.msra.mxu0 %v2604
        %2824 = vmatprep.subr.mxu0 %v2609
        %2825 = vmatpush1.msra.mxu0 %v2608
        %2826 = vmatprep.mubr.f32.mxu0 %v2481
        %2827 = vmatmul.mubr.f32.gmra.mrb[0].mxu0 %v2480
        %v2828 = vpop.f32.mrb[0].mxu0
        %v2829 = vadd.f32 %v2745, %v2828
        %v2830 = vpop.f32.mrb[0].mxu0
        %v2831 = vadd.f32 %v2749, %v2830
        %2832 = vdwg.mxu0
        %2833 = vmatprep.subr.mxu0 %v2613
        %2834 = vmatpush1.msra.mxu0 %v2612
        %2835 = vmatprep.subr.mxu0 %v2617
        %2836 = vmatpush1.msra.mxu0 %v2616
        %2837 = vmatprep.subr.mxu0 %v2621
        %2838 = vmatpush1.msra.mxu0 %v2620
        %2839 = vmatprep.subr.mxu0 %v2625
        %2840 = vmatpush1.msra.mxu0 %v2624
        %2841 = vmatprep.subr.mxu0 %v2629
        %2842 = vmatpush1.msra.mxu0 %v2628
        %2843 = vmatprep.subr.mxu0 %v2633
        %2844 = vmatpush1.msra.mxu0 %v2632
        %2845 = vmatprep.subr.mxu0 %v2637
        %2846 = vmatpush1.msra.mxu0 %v2636
        %2847 = vmatprep.subr.mxu0 %v2641
        %2848 = vmatpush1.msra.mxu0 %v2640
        %2849 = vmatprep.subr.mxu0 %v2645
        %2850 = vmatpush1.msra.mxu0 %v2644
        %2851 = vmatprep.subr.mxu0 %v2649
        %2852 = vmatpush1.msra.mxu0 %v2648
        %2853 = vmatprep.subr.mxu0 %v2653
        %2854 = vmatpush1.msra.mxu0 %v2652
        %2855 = vmatprep.subr.mxu0 %v2657
        %2856 = vmatpush1.msra.mxu0 %v2656
        %2857 = vmatprep.subr.mxu0 %v2661
        %2858 = vmatpush1.msra.mxu0 %v2660
        %2859 = vmatprep.subr.mxu0 %v2665
        %2860 = vmatpush1.msra.mxu0 %v2664
        %2861 = vmatprep.subr.mxu0 %v2669
        %2862 = vmatpush1.msra.mxu0 %v2668
        %2863 = vmatprep.subr.mxu0 %v2673
        %2864 = vmatpush1.msra.mxu0 %v2672
        %2865 = vmatprep.subr.mxu0 %v2677
        %2866 = vmatpush1.msra.mxu0 %v2676
        %2867 = vmatprep.subr.mxu0 %v2681
        %2868 = vmatpush1.msra.mxu0 %v2680
        %2869 = vmatprep.subr.mxu0 %v2685
        %2870 = vmatpush1.msra.mxu0 %v2684
        %2871 = vmatprep.subr.mxu0 %v2689
        %2872 = vmatpush1.msra.mxu0 %v2688
        %2873 = vmatprep.subr.mxu0 %v2693
        %2874 = vmatpush1.msra.mxu0 %v2692
        %2875 = vmatprep.subr.mxu0 %v2697
        %2876 = vmatpush1.msra.mxu0 %v2696
        %2877 = vmatprep.subr.mxu0 %v2701
        %2878 = vmatpush1.msra.mxu0 %v2700
        %2879 = vmatprep.subr.mxu0 %v2705
        %2880 = vmatpush1.msra.mxu0 %v2704
        %2881 = vmatprep.subr.mxu0 %v2709
        %2882 = vmatpush1.msra.mxu0 %v2708
        %2883 = vmatprep.subr.mxu0 %v2713
        %2884 = vmatpush1.msra.mxu0 %v2712
        %2885 = vmatprep.subr.mxu0 %v2717
        %2886 = vmatpush1.msra.mxu0 %v2716
        %2887 = vmatprep.subr.mxu0 %v2721
        %2888 = vmatpush1.msra.mxu0 %v2720
        %2889 = vmatprep.subr.mxu0 %v2725
        %2890 = vmatpush1.msra.mxu0 %v2724
        %2891 = vmatprep.subr.mxu0 %v2729
        %2892 = vmatpush1.msra.mxu0 %v2728
        %2893 = vmatprep.subr.mxu0 %v2733
        %2894 = vmatpush1.msra.mxu0 %v2732
        %2895 = vmatprep.subr.mxu0 %v2737
        %2896 = vmatpush1.msra.mxu0 %v2736
        %2897 = vmatprep.mubr.f32.mxu0 %v2483
        %2898 = vmatmul.mubr.f32.gmra.mrb[0].mxu0 %v2482
        %v2899 = vpop.f32.mrb[0].mxu0
        %v2900 = vadd.f32 %v2829, %v2899
        %v2901 = vpop.f32.mrb[0].mxu0
        %v2902 = vadd.f32 %v2831, %v2901
        %2903 = vdwg.mxu0
        %2904 = vmatprep.subr.mxu0 %v2487
        %2905 = vmatpush1.msra.mxu0 %v2486
        %2906 = vmatprep.subr.mxu0 %v2491
        %2907 = vmatpush1.msra.mxu0 %v2490
        %2908 = vmatprep.subr.mxu0 %v2495
        %2909 = vmatpush1.msra.mxu0 %v2494
        %2910 = vmatprep.subr.mxu0 %v2499
        %2911 = vmatpush1.msra.mxu0 %v2498
        %2912 = vmatprep.subr.mxu0 %v2503
        %2913 = vmatpush1.msra.mxu0 %v2502
        %2914 = vmatprep.subr.mxu0 %v2507
        %2915 = vmatpush1.msra.mxu0 %v2506
        %2916 = vmatprep.subr.mxu0 %v2511
        %2917 = vmatpush1.msra.mxu0 %v2510
        %2918 = vmatprep.subr.mxu0 %v2515
        %2919 = vmatpush1.msra.mxu0 %v2514
        %2920 = vmatprep.subr.mxu0 %v2519
        %2921 = vmatpush1.msra.mxu0 %v2518
        %2922 = vmatprep.subr.mxu0 %v2523
        %2923 = vmatpush1.msra.mxu0 %v2522
        %2924 = vmatprep.subr.mxu0 %v2527
        %2925 = vmatpush1.msra.mxu0 %v2526
        %2926 = vmatprep.subr.mxu0 %v2531
        %2927 = vmatpush1.msra.mxu0 %v2530
        %2928 = vmatprep.subr.mxu0 %v2535
        %2929 = vmatpush1.msra.mxu0 %v2534
        %2930 = vmatprep.subr.mxu0 %v2539
        %2931 = vmatpush1.msra.mxu0 %v2538
        %2932 = vmatprep.subr.mxu0 %v2543
        %2933 = vmatpush1.msra.mxu0 %v2542
        %2934 = vmatprep.subr.mxu0 %v2547
        %2935 = vmatpush1.msra.mxu0 %v2546
        %2936 = vmatprep.subr.mxu0 %v2551
        %2937 = vmatpush1.msra.mxu0 %v2550
        %2938 = vmatprep.subr.mxu0 %v2555
        %2939 = vmatpush1.msra.mxu0 %v2554
        %2940 = vmatprep.subr.mxu0 %v2559
        %2941 = vmatpush1.msra.mxu0 %v2558
        %2942 = vmatprep.subr.mxu0 %v2563
        %2943 = vmatpush1.msra.mxu0 %v2562
        %2944 = vmatprep.subr.mxu0 %v2567
        %2945 = vmatpush1.msra.mxu0 %v2566
        %2946 = vmatprep.subr.mxu0 %v2571
        %2947 = vmatpush1.msra.mxu0 %v2570
        %2948 = vmatprep.subr.mxu0 %v2575
        %2949 = vmatpush1.msra.mxu0 %v2574
        %2950 = vmatprep.subr.mxu0 %v2579
        %2951 = vmatpush1.msra.mxu0 %v2578
        %2952 = vmatprep.subr.mxu0 %v2583
        %2953 = vmatpush1.msra.mxu0 %v2582
        %2954 = vmatprep.subr.mxu0 %v2587
        %2955 = vmatpush1.msra.mxu0 %v2586
        %2956 = vmatprep.subr.mxu0 %v2591
        %2957 = vmatpush1.msra.mxu0 %v2590
        %2958 = vmatprep.subr.mxu0 %v2595
        %2959 = vmatpush1.msra.mxu0 %v2594
        %2960 = vmatprep.subr.mxu0 %v2599
        %2961 = vmatpush1.msra.mxu0 %v2598
        %2962 = vmatprep.subr.mxu0 %v2603
        %2963 = vmatpush1.msra.mxu0 %v2602
        %2964 = vmatprep.subr.mxu0 %v2607
        %2965 = vmatpush1.msra.mxu0 %v2606
        %2966 = vmatprep.subr.mxu0 %v2611
        %2967 = vmatpush1.msra.mxu0 %v2610
        %2968 = vmatprep.mubr.f32.mxu0 %v2481
        %2969 = vmatmul.mubr.f32.gmra.mrb[0].mxu0 %v2480
        %v2970 = vpop.f32.mrb[0].mxu0
        %v2971 = vadd.f32 %v2753, %v2970
        %v2972 = vpop.f32.mrb[0].mxu0
        %v2973 = vadd.f32 %v2757, %v2972
        %2974 = vdwg.mxu0
        %2975 = vmatprep.subr.mxu0 %v2615
        %2976 = vmatpush1.msra.mxu0 %v2614
        %2977 = vmatprep.subr.mxu0 %v2619
        %2978 = vmatpush1.msra.mxu0 %v2618
        %2979 = vmatprep.subr.mxu0 %v2623
        %2980 = vmatpush1.msra.mxu0 %v2622
        %2981 = vmatprep.subr.mxu0 %v2627
        %2982 = vmatpush1.msra.mxu0 %v2626
        %2983 = vmatprep.subr.mxu0 %v2631
        %2984 = vmatpush1.msra.mxu0 %v2630
        %2985 = vmatprep.subr.mxu0 %v2635
        %2986 = vmatpush1.msra.mxu0 %v2634
        %2987 = vmatprep.subr.mxu0 %v2639
        %2988 = vmatpush1.msra.mxu0 %v2638
        %2989 = vmatprep.subr.mxu0 %v2643
        %2990 = vmatpush1.msra.mxu0 %v2642
        %2991 = vmatprep.subr.mxu0 %v2647
        %2992 = vmatpush1.msra.mxu0 %v2646
        %2993 = vmatprep.subr.mxu0 %v2651
        %2994 = vmatpush1.msra.mxu0 %v2650
        %2995 = vmatprep.subr.mxu0 %v2655
        %2996 = vmatpush1.msra.mxu0 %v2654
        %2997 = vmatprep.subr.mxu0 %v2659
        %2998 = vmatpush1.msra.mxu0 %v2658
        %2999 = vmatprep.subr.mxu0 %v2663
        %3000 = vmatpush1.msra.mxu0 %v2662
        %3001 = vmatprep.subr.mxu0 %v2667
        %3002 = vmatpush1.msra.mxu0 %v2666
        %3003 = vmatprep.subr.mxu0 %v2671
        %3004 = vmatpush1.msra.mxu0 %v2670
        %3005 = vmatprep.subr.mxu0 %v2675
        %3006 = vmatpush1.msra.mxu0 %v2674
        %3007 = vmatprep.subr.mxu0 %v2679
        %3008 = vmatpush1.msra.mxu0 %v2678
        %3009 = vmatprep.subr.mxu0 %v2683
        %3010 = vmatpush1.msra.mxu0 %v2682
        %3011 = vmatprep.subr.mxu0 %v2687
        %3012 = vmatpush1.msra.mxu0 %v2686
        %3013 = vmatprep.subr.mxu0 %v2691
        %3014 = vmatpush1.msra.mxu0 %v2690
        %3015 = vmatprep.subr.mxu0 %v2695
        %3016 = vmatpush1.msra.mxu0 %v2694
        %3017 = vmatprep.subr.mxu0 %v2699
        %3018 = vmatpush1.msra.mxu0 %v2698
        %3019 = vmatprep.subr.mxu0 %v2703
        %3020 = vmatpush1.msra.mxu0 %v2702
        %3021 = vmatprep.subr.mxu0 %v2707
        %3022 = vmatpush1.msra.mxu0 %v2706
        %3023 = vmatprep.subr.mxu0 %v2711
        %3024 = vmatpush1.msra.mxu0 %v2710
        %3025 = vmatprep.subr.mxu0 %v2715
        %3026 = vmatpush1.msra.mxu0 %v2714
        %3027 = vmatprep.subr.mxu0 %v2719
        %3028 = vmatpush1.msra.mxu0 %v2718
        %3029 = vmatprep.subr.mxu0 %v2723
        %3030 = vmatpush1.msra.mxu0 %v2722
        %3031 = vmatprep.subr.mxu0 %v2727
        %3032 = vmatpush1.msra.mxu0 %v2726
        %3033 = vmatprep.subr.mxu0 %v2731
        %3034 = vmatpush1.msra.mxu0 %v2730
        %3035 = vmatprep.subr.mxu0 %v2735
        %3036 = vmatpush1.msra.mxu0 %v2734
        %3037 = vmatprep.subr.mxu0 %v2739
        %3038 = vmatpush1.msra.mxu0 %v2738
        %3039 = vmatprep.mubr.f32.mxu0 %v2483
        %3040 = vmatmul.mubr.f32.gmra.mrb[0].mxu0 %v2482
        %v3041 = vpop.f32.mrb[0].mxu0
        %v3042 = vadd.f32 %v2971, %v3041
        %v3043 = vpop.f32.mrb[0].mxu0
        %v3044 = vadd.f32 %v2973, %v3043
        %3045 = vdwg.mxu0
        %v3046 = vtanh.pop %v2900
        %v3047 = vtanh.pop %v2902
        %v3048 = vtanh.pop %v3042
        %v3049 = vtanh.pop %v3044
        %v3050 = vld [vmem:[#allocation4] sm:$0xff]
        %v3051 = vld [vmem:[#allocation4 + $0x8] sm:$0xff]
        %v3052 = vld [vmem:[#allocation4 + $0x10] sm:$0xff]
        %v3053 = vld [vmem:[#allocation4 + $0x18] sm:$0xff]
        %v3054 = vld [vmem:[#allocation4 + $0x20] sm:$0xff]
        %v3055 = vld [vmem:[#allocation4 + $0x28] sm:$0xff]
        %v3056 = vld [vmem:[#allocation4 + $0x30] sm:$0xff]
        %v3057 = vld [vmem:[#allocation4 + $0x38] sm:$0xff]
        %v3058 = vld [vmem:[#allocation4 + $0x40] sm:$0xff]
        %v3059 = vld [vmem:[#allocation4 + $0x48] sm:$0xff]
        %v3060 = vld [vmem:[#allocation4 + $0x50] sm:$0xff]
        %v3061 = vld [vmem:[#allocation4 + $0x58] sm:$0xff]
        %v3062 = vld [vmem:[#allocation4 + $0x60] sm:$0xff]
        %v3063 = vld [vmem:[#allocation4 + $0x68] sm:$0xff]
        %v3064 = vld [vmem:[#allocation4 + $0x70] sm:$0xff]
        %v3065 = vld [vmem:[#allocation4 + $0x78] sm:$0xff]
        %v3066 = vld [vmem:[#allocation4 + $0x80] sm:$0xff]
        %v3067 = vld [vmem:[#allocation4 + $0x88] sm:$0xff]
        %v3068 = vld [vmem:[#allocation4 + $0x90] sm:$0xff]
        %v3069 = vld [vmem:[#allocation4 + $0x98] sm:$0xff]
        %v3070 = vld [vmem:[#allocation4 + $0xa0] sm:$0xff]
        %v3071 = vld [vmem:[#allocation4 + $0xa8] sm:$0xff]
        %v3072 = vld [vmem:[#allocation4 + $0xb0] sm:$0xff]
        %v3073 = vld [vmem:[#allocation4 + $0xb8] sm:$0xff]
        %v3074 = vld [vmem:[#allocation4 + $0xc0] sm:$0xff]
        %v3075 = vld [vmem:[#allocation4 + $0xc8] sm:$0xff]
        %v3076 = vld [vmem:[#allocation4 + $0xd0] sm:$0xff]
        %v3077 = vld [vmem:[#allocation4 + $0xd8] sm:$0xff]
        %v3078 = vld [vmem:[#allocation4 + $0xe0] sm:$0xff]
        %v3079 = vld [vmem:[#allocation4 + $0xe8] sm:$0xff]
        %v3080 = vld [vmem:[#allocation4 + $0xf0] sm:$0xff]
        %v3081 = vld [vmem:[#allocation4 + $0xf8] sm:$0xff]
        %v3082 = vld [vmem:[#allocation4 + $0x100] sm:$0xff]
        %v3083 = vld [vmem:[#allocation4 + $0x108] sm:$0xff]
        %v3084 = vld [vmem:[#allocation4 + $0x110] sm:$0xff]
        %v3085 = vld [vmem:[#allocation4 + $0x118] sm:$0xff]
        %v3086 = vld [vmem:[#allocation4 + $0x120] sm:$0xff]
        %v3087 = vld [vmem:[#allocation4 + $0x128] sm:$0xff]
        %v3088 = vld [vmem:[#allocation4 + $0x130] sm:$0xff]
        %v3089 = vld [vmem:[#allocation4 + $0x138] sm:$0xff]
        %v3090 = vld [vmem:[#allocation4 + $0x140] sm:$0xff]
        %v3091 = vld [vmem:[#allocation4 + $0x148] sm:$0xff]
        %v3092 = vld [vmem:[#allocation4 + $0x150] sm:$0xff]
        %v3093 = vld [vmem:[#allocation4 + $0x158] sm:$0xff]
        %v3094 = vld [vmem:[#allocation4 + $0x160] sm:$0xff]
        %v3095 = vld [vmem:[#allocation4 + $0x168] sm:$0xff]
        %v3096 = vld [vmem:[#allocation4 + $0x170] sm:$0xff]
        %v3097 = vld [vmem:[#allocation4 + $0x178] sm:$0xff]
        %v3098 = vld [vmem:[#allocation4 + $0x180] sm:$0xff]
        %v3099 = vld [vmem:[#allocation4 + $0x188] sm:$0xff]
        %v3100 = vld [vmem:[#allocation4 + $0x190] sm:$0xff]
        %v3101 = vld [vmem:[#allocation4 + $0x198] sm:$0xff]
        %v3102 = vld [vmem:[#allocation4 + $0x1a0] sm:$0xff]
        %v3103 = vld [vmem:[#allocation4 + $0x1a8] sm:$0xff]
        %v3104 = vld [vmem:[#allocation4 + $0x1b0] sm:$0xff]
        %v3105 = vld [vmem:[#allocation4 + $0x1b8] sm:$0xff]
        %v3106 = vld [vmem:[#allocation4 + $0x1c0] sm:$0xff]
        %v3107 = vld [vmem:[#allocation4 + $0x1c8] sm:$0xff]
        %v3108 = vld [vmem:[#allocation4 + $0x1d0] sm:$0xff]
        %v3109 = vld [vmem:[#allocation4 + $0x1d8] sm:$0xff]
        %v3110 = vld [vmem:[#allocation4 + $0x1e0] sm:$0xff]
        %v3111 = vld [vmem:[#allocation4 + $0x1e8] sm:$0xff]
        %v3112 = vld [vmem:[#allocation4 + $0x1f0] sm:$0xff]
        %v3113 = vld [vmem:[#allocation4 + $0x1f8] sm:$0xff]
        %v3114 = vld [vmem:[%s10] sm:$0x1]
        %v3116 = vlaneseq
        %v3117 = vshrl.u32 %v3116, 7
        %v3118 = vsub.s32 0, %v3117
        %v3119 = vrot.slane %v3114, %v3118
        %3121 = vmatprep.subr.mxu0 0.0
        %3122 = vmatpush1.msra.mxu0 %v3050
        %3123 = vmatprep.subr.mxu0 0.0
        %3124 = vmatpush1.msra.mxu0 %v3051
        %3125 = vmatprep.subr.mxu0 0.0
        %3126 = vmatpush1.msra.mxu0 %v3052
        %3127 = vmatprep.subr.mxu0 0.0
        %3128 = vmatpush1.msra.mxu0 %v3053
        %3129 = vmatprep.subr.mxu0 0.0
        %3130 = vmatpush1.msra.mxu0 %v3054
        %3131 = vmatprep.subr.mxu0 0.0
        %3132 = vmatpush1.msra.mxu0 %v3055
        %3133 = vmatprep.subr.mxu0 0.0
        %3134 = vmatpush1.msra.mxu0 %v3056
        %3135 = vmatprep.subr.mxu0 0.0
        %3136 = vmatpush1.msra.mxu0 %v3057
        %3137 = vmatprep.subr.mxu0 0.0
        %3138 = vmatpush1.msra.mxu0 %v3058
        %3139 = vmatprep.subr.mxu0 0.0
        %3140 = vmatpush1.msra.mxu0 %v3059
        %3141 = vmatprep.subr.mxu0 0.0
        %3142 = vmatpush1.msra.mxu0 %v3060
        %3143 = vmatprep.subr.mxu0 0.0
        %3144 = vmatpush1.msra.mxu0 %v3061
        %3145 = vmatprep.subr.mxu0 0.0
        %3146 = vmatpush1.msra.mxu0 %v3062
        %3147 = vmatprep.subr.mxu0 0.0
        %3148 = vmatpush1.msra.mxu0 %v3063
        %3149 = vmatprep.subr.mxu0 0.0
        %3150 = vmatpush1.msra.mxu0 %v3064
        %3151 = vmatprep.subr.mxu0 0.0
        %3152 = vmatpush1.msra.mxu0 %v3065
        %3153 = vmatprep.subr.mxu0 0.0
        %3154 = vmatpush1.msra.mxu0 %v3066
        %3155 = vmatprep.subr.mxu0 0.0
        %3156 = vmatpush1.msra.mxu0 %v3067
        %3157 = vmatprep.subr.mxu0 0.0
        %3158 = vmatpush1.msra.mxu0 %v3068
        %3159 = vmatprep.subr.mxu0 0.0
        %3160 = vmatpush1.msra.mxu0 %v3069
        %3161 = vmatprep.subr.mxu0 0.0
        %3162 = vmatpush1.msra.mxu0 %v3070
        %3163 = vmatprep.subr.mxu0 0.0
        %3164 = vmatpush1.msra.mxu0 %v3071
        %3165 = vmatprep.subr.mxu0 0.0
        %3166 = vmatpush1.msra.mxu0 %v3072
        %3167 = vmatprep.subr.mxu0 0.0
        %3168 = vmatpush1.msra.mxu0 %v3073
        %3169 = vmatprep.subr.mxu0 0.0
        %3170 = vmatpush1.msra.mxu0 %v3074
        %3171 = vmatprep.subr.mxu0 0.0
        %3172 = vmatpush1.msra.mxu0 %v3075
        %3173 = vmatprep.subr.mxu0 0.0
        %3174 = vmatpush1.msra.mxu0 %v3076
        %3175 = vmatprep.subr.mxu0 0.0
        %3176 = vmatpush1.msra.mxu0 %v3077
        %3177 = vmatprep.subr.mxu0 0.0
        %3178 = vmatpush1.msra.mxu0 %v3078
        %3179 = vmatprep.subr.mxu0 0.0
        %3180 = vmatpush1.msra.mxu0 %v3079
        %3181 = vmatprep.subr.mxu0 0.0
        %3182 = vmatpush1.msra.mxu0 %v3080
        %3183 = vmatprep.subr.mxu0 0.0
        %3184 = vmatpush1.msra.mxu0 %v3081
        %3185 = vmatprep.mubr.f32.mxu0 %v3047
        %3186 = vmatmul.mubr.f32.gmra.mrb[0].mxu0 %v3046
        %v3187 = vpop.f32.mrb[0].mxu0
        %v3188 = vadd.f32 %v3119, %v3187
        %v3189 = vpop.f32.mrb[0].mxu0
        %3190 = vdwg.mxu0
        %3191 = vmatprep.subr.mxu0 0.0
        %3192 = vmatpush1.msra.mxu0 %v3082
        %3193 = vmatprep.subr.mxu0 0.0
        %3194 = vmatpush1.msra.mxu0 %v3083
        %3195 = vmatprep.subr.mxu0 0.0
        %3196 = vmatpush1.msra.mxu0 %v3084
        %3197 = vmatprep.subr.mxu0 0.0
        %3198 = vmatpush1.msra.mxu0 %v3085
        %3199 = vmatprep.subr.mxu0 0.0
        %3200 = vmatpush1.msra.mxu0 %v3086
        %3201 = vmatprep.subr.mxu0 0.0
        %3202 = vmatpush1.msra.mxu0 %v3087
        %3203 = vmatprep.subr.mxu0 0.0
        %3204 = vmatpush1.msra.mxu0 %v3088
        %3205 = vmatprep.subr.mxu0 0.0
        %3206 = vmatpush1.msra.mxu0 %v3089
        %3207 = vmatprep.subr.mxu0 0.0
        %3208 = vmatpush1.msra.mxu0 %v3090
        %3209 = vmatprep.subr.mxu0 0.0
        %3210 = vmatpush1.msra.mxu0 %v3091
        %3211 = vmatprep.subr.mxu0 0.0
        %3212 = vmatpush1.msra.mxu0 %v3092
        %3213 = vmatprep.subr.mxu0 0.0
        %3214 = vmatpush1.msra.mxu0 %v3093
        %3215 = vmatprep.subr.mxu0 0.0
        %3216 = vmatpush1.msra.mxu0 %v3094
        %3217 = vmatprep.subr.mxu0 0.0
        %3218 = vmatpush1.msra.mxu0 %v3095
        %3219 = vmatprep.subr.mxu0 0.0
        %3220 = vmatpush1.msra.mxu0 %v3096
        %3221 = vmatprep.subr.mxu0 0.0
        %3222 = vmatpush1.msra.mxu0 %v3097
        %3223 = vmatprep.subr.mxu0 0.0
        %3224 = vmatpush1.msra.mxu0 %v3098
        %3225 = vmatprep.subr.mxu0 0.0
        %3226 = vmatpush1.msra.mxu0 %v3099
        %3227 = vmatprep.subr.mxu0 0.0
        %3228 = vmatpush1.msra.mxu0 %v3100
        %3229 = vmatprep.subr.mxu0 0.0
        %3230 = vmatpush1.msra.mxu0 %v3101
        %3231 = vmatprep.subr.mxu0 0.0
        %3232 = vmatpush1.msra.mxu0 %v3102
        %3233 = vmatprep.subr.mxu0 0.0
        %3234 = vmatpush1.msra.mxu0 %v3103
        %3235 = vmatprep.subr.mxu0 0.0
        %3236 = vmatpush1.msra.mxu0 %v3104
        %3237 = vmatprep.subr.mxu0 0.0
        %3238 = vmatpush1.msra.mxu0 %v3105
        %3239 = vmatprep.subr.mxu0 0.0
        %3240 = vmatpush1.msra.mxu0 %v3106
        %3241 = vmatprep.subr.mxu0 0.0
        %3242 = vmatpush1.msra.mxu0 %v3107
        %3243 = vmatprep.subr.mxu0 0.0
        %3244 = vmatpush1.msra.mxu0 %v3108
        %3245 = vmatprep.subr.mxu0 0.0
        %3246 = vmatpush1.msra.mxu0 %v3109
        %3247 = vmatprep.subr.mxu0 0.0
        %3248 = vmatpush1.msra.mxu0 %v3110
        %3249 = vmatprep.subr.mxu0 0.0
        %3250 = vmatpush1.msra.mxu0 %v3111
        %3251 = vmatprep.subr.mxu0 0.0
        %3252 = vmatpush1.msra.mxu0 %v3112
        %3253 = vmatprep.subr.mxu0 0.0
        %3254 = vmatpush1.msra.mxu0 %v3113
        %3255 = vmatprep.mubr.f32.mxu0 %v3049
        %3256 = vmatmul.mubr.f32.gmra.mrb[0].mxu0 %v3048
        %v3257 = vpop.f32.mrb[0].mxu0
        %v3258 = vadd.f32 %v3188, %v3257
        %v3259 = vpop.f32.mrb[0].mxu0
        %3260 = vdwg.mxu0
        %3261 = vst [vmem:[%s762] sm:$0xff] %v3258
        %v3262 = vld [vmem:[#allocation6] sm:$0xff]
        %v3263 = vld [vmem:[#allocation6 + $0x8] sm:$0xff]
        %v3264 = vld [vmem:[#allocation6 + $0x10] sm:$0xff]
        %v3265 = vld [vmem:[#allocation6 + $0x18] sm:$0xff]
        %v3266 = vld [vmem:[#allocation6 + $0x20] sm:$0xff]
        %v3267 = vld [vmem:[#allocation6 + $0x28] sm:$0xff]
        %v3268 = vld [vmem:[#allocation6 + $0x30] sm:$0xff]
        %v3269 = vld [vmem:[#allocation6 + $0x38] sm:$0xff]
        %v3270 = vld [vmem:[#allocation6 + $0x40] sm:$0xff]
        %v3271 = vld [vmem:[#allocation6 + $0x48] sm:$0xff]
        %v3272 = vld [vmem:[#allocation6 + $0x50] sm:$0xff]
        %v3273 = vld [vmem:[#allocation6 + $0x58] sm:$0xff]
        %v3274 = vld [vmem:[#allocation6 + $0x60] sm:$0xff]
        %v3275 = vld [vmem:[#allocation6 + $0x68] sm:$0xff]
        %v3276 = vld [vmem:[#allocation6 + $0x70] sm:$0xff]
        %v3277 = vld [vmem:[#allocation6 + $0x78] sm:$0xff]
        %v3278 = vld [vmem:[#allocation6 + $0x80] sm:$0xff]
        %v3279 = vld [vmem:[#allocation6 + $0x88] sm:$0xff]
        %v3280 = vld [vmem:[#allocation6 + $0x90] sm:$0xff]
        %v3281 = vld [vmem:[#allocation6 + $0x98] sm:$0xff]
        %v3282 = vld [vmem:[#allocation6 + $0xa0] sm:$0xff]
        %v3283 = vld [vmem:[#allocation6 + $0xa8] sm:$0xff]
        %v3284 = vld [vmem:[#allocation6 + $0xb0] sm:$0xff]
        %v3285 = vld [vmem:[#allocation6 + $0xb8] sm:$0xff]
        %v3286 = vld [vmem:[#allocation6 + $0xc0] sm:$0xff]
        %v3287 = vld [vmem:[#allocation6 + $0xc8] sm:$0xff]
        %v3288 = vld [vmem:[#allocation6 + $0xd0] sm:$0xff]
        %v3289 = vld [vmem:[#allocation6 + $0xd8] sm:$0xff]
        %v3290 = vld [vmem:[#allocation6 + $0xe0] sm:$0xff]
        %v3291 = vld [vmem:[#allocation6 + $0xe8] sm:$0xff]
        %v3292 = vld [vmem:[#allocation6 + $0xf0] sm:$0xff]
        %v3293 = vld [vmem:[#allocation6 + $0xf8] sm:$0xff]
        %v3294 = vld [vmem:[#allocation6 + $0x100] sm:$0xff]
        %v3295 = vld [vmem:[#allocation6 + $0x108] sm:$0xff]
        %v3296 = vld [vmem:[#allocation6 + $0x110] sm:$0xff]
        %v3297 = vld [vmem:[#allocation6 + $0x118] sm:$0xff]
        %v3298 = vld [vmem:[#allocation6 + $0x120] sm:$0xff]
        %v3299 = vld [vmem:[#allocation6 + $0x128] sm:$0xff]
        %v3300 = vld [vmem:[#allocation6 + $0x130] sm:$0xff]
        %v3301 = vld [vmem:[#allocation6 + $0x138] sm:$0xff]
        %v3302 = vld [vmem:[#allocation6 + $0x140] sm:$0xff]
        %v3303 = vld [vmem:[#allocation6 + $0x148] sm:$0xff]
        %v3304 = vld [vmem:[#allocation6 + $0x150] sm:$0xff]
        %v3305 = vld [vmem:[#allocation6 + $0x158] sm:$0xff]
        %v3306 = vld [vmem:[#allocation6 + $0x160] sm:$0xff]
        %v3307 = vld [vmem:[#allocation6 + $0x168] sm:$0xff]
        %v3308 = vld [vmem:[#allocation6 + $0x170] sm:$0xff]
        %v3309 = vld [vmem:[#allocation6 + $0x178] sm:$0xff]
        %v3310 = vld [vmem:[#allocation6 + $0x180] sm:$0xff]
        %v3311 = vld [vmem:[#allocation6 + $0x188] sm:$0xff]
        %v3312 = vld [vmem:[#allocation6 + $0x190] sm:$0xff]
        %v3313 = vld [vmem:[#allocation6 + $0x198] sm:$0xff]
        %v3314 = vld [vmem:[#allocation6 + $0x1a0] sm:$0xff]
        %v3315 = vld [vmem:[#allocation6 + $0x1a8] sm:$0xff]
        %v3316 = vld [vmem:[#allocation6 + $0x1b0] sm:$0xff]
        %v3317 = vld [vmem:[#allocation6 + $0x1b8] sm:$0xff]
        %v3318 = vld [vmem:[#allocation6 + $0x1c0] sm:$0xff]
        %v3319 = vld [vmem:[#allocation6 + $0x1c8] sm:$0xff]
        %v3320 = vld [vmem:[#allocation6 + $0x1d0] sm:$0xff]
        %v3321 = vld [vmem:[#allocation6 + $0x1d8] sm:$0xff]
        %v3322 = vld [vmem:[#allocation6 + $0x1e0] sm:$0xff]
        %v3323 = vld [vmem:[#allocation6 + $0x1e8] sm:$0xff]
        %v3324 = vld [vmem:[#allocation6 + $0x1f0] sm:$0xff]
        %v3325 = vld [vmem:[#allocation6 + $0x1f8] sm:$0xff]
        %v3326 = vld [vmem:[%s12] sm:$0xf]
        %v3328 = vlaneseq
        %v3329 = vshrl.u32 %v3328, 7
        %v3330 = vsub.s32 0, %v3329
        %v3331 = vrot.slane %v3326, %v3330
        %v3332 = vlaneseq
        %v3333 = vshrl.u32 %v3332, 7
        %v3334 = vsub.s32 1, %v3333
        %v3335 = vrot.slane %v3326, %v3334
        %v3336 = vlaneseq
        %v3337 = vshrl.u32 %v3336, 7
        %v3338 = vsub.s32 2, %v3337
        %v3339 = vrot.slane %v3326, %v3338
        %v3340 = vlaneseq
        %v3341 = vshrl.u32 %v3340, 7
        %v3342 = vsub.s32 3, %v3341
        %v3343 = vrot.slane %v3326, %v3342
        %3348 = vmatprep.subr.mxu0 %v3263
        %3349 = vmatpush1.msra.mxu0 %v3262
        %3350 = vmatprep.subr.mxu0 %v3267
        %3351 = vmatpush1.msra.mxu0 %v3266
        %3352 = vmatprep.subr.mxu0 %v3271
        %3353 = vmatpush1.msra.mxu0 %v3270
        %3354 = vmatprep.subr.mxu0 %v3275
        %3355 = vmatpush1.msra.mxu0 %v3274
        %3356 = vmatprep.subr.mxu0 %v3279
        %3357 = vmatpush1.msra.mxu0 %v3278
        %3358 = vmatprep.subr.mxu0 %v3283
        %3359 = vmatpush1.msra.mxu0 %v3282
        %3360 = vmatprep.subr.mxu0 %v3287
        %3361 = vmatpush1.msra.mxu0 %v3286
        %3362 = vmatprep.subr.mxu0 %v3291
        %3363 = vmatpush1.msra.mxu0 %v3290
        %3364 = vmatprep.subr.mxu0 %v3295
        %3365 = vmatpush1.msra.mxu0 %v3294
        %3366 = vmatprep.subr.mxu0 %v3299
        %3367 = vmatpush1.msra.mxu0 %v3298
        %3368 = vmatprep.subr.mxu0 %v3303
        %3369 = vmatpush1.msra.mxu0 %v3302
        %3370 = vmatprep.subr.mxu0 %v3307
        %3371 = vmatpush1.msra.mxu0 %v3306
        %3372 = vmatprep.subr.mxu0 %v3311
        %3373 = vmatpush1.msra.mxu0 %v3310
        %3374 = vmatprep.subr.mxu0 %v3315
        %3375 = vmatpush1.msra.mxu0 %v3314
        %3376 = vmatprep.subr.mxu0 %v3319
        %3377 = vmatpush1.msra.mxu0 %v3318
        %3378 = vmatprep.subr.mxu0 %v3323
        %3379 = vmatpush1.msra.mxu0 %v3322
        %3380 = vmatprep.subr.mxu0 0.0
        %3381 = vmatpush1.msra.mxu0 0.0
        %3382 = vmatprep.subr.mxu0 0.0
        %3383 = vmatpush1.msra.mxu0 0.0
        %3384 = vmatprep.subr.mxu0 0.0
        %3385 = vmatpush1.msra.mxu0 0.0
        %3386 = vmatprep.subr.mxu0 0.0
        %3387 = vmatpush1.msra.mxu0 0.0
        %3388 = vmatprep.subr.mxu0 0.0
        %3389 = vmatpush1.msra.mxu0 0.0
        %3390 = vmatprep.subr.mxu0 0.0
        %3391 = vmatpush1.msra.mxu0 0.0
        %3392 = vmatprep.subr.mxu0 0.0
        %3393 = vmatpush1.msra.mxu0 0.0
        %3394 = vmatprep.subr.mxu0 0.0
        %3395 = vmatpush1.msra.mxu0 0.0
        %3396 = vmatprep.subr.mxu0 0.0
        %3397 = vmatpush1.msra.mxu0 0.0
        %3398 = vmatprep.subr.mxu0 0.0
        %3399 = vmatpush1.msra.mxu0 0.0
        %3400 = vmatprep.subr.mxu0 0.0
        %3401 = vmatpush1.msra.mxu0 0.0
        %3402 = vmatprep.subr.mxu0 0.0
        %3403 = vmatpush1.msra.mxu0 0.0
        %3404 = vmatprep.subr.mxu0 0.0
        %3405 = vmatpush1.msra.mxu0 0.0
        %3406 = vmatprep.subr.mxu0 0.0
        %3407 = vmatpush1.msra.mxu0 0.0
        %3408 = vmatprep.subr.mxu0 0.0
        %3409 = vmatpush1.msra.mxu0 0.0
        %3410 = vmatprep.subr.mxu0 0.0
        %3411 = vmatpush1.msra.mxu0 0.0
        %3412 = vmatprep.mubr.f32.mxu0 0.0
        %3413 = vmatmul.mubr.f32.gmra.mrb[0].mxu0 %v3258
        %v3414 = vpop.f32.mrb[0].mxu0
        %v3415 = vadd.f32 %v3331, %v3414
        %v3416 = vpop.f32.mrb[0].mxu0
        %v3417 = vadd.f32 %v3335, %v3416
        %3418 = vdwg.mxu0
        %3419 = vmatprep.subr.mxu0 %v3265
        %3420 = vmatpush1.msra.mxu0 %v3264
        %3421 = vmatprep.subr.mxu0 %v3269
        %3422 = vmatpush1.msra.mxu0 %v3268
        %3423 = vmatprep.subr.mxu0 %v3273
        %3424 = vmatpush1.msra.mxu0 %v3272
        %3425 = vmatprep.subr.mxu0 %v3277
        %3426 = vmatpush1.msra.mxu0 %v3276
        %3427 = vmatprep.subr.mxu0 %v3281
        %3428 = vmatpush1.msra.mxu0 %v3280
        %3429 = vmatprep.subr.mxu0 %v3285
        %3430 = vmatpush1.msra.mxu0 %v3284
        %3431 = vmatprep.subr.mxu0 %v3289
        %3432 = vmatpush1.msra.mxu0 %v3288
        %3433 = vmatprep.subr.mxu0 %v3293
        %3434 = vmatpush1.msra.mxu0 %v3292
        %3435 = vmatprep.subr.mxu0 %v3297
        %3436 = vmatpush1.msra.mxu0 %v3296
        %3437 = vmatprep.subr.mxu0 %v3301
        %3438 = vmatpush1.msra.mxu0 %v3300
        %3439 = vmatprep.subr.mxu0 %v3305
        %3440 = vmatpush1.msra.mxu0 %v3304
        %3441 = vmatprep.subr.mxu0 %v3309
        %3442 = vmatpush1.msra.mxu0 %v3308
        %3443 = vmatprep.subr.mxu0 %v3313
        %3444 = vmatpush1.msra.mxu0 %v3312
        %3445 = vmatprep.subr.mxu0 %v3317
        %3446 = vmatpush1.msra.mxu0 %v3316
        %3447 = vmatprep.subr.mxu0 %v3321
        %3448 = vmatpush1.msra.mxu0 %v3320
        %3449 = vmatprep.subr.mxu0 %v3325
        %3450 = vmatpush1.msra.mxu0 %v3324
        %3451 = vmatprep.subr.mxu0 0.0
        %3452 = vmatpush1.msra.mxu0 0.0
        %3453 = vmatprep.subr.mxu0 0.0
        %3454 = vmatpush1.msra.mxu0 0.0
        %3455 = vmatprep.subr.mxu0 0.0
        %3456 = vmatpush1.msra.mxu0 0.0
        %3457 = vmatprep.subr.mxu0 0.0
        %3458 = vmatpush1.msra.mxu0 0.0
        %3459 = vmatprep.subr.mxu0 0.0
        %3460 = vmatpush1.msra.mxu0 0.0
        %3461 = vmatprep.subr.mxu0 0.0
        %3462 = vmatpush1.msra.mxu0 0.0
        %3463 = vmatprep.subr.mxu0 0.0
        %3464 = vmatpush1.msra.mxu0 0.0
        %3465 = vmatprep.subr.mxu0 0.0
        %3466 = vmatpush1.msra.mxu0 0.0
        %3467 = vmatprep.subr.mxu0 0.0
        %3468 = vmatpush1.msra.mxu0 0.0
        %3469 = vmatprep.subr.mxu0 0.0
        %3470 = vmatpush1.msra.mxu0 0.0
        %3471 = vmatprep.subr.mxu0 0.0
        %3472 = vmatpush1.msra.mxu0 0.0
        %3473 = vmatprep.subr.mxu0 0.0
        %3474 = vmatpush1.msra.mxu0 0.0
        %3475 = vmatprep.subr.mxu0 0.0
        %3476 = vmatpush1.msra.mxu0 0.0
        %3477 = vmatprep.subr.mxu0 0.0
        %3478 = vmatpush1.msra.mxu0 0.0
        %3479 = vmatprep.subr.mxu0 0.0
        %3480 = vmatpush1.msra.mxu0 0.0
        %3481 = vmatprep.subr.mxu0 0.0
        %3482 = vmatpush1.msra.mxu0 0.0
        %3483 = vmatprep.mubr.f32.mxu0 0.0
        %3484 = vmatmul.mubr.f32.gmra.mrb[0].mxu0 %v3258
        %v3485 = vpop.f32.mrb[0].mxu0
        %v3486 = vadd.f32 %v3339, %v3485
        %v3487 = vpop.f32.mrb[0].mxu0
        %v3488 = vadd.f32 %v3343, %v3487
        %3489 = vdwg.mxu0
        %v3490 = vtanh.pop %v3415
        %v3491 = vtanh.pop %v3417
        %v3492 = vtanh.pop %v3486
        %v3493 = vtanh.pop %v3488
        %v3494 = vld [vmem:[#allocation7] sm:$0xff]
        %v3495 = vld [vmem:[#allocation7 + $0x8] sm:$0xff]
        %v3496 = vld [vmem:[#allocation7 + $0x10] sm:$0xff]
        %v3497 = vld [vmem:[#allocation7 + $0x18] sm:$0xff]
        %v3498 = vld [vmem:[#allocation7 + $0x20] sm:$0xff]
        %v3499 = vld [vmem:[#allocation7 + $0x28] sm:$0xff]
        %v3500 = vld [vmem:[#allocation7 + $0x30] sm:$0xff]
        %v3501 = vld [vmem:[#allocation7 + $0x38] sm:$0xff]
        %v3502 = vld [vmem:[#allocation7 + $0x40] sm:$0xff]
        %v3503 = vld [vmem:[#allocation7 + $0x48] sm:$0xff]
        %v3504 = vld [vmem:[#allocation7 + $0x50] sm:$0xff]
        %v3505 = vld [vmem:[#allocation7 + $0x58] sm:$0xff]
        %v3506 = vld [vmem:[#allocation7 + $0x60] sm:$0xff]
        %v3507 = vld [vmem:[#allocation7 + $0x68] sm:$0xff]
        %v3508 = vld [vmem:[#allocation7 + $0x70] sm:$0xff]
        %v3509 = vld [vmem:[#allocation7 + $0x78] sm:$0xff]
        %v3510 = vld [vmem:[#allocation7 + $0x80] sm:$0xff]
        %v3511 = vld [vmem:[#allocation7 + $0x88] sm:$0xff]
        %v3512 = vld [vmem:[#allocation7 + $0x90] sm:$0xff]
        %v3513 = vld [vmem:[#allocation7 + $0x98] sm:$0xff]
        %v3514 = vld [vmem:[#allocation7 + $0xa0] sm:$0xff]
        %v3515 = vld [vmem:[#allocation7 + $0xa8] sm:$0xff]
        %v3516 = vld [vmem:[#allocation7 + $0xb0] sm:$0xff]
        %v3517 = vld [vmem:[#allocation7 + $0xb8] sm:$0xff]
        %v3518 = vld [vmem:[#allocation7 + $0xc0] sm:$0xff]
        %v3519 = vld [vmem:[#allocation7 + $0xc8] sm:$0xff]
        %v3520 = vld [vmem:[#allocation7 + $0xd0] sm:$0xff]
        %v3521 = vld [vmem:[#allocation7 + $0xd8] sm:$0xff]
        %v3522 = vld [vmem:[#allocation7 + $0xe0] sm:$0xff]
        %v3523 = vld [vmem:[#allocation7 + $0xe8] sm:$0xff]
        %v3524 = vld [vmem:[#allocation7 + $0xf0] sm:$0xff]
        %v3525 = vld [vmem:[#allocation7 + $0xf8] sm:$0xff]
        %v3526 = vld [vmem:[#allocation7 + $0x100] sm:$0xff]
        %v3527 = vld [vmem:[#allocation7 + $0x108] sm:$0xff]
        %v3528 = vld [vmem:[#allocation7 + $0x110] sm:$0xff]
        %v3529 = vld [vmem:[#allocation7 + $0x118] sm:$0xff]
        %v3530 = vld [vmem:[#allocation7 + $0x120] sm:$0xff]
        %v3531 = vld [vmem:[#allocation7 + $0x128] sm:$0xff]
        %v3532 = vld [vmem:[#allocation7 + $0x130] sm:$0xff]
        %v3533 = vld [vmem:[#allocation7 + $0x138] sm:$0xff]
        %v3534 = vld [vmem:[#allocation7 + $0x140] sm:$0xff]
        %v3535 = vld [vmem:[#allocation7 + $0x148] sm:$0xff]
        %v3536 = vld [vmem:[#allocation7 + $0x150] sm:$0xff]
        %v3537 = vld [vmem:[#allocation7 + $0x158] sm:$0xff]
        %v3538 = vld [vmem:[#allocation7 + $0x160] sm:$0xff]
        %v3539 = vld [vmem:[#allocation7 + $0x168] sm:$0xff]
        %v3540 = vld [vmem:[#allocation7 + $0x170] sm:$0xff]
        %v3541 = vld [vmem:[#allocation7 + $0x178] sm:$0xff]
        %v3542 = vld [vmem:[#allocation7 + $0x180] sm:$0xff]
        %v3543 = vld [vmem:[#allocation7 + $0x188] sm:$0xff]
        %v3544 = vld [vmem:[#allocation7 + $0x190] sm:$0xff]
        %v3545 = vld [vmem:[#allocation7 + $0x198] sm:$0xff]
        %v3546 = vld [vmem:[#allocation7 + $0x1a0] sm:$0xff]
        %v3547 = vld [vmem:[#allocation7 + $0x1a8] sm:$0xff]
        %v3548 = vld [vmem:[#allocation7 + $0x1b0] sm:$0xff]
        %v3549 = vld [vmem:[#allocation7 + $0x1b8] sm:$0xff]
        %v3550 = vld [vmem:[#allocation7 + $0x1c0] sm:$0xff]
        %v3551 = vld [vmem:[#allocation7 + $0x1c8] sm:$0xff]
        %v3552 = vld [vmem:[#allocation7 + $0x1d0] sm:$0xff]
        %v3553 = vld [vmem:[#allocation7 + $0x1d8] sm:$0xff]
        %v3554 = vld [vmem:[#allocation7 + $0x1e0] sm:$0xff]
        %v3555 = vld [vmem:[#allocation7 + $0x1e8] sm:$0xff]
        %v3556 = vld [vmem:[#allocation7 + $0x1f0] sm:$0xff]
        %v3557 = vld [vmem:[#allocation7 + $0x1f8] sm:$0xff]
        %v3558 = vld [vmem:[#allocation7 + $0x200] sm:$0xff]
        %v3559 = vld [vmem:[#allocation7 + $0x208] sm:$0xff]
        %v3560 = vld [vmem:[#allocation7 + $0x210] sm:$0xff]
        %v3561 = vld [vmem:[#allocation7 + $0x218] sm:$0xff]
        %v3562 = vld [vmem:[#allocation7 + $0x220] sm:$0xff]
        %v3563 = vld [vmem:[#allocation7 + $0x228] sm:$0xff]
        %v3564 = vld [vmem:[#allocation7 + $0x230] sm:$0xff]
        %v3565 = vld [vmem:[#allocation7 + $0x238] sm:$0xff]
        %v3566 = vld [vmem:[#allocation7 + $0x240] sm:$0xff]
        %v3567 = vld [vmem:[#allocation7 + $0x248] sm:$0xff]
        %v3568 = vld [vmem:[#allocation7 + $0x250] sm:$0xff]
        %v3569 = vld [vmem:[#allocation7 + $0x258] sm:$0xff]
        %v3570 = vld [vmem:[#allocation7 + $0x260] sm:$0xff]
        %v3571 = vld [vmem:[#allocation7 + $0x268] sm:$0xff]
        %v3572 = vld [vmem:[#allocation7 + $0x270] sm:$0xff]
        %v3573 = vld [vmem:[#allocation7 + $0x278] sm:$0xff]
        %v3574 = vld [vmem:[#allocation7 + $0x280] sm:$0xff]
        %v3575 = vld [vmem:[#allocation7 + $0x288] sm:$0xff]
        %v3576 = vld [vmem:[#allocation7 + $0x290] sm:$0xff]
        %v3577 = vld [vmem:[#allocation7 + $0x298] sm:$0xff]
        %v3578 = vld [vmem:[#allocation7 + $0x2a0] sm:$0xff]
        %v3579 = vld [vmem:[#allocation7 + $0x2a8] sm:$0xff]
        %v3580 = vld [vmem:[#allocation7 + $0x2b0] sm:$0xff]
        %v3581 = vld [vmem:[#allocation7 + $0x2b8] sm:$0xff]
        %v3582 = vld [vmem:[#allocation7 + $0x2c0] sm:$0xff]
        %v3583 = vld [vmem:[#allocation7 + $0x2c8] sm:$0xff]
        %v3584 = vld [vmem:[#allocation7 + $0x2d0] sm:$0xff]
        %v3585 = vld [vmem:[#allocation7 + $0x2d8] sm:$0xff]
        %v3586 = vld [vmem:[#allocation7 + $0x2e0] sm:$0xff]
        %v3587 = vld [vmem:[#allocation7 + $0x2e8] sm:$0xff]
        %v3588 = vld [vmem:[#allocation7 + $0x2f0] sm:$0xff]
        %v3589 = vld [vmem:[#allocation7 + $0x2f8] sm:$0xff]
        %v3590 = vld [vmem:[#allocation7 + $0x300] sm:$0xff]
        %v3591 = vld [vmem:[#allocation7 + $0x308] sm:$0xff]
        %v3592 = vld [vmem:[#allocation7 + $0x310] sm:$0xff]
        %v3593 = vld [vmem:[#allocation7 + $0x318] sm:$0xff]
        %v3594 = vld [vmem:[#allocation7 + $0x320] sm:$0xff]
        %v3595 = vld [vmem:[#allocation7 + $0x328] sm:$0xff]
        %v3596 = vld [vmem:[#allocation7 + $0x330] sm:$0xff]
        %v3597 = vld [vmem:[#allocation7 + $0x338] sm:$0xff]
        %v3598 = vld [vmem:[#allocation7 + $0x340] sm:$0xff]
        %v3599 = vld [vmem:[#allocation7 + $0x348] sm:$0xff]
        %v3600 = vld [vmem:[#allocation7 + $0x350] sm:$0xff]
        %v3601 = vld [vmem:[#allocation7 + $0x358] sm:$0xff]
        %v3602 = vld [vmem:[#allocation7 + $0x360] sm:$0xff]
        %v3603 = vld [vmem:[#allocation7 + $0x368] sm:$0xff]
        %v3604 = vld [vmem:[#allocation7 + $0x370] sm:$0xff]
        %v3605 = vld [vmem:[#allocation7 + $0x378] sm:$0xff]
        %v3606 = vld [vmem:[#allocation7 + $0x380] sm:$0xff]
        %v3607 = vld [vmem:[#allocation7 + $0x388] sm:$0xff]
        %v3608 = vld [vmem:[#allocation7 + $0x390] sm:$0xff]
        %v3609 = vld [vmem:[#allocation7 + $0x398] sm:$0xff]
        %v3610 = vld [vmem:[#allocation7 + $0x3a0] sm:$0xff]
        %v3611 = vld [vmem:[#allocation7 + $0x3a8] sm:$0xff]
        %v3612 = vld [vmem:[#allocation7 + $0x3b0] sm:$0xff]
        %v3613 = vld [vmem:[#allocation7 + $0x3b8] sm:$0xff]
        %v3614 = vld [vmem:[#allocation7 + $0x3c0] sm:$0xff]
        %v3615 = vld [vmem:[#allocation7 + $0x3c8] sm:$0xff]
        %v3616 = vld [vmem:[#allocation7 + $0x3d0] sm:$0xff]
        %v3617 = vld [vmem:[#allocation7 + $0x3d8] sm:$0xff]
        %v3618 = vld [vmem:[#allocation7 + $0x3e0] sm:$0xff]
        %v3619 = vld [vmem:[#allocation7 + $0x3e8] sm:$0xff]
        %v3620 = vld [vmem:[#allocation7 + $0x3f0] sm:$0xff]
        %v3621 = vld [vmem:[#allocation7 + $0x3f8] sm:$0xff]
        %v3622 = vld [vmem:[#allocation7 + $0x400] sm:$0xff]
        %v3623 = vld [vmem:[#allocation7 + $0x408] sm:$0xff]
        %v3624 = vld [vmem:[#allocation7 + $0x410] sm:$0xff]
        %v3625 = vld [vmem:[#allocation7 + $0x418] sm:$0xff]
        %v3626 = vld [vmem:[#allocation7 + $0x420] sm:$0xff]
        %v3627 = vld [vmem:[#allocation7 + $0x428] sm:$0xff]
        %v3628 = vld [vmem:[#allocation7 + $0x430] sm:$0xff]
        %v3629 = vld [vmem:[#allocation7 + $0x438] sm:$0xff]
        %v3630 = vld [vmem:[#allocation7 + $0x440] sm:$0xff]
        %v3631 = vld [vmem:[#allocation7 + $0x448] sm:$0xff]
        %v3632 = vld [vmem:[#allocation7 + $0x450] sm:$0xff]
        %v3633 = vld [vmem:[#allocation7 + $0x458] sm:$0xff]
        %v3634 = vld [vmem:[#allocation7 + $0x460] sm:$0xff]
        %v3635 = vld [vmem:[#allocation7 + $0x468] sm:$0xff]
        %v3636 = vld [vmem:[#allocation7 + $0x470] sm:$0xff]
        %v3637 = vld [vmem:[#allocation7 + $0x478] sm:$0xff]
        %v3638 = vld [vmem:[#allocation7 + $0x480] sm:$0xff]
        %v3639 = vld [vmem:[#allocation7 + $0x488] sm:$0xff]
        %v3640 = vld [vmem:[#allocation7 + $0x490] sm:$0xff]
        %v3641 = vld [vmem:[#allocation7 + $0x498] sm:$0xff]
        %v3642 = vld [vmem:[#allocation7 + $0x4a0] sm:$0xff]
        %v3643 = vld [vmem:[#allocation7 + $0x4a8] sm:$0xff]
        %v3644 = vld [vmem:[#allocation7 + $0x4b0] sm:$0xff]
        %v3645 = vld [vmem:[#allocation7 + $0x4b8] sm:$0xff]
        %v3646 = vld [vmem:[#allocation7 + $0x4c0] sm:$0xff]
        %v3647 = vld [vmem:[#allocation7 + $0x4c8] sm:$0xff]
        %v3648 = vld [vmem:[#allocation7 + $0x4d0] sm:$0xff]
        %v3649 = vld [vmem:[#allocation7 + $0x4d8] sm:$0xff]
        %v3650 = vld [vmem:[#allocation7 + $0x4e0] sm:$0xff]
        %v3651 = vld [vmem:[#allocation7 + $0x4e8] sm:$0xff]
        %v3652 = vld [vmem:[#allocation7 + $0x4f0] sm:$0xff]
        %v3653 = vld [vmem:[#allocation7 + $0x4f8] sm:$0xff]
        %v3654 = vld [vmem:[#allocation7 + $0x500] sm:$0xff]
        %v3655 = vld [vmem:[#allocation7 + $0x508] sm:$0xff]
        %v3656 = vld [vmem:[#allocation7 + $0x510] sm:$0xff]
        %v3657 = vld [vmem:[#allocation7 + $0x518] sm:$0xff]
        %v3658 = vld [vmem:[#allocation7 + $0x520] sm:$0xff]
        %v3659 = vld [vmem:[#allocation7 + $0x528] sm:$0xff]
        %v3660 = vld [vmem:[#allocation7 + $0x530] sm:$0xff]
        %v3661 = vld [vmem:[#allocation7 + $0x538] sm:$0xff]
        %v3662 = vld [vmem:[#allocation7 + $0x540] sm:$0xff]
        %v3663 = vld [vmem:[#allocation7 + $0x548] sm:$0xff]
        %v3664 = vld [vmem:[#allocation7 + $0x550] sm:$0xff]
        %v3665 = vld [vmem:[#allocation7 + $0x558] sm:$0xff]
        %v3666 = vld [vmem:[#allocation7 + $0x560] sm:$0xff]
        %v3667 = vld [vmem:[#allocation7 + $0x568] sm:$0xff]
        %v3668 = vld [vmem:[#allocation7 + $0x570] sm:$0xff]
        %v3669 = vld [vmem:[#allocation7 + $0x578] sm:$0xff]
        %v3670 = vld [vmem:[#allocation7 + $0x580] sm:$0xff]
        %v3671 = vld [vmem:[#allocation7 + $0x588] sm:$0xff]
        %v3672 = vld [vmem:[#allocation7 + $0x590] sm:$0xff]
        %v3673 = vld [vmem:[#allocation7 + $0x598] sm:$0xff]
        %v3674 = vld [vmem:[#allocation7 + $0x5a0] sm:$0xff]
        %v3675 = vld [vmem:[#allocation7 + $0x5a8] sm:$0xff]
        %v3676 = vld [vmem:[#allocation7 + $0x5b0] sm:$0xff]
        %v3677 = vld [vmem:[#allocation7 + $0x5b8] sm:$0xff]
        %v3678 = vld [vmem:[#allocation7 + $0x5c0] sm:$0xff]
        %v3679 = vld [vmem:[#allocation7 + $0x5c8] sm:$0xff]
        %v3680 = vld [vmem:[#allocation7 + $0x5d0] sm:$0xff]
        %v3681 = vld [vmem:[#allocation7 + $0x5d8] sm:$0xff]
        %v3682 = vld [vmem:[#allocation7 + $0x5e0] sm:$0xff]
        %v3683 = vld [vmem:[#allocation7 + $0x5e8] sm:$0xff]
        %v3684 = vld [vmem:[#allocation7 + $0x5f0] sm:$0xff]
        %v3685 = vld [vmem:[#allocation7 + $0x5f8] sm:$0xff]
        %v3686 = vld [vmem:[#allocation7 + $0x600] sm:$0xff]
        %v3687 = vld [vmem:[#allocation7 + $0x608] sm:$0xff]
        %v3688 = vld [vmem:[#allocation7 + $0x610] sm:$0xff]
        %v3689 = vld [vmem:[#allocation7 + $0x618] sm:$0xff]
        %v3690 = vld [vmem:[#allocation7 + $0x620] sm:$0xff]
        %v3691 = vld [vmem:[#allocation7 + $0x628] sm:$0xff]
        %v3692 = vld [vmem:[#allocation7 + $0x630] sm:$0xff]
        %v3693 = vld [vmem:[#allocation7 + $0x638] sm:$0xff]
        %v3694 = vld [vmem:[#allocation7 + $0x640] sm:$0xff]
        %v3695 = vld [vmem:[#allocation7 + $0x648] sm:$0xff]
        %v3696 = vld [vmem:[#allocation7 + $0x650] sm:$0xff]
        %v3697 = vld [vmem:[#allocation7 + $0x658] sm:$0xff]
        %v3698 = vld [vmem:[#allocation7 + $0x660] sm:$0xff]
        %v3699 = vld [vmem:[#allocation7 + $0x668] sm:$0xff]
        %v3700 = vld [vmem:[#allocation7 + $0x670] sm:$0xff]
        %v3701 = vld [vmem:[#allocation7 + $0x678] sm:$0xff]
        %v3702 = vld [vmem:[#allocation7 + $0x680] sm:$0xff]
        %v3703 = vld [vmem:[#allocation7 + $0x688] sm:$0xff]
        %v3704 = vld [vmem:[#allocation7 + $0x690] sm:$0xff]
        %v3705 = vld [vmem:[#allocation7 + $0x698] sm:$0xff]
        %v3706 = vld [vmem:[#allocation7 + $0x6a0] sm:$0xff]
        %v3707 = vld [vmem:[#allocation7 + $0x6a8] sm:$0xff]
        %v3708 = vld [vmem:[#allocation7 + $0x6b0] sm:$0xff]
        %v3709 = vld [vmem:[#allocation7 + $0x6b8] sm:$0xff]
        %v3710 = vld [vmem:[#allocation7 + $0x6c0] sm:$0xff]
        %v3711 = vld [vmem:[#allocation7 + $0x6c8] sm:$0xff]
        %v3712 = vld [vmem:[#allocation7 + $0x6d0] sm:$0xff]
        %v3713 = vld [vmem:[#allocation7 + $0x6d8] sm:$0xff]
        %v3714 = vld [vmem:[#allocation7 + $0x6e0] sm:$0xff]
        %v3715 = vld [vmem:[#allocation7 + $0x6e8] sm:$0xff]
        %v3716 = vld [vmem:[#allocation7 + $0x6f0] sm:$0xff]
        %v3717 = vld [vmem:[#allocation7 + $0x6f8] sm:$0xff]
        %v3718 = vld [vmem:[#allocation7 + $0x700] sm:$0xff]
        %v3719 = vld [vmem:[#allocation7 + $0x708] sm:$0xff]
        %v3720 = vld [vmem:[#allocation7 + $0x710] sm:$0xff]
        %v3721 = vld [vmem:[#allocation7 + $0x718] sm:$0xff]
        %v3722 = vld [vmem:[#allocation7 + $0x720] sm:$0xff]
        %v3723 = vld [vmem:[#allocation7 + $0x728] sm:$0xff]
        %v3724 = vld [vmem:[#allocation7 + $0x730] sm:$0xff]
        %v3725 = vld [vmem:[#allocation7 + $0x738] sm:$0xff]
        %v3726 = vld [vmem:[#allocation7 + $0x740] sm:$0xff]
        %v3727 = vld [vmem:[#allocation7 + $0x748] sm:$0xff]
        %v3728 = vld [vmem:[#allocation7 + $0x750] sm:$0xff]
        %v3729 = vld [vmem:[#allocation7 + $0x758] sm:$0xff]
        %v3730 = vld [vmem:[#allocation7 + $0x760] sm:$0xff]
        %v3731 = vld [vmem:[#allocation7 + $0x768] sm:$0xff]
        %v3732 = vld [vmem:[#allocation7 + $0x770] sm:$0xff]
        %v3733 = vld [vmem:[#allocation7 + $0x778] sm:$0xff]
        %v3734 = vld [vmem:[#allocation7 + $0x780] sm:$0xff]
        %v3735 = vld [vmem:[#allocation7 + $0x788] sm:$0xff]
        %v3736 = vld [vmem:[#allocation7 + $0x790] sm:$0xff]
        %v3737 = vld [vmem:[#allocation7 + $0x798] sm:$0xff]
        %v3738 = vld [vmem:[#allocation7 + $0x7a0] sm:$0xff]
        %v3739 = vld [vmem:[#allocation7 + $0x7a8] sm:$0xff]
        %v3740 = vld [vmem:[#allocation7 + $0x7b0] sm:$0xff]
        %v3741 = vld [vmem:[#allocation7 + $0x7b8] sm:$0xff]
        %v3742 = vld [vmem:[#allocation7 + $0x7c0] sm:$0xff]
        %v3743 = vld [vmem:[#allocation7 + $0x7c8] sm:$0xff]
        %v3744 = vld [vmem:[#allocation7 + $0x7d0] sm:$0xff]
        %v3745 = vld [vmem:[#allocation7 + $0x7d8] sm:$0xff]
        %v3746 = vld [vmem:[#allocation7 + $0x7e0] sm:$0xff]
        %v3747 = vld [vmem:[#allocation7 + $0x7e8] sm:$0xff]
        %v3748 = vld [vmem:[#allocation7 + $0x7f0] sm:$0xff]
        %v3749 = vld [vmem:[#allocation7 + $0x7f8] sm:$0xff]
        %v3750 = vld [vmem:[%s14] sm:$0xf]
        %v3752 = vlaneseq
        %v3753 = vshrl.u32 %v3752, 7
        %v3754 = vsub.s32 0, %v3753
        %v3755 = vrot.slane %v3750, %v3754
        %v3756 = vlaneseq
        %v3757 = vshrl.u32 %v3756, 7
        %v3758 = vsub.s32 1, %v3757
        %v3759 = vrot.slane %v3750, %v3758
        %v3760 = vlaneseq
        %v3761 = vshrl.u32 %v3760, 7
        %v3762 = vsub.s32 2, %v3761
        %v3763 = vrot.slane %v3750, %v3762
        %v3764 = vlaneseq
        %v3765 = vshrl.u32 %v3764, 7
        %v3766 = vsub.s32 3, %v3765
        %v3767 = vrot.slane %v3750, %v3766
        %3772 = vmatprep.subr.mxu0 %v3495
        %3773 = vmatpush1.msra.mxu0 %v3494
        %3774 = vmatprep.subr.mxu0 %v3499
        %3775 = vmatpush1.msra.mxu0 %v3498
        %3776 = vmatprep.subr.mxu0 %v3503
        %3777 = vmatpush1.msra.mxu0 %v3502
        %3778 = vmatprep.subr.mxu0 %v3507
        %3779 = vmatpush1.msra.mxu0 %v3506
        %3780 = vmatprep.subr.mxu0 %v3511
        %3781 = vmatpush1.msra.mxu0 %v3510
        %3782 = vmatprep.subr.mxu0 %v3515
        %3783 = vmatpush1.msra.mxu0 %v3514
        %3784 = vmatprep.subr.mxu0 %v3519
        %3785 = vmatpush1.msra.mxu0 %v3518
        %3786 = vmatprep.subr.mxu0 %v3523
        %3787 = vmatpush1.msra.mxu0 %v3522
        %3788 = vmatprep.subr.mxu0 %v3527
        %3789 = vmatpush1.msra.mxu0 %v3526
        %3790 = vmatprep.subr.mxu0 %v3531
        %3791 = vmatpush1.msra.mxu0 %v3530
        %3792 = vmatprep.subr.mxu0 %v3535
        %3793 = vmatpush1.msra.mxu0 %v3534
        %3794 = vmatprep.subr.mxu0 %v3539
        %3795 = vmatpush1.msra.mxu0 %v3538
        %3796 = vmatprep.subr.mxu0 %v3543
        %3797 = vmatpush1.msra.mxu0 %v3542
        %3798 = vmatprep.subr.mxu0 %v3547
        %3799 = vmatpush1.msra.mxu0 %v3546
        %3800 = vmatprep.subr.mxu0 %v3551
        %3801 = vmatpush1.msra.mxu0 %v3550
        %3802 = vmatprep.subr.mxu0 %v3555
        %3803 = vmatpush1.msra.mxu0 %v3554
        %3804 = vmatprep.subr.mxu0 %v3559
        %3805 = vmatpush1.msra.mxu0 %v3558
        %3806 = vmatprep.subr.mxu0 %v3563
        %3807 = vmatpush1.msra.mxu0 %v3562
        %3808 = vmatprep.subr.mxu0 %v3567
        %3809 = vmatpush1.msra.mxu0 %v3566
        %3810 = vmatprep.subr.mxu0 %v3571
        %3811 = vmatpush1.msra.mxu0 %v3570
        %3812 = vmatprep.subr.mxu0 %v3575
        %3813 = vmatpush1.msra.mxu0 %v3574
        %3814 = vmatprep.subr.mxu0 %v3579
        %3815 = vmatpush1.msra.mxu0 %v3578
        %3816 = vmatprep.subr.mxu0 %v3583
        %3817 = vmatpush1.msra.mxu0 %v3582
        %3818 = vmatprep.subr.mxu0 %v3587
        %3819 = vmatpush1.msra.mxu0 %v3586
        %3820 = vmatprep.subr.mxu0 %v3591
        %3821 = vmatpush1.msra.mxu0 %v3590
        %3822 = vmatprep.subr.mxu0 %v3595
        %3823 = vmatpush1.msra.mxu0 %v3594
        %3824 = vmatprep.subr.mxu0 %v3599
        %3825 = vmatpush1.msra.mxu0 %v3598
        %3826 = vmatprep.subr.mxu0 %v3603
        %3827 = vmatpush1.msra.mxu0 %v3602
        %3828 = vmatprep.subr.mxu0 %v3607
        %3829 = vmatpush1.msra.mxu0 %v3606
        %3830 = vmatprep.subr.mxu0 %v3611
        %3831 = vmatpush1.msra.mxu0 %v3610
        %3832 = vmatprep.subr.mxu0 %v3615
        %3833 = vmatpush1.msra.mxu0 %v3614
        %3834 = vmatprep.subr.mxu0 %v3619
        %3835 = vmatpush1.msra.mxu0 %v3618
        %3836 = vmatprep.mubr.f32.mxu0 %v3491
        %3837 = vmatmul.mubr.f32.gmra.mrb[0].mxu0 %v3490
        %v3838 = vpop.f32.mrb[0].mxu0
        %v3839 = vadd.f32 %v3755, %v3838
        %v3840 = vpop.f32.mrb[0].mxu0
        %v3841 = vadd.f32 %v3759, %v3840
        %3842 = vdwg.mxu0
        %3843 = vmatprep.subr.mxu0 %v3623
        %3844 = vmatpush1.msra.mxu0 %v3622
        %3845 = vmatprep.subr.mxu0 %v3627
        %3846 = vmatpush1.msra.mxu0 %v3626
        %3847 = vmatprep.subr.mxu0 %v3631
        %3848 = vmatpush1.msra.mxu0 %v3630
        %3849 = vmatprep.subr.mxu0 %v3635
        %3850 = vmatpush1.msra.mxu0 %v3634
        %3851 = vmatprep.subr.mxu0 %v3639
        %3852 = vmatpush1.msra.mxu0 %v3638
        %3853 = vmatprep.subr.mxu0 %v3643
        %3854 = vmatpush1.msra.mxu0 %v3642
        %3855 = vmatprep.subr.mxu0 %v3647
        %3856 = vmatpush1.msra.mxu0 %v3646
        %3857 = vmatprep.subr.mxu0 %v3651
        %3858 = vmatpush1.msra.mxu0 %v3650
        %3859 = vmatprep.subr.mxu0 %v3655
        %3860 = vmatpush1.msra.mxu0 %v3654
        %3861 = vmatprep.subr.mxu0 %v3659
        %3862 = vmatpush1.msra.mxu0 %v3658
        %3863 = vmatprep.subr.mxu0 %v3663
        %3864 = vmatpush1.msra.mxu0 %v3662
        %3865 = vmatprep.subr.mxu0 %v3667
        %3866 = vmatpush1.msra.mxu0 %v3666
        %3867 = vmatprep.subr.mxu0 %v3671
        %3868 = vmatpush1.msra.mxu0 %v3670
        %3869 = vmatprep.subr.mxu0 %v3675
        %3870 = vmatpush1.msra.mxu0 %v3674
        %3871 = vmatprep.subr.mxu0 %v3679
        %3872 = vmatpush1.msra.mxu0 %v3678
        %3873 = vmatprep.subr.mxu0 %v3683
        %3874 = vmatpush1.msra.mxu0 %v3682
        %3875 = vmatprep.subr.mxu0 %v3687
        %3876 = vmatpush1.msra.mxu0 %v3686
        %3877 = vmatprep.subr.mxu0 %v3691
        %3878 = vmatpush1.msra.mxu0 %v3690
        %3879 = vmatprep.subr.mxu0 %v3695
        %3880 = vmatpush1.msra.mxu0 %v3694
        %3881 = vmatprep.subr.mxu0 %v3699
        %3882 = vmatpush1.msra.mxu0 %v3698
        %3883 = vmatprep.subr.mxu0 %v3703
        %3884 = vmatpush1.msra.mxu0 %v3702
        %3885 = vmatprep.subr.mxu0 %v3707
        %3886 = vmatpush1.msra.mxu0 %v3706
        %3887 = vmatprep.subr.mxu0 %v3711
        %3888 = vmatpush1.msra.mxu0 %v3710
        %3889 = vmatprep.subr.mxu0 %v3715
        %3890 = vmatpush1.msra.mxu0 %v3714
        %3891 = vmatprep.subr.mxu0 %v3719
        %3892 = vmatpush1.msra.mxu0 %v3718
        %3893 = vmatprep.subr.mxu0 %v3723
        %3894 = vmatpush1.msra.mxu0 %v3722
        %3895 = vmatprep.subr.mxu0 %v3727
        %3896 = vmatpush1.msra.mxu0 %v3726
        %3897 = vmatprep.subr.mxu0 %v3731
        %3898 = vmatpush1.msra.mxu0 %v3730
        %3899 = vmatprep.subr.mxu0 %v3735
        %3900 = vmatpush1.msra.mxu0 %v3734
        %3901 = vmatprep.subr.mxu0 %v3739
        %3902 = vmatpush1.msra.mxu0 %v3738
        %3903 = vmatprep.subr.mxu0 %v3743
        %3904 = vmatpush1.msra.mxu0 %v3742
        %3905 = vmatprep.subr.mxu0 %v3747
        %3906 = vmatpush1.msra.mxu0 %v3746
        %3907 = vmatprep.mubr.f32.mxu0 %v3493
        %3908 = vmatmul.mubr.f32.gmra.mrb[0].mxu0 %v3492
        %v3909 = vpop.f32.mrb[0].mxu0
        %v3910 = vadd.f32 %v3839, %v3909
        %v3911 = vpop.f32.mrb[0].mxu0
        %v3912 = vadd.f32 %v3841, %v3911
        %3913 = vdwg.mxu0
        %3914 = vmatprep.subr.mxu0 %v3497
        %3915 = vmatpush1.msra.mxu0 %v3496
        %3916 = vmatprep.subr.mxu0 %v3501
        %3917 = vmatpush1.msra.mxu0 %v3500
        %3918 = vmatprep.subr.mxu0 %v3505
        %3919 = vmatpush1.msra.mxu0 %v3504
        %3920 = vmatprep.subr.mxu0 %v3509
        %3921 = vmatpush1.msra.mxu0 %v3508
        %3922 = vmatprep.subr.mxu0 %v3513
        %3923 = vmatpush1.msra.mxu0 %v3512
        %3924 = vmatprep.subr.mxu0 %v3517
        %3925 = vmatpush1.msra.mxu0 %v3516
        %3926 = vmatprep.subr.mxu0 %v3521
        %3927 = vmatpush1.msra.mxu0 %v3520
        %3928 = vmatprep.subr.mxu0 %v3525
        %3929 = vmatpush1.msra.mxu0 %v3524
        %3930 = vmatprep.subr.mxu0 %v3529
        %3931 = vmatpush1.msra.mxu0 %v3528
        %3932 = vmatprep.subr.mxu0 %v3533
        %3933 = vmatpush1.msra.mxu0 %v3532
        %3934 = vmatprep.subr.mxu0 %v3537
        %3935 = vmatpush1.msra.mxu0 %v3536
        %3936 = vmatprep.subr.mxu0 %v3541
        %3937 = vmatpush1.msra.mxu0 %v3540
        %3938 = vmatprep.subr.mxu0 %v3545
        %3939 = vmatpush1.msra.mxu0 %v3544
        %3940 = vmatprep.subr.mxu0 %v3549
        %3941 = vmatpush1.msra.mxu0 %v3548
        %3942 = vmatprep.subr.mxu0 %v3553
        %3943 = vmatpush1.msra.mxu0 %v3552
        %3944 = vmatprep.subr.mxu0 %v3557
        %3945 = vmatpush1.msra.mxu0 %v3556
        %3946 = vmatprep.subr.mxu0 %v3561
        %3947 = vmatpush1.msra.mxu0 %v3560
        %3948 = vmatprep.subr.mxu0 %v3565
        %3949 = vmatpush1.msra.mxu0 %v3564
        %3950 = vmatprep.subr.mxu0 %v3569
        %3951 = vmatpush1.msra.mxu0 %v3568
        %3952 = vmatprep.subr.mxu0 %v3573
        %3953 = vmatpush1.msra.mxu0 %v3572
        %3954 = vmatprep.subr.mxu0 %v3577
        %3955 = vmatpush1.msra.mxu0 %v3576
        %3956 = vmatprep.subr.mxu0 %v3581
        %3957 = vmatpush1.msra.mxu0 %v3580
        %3958 = vmatprep.subr.mxu0 %v3585
        %3959 = vmatpush1.msra.mxu0 %v3584
        %3960 = vmatprep.subr.mxu0 %v3589
        %3961 = vmatpush1.msra.mxu0 %v3588
        %3962 = vmatprep.subr.mxu0 %v3593
        %3963 = vmatpush1.msra.mxu0 %v3592
        %3964 = vmatprep.subr.mxu0 %v3597
        %3965 = vmatpush1.msra.mxu0 %v3596
        %3966 = vmatprep.subr.mxu0 %v3601
        %3967 = vmatpush1.msra.mxu0 %v3600
        %3968 = vmatprep.subr.mxu0 %v3605
        %3969 = vmatpush1.msra.mxu0 %v3604
        %3970 = vmatprep.subr.mxu0 %v3609
        %3971 = vmatpush1.msra.mxu0 %v3608
        %3972 = vmatprep.subr.mxu0 %v3613
        %3973 = vmatpush1.msra.mxu0 %v3612
        %3974 = vmatprep.subr.mxu0 %v3617
        %3975 = vmatpush1.msra.mxu0 %v3616
        %3976 = vmatprep.subr.mxu0 %v3621
        %3977 = vmatpush1.msra.mxu0 %v3620
        %3978 = vmatprep.mubr.f32.mxu0 %v3491
        %3979 = vmatmul.mubr.f32.gmra.mrb[0].mxu0 %v3490
        %v3980 = vpop.f32.mrb[0].mxu0
        %v3981 = vadd.f32 %v3763, %v3980
        %v3982 = vpop.f32.mrb[0].mxu0
        %v3983 = vadd.f32 %v3767, %v3982
        %3984 = vdwg.mxu0
        %3985 = vmatprep.subr.mxu0 %v3625
        %3986 = vmatpush1.msra.mxu0 %v3624
        %3987 = vmatprep.subr.mxu0 %v3629
        %3988 = vmatpush1.msra.mxu0 %v3628
        %3989 = vmatprep.subr.mxu0 %v3633
        %3990 = vmatpush1.msra.mxu0 %v3632
        %3991 = vmatprep.subr.mxu0 %v3637
        %3992 = vmatpush1.msra.mxu0 %v3636
        %3993 = vmatprep.subr.mxu0 %v3641
        %3994 = vmatpush1.msra.mxu0 %v3640
        %3995 = vmatprep.subr.mxu0 %v3645
        %3996 = vmatpush1.msra.mxu0 %v3644
        %3997 = vmatprep.subr.mxu0 %v3649
        %3998 = vmatpush1.msra.mxu0 %v3648
        %3999 = vmatprep.subr.mxu0 %v3653
        %4000 = vmatpush1.msra.mxu0 %v3652
        %4001 = vmatprep.subr.mxu0 %v3657
        %4002 = vmatpush1.msra.mxu0 %v3656
        %4003 = vmatprep.subr.mxu0 %v3661
        %4004 = vmatpush1.msra.mxu0 %v3660
        %4005 = vmatprep.subr.mxu0 %v3665
        %4006 = vmatpush1.msra.mxu0 %v3664
        %4007 = vmatprep.subr.mxu0 %v3669
        %4008 = vmatpush1.msra.mxu0 %v3668
        %4009 = vmatprep.subr.mxu0 %v3673
        %4010 = vmatpush1.msra.mxu0 %v3672
        %4011 = vmatprep.subr.mxu0 %v3677
        %4012 = vmatpush1.msra.mxu0 %v3676
        %4013 = vmatprep.subr.mxu0 %v3681
        %4014 = vmatpush1.msra.mxu0 %v3680
        %4015 = vmatprep.subr.mxu0 %v3685
        %4016 = vmatpush1.msra.mxu0 %v3684
        %4017 = vmatprep.subr.mxu0 %v3689
        %4018 = vmatpush1.msra.mxu0 %v3688
        %4019 = vmatprep.subr.mxu0 %v3693
        %4020 = vmatpush1.msra.mxu0 %v3692
        %4021 = vmatprep.subr.mxu0 %v3697
        %4022 = vmatpush1.msra.mxu0 %v3696
        %4023 = vmatprep.subr.mxu0 %v3701
        %4024 = vmatpush1.msra.mxu0 %v3700
        %4025 = vmatprep.subr.mxu0 %v3705
        %4026 = vmatpush1.msra.mxu0 %v3704
        %4027 = vmatprep.subr.mxu0 %v3709
        %4028 = vmatpush1.msra.mxu0 %v3708
        %4029 = vmatprep.subr.mxu0 %v3713
        %4030 = vmatpush1.msra.mxu0 %v3712
        %4031 = vmatprep.subr.mxu0 %v3717
        %4032 = vmatpush1.msra.mxu0 %v3716
        %4033 = vmatprep.subr.mxu0 %v3721
        %4034 = vmatpush1.msra.mxu0 %v3720
        %4035 = vmatprep.subr.mxu0 %v3725
        %4036 = vmatpush1.msra.mxu0 %v3724
        %4037 = vmatprep.subr.mxu0 %v3729
        %4038 = vmatpush1.msra.mxu0 %v3728
        %4039 = vmatprep.subr.mxu0 %v3733
        %4040 = vmatpush1.msra.mxu0 %v3732
        %4041 = vmatprep.subr.mxu0 %v3737
        %4042 = vmatpush1.msra.mxu0 %v3736
        %4043 = vmatprep.subr.mxu0 %v3741
        %4044 = vmatpush1.msra.mxu0 %v3740
        %4045 = vmatprep.subr.mxu0 %v3745
        %4046 = vmatpush1.msra.mxu0 %v3744
        %4047 = vmatprep.subr.mxu0 %v3749
        %4048 = vmatpush1.msra.mxu0 %v3748
        %4049 = vmatprep.mubr.f32.mxu0 %v3493
        %4050 = vmatmul.mubr.f32.gmra.mrb[0].mxu0 %v3492
        %v4051 = vpop.f32.mrb[0].mxu0
        %v4052 = vadd.f32 %v3981, %v4051
        %v4053 = vpop.f32.mrb[0].mxu0
        %v4054 = vadd.f32 %v3983, %v4053
        %4055 = vdwg.mxu0
        %v4056 = vtanh.pop %v3910
        %v4057 = vtanh.pop %v3912
        %v4058 = vtanh.pop %v4052
        %v4059 = vtanh.pop %v4054
        %v4060 = vld [vmem:[#allocation9] sm:$0xff]
        %v4061 = vld [vmem:[#allocation9 + $0x8] sm:$0xff]
        %v4062 = vld [vmem:[#allocation9 + $0x10] sm:$0xff]
        %v4063 = vld [vmem:[#allocation9 + $0x18] sm:$0xff]
        %v4064 = vld [vmem:[#allocation9 + $0x20] sm:$0xff]
        %v4065 = vld [vmem:[#allocation9 + $0x28] sm:$0xff]
        %v4066 = vld [vmem:[#allocation9 + $0x30] sm:$0xff]
        %v4067 = vld [vmem:[#allocation9 + $0x38] sm:$0xff]
        %v4068 = vld [vmem:[#allocation9 + $0x40] sm:$0xff]
        %v4069 = vld [vmem:[#allocation9 + $0x48] sm:$0xff]
        %v4070 = vld [vmem:[#allocation9 + $0x50] sm:$0xff]
        %v4071 = vld [vmem:[#allocation9 + $0x58] sm:$0xff]
        %v4072 = vld [vmem:[#allocation9 + $0x60] sm:$0xff]
        %v4073 = vld [vmem:[#allocation9 + $0x68] sm:$0xff]
        %v4074 = vld [vmem:[#allocation9 + $0x70] sm:$0xff]
        %v4075 = vld [vmem:[#allocation9 + $0x78] sm:$0xff]
        %v4076 = vld [vmem:[#allocation9 + $0x80] sm:$0xff]
        %v4077 = vld [vmem:[#allocation9 + $0x88] sm:$0xff]
        %v4078 = vld [vmem:[#allocation9 + $0x90] sm:$0xff]
        %v4079 = vld [vmem:[#allocation9 + $0x98] sm:$0xff]
        %v4080 = vld [vmem:[#allocation9 + $0xa0] sm:$0xff]
        %v4081 = vld [vmem:[#allocation9 + $0xa8] sm:$0xff]
        %v4082 = vld [vmem:[#allocation9 + $0xb0] sm:$0xff]
        %v4083 = vld [vmem:[#allocation9 + $0xb8] sm:$0xff]
        %v4084 = vld [vmem:[#allocation9 + $0xc0] sm:$0xff]
        %v4085 = vld [vmem:[#allocation9 + $0xc8] sm:$0xff]
        %v4086 = vld [vmem:[#allocation9 + $0xd0] sm:$0xff]
        %v4087 = vld [vmem:[#allocation9 + $0xd8] sm:$0xff]
        %v4088 = vld [vmem:[#allocation9 + $0xe0] sm:$0xff]
        %v4089 = vld [vmem:[#allocation9 + $0xe8] sm:$0xff]
        %v4090 = vld [vmem:[#allocation9 + $0xf0] sm:$0xff]
        %v4091 = vld [vmem:[#allocation9 + $0xf8] sm:$0xff]
        %v4092 = vld [vmem:[#allocation9 + $0x100] sm:$0xff]
        %v4093 = vld [vmem:[#allocation9 + $0x108] sm:$0xff]
        %v4094 = vld [vmem:[#allocation9 + $0x110] sm:$0xff]
        %v4095 = vld [vmem:[#allocation9 + $0x118] sm:$0xff]
        %v4096 = vld [vmem:[#allocation9 + $0x120] sm:$0xff]
        %v4097 = vld [vmem:[#allocation9 + $0x128] sm:$0xff]
        %v4098 = vld [vmem:[#allocation9 + $0x130] sm:$0xff]
        %v4099 = vld [vmem:[#allocation9 + $0x138] sm:$0xff]
        %v4100 = vld [vmem:[#allocation9 + $0x140] sm:$0xff]
        %v4101 = vld [vmem:[#allocation9 + $0x148] sm:$0xff]
        %v4102 = vld [vmem:[#allocation9 + $0x150] sm:$0xff]
        %v4103 = vld [vmem:[#allocation9 + $0x158] sm:$0xff]
        %v4104 = vld [vmem:[#allocation9 + $0x160] sm:$0xff]
        %v4105 = vld [vmem:[#allocation9 + $0x168] sm:$0xff]
        %v4106 = vld [vmem:[#allocation9 + $0x170] sm:$0xff]
        %v4107 = vld [vmem:[#allocation9 + $0x178] sm:$0xff]
        %v4108 = vld [vmem:[#allocation9 + $0x180] sm:$0xff]
        %v4109 = vld [vmem:[#allocation9 + $0x188] sm:$0xff]
        %v4110 = vld [vmem:[#allocation9 + $0x190] sm:$0xff]
        %v4111 = vld [vmem:[#allocation9 + $0x198] sm:$0xff]
        %v4112 = vld [vmem:[#allocation9 + $0x1a0] sm:$0xff]
        %v4113 = vld [vmem:[#allocation9 + $0x1a8] sm:$0xff]
        %v4114 = vld [vmem:[#allocation9 + $0x1b0] sm:$0xff]
        %v4115 = vld [vmem:[#allocation9 + $0x1b8] sm:$0xff]
        %v4116 = vld [vmem:[#allocation9 + $0x1c0] sm:$0xff]
        %v4117 = vld [vmem:[#allocation9 + $0x1c8] sm:$0xff]
        %v4118 = vld [vmem:[#allocation9 + $0x1d0] sm:$0xff]
        %v4119 = vld [vmem:[#allocation9 + $0x1d8] sm:$0xff]
        %v4120 = vld [vmem:[#allocation9 + $0x1e0] sm:$0xff]
        %v4121 = vld [vmem:[#allocation9 + $0x1e8] sm:$0xff]
        %v4122 = vld [vmem:[#allocation9 + $0x1f0] sm:$0xff]
        %v4123 = vld [vmem:[#allocation9 + $0x1f8] sm:$0xff]
        %v4124 = vld [vmem:[#allocation9 + $0x200] sm:$0xff]
        %v4125 = vld [vmem:[#allocation9 + $0x208] sm:$0xff]
        %v4126 = vld [vmem:[#allocation9 + $0x210] sm:$0xff]
        %v4127 = vld [vmem:[#allocation9 + $0x218] sm:$0xff]
        %v4128 = vld [vmem:[#allocation9 + $0x220] sm:$0xff]
        %v4129 = vld [vmem:[#allocation9 + $0x228] sm:$0xff]
        %v4130 = vld [vmem:[#allocation9 + $0x230] sm:$0xff]
        %v4131 = vld [vmem:[#allocation9 + $0x238] sm:$0xff]
        %v4132 = vld [vmem:[#allocation9 + $0x240] sm:$0xff]
        %v4133 = vld [vmem:[#allocation9 + $0x248] sm:$0xff]
        %v4134 = vld [vmem:[#allocation9 + $0x250] sm:$0xff]
        %v4135 = vld [vmem:[#allocation9 + $0x258] sm:$0xff]
        %v4136 = vld [vmem:[#allocation9 + $0x260] sm:$0xff]
        %v4137 = vld [vmem:[#allocation9 + $0x268] sm:$0xff]
        %v4138 = vld [vmem:[#allocation9 + $0x270] sm:$0xff]
        %v4139 = vld [vmem:[#allocation9 + $0x278] sm:$0xff]
        %v4140 = vld [vmem:[#allocation9 + $0x280] sm:$0xff]
        %v4141 = vld [vmem:[#allocation9 + $0x288] sm:$0xff]
        %v4142 = vld [vmem:[#allocation9 + $0x290] sm:$0xff]
        %v4143 = vld [vmem:[#allocation9 + $0x298] sm:$0xff]
        %v4144 = vld [vmem:[#allocation9 + $0x2a0] sm:$0xff]
        %v4145 = vld [vmem:[#allocation9 + $0x2a8] sm:$0xff]
        %v4146 = vld [vmem:[#allocation9 + $0x2b0] sm:$0xff]
        %v4147 = vld [vmem:[#allocation9 + $0x2b8] sm:$0xff]
        %v4148 = vld [vmem:[#allocation9 + $0x2c0] sm:$0xff]
        %v4149 = vld [vmem:[#allocation9 + $0x2c8] sm:$0xff]
        %v4150 = vld [vmem:[#allocation9 + $0x2d0] sm:$0xff]
        %v4151 = vld [vmem:[#allocation9 + $0x2d8] sm:$0xff]
        %v4152 = vld [vmem:[#allocation9 + $0x2e0] sm:$0xff]
        %v4153 = vld [vmem:[#allocation9 + $0x2e8] sm:$0xff]
        %v4154 = vld [vmem:[#allocation9 + $0x2f0] sm:$0xff]
        %v4155 = vld [vmem:[#allocation9 + $0x2f8] sm:$0xff]
        %v4156 = vld [vmem:[#allocation9 + $0x300] sm:$0xff]
        %v4157 = vld [vmem:[#allocation9 + $0x308] sm:$0xff]
        %v4158 = vld [vmem:[#allocation9 + $0x310] sm:$0xff]
        %v4159 = vld [vmem:[#allocation9 + $0x318] sm:$0xff]
        %v4160 = vld [vmem:[#allocation9 + $0x320] sm:$0xff]
        %v4161 = vld [vmem:[#allocation9 + $0x328] sm:$0xff]
        %v4162 = vld [vmem:[#allocation9 + $0x330] sm:$0xff]
        %v4163 = vld [vmem:[#allocation9 + $0x338] sm:$0xff]
        %v4164 = vld [vmem:[#allocation9 + $0x340] sm:$0xff]
        %v4165 = vld [vmem:[#allocation9 + $0x348] sm:$0xff]
        %v4166 = vld [vmem:[#allocation9 + $0x350] sm:$0xff]
        %v4167 = vld [vmem:[#allocation9 + $0x358] sm:$0xff]
        %v4168 = vld [vmem:[#allocation9 + $0x360] sm:$0xff]
        %v4169 = vld [vmem:[#allocation9 + $0x368] sm:$0xff]
        %v4170 = vld [vmem:[#allocation9 + $0x370] sm:$0xff]
        %v4171 = vld [vmem:[#allocation9 + $0x378] sm:$0xff]
        %v4172 = vld [vmem:[#allocation9 + $0x380] sm:$0xff]
        %v4173 = vld [vmem:[#allocation9 + $0x388] sm:$0xff]
        %v4174 = vld [vmem:[#allocation9 + $0x390] sm:$0xff]
        %v4175 = vld [vmem:[#allocation9 + $0x398] sm:$0xff]
        %v4176 = vld [vmem:[#allocation9 + $0x3a0] sm:$0xff]
        %v4177 = vld [vmem:[#allocation9 + $0x3a8] sm:$0xff]
        %v4178 = vld [vmem:[#allocation9 + $0x3b0] sm:$0xff]
        %v4179 = vld [vmem:[#allocation9 + $0x3b8] sm:$0xff]
        %v4180 = vld [vmem:[#allocation9 + $0x3c0] sm:$0xff]
        %v4181 = vld [vmem:[#allocation9 + $0x3c8] sm:$0xff]
        %v4182 = vld [vmem:[#allocation9 + $0x3d0] sm:$0xff]
        %v4183 = vld [vmem:[#allocation9 + $0x3d8] sm:$0xff]
        %v4184 = vld [vmem:[#allocation9 + $0x3e0] sm:$0xff]
        %v4185 = vld [vmem:[#allocation9 + $0x3e8] sm:$0xff]
        %v4186 = vld [vmem:[#allocation9 + $0x3f0] sm:$0xff]
        %v4187 = vld [vmem:[#allocation9 + $0x3f8] sm:$0xff]
        %v4188 = vld [vmem:[#allocation9 + $0x400] sm:$0xff]
        %v4189 = vld [vmem:[#allocation9 + $0x408] sm:$0xff]
        %v4190 = vld [vmem:[#allocation9 + $0x410] sm:$0xff]
        %v4191 = vld [vmem:[#allocation9 + $0x418] sm:$0xff]
        %v4192 = vld [vmem:[#allocation9 + $0x420] sm:$0xff]
        %v4193 = vld [vmem:[#allocation9 + $0x428] sm:$0xff]
        %v4194 = vld [vmem:[#allocation9 + $0x430] sm:$0xff]
        %v4195 = vld [vmem:[#allocation9 + $0x438] sm:$0xff]
        %v4196 = vld [vmem:[#allocation9 + $0x440] sm:$0xff]
        %v4197 = vld [vmem:[#allocation9 + $0x448] sm:$0xff]
        %v4198 = vld [vmem:[#allocation9 + $0x450] sm:$0xff]
        %v4199 = vld [vmem:[#allocation9 + $0x458] sm:$0xff]
        %v4200 = vld [vmem:[#allocation9 + $0x460] sm:$0xff]
        %v4201 = vld [vmem:[#allocation9 + $0x468] sm:$0xff]
        %v4202 = vld [vmem:[#allocation9 + $0x470] sm:$0xff]
        %v4203 = vld [vmem:[#allocation9 + $0x478] sm:$0xff]
        %v4204 = vld [vmem:[#allocation9 + $0x480] sm:$0xff]
        %v4205 = vld [vmem:[#allocation9 + $0x488] sm:$0xff]
        %v4206 = vld [vmem:[#allocation9 + $0x490] sm:$0xff]
        %v4207 = vld [vmem:[#allocation9 + $0x498] sm:$0xff]
        %v4208 = vld [vmem:[#allocation9 + $0x4a0] sm:$0xff]
        %v4209 = vld [vmem:[#allocation9 + $0x4a8] sm:$0xff]
        %v4210 = vld [vmem:[#allocation9 + $0x4b0] sm:$0xff]
        %v4211 = vld [vmem:[#allocation9 + $0x4b8] sm:$0xff]
        %v4212 = vld [vmem:[#allocation9 + $0x4c0] sm:$0xff]
        %v4213 = vld [vmem:[#allocation9 + $0x4c8] sm:$0xff]
        %v4214 = vld [vmem:[#allocation9 + $0x4d0] sm:$0xff]
        %v4215 = vld [vmem:[#allocation9 + $0x4d8] sm:$0xff]
        %v4216 = vld [vmem:[#allocation9 + $0x4e0] sm:$0xff]
        %v4217 = vld [vmem:[#allocation9 + $0x4e8] sm:$0xff]
        %v4218 = vld [vmem:[#allocation9 + $0x4f0] sm:$0xff]
        %v4219 = vld [vmem:[#allocation9 + $0x4f8] sm:$0xff]
        %v4220 = vld [vmem:[#allocation9 + $0x500] sm:$0xff]
        %v4221 = vld [vmem:[#allocation9 + $0x508] sm:$0xff]
        %v4222 = vld [vmem:[#allocation9 + $0x510] sm:$0xff]
        %v4223 = vld [vmem:[#allocation9 + $0x518] sm:$0xff]
        %v4224 = vld [vmem:[#allocation9 + $0x520] sm:$0xff]
        %v4225 = vld [vmem:[#allocation9 + $0x528] sm:$0xff]
        %v4226 = vld [vmem:[#allocation9 + $0x530] sm:$0xff]
        %v4227 = vld [vmem:[#allocation9 + $0x538] sm:$0xff]
        %v4228 = vld [vmem:[#allocation9 + $0x540] sm:$0xff]
        %v4229 = vld [vmem:[#allocation9 + $0x548] sm:$0xff]
        %v4230 = vld [vmem:[#allocation9 + $0x550] sm:$0xff]
        %v4231 = vld [vmem:[#allocation9 + $0x558] sm:$0xff]
        %v4232 = vld [vmem:[#allocation9 + $0x560] sm:$0xff]
        %v4233 = vld [vmem:[#allocation9 + $0x568] sm:$0xff]
        %v4234 = vld [vmem:[#allocation9 + $0x570] sm:$0xff]
        %v4235 = vld [vmem:[#allocation9 + $0x578] sm:$0xff]
        %v4236 = vld [vmem:[#allocation9 + $0x580] sm:$0xff]
        %v4237 = vld [vmem:[#allocation9 + $0x588] sm:$0xff]
        %v4238 = vld [vmem:[#allocation9 + $0x590] sm:$0xff]
        %v4239 = vld [vmem:[#allocation9 + $0x598] sm:$0xff]
        %v4240 = vld [vmem:[#allocation9 + $0x5a0] sm:$0xff]
        %v4241 = vld [vmem:[#allocation9 + $0x5a8] sm:$0xff]
        %v4242 = vld [vmem:[#allocation9 + $0x5b0] sm:$0xff]
        %v4243 = vld [vmem:[#allocation9 + $0x5b8] sm:$0xff]
        %v4244 = vld [vmem:[#allocation9 + $0x5c0] sm:$0xff]
        %v4245 = vld [vmem:[#allocation9 + $0x5c8] sm:$0xff]
        %v4246 = vld [vmem:[#allocation9 + $0x5d0] sm:$0xff]
        %v4247 = vld [vmem:[#allocation9 + $0x5d8] sm:$0xff]
        %v4248 = vld [vmem:[#allocation9 + $0x5e0] sm:$0xff]
        %v4249 = vld [vmem:[#allocation9 + $0x5e8] sm:$0xff]
        %v4250 = vld [vmem:[#allocation9 + $0x5f0] sm:$0xff]
        %v4251 = vld [vmem:[#allocation9 + $0x5f8] sm:$0xff]
        %v4252 = vld [vmem:[#allocation9 + $0x600] sm:$0xff]
        %v4253 = vld [vmem:[#allocation9 + $0x608] sm:$0xff]
        %v4254 = vld [vmem:[#allocation9 + $0x610] sm:$0xff]
        %v4255 = vld [vmem:[#allocation9 + $0x618] sm:$0xff]
        %v4256 = vld [vmem:[#allocation9 + $0x620] sm:$0xff]
        %v4257 = vld [vmem:[#allocation9 + $0x628] sm:$0xff]
        %v4258 = vld [vmem:[#allocation9 + $0x630] sm:$0xff]
        %v4259 = vld [vmem:[#allocation9 + $0x638] sm:$0xff]
        %v4260 = vld [vmem:[#allocation9 + $0x640] sm:$0xff]
        %v4261 = vld [vmem:[#allocation9 + $0x648] sm:$0xff]
        %v4262 = vld [vmem:[#allocation9 + $0x650] sm:$0xff]
        %v4263 = vld [vmem:[#allocation9 + $0x658] sm:$0xff]
        %v4264 = vld [vmem:[#allocation9 + $0x660] sm:$0xff]
        %v4265 = vld [vmem:[#allocation9 + $0x668] sm:$0xff]
        %v4266 = vld [vmem:[#allocation9 + $0x670] sm:$0xff]
        %v4267 = vld [vmem:[#allocation9 + $0x678] sm:$0xff]
        %v4268 = vld [vmem:[#allocation9 + $0x680] sm:$0xff]
        %v4269 = vld [vmem:[#allocation9 + $0x688] sm:$0xff]
        %v4270 = vld [vmem:[#allocation9 + $0x690] sm:$0xff]
        %v4271 = vld [vmem:[#allocation9 + $0x698] sm:$0xff]
        %v4272 = vld [vmem:[#allocation9 + $0x6a0] sm:$0xff]
        %v4273 = vld [vmem:[#allocation9 + $0x6a8] sm:$0xff]
        %v4274 = vld [vmem:[#allocation9 + $0x6b0] sm:$0xff]
        %v4275 = vld [vmem:[#allocation9 + $0x6b8] sm:$0xff]
        %v4276 = vld [vmem:[#allocation9 + $0x6c0] sm:$0xff]
        %v4277 = vld [vmem:[#allocation9 + $0x6c8] sm:$0xff]
        %v4278 = vld [vmem:[#allocation9 + $0x6d0] sm:$0xff]
        %v4279 = vld [vmem:[#allocation9 + $0x6d8] sm:$0xff]
        %v4280 = vld [vmem:[#allocation9 + $0x6e0] sm:$0xff]
        %v4281 = vld [vmem:[#allocation9 + $0x6e8] sm:$0xff]
        %v4282 = vld [vmem:[#allocation9 + $0x6f0] sm:$0xff]
        %v4283 = vld [vmem:[#allocation9 + $0x6f8] sm:$0xff]
        %v4284 = vld [vmem:[#allocation9 + $0x700] sm:$0xff]
        %v4285 = vld [vmem:[#allocation9 + $0x708] sm:$0xff]
        %v4286 = vld [vmem:[#allocation9 + $0x710] sm:$0xff]
        %v4287 = vld [vmem:[#allocation9 + $0x718] sm:$0xff]
        %v4288 = vld [vmem:[#allocation9 + $0x720] sm:$0xff]
        %v4289 = vld [vmem:[#allocation9 + $0x728] sm:$0xff]
        %v4290 = vld [vmem:[#allocation9 + $0x730] sm:$0xff]
        %v4291 = vld [vmem:[#allocation9 + $0x738] sm:$0xff]
        %v4292 = vld [vmem:[#allocation9 + $0x740] sm:$0xff]
        %v4293 = vld [vmem:[#allocation9 + $0x748] sm:$0xff]
        %v4294 = vld [vmem:[#allocation9 + $0x750] sm:$0xff]
        %v4295 = vld [vmem:[#allocation9 + $0x758] sm:$0xff]
        %v4296 = vld [vmem:[#allocation9 + $0x760] sm:$0xff]
        %v4297 = vld [vmem:[#allocation9 + $0x768] sm:$0xff]
        %v4298 = vld [vmem:[#allocation9 + $0x770] sm:$0xff]
        %v4299 = vld [vmem:[#allocation9 + $0x778] sm:$0xff]
        %v4300 = vld [vmem:[#allocation9 + $0x780] sm:$0xff]
        %v4301 = vld [vmem:[#allocation9 + $0x788] sm:$0xff]
        %v4302 = vld [vmem:[#allocation9 + $0x790] sm:$0xff]
        %v4303 = vld [vmem:[#allocation9 + $0x798] sm:$0xff]
        %v4304 = vld [vmem:[#allocation9 + $0x7a0] sm:$0xff]
        %v4305 = vld [vmem:[#allocation9 + $0x7a8] sm:$0xff]
        %v4306 = vld [vmem:[#allocation9 + $0x7b0] sm:$0xff]
        %v4307 = vld [vmem:[#allocation9 + $0x7b8] sm:$0xff]
        %v4308 = vld [vmem:[#allocation9 + $0x7c0] sm:$0xff]
        %v4309 = vld [vmem:[#allocation9 + $0x7c8] sm:$0xff]
        %v4310 = vld [vmem:[#allocation9 + $0x7d0] sm:$0xff]
        %v4311 = vld [vmem:[#allocation9 + $0x7d8] sm:$0xff]
        %v4312 = vld [vmem:[#allocation9 + $0x7e0] sm:$0xff]
        %v4313 = vld [vmem:[#allocation9 + $0x7e8] sm:$0xff]
        %v4314 = vld [vmem:[#allocation9 + $0x7f0] sm:$0xff]
        %v4315 = vld [vmem:[#allocation9 + $0x7f8] sm:$0xff]
        %v4316 = vld [vmem:[%s16] sm:$0xf]
        %v4318 = vlaneseq
        %v4319 = vshrl.u32 %v4318, 7
        %v4320 = vsub.s32 0, %v4319
        %v4321 = vrot.slane %v4316, %v4320
        %v4322 = vlaneseq
        %v4323 = vshrl.u32 %v4322, 7
        %v4324 = vsub.s32 1, %v4323
        %v4325 = vrot.slane %v4316, %v4324
        %v4326 = vlaneseq
        %v4327 = vshrl.u32 %v4326, 7
        %v4328 = vsub.s32 2, %v4327
        %v4329 = vrot.slane %v4316, %v4328
        %v4330 = vlaneseq
        %v4331 = vshrl.u32 %v4330, 7
        %v4332 = vsub.s32 3, %v4331
        %v4333 = vrot.slane %v4316, %v4332
        %4338 = vmatprep.subr.mxu0 %v4061
        %4339 = vmatpush1.msra.mxu0 %v4060
        %4340 = vmatprep.subr.mxu0 %v4065
        %4341 = vmatpush1.msra.mxu0 %v4064
        %4342 = vmatprep.subr.mxu0 %v4069
        %4343 = vmatpush1.msra.mxu0 %v4068
        %4344 = vmatprep.subr.mxu0 %v4073
        %4345 = vmatpush1.msra.mxu0 %v4072
        %4346 = vmatprep.subr.mxu0 %v4077
        %4347 = vmatpush1.msra.mxu0 %v4076
        %4348 = vmatprep.subr.mxu0 %v4081
        %4349 = vmatpush1.msra.mxu0 %v4080
        %4350 = vmatprep.subr.mxu0 %v4085
        %4351 = vmatpush1.msra.mxu0 %v4084
        %4352 = vmatprep.subr.mxu0 %v4089
        %4353 = vmatpush1.msra.mxu0 %v4088
        %4354 = vmatprep.subr.mxu0 %v4093
        %4355 = vmatpush1.msra.mxu0 %v4092
        %4356 = vmatprep.subr.mxu0 %v4097
        %4357 = vmatpush1.msra.mxu0 %v4096
        %4358 = vmatprep.subr.mxu0 %v4101
        %4359 = vmatpush1.msra.mxu0 %v4100
        %4360 = vmatprep.subr.mxu0 %v4105
        %4361 = vmatpush1.msra.mxu0 %v4104
        %4362 = vmatprep.subr.mxu0 %v4109
        %4363 = vmatpush1.msra.mxu0 %v4108
        %4364 = vmatprep.subr.mxu0 %v4113
        %4365 = vmatpush1.msra.mxu0 %v4112
        %4366 = vmatprep.subr.mxu0 %v4117
        %4367 = vmatpush1.msra.mxu0 %v4116
        %4368 = vmatprep.subr.mxu0 %v4121
        %4369 = vmatpush1.msra.mxu0 %v4120
        %4370 = vmatprep.subr.mxu0 %v4125
        %4371 = vmatpush1.msra.mxu0 %v4124
        %4372 = vmatprep.subr.mxu0 %v4129
        %4373 = vmatpush1.msra.mxu0 %v4128
        %4374 = vmatprep.subr.mxu0 %v4133
        %4375 = vmatpush1.msra.mxu0 %v4132
        %4376 = vmatprep.subr.mxu0 %v4137
        %4377 = vmatpush1.msra.mxu0 %v4136
        %4378 = vmatprep.subr.mxu0 %v4141
        %4379 = vmatpush1.msra.mxu0 %v4140
        %4380 = vmatprep.subr.mxu0 %v4145
        %4381 = vmatpush1.msra.mxu0 %v4144
        %4382 = vmatprep.subr.mxu0 %v4149
        %4383 = vmatpush1.msra.mxu0 %v4148
        %4384 = vmatprep.subr.mxu0 %v4153
        %4385 = vmatpush1.msra.mxu0 %v4152
        %4386 = vmatprep.subr.mxu0 %v4157
        %4387 = vmatpush1.msra.mxu0 %v4156
        %4388 = vmatprep.subr.mxu0 %v4161
        %4389 = vmatpush1.msra.mxu0 %v4160
        %4390 = vmatprep.subr.mxu0 %v4165
        %4391 = vmatpush1.msra.mxu0 %v4164
        %4392 = vmatprep.subr.mxu0 %v4169
        %4393 = vmatpush1.msra.mxu0 %v4168
        %4394 = vmatprep.subr.mxu0 %v4173
        %4395 = vmatpush1.msra.mxu0 %v4172
        %4396 = vmatprep.subr.mxu0 %v4177
        %4397 = vmatpush1.msra.mxu0 %v4176
        %4398 = vmatprep.subr.mxu0 %v4181
        %4399 = vmatpush1.msra.mxu0 %v4180
        %4400 = vmatprep.subr.mxu0 %v4185
        %4401 = vmatpush1.msra.mxu0 %v4184
        %4402 = vmatprep.mubr.f32.mxu0 %v4057
        %4403 = vmatmul.mubr.f32.gmra.mrb[0].mxu0 %v4056
        %v4404 = vpop.f32.mrb[0].mxu0
        %v4405 = vadd.f32 %v4321, %v4404
        %v4406 = vpop.f32.mrb[0].mxu0
        %v4407 = vadd.f32 %v4325, %v4406
        %4408 = vdwg.mxu0
        %4409 = vmatprep.subr.mxu0 %v4189
        %4410 = vmatpush1.msra.mxu0 %v4188
        %4411 = vmatprep.subr.mxu0 %v4193
        %4412 = vmatpush1.msra.mxu0 %v4192
        %4413 = vmatprep.subr.mxu0 %v4197
        %4414 = vmatpush1.msra.mxu0 %v4196
        %4415 = vmatprep.subr.mxu0 %v4201
        %4416 = vmatpush1.msra.mxu0 %v4200
        %4417 = vmatprep.subr.mxu0 %v4205
        %4418 = vmatpush1.msra.mxu0 %v4204
        %4419 = vmatprep.subr.mxu0 %v4209
        %4420 = vmatpush1.msra.mxu0 %v4208
        %4421 = vmatprep.subr.mxu0 %v4213
        %4422 = vmatpush1.msra.mxu0 %v4212
        %4423 = vmatprep.subr.mxu0 %v4217
        %4424 = vmatpush1.msra.mxu0 %v4216
        %4425 = vmatprep.subr.mxu0 %v4221
        %4426 = vmatpush1.msra.mxu0 %v4220
        %4427 = vmatprep.subr.mxu0 %v4225
        %4428 = vmatpush1.msra.mxu0 %v4224
        %4429 = vmatprep.subr.mxu0 %v4229
        %4430 = vmatpush1.msra.mxu0 %v4228
        %4431 = vmatprep.subr.mxu0 %v4233
        %4432 = vmatpush1.msra.mxu0 %v4232
        %4433 = vmatprep.subr.mxu0 %v4237
        %4434 = vmatpush1.msra.mxu0 %v4236
        %4435 = vmatprep.subr.mxu0 %v4241
        %4436 = vmatpush1.msra.mxu0 %v4240
        %4437 = vmatprep.subr.mxu0 %v4245
        %4438 = vmatpush1.msra.mxu0 %v4244
        %4439 = vmatprep.subr.mxu0 %v4249
        %4440 = vmatpush1.msra.mxu0 %v4248
        %4441 = vmatprep.subr.mxu0 %v4253
        %4442 = vmatpush1.msra.mxu0 %v4252
        %4443 = vmatprep.subr.mxu0 %v4257
        %4444 = vmatpush1.msra.mxu0 %v4256
        %4445 = vmatprep.subr.mxu0 %v4261
        %4446 = vmatpush1.msra.mxu0 %v4260
        %4447 = vmatprep.subr.mxu0 %v4265
        %4448 = vmatpush1.msra.mxu0 %v4264
        %4449 = vmatprep.subr.mxu0 %v4269
        %4450 = vmatpush1.msra.mxu0 %v4268
        %4451 = vmatprep.subr.mxu0 %v4273
        %4452 = vmatpush1.msra.mxu0 %v4272
        %4453 = vmatprep.subr.mxu0 %v4277
        %4454 = vmatpush1.msra.mxu0 %v4276
        %4455 = vmatprep.subr.mxu0 %v4281
        %4456 = vmatpush1.msra.mxu0 %v4280
        %4457 = vmatprep.subr.mxu0 %v4285
        %4458 = vmatpush1.msra.mxu0 %v4284
        %4459 = vmatprep.subr.mxu0 %v4289
        %4460 = vmatpush1.msra.mxu0 %v4288
        %4461 = vmatprep.subr.mxu0 %v4293
        %4462 = vmatpush1.msra.mxu0 %v4292
        %4463 = vmatprep.subr.mxu0 %v4297
        %4464 = vmatpush1.msra.mxu0 %v4296
        %4465 = vmatprep.subr.mxu0 %v4301
        %4466 = vmatpush1.msra.mxu0 %v4300
        %4467 = vmatprep.subr.mxu0 %v4305
        %4468 = vmatpush1.msra.mxu0 %v4304
        %4469 = vmatprep.subr.mxu0 %v4309
        %4470 = vmatpush1.msra.mxu0 %v4308
        %4471 = vmatprep.subr.mxu0 %v4313
        %4472 = vmatpush1.msra.mxu0 %v4312
        %4473 = vmatprep.mubr.f32.mxu0 %v4059
        %4474 = vmatmul.mubr.f32.gmra.mrb[0].mxu0 %v4058
        %v4475 = vpop.f32.mrb[0].mxu0
        %v4476 = vadd.f32 %v4405, %v4475
        %v4477 = vpop.f32.mrb[0].mxu0
        %v4478 = vadd.f32 %v4407, %v4477
        %4479 = vdwg.mxu0
        %4480 = vmatprep.subr.mxu0 %v4063
        %4481 = vmatpush1.msra.mxu0 %v4062
        %4482 = vmatprep.subr.mxu0 %v4067
        %4483 = vmatpush1.msra.mxu0 %v4066
        %4484 = vmatprep.subr.mxu0 %v4071
        %4485 = vmatpush1.msra.mxu0 %v4070
        %4486 = vmatprep.subr.mxu0 %v4075
        %4487 = vmatpush1.msra.mxu0 %v4074
        %4488 = vmatprep.subr.mxu0 %v4079
        %4489 = vmatpush1.msra.mxu0 %v4078
        %4490 = vmatprep.subr.mxu0 %v4083
        %4491 = vmatpush1.msra.mxu0 %v4082
        %4492 = vmatprep.subr.mxu0 %v4087
        %4493 = vmatpush1.msra.mxu0 %v4086
        %4494 = vmatprep.subr.mxu0 %v4091
        %4495 = vmatpush1.msra.mxu0 %v4090
        %4496 = vmatprep.subr.mxu0 %v4095
        %4497 = vmatpush1.msra.mxu0 %v4094
        %4498 = vmatprep.subr.mxu0 %v4099
        %4499 = vmatpush1.msra.mxu0 %v4098
        %4500 = vmatprep.subr.mxu0 %v4103
        %4501 = vmatpush1.msra.mxu0 %v4102
        %4502 = vmatprep.subr.mxu0 %v4107
        %4503 = vmatpush1.msra.mxu0 %v4106
        %4504 = vmatprep.subr.mxu0 %v4111
        %4505 = vmatpush1.msra.mxu0 %v4110
        %4506 = vmatprep.subr.mxu0 %v4115
        %4507 = vmatpush1.msra.mxu0 %v4114
        %4508 = vmatprep.subr.mxu0 %v4119
        %4509 = vmatpush1.msra.mxu0 %v4118
        %4510 = vmatprep.subr.mxu0 %v4123
        %4511 = vmatpush1.msra.mxu0 %v4122
        %4512 = vmatprep.subr.mxu0 %v4127
        %4513 = vmatpush1.msra.mxu0 %v4126
        %4514 = vmatprep.subr.mxu0 %v4131
        %4515 = vmatpush1.msra.mxu0 %v4130
        %4516 = vmatprep.subr.mxu0 %v4135
        %4517 = vmatpush1.msra.mxu0 %v4134
        %4518 = vmatprep.subr.mxu0 %v4139
        %4519 = vmatpush1.msra.mxu0 %v4138
        %4520 = vmatprep.subr.mxu0 %v4143
        %4521 = vmatpush1.msra.mxu0 %v4142
        %4522 = vmatprep.subr.mxu0 %v4147
        %4523 = vmatpush1.msra.mxu0 %v4146
        %4524 = vmatprep.subr.mxu0 %v4151
        %4525 = vmatpush1.msra.mxu0 %v4150
        %4526 = vmatprep.subr.mxu0 %v4155
        %4527 = vmatpush1.msra.mxu0 %v4154
        %4528 = vmatprep.subr.mxu0 %v4159
        %4529 = vmatpush1.msra.mxu0 %v4158
        %4530 = vmatprep.subr.mxu0 %v4163
        %4531 = vmatpush1.msra.mxu0 %v4162
        %4532 = vmatprep.subr.mxu0 %v4167
        %4533 = vmatpush1.msra.mxu0 %v4166
        %4534 = vmatprep.subr.mxu0 %v4171
        %4535 = vmatpush1.msra.mxu0 %v4170
        %4536 = vmatprep.subr.mxu0 %v4175
        %4537 = vmatpush1.msra.mxu0 %v4174
        %4538 = vmatprep.subr.mxu0 %v4179
        %4539 = vmatpush1.msra.mxu0 %v4178
        %4540 = vmatprep.subr.mxu0 %v4183
        %4541 = vmatpush1.msra.mxu0 %v4182
        %4542 = vmatprep.subr.mxu0 %v4187
        %4543 = vmatpush1.msra.mxu0 %v4186
        %4544 = vmatprep.mubr.f32.mxu0 %v4057
        %4545 = vmatmul.mubr.f32.gmra.mrb[0].mxu0 %v4056
        %v4546 = vpop.f32.mrb[0].mxu0
        %v4547 = vadd.f32 %v4329, %v4546
        %v4548 = vpop.f32.mrb[0].mxu0
        %v4549 = vadd.f32 %v4333, %v4548
        %4550 = vdwg.mxu0
        %4551 = vmatprep.subr.mxu0 %v4191
        %4552 = vmatpush1.msra.mxu0 %v4190
        %4553 = vmatprep.subr.mxu0 %v4195
        %4554 = vmatpush1.msra.mxu0 %v4194
        %4555 = vmatprep.subr.mxu0 %v4199
        %4556 = vmatpush1.msra.mxu0 %v4198
        %4557 = vmatprep.subr.mxu0 %v4203
        %4558 = vmatpush1.msra.mxu0 %v4202
        %4559 = vmatprep.subr.mxu0 %v4207
        %4560 = vmatpush1.msra.mxu0 %v4206
        %4561 = vmatprep.subr.mxu0 %v4211
        %4562 = vmatpush1.msra.mxu0 %v4210
        %4563 = vmatprep.subr.mxu0 %v4215
        %4564 = vmatpush1.msra.mxu0 %v4214
        %4565 = vmatprep.subr.mxu0 %v4219
        %4566 = vmatpush1.msra.mxu0 %v4218
        %4567 = vmatprep.subr.mxu0 %v4223
        %4568 = vmatpush1.msra.mxu0 %v4222
        %4569 = vmatprep.subr.mxu0 %v4227
        %4570 = vmatpush1.msra.mxu0 %v4226
        %4571 = vmatprep.subr.mxu0 %v4231
        %4572 = vmatpush1.msra.mxu0 %v4230
        %4573 = vmatprep.subr.mxu0 %v4235
        %4574 = vmatpush1.msra.mxu0 %v4234
        %4575 = vmatprep.subr.mxu0 %v4239
        %4576 = vmatpush1.msra.mxu0 %v4238
        %4577 = vmatprep.subr.mxu0 %v4243
        %4578 = vmatpush1.msra.mxu0 %v4242
        %4579 = vmatprep.subr.mxu0 %v4247
        %4580 = vmatpush1.msra.mxu0 %v4246
        %4581 = vmatprep.subr.mxu0 %v4251
        %4582 = vmatpush1.msra.mxu0 %v4250
        %4583 = vmatprep.subr.mxu0 %v4255
        %4584 = vmatpush1.msra.mxu0 %v4254
        %4585 = vmatprep.subr.mxu0 %v4259
        %4586 = vmatpush1.msra.mxu0 %v4258
        %4587 = vmatprep.subr.mxu0 %v4263
        %4588 = vmatpush1.msra.mxu0 %v4262
        %4589 = vmatprep.subr.mxu0 %v4267
        %4590 = vmatpush1.msra.mxu0 %v4266
        %4591 = vmatprep.subr.mxu0 %v4271
        %4592 = vmatpush1.msra.mxu0 %v4270
        %4593 = vmatprep.subr.mxu0 %v4275
        %4594 = vmatpush1.msra.mxu0 %v4274
        %4595 = vmatprep.subr.mxu0 %v4279
        %4596 = vmatpush1.msra.mxu0 %v4278
        %4597 = vmatprep.subr.mxu0 %v4283
        %4598 = vmatpush1.msra.mxu0 %v4282
        %4599 = vmatprep.subr.mxu0 %v4287
        %4600 = vmatpush1.msra.mxu0 %v4286
        %4601 = vmatprep.subr.mxu0 %v4291
        %4602 = vmatpush1.msra.mxu0 %v4290
        %4603 = vmatprep.subr.mxu0 %v4295
        %4604 = vmatpush1.msra.mxu0 %v4294
        %4605 = vmatprep.subr.mxu0 %v4299
        %4606 = vmatpush1.msra.mxu0 %v4298
        %4607 = vmatprep.subr.mxu0 %v4303
        %4608 = vmatpush1.msra.mxu0 %v4302
        %4609 = vmatprep.subr.mxu0 %v4307
        %4610 = vmatpush1.msra.mxu0 %v4306
        %4611 = vmatprep.subr.mxu0 %v4311
        %4612 = vmatpush1.msra.mxu0 %v4310
        %4613 = vmatprep.subr.mxu0 %v4315
        %4614 = vmatpush1.msra.mxu0 %v4314
        %4615 = vmatprep.mubr.f32.mxu0 %v4059
        %4616 = vmatmul.mubr.f32.gmra.mrb[0].mxu0 %v4058
        %v4617 = vpop.f32.mrb[0].mxu0
        %v4618 = vadd.f32 %v4547, %v4617
        %v4619 = vpop.f32.mrb[0].mxu0
        %v4620 = vadd.f32 %v4549, %v4619
        %4621 = vdwg.mxu0
        %v4622 = vtanh.pop %v4476
        %v4623 = vtanh.pop %v4478
        %v4624 = vtanh.pop %v4618
        %v4625 = vtanh.pop %v4620
        %v4626 = vld [vmem:[%s17] sm:$0xff]
        %v4627 = vld [vmem:[%s17 + $0x8] sm:$0xff]
        %v4628 = vld [vmem:[%s17 + $0x10] sm:$0xff]
        %v4629 = vld [vmem:[%s17 + $0x18] sm:$0xff]
        %v4630 = vld [vmem:[%s17 + $0x20] sm:$0xff]
        %v4631 = vld [vmem:[%s17 + $0x28] sm:$0xff]
        %v4632 = vld [vmem:[%s17 + $0x30] sm:$0xff]
        %v4633 = vld [vmem:[%s17 + $0x38] sm:$0xff]
        %v4634 = vld [vmem:[%s17 + $0x40] sm:$0xff]
        %v4635 = vld [vmem:[%s17 + $0x48] sm:$0xff]
        %v4636 = vld [vmem:[%s17 + $0x50] sm:$0xff]
        %v4637 = vld [vmem:[%s17 + $0x58] sm:$0xff]
        %v4638 = vld [vmem:[%s17 + $0x60] sm:$0xff]
        %v4639 = vld [vmem:[%s17 + $0x68] sm:$0xff]
        %v4640 = vld [vmem:[%s17 + $0x70] sm:$0xff]
        %v4641 = vld [vmem:[%s17 + $0x78] sm:$0xff]
        %v4642 = vld [vmem:[%s17 + $0x80] sm:$0xff]
        %v4643 = vld [vmem:[%s17 + $0x88] sm:$0xff]
        %v4644 = vld [vmem:[%s17 + $0x90] sm:$0xff]
        %v4645 = vld [vmem:[%s17 + $0x98] sm:$0xff]
        %v4646 = vld [vmem:[%s17 + $0xa0] sm:$0xff]
        %v4647 = vld [vmem:[%s17 + $0xa8] sm:$0xff]
        %v4648 = vld [vmem:[%s17 + $0xb0] sm:$0xff]
        %v4649 = vld [vmem:[%s17 + $0xb8] sm:$0xff]
        %v4650 = vld [vmem:[%s17 + $0xc0] sm:$0xff]
        %v4651 = vld [vmem:[%s17 + $0xc8] sm:$0xff]
        %v4652 = vld [vmem:[%s17 + $0xd0] sm:$0xff]
        %v4653 = vld [vmem:[%s17 + $0xd8] sm:$0xff]
        %v4654 = vld [vmem:[%s17 + $0xe0] sm:$0xff]
        %v4655 = vld [vmem:[%s17 + $0xe8] sm:$0xff]
        %v4656 = vld [vmem:[%s17 + $0xf0] sm:$0xff]
        %v4657 = vld [vmem:[%s17 + $0xf8] sm:$0xff]
        %v4658 = vld [vmem:[%s17 + $0x100] sm:$0xff]
        %v4659 = vld [vmem:[%s17 + $0x108] sm:$0xff]
        %v4660 = vld [vmem:[%s17 + $0x110] sm:$0xff]
        %v4661 = vld [vmem:[%s17 + $0x118] sm:$0xff]
        %v4662 = vld [vmem:[%s17 + $0x120] sm:$0xff]
        %v4663 = vld [vmem:[%s17 + $0x128] sm:$0xff]
        %v4664 = vld [vmem:[%s17 + $0x130] sm:$0xff]
        %v4665 = vld [vmem:[%s17 + $0x138] sm:$0xff]
        %v4666 = vld [vmem:[%s17 + $0x140] sm:$0xff]
        %v4667 = vld [vmem:[%s17 + $0x148] sm:$0xff]
        %v4668 = vld [vmem:[%s17 + $0x150] sm:$0xff]
        %v4669 = vld [vmem:[%s17 + $0x158] sm:$0xff]
        %v4670 = vld [vmem:[%s17 + $0x160] sm:$0xff]
        %v4671 = vld [vmem:[%s17 + $0x168] sm:$0xff]
        %v4672 = vld [vmem:[%s17 + $0x170] sm:$0xff]
        %v4673 = vld [vmem:[%s17 + $0x178] sm:$0xff]
        %v4674 = vld [vmem:[%s17 + $0x180] sm:$0xff]
        %v4675 = vld [vmem:[%s17 + $0x188] sm:$0xff]
        %v4676 = vld [vmem:[%s17 + $0x190] sm:$0xff]
        %v4677 = vld [vmem:[%s17 + $0x198] sm:$0xff]
        %v4678 = vld [vmem:[%s17 + $0x1a0] sm:$0xff]
        %v4679 = vld [vmem:[%s17 + $0x1a8] sm:$0xff]
        %v4680 = vld [vmem:[%s17 + $0x1b0] sm:$0xff]
        %v4681 = vld [vmem:[%s17 + $0x1b8] sm:$0xff]
        %v4682 = vld [vmem:[%s17 + $0x1c0] sm:$0xff]
        %v4683 = vld [vmem:[%s17 + $0x1c8] sm:$0xff]
        %v4684 = vld [vmem:[%s17 + $0x1d0] sm:$0xff]
        %v4685 = vld [vmem:[%s17 + $0x1d8] sm:$0xff]
        %v4686 = vld [vmem:[%s17 + $0x1e0] sm:$0xff]
        %v4687 = vld [vmem:[%s17 + $0x1e8] sm:$0xff]
        %v4688 = vld [vmem:[%s17 + $0x1f0] sm:$0xff]
        %v4689 = vld [vmem:[%s17 + $0x1f8] sm:$0xff]
        %v4690 = vld [vmem:[%s17 + $0x200] sm:$0xff]
        %v4691 = vld [vmem:[%s17 + $0x208] sm:$0xff]
        %v4692 = vld [vmem:[%s17 + $0x210] sm:$0xff]
        %v4693 = vld [vmem:[%s17 + $0x218] sm:$0xff]
        %v4694 = vld [vmem:[%s17 + $0x220] sm:$0xff]
        %v4695 = vld [vmem:[%s17 + $0x228] sm:$0xff]
        %v4696 = vld [vmem:[%s17 + $0x230] sm:$0xff]
        %v4697 = vld [vmem:[%s17 + $0x238] sm:$0xff]
        %v4698 = vld [vmem:[%s17 + $0x240] sm:$0xff]
        %v4699 = vld [vmem:[%s17 + $0x248] sm:$0xff]
        %v4700 = vld [vmem:[%s17 + $0x250] sm:$0xff]
        %v4701 = vld [vmem:[%s17 + $0x258] sm:$0xff]
        %v4702 = vld [vmem:[%s17 + $0x260] sm:$0xff]
        %v4703 = vld [vmem:[%s17 + $0x268] sm:$0xff]
        %v4704 = vld [vmem:[%s17 + $0x270] sm:$0xff]
        %v4705 = vld [vmem:[%s17 + $0x278] sm:$0xff]
        %v4706 = vld [vmem:[%s17 + $0x280] sm:$0xff]
        %v4707 = vld [vmem:[%s17 + $0x288] sm:$0xff]
        %v4708 = vld [vmem:[%s17 + $0x290] sm:$0xff]
        %v4709 = vld [vmem:[%s17 + $0x298] sm:$0xff]
        %v4710 = vld [vmem:[%s17 + $0x2a0] sm:$0xff]
        %v4711 = vld [vmem:[%s17 + $0x2a8] sm:$0xff]
        %v4712 = vld [vmem:[%s17 + $0x2b0] sm:$0xff]
        %v4713 = vld [vmem:[%s17 + $0x2b8] sm:$0xff]
        %v4714 = vld [vmem:[%s17 + $0x2c0] sm:$0xff]
        %v4715 = vld [vmem:[%s17 + $0x2c8] sm:$0xff]
        %v4716 = vld [vmem:[%s17 + $0x2d0] sm:$0xff]
        %v4717 = vld [vmem:[%s17 + $0x2d8] sm:$0xff]
        %v4718 = vld [vmem:[%s17 + $0x2e0] sm:$0xff]
        %v4719 = vld [vmem:[%s17 + $0x2e8] sm:$0xff]
        %v4720 = vld [vmem:[%s17 + $0x2f0] sm:$0xff]
        %v4721 = vld [vmem:[%s17 + $0x2f8] sm:$0xff]
        %v4722 = vld [vmem:[%s17 + $0x300] sm:$0xff]
        %v4723 = vld [vmem:[%s17 + $0x308] sm:$0xff]
        %v4724 = vld [vmem:[%s17 + $0x310] sm:$0xff]
        %v4725 = vld [vmem:[%s17 + $0x318] sm:$0xff]
        %v4726 = vld [vmem:[%s17 + $0x320] sm:$0xff]
        %v4727 = vld [vmem:[%s17 + $0x328] sm:$0xff]
        %v4728 = vld [vmem:[%s17 + $0x330] sm:$0xff]
        %v4729 = vld [vmem:[%s17 + $0x338] sm:$0xff]
        %v4730 = vld [vmem:[%s17 + $0x340] sm:$0xff]
        %v4731 = vld [vmem:[%s17 + $0x348] sm:$0xff]
        %v4732 = vld [vmem:[%s17 + $0x350] sm:$0xff]
        %v4733 = vld [vmem:[%s17 + $0x358] sm:$0xff]
        %v4734 = vld [vmem:[%s17 + $0x360] sm:$0xff]
        %v4735 = vld [vmem:[%s17 + $0x368] sm:$0xff]
        %v4736 = vld [vmem:[%s17 + $0x370] sm:$0xff]
        %v4737 = vld [vmem:[%s17 + $0x378] sm:$0xff]
        %v4738 = vld [vmem:[%s17 + $0x380] sm:$0xff]
        %v4739 = vld [vmem:[%s17 + $0x388] sm:$0xff]
        %v4740 = vld [vmem:[%s17 + $0x390] sm:$0xff]
        %v4741 = vld [vmem:[%s17 + $0x398] sm:$0xff]
        %v4742 = vld [vmem:[%s17 + $0x3a0] sm:$0xff]
        %v4743 = vld [vmem:[%s17 + $0x3a8] sm:$0xff]
        %v4744 = vld [vmem:[%s17 + $0x3b0] sm:$0xff]
        %v4745 = vld [vmem:[%s17 + $0x3b8] sm:$0xff]
        %v4746 = vld [vmem:[%s17 + $0x3c0] sm:$0xff]
        %v4747 = vld [vmem:[%s17 + $0x3c8] sm:$0xff]
        %v4748 = vld [vmem:[%s17 + $0x3d0] sm:$0xff]
        %v4749 = vld [vmem:[%s17 + $0x3d8] sm:$0xff]
        %v4750 = vld [vmem:[%s17 + $0x3e0] sm:$0xff]
        %v4751 = vld [vmem:[%s17 + $0x3e8] sm:$0xff]
        %v4752 = vld [vmem:[%s17 + $0x3f0] sm:$0xff]
        %v4753 = vld [vmem:[%s17 + $0x3f8] sm:$0xff]
        %v4754 = vld [vmem:[%s17 + $0x400] sm:$0xff]
        %v4755 = vld [vmem:[%s17 + $0x408] sm:$0xff]
        %v4756 = vld [vmem:[%s17 + $0x410] sm:$0xff]
        %v4757 = vld [vmem:[%s17 + $0x418] sm:$0xff]
        %v4758 = vld [vmem:[%s17 + $0x420] sm:$0xff]
        %v4759 = vld [vmem:[%s17 + $0x428] sm:$0xff]
        %v4760 = vld [vmem:[%s17 + $0x430] sm:$0xff]
        %v4761 = vld [vmem:[%s17 + $0x438] sm:$0xff]
        %v4762 = vld [vmem:[%s17 + $0x440] sm:$0xff]
        %v4763 = vld [vmem:[%s17 + $0x448] sm:$0xff]
        %v4764 = vld [vmem:[%s17 + $0x450] sm:$0xff]
        %v4765 = vld [vmem:[%s17 + $0x458] sm:$0xff]
        %v4766 = vld [vmem:[%s17 + $0x460] sm:$0xff]
        %v4767 = vld [vmem:[%s17 + $0x468] sm:$0xff]
        %v4768 = vld [vmem:[%s17 + $0x470] sm:$0xff]
        %v4769 = vld [vmem:[%s17 + $0x478] sm:$0xff]
        %v4770 = vld [vmem:[%s17 + $0x480] sm:$0xff]
        %v4771 = vld [vmem:[%s17 + $0x488] sm:$0xff]
        %v4772 = vld [vmem:[%s17 + $0x490] sm:$0xff]
        %v4773 = vld [vmem:[%s17 + $0x498] sm:$0xff]
        %v4774 = vld [vmem:[%s17 + $0x4a0] sm:$0xff]
        %v4775 = vld [vmem:[%s17 + $0x4a8] sm:$0xff]
        %v4776 = vld [vmem:[%s17 + $0x4b0] sm:$0xff]
        %v4777 = vld [vmem:[%s17 + $0x4b8] sm:$0xff]
        %v4778 = vld [vmem:[%s17 + $0x4c0] sm:$0xff]
        %v4779 = vld [vmem:[%s17 + $0x4c8] sm:$0xff]
        %v4780 = vld [vmem:[%s17 + $0x4d0] sm:$0xff]
        %v4781 = vld [vmem:[%s17 + $0x4d8] sm:$0xff]
        %v4782 = vld [vmem:[%s17 + $0x4e0] sm:$0xff]
        %v4783 = vld [vmem:[%s17 + $0x4e8] sm:$0xff]
        %v4784 = vld [vmem:[%s17 + $0x4f0] sm:$0xff]
        %v4785 = vld [vmem:[%s17 + $0x4f8] sm:$0xff]
        %v4786 = vld [vmem:[%s17 + $0x500] sm:$0xff]
        %v4787 = vld [vmem:[%s17 + $0x508] sm:$0xff]
        %v4788 = vld [vmem:[%s17 + $0x510] sm:$0xff]
        %v4789 = vld [vmem:[%s17 + $0x518] sm:$0xff]
        %v4790 = vld [vmem:[%s17 + $0x520] sm:$0xff]
        %v4791 = vld [vmem:[%s17 + $0x528] sm:$0xff]
        %v4792 = vld [vmem:[%s17 + $0x530] sm:$0xff]
        %v4793 = vld [vmem:[%s17 + $0x538] sm:$0xff]
        %v4794 = vld [vmem:[%s17 + $0x540] sm:$0xff]
        %v4795 = vld [vmem:[%s17 + $0x548] sm:$0xff]
        %v4796 = vld [vmem:[%s17 + $0x550] sm:$0xff]
        %v4797 = vld [vmem:[%s17 + $0x558] sm:$0xff]
        %v4798 = vld [vmem:[%s17 + $0x560] sm:$0xff]
        %v4799 = vld [vmem:[%s17 + $0x568] sm:$0xff]
        %v4800 = vld [vmem:[%s17 + $0x570] sm:$0xff]
        %v4801 = vld [vmem:[%s17 + $0x578] sm:$0xff]
        %v4802 = vld [vmem:[%s17 + $0x580] sm:$0xff]
        %v4803 = vld [vmem:[%s17 + $0x588] sm:$0xff]
        %v4804 = vld [vmem:[%s17 + $0x590] sm:$0xff]
        %v4805 = vld [vmem:[%s17 + $0x598] sm:$0xff]
        %v4806 = vld [vmem:[%s17 + $0x5a0] sm:$0xff]
        %v4807 = vld [vmem:[%s17 + $0x5a8] sm:$0xff]
        %v4808 = vld [vmem:[%s17 + $0x5b0] sm:$0xff]
        %v4809 = vld [vmem:[%s17 + $0x5b8] sm:$0xff]
        %v4810 = vld [vmem:[%s17 + $0x5c0] sm:$0xff]
        %v4811 = vld [vmem:[%s17 + $0x5c8] sm:$0xff]
        %v4812 = vld [vmem:[%s17 + $0x5d0] sm:$0xff]
        %v4813 = vld [vmem:[%s17 + $0x5d8] sm:$0xff]
        %v4814 = vld [vmem:[%s17 + $0x5e0] sm:$0xff]
        %v4815 = vld [vmem:[%s17 + $0x5e8] sm:$0xff]
        %v4816 = vld [vmem:[%s17 + $0x5f0] sm:$0xff]
        %v4817 = vld [vmem:[%s17 + $0x5f8] sm:$0xff]
        %v4818 = vld [vmem:[%s17 + $0x600] sm:$0xff]
        %v4819 = vld [vmem:[%s17 + $0x608] sm:$0xff]
        %v4820 = vld [vmem:[%s17 + $0x610] sm:$0xff]
        %v4821 = vld [vmem:[%s17 + $0x618] sm:$0xff]
        %v4822 = vld [vmem:[%s17 + $0x620] sm:$0xff]
        %v4823 = vld [vmem:[%s17 + $0x628] sm:$0xff]
        %v4824 = vld [vmem:[%s17 + $0x630] sm:$0xff]
        %v4825 = vld [vmem:[%s17 + $0x638] sm:$0xff]
        %v4826 = vld [vmem:[%s17 + $0x640] sm:$0xff]
        %v4827 = vld [vmem:[%s17 + $0x648] sm:$0xff]
        %v4828 = vld [vmem:[%s17 + $0x650] sm:$0xff]
        %v4829 = vld [vmem:[%s17 + $0x658] sm:$0xff]
        %v4830 = vld [vmem:[%s17 + $0x660] sm:$0xff]
        %v4831 = vld [vmem:[%s17 + $0x668] sm:$0xff]
        %v4832 = vld [vmem:[%s17 + $0x670] sm:$0xff]
        %v4833 = vld [vmem:[%s17 + $0x678] sm:$0xff]
        %v4834 = vld [vmem:[%s17 + $0x680] sm:$0xff]
        %v4835 = vld [vmem:[%s17 + $0x688] sm:$0xff]
        %v4836 = vld [vmem:[%s17 + $0x690] sm:$0xff]
        %v4837 = vld [vmem:[%s17 + $0x698] sm:$0xff]
        %v4838 = vld [vmem:[%s17 + $0x6a0] sm:$0xff]
        %v4839 = vld [vmem:[%s17 + $0x6a8] sm:$0xff]
        %v4840 = vld [vmem:[%s17 + $0x6b0] sm:$0xff]
        %v4841 = vld [vmem:[%s17 + $0x6b8] sm:$0xff]
        %v4842 = vld [vmem:[%s17 + $0x6c0] sm:$0xff]
        %v4843 = vld [vmem:[%s17 + $0x6c8] sm:$0xff]
        %v4844 = vld [vmem:[%s17 + $0x6d0] sm:$0xff]
        %v4845 = vld [vmem:[%s17 + $0x6d8] sm:$0xff]
        %v4846 = vld [vmem:[%s17 + $0x6e0] sm:$0xff]
        %v4847 = vld [vmem:[%s17 + $0x6e8] sm:$0xff]
        %v4848 = vld [vmem:[%s17 + $0x6f0] sm:$0xff]
        %v4849 = vld [vmem:[%s17 + $0x6f8] sm:$0xff]
        %v4850 = vld [vmem:[%s17 + $0x700] sm:$0xff]
        %v4851 = vld [vmem:[%s17 + $0x708] sm:$0xff]
        %v4852 = vld [vmem:[%s17 + $0x710] sm:$0xff]
        %v4853 = vld [vmem:[%s17 + $0x718] sm:$0xff]
        %v4854 = vld [vmem:[%s17 + $0x720] sm:$0xff]
        %v4855 = vld [vmem:[%s17 + $0x728] sm:$0xff]
        %v4856 = vld [vmem:[%s17 + $0x730] sm:$0xff]
        %v4857 = vld [vmem:[%s17 + $0x738] sm:$0xff]
        %v4858 = vld [vmem:[%s17 + $0x740] sm:$0xff]
        %v4859 = vld [vmem:[%s17 + $0x748] sm:$0xff]
        %v4860 = vld [vmem:[%s17 + $0x750] sm:$0xff]
        %v4861 = vld [vmem:[%s17 + $0x758] sm:$0xff]
        %v4862 = vld [vmem:[%s17 + $0x760] sm:$0xff]
        %v4863 = vld [vmem:[%s17 + $0x768] sm:$0xff]
        %v4864 = vld [vmem:[%s17 + $0x770] sm:$0xff]
        %v4865 = vld [vmem:[%s17 + $0x778] sm:$0xff]
        %v4866 = vld [vmem:[%s17 + $0x780] sm:$0xff]
        %v4867 = vld [vmem:[%s17 + $0x788] sm:$0xff]
        %v4868 = vld [vmem:[%s17 + $0x790] sm:$0xff]
        %v4869 = vld [vmem:[%s17 + $0x798] sm:$0xff]
        %v4870 = vld [vmem:[%s17 + $0x7a0] sm:$0xff]
        %v4871 = vld [vmem:[%s17 + $0x7a8] sm:$0xff]
        %v4872 = vld [vmem:[%s17 + $0x7b0] sm:$0xff]
        %v4873 = vld [vmem:[%s17 + $0x7b8] sm:$0xff]
        %v4874 = vld [vmem:[%s17 + $0x7c0] sm:$0xff]
        %v4875 = vld [vmem:[%s17 + $0x7c8] sm:$0xff]
        %v4876 = vld [vmem:[%s17 + $0x7d0] sm:$0xff]
        %v4877 = vld [vmem:[%s17 + $0x7d8] sm:$0xff]
        %v4878 = vld [vmem:[%s17 + $0x7e0] sm:$0xff]
        %v4879 = vld [vmem:[%s17 + $0x7e8] sm:$0xff]
        %v4880 = vld [vmem:[%s17 + $0x7f0] sm:$0xff]
        %v4881 = vld [vmem:[%s17 + $0x7f8] sm:$0xff]
        %v4882 = vld [vmem:[%s17 + $0x800] sm:$0xff]
        %v4883 = vld [vmem:[%s17 + $0x808] sm:$0xff]
        %v4884 = vld [vmem:[%s17 + $0x810] sm:$0xff]
        %v4885 = vld [vmem:[%s17 + $0x818] sm:$0xff]
        %v4886 = vld [vmem:[%s17 + $0x820] sm:$0xff]
        %v4887 = vld [vmem:[%s17 + $0x828] sm:$0xff]
        %v4888 = vld [vmem:[%s17 + $0x830] sm:$0xff]
        %v4889 = vld [vmem:[%s17 + $0x838] sm:$0xff]
        %v4890 = vld [vmem:[%s17 + $0x840] sm:$0xff]
        %v4891 = vld [vmem:[%s17 + $0x848] sm:$0xff]
        %v4892 = vld [vmem:[%s17 + $0x850] sm:$0xff]
        %v4893 = vld [vmem:[%s17 + $0x858] sm:$0xff]
        %v4894 = vld [vmem:[%s17 + $0x860] sm:$0xff]
        %v4895 = vld [vmem:[%s17 + $0x868] sm:$0xff]
        %v4896 = vld [vmem:[%s17 + $0x870] sm:$0xff]
        %v4897 = vld [vmem:[%s17 + $0x878] sm:$0xff]
        %v4898 = vld [vmem:[%s17 + $0x880] sm:$0xff]
        %v4899 = vld [vmem:[%s17 + $0x888] sm:$0xff]
        %v4900 = vld [vmem:[%s17 + $0x890] sm:$0xff]
        %v4901 = vld [vmem:[%s17 + $0x898] sm:$0xff]
        %v4902 = vld [vmem:[%s17 + $0x8a0] sm:$0xff]
        %v4903 = vld [vmem:[%s17 + $0x8a8] sm:$0xff]
        %v4904 = vld [vmem:[%s17 + $0x8b0] sm:$0xff]
        %v4905 = vld [vmem:[%s17 + $0x8b8] sm:$0xff]
        %v4906 = vld [vmem:[%s17 + $0x8c0] sm:$0xff]
        %v4907 = vld [vmem:[%s17 + $0x8c8] sm:$0xff]
        %v4908 = vld [vmem:[%s17 + $0x8d0] sm:$0xff]
        %v4909 = vld [vmem:[%s17 + $0x8d8] sm:$0xff]
        %v4910 = vld [vmem:[%s17 + $0x8e0] sm:$0xff]
        %v4911 = vld [vmem:[%s17 + $0x8e8] sm:$0xff]
        %v4912 = vld [vmem:[%s17 + $0x8f0] sm:$0xff]
        %v4913 = vld [vmem:[%s17 + $0x8f8] sm:$0xff]
        %v4914 = vld [vmem:[%s17 + $0x900] sm:$0xff]
        %v4915 = vld [vmem:[%s17 + $0x908] sm:$0xff]
        %v4916 = vld [vmem:[%s17 + $0x910] sm:$0xff]
        %v4917 = vld [vmem:[%s17 + $0x918] sm:$0xff]
        %v4918 = vld [vmem:[%s17 + $0x920] sm:$0xff]
        %v4919 = vld [vmem:[%s17 + $0x928] sm:$0xff]
        %v4920 = vld [vmem:[%s17 + $0x930] sm:$0xff]
        %v4921 = vld [vmem:[%s17 + $0x938] sm:$0xff]
        %v4922 = vld [vmem:[%s17 + $0x940] sm:$0xff]
        %v4923 = vld [vmem:[%s17 + $0x948] sm:$0xff]
        %v4924 = vld [vmem:[%s17 + $0x950] sm:$0xff]
        %v4925 = vld [vmem:[%s17 + $0x958] sm:$0xff]
        %v4926 = vld [vmem:[%s17 + $0x960] sm:$0xff]
        %v4927 = vld [vmem:[%s17 + $0x968] sm:$0xff]
        %v4928 = vld [vmem:[%s17 + $0x970] sm:$0xff]
        %v4929 = vld [vmem:[%s17 + $0x978] sm:$0xff]
        %v4930 = vld [vmem:[%s17 + $0x980] sm:$0xff]
        %v4931 = vld [vmem:[%s17 + $0x988] sm:$0xff]
        %v4932 = vld [vmem:[%s17 + $0x990] sm:$0xff]
        %v4933 = vld [vmem:[%s17 + $0x998] sm:$0xff]
        %v4934 = vld [vmem:[%s17 + $0x9a0] sm:$0xff]
        %v4935 = vld [vmem:[%s17 + $0x9a8] sm:$0xff]
        %v4936 = vld [vmem:[%s17 + $0x9b0] sm:$0xff]
        %v4937 = vld [vmem:[%s17 + $0x9b8] sm:$0xff]
        %v4938 = vld [vmem:[%s17 + $0x9c0] sm:$0xff]
        %v4939 = vld [vmem:[%s17 + $0x9c8] sm:$0xff]
        %v4940 = vld [vmem:[%s17 + $0x9d0] sm:$0xff]
        %v4941 = vld [vmem:[%s17 + $0x9d8] sm:$0xff]
        %v4942 = vld [vmem:[%s17 + $0x9e0] sm:$0xff]
        %v4943 = vld [vmem:[%s17 + $0x9e8] sm:$0xff]
        %v4944 = vld [vmem:[%s17 + $0x9f0] sm:$0xff]
        %v4945 = vld [vmem:[%s17 + $0x9f8] sm:$0xff]
        %v4946 = vld [vmem:[%s18] sm:$0x1f]
        %v4948 = vlaneseq
        %v4949 = vshrl.u32 %v4948, 7
        %v4950 = vsub.s32 0, %v4949
        %v4951 = vrot.slane %v4946, %v4950
        %v4952 = vlaneseq
        %v4953 = vshrl.u32 %v4952, 7
        %v4954 = vsub.s32 1, %v4953
        %v4955 = vrot.slane %v4946, %v4954
        %v4956 = vlaneseq
        %v4957 = vshrl.u32 %v4956, 7
        %v4958 = vsub.s32 2, %v4957
        %v4959 = vrot.slane %v4946, %v4958
        %v4960 = vlaneseq
        %v4961 = vshrl.u32 %v4960, 7
        %v4962 = vsub.s32 3, %v4961
        %v4963 = vrot.slane %v4946, %v4962
        %v4964 = vlaneseq
        %v4965 = vshrl.u32 %v4964, 7
        %v4966 = vsub.s32 4, %v4965
        %v4967 = vrot.slane %v4946, %v4966
        %4973 = vmatprep.subr.mxu0 %v4627
        %4974 = vmatpush1.msra.mxu0 %v4626
        %4975 = vmatprep.subr.mxu0 %v4632
        %4976 = vmatpush1.msra.mxu0 %v4631
        %4977 = vmatprep.subr.mxu0 %v4637
        %4978 = vmatpush1.msra.mxu0 %v4636
        %4979 = vmatprep.subr.mxu0 %v4642
        %4980 = vmatpush1.msra.mxu0 %v4641
        %4981 = vmatprep.subr.mxu0 %v4647
        %4982 = vmatpush1.msra.mxu0 %v4646
        %4983 = vmatprep.subr.mxu0 %v4652
        %4984 = vmatpush1.msra.mxu0 %v4651
        %4985 = vmatprep.subr.mxu0 %v4657
        %4986 = vmatpush1.msra.mxu0 %v4656
        %4987 = vmatprep.subr.mxu0 %v4662
        %4988 = vmatpush1.msra.mxu0 %v4661
        %4989 = vmatprep.subr.mxu0 %v4667
        %4990 = vmatpush1.msra.mxu0 %v4666
        %4991 = vmatprep.subr.mxu0 %v4672
        %4992 = vmatpush1.msra.mxu0 %v4671
        %4993 = vmatprep.subr.mxu0 %v4677
        %4994 = vmatpush1.msra.mxu0 %v4676
        %4995 = vmatprep.subr.mxu0 %v4682
        %4996 = vmatpush1.msra.mxu0 %v4681
        %4997 = vmatprep.subr.mxu0 %v4687
        %4998 = vmatpush1.msra.mxu0 %v4686
        %4999 = vmatprep.subr.mxu0 %v4692
        %5000 = vmatpush1.msra.mxu0 %v4691
        %5001 = vmatprep.subr.mxu0 %v4697
        %5002 = vmatpush1.msra.mxu0 %v4696
        %5003 = vmatprep.subr.mxu0 %v4702
        %5004 = vmatpush1.msra.mxu0 %v4701
        %5005 = vmatprep.subr.mxu0 %v4707
        %5006 = vmatpush1.msra.mxu0 %v4706
        %5007 = vmatprep.subr.mxu0 %v4712
        %5008 = vmatpush1.msra.mxu0 %v4711
        %5009 = vmatprep.subr.mxu0 %v4717
        %5010 = vmatpush1.msra.mxu0 %v4716
        %5011 = vmatprep.subr.mxu0 %v4722
        %5012 = vmatpush1.msra.mxu0 %v4721
        %5013 = vmatprep.subr.mxu0 %v4727
        %5014 = vmatpush1.msra.mxu0 %v4726
        %5015 = vmatprep.subr.mxu0 %v4732
        %5016 = vmatpush1.msra.mxu0 %v4731
        %5017 = vmatprep.subr.mxu0 %v4737
        %5018 = vmatpush1.msra.mxu0 %v4736
        %5019 = vmatprep.subr.mxu0 %v4742
        %5020 = vmatpush1.msra.mxu0 %v4741
        %5021 = vmatprep.subr.mxu0 %v4747
        %5022 = vmatpush1.msra.mxu0 %v4746
        %5023 = vmatprep.subr.mxu0 %v4752
        %5024 = vmatpush1.msra.mxu0 %v4751
        %5025 = vmatprep.subr.mxu0 %v4757
        %5026 = vmatpush1.msra.mxu0 %v4756
        %5027 = vmatprep.subr.mxu0 %v4762
        %5028 = vmatpush1.msra.mxu0 %v4761
        %5029 = vmatprep.subr.mxu0 %v4767
        %5030 = vmatpush1.msra.mxu0 %v4766
        %5031 = vmatprep.subr.mxu0 %v4772
        %5032 = vmatpush1.msra.mxu0 %v4771
        %5033 = vmatprep.subr.mxu0 %v4777
        %5034 = vmatpush1.msra.mxu0 %v4776
        %5035 = vmatprep.subr.mxu0 %v4782
        %5036 = vmatpush1.msra.mxu0 %v4781
        %5037 = vmatprep.mubr.f32.mxu0 %v4623
        %5038 = vmatmul.mubr.f32.gmra.mrb[0].mxu0 %v4622
        %v5039 = vpop.f32.mrb[0].mxu0
        %v5040 = vadd.f32 %v4951, %v5039
        %v5041 = vpop.f32.mrb[0].mxu0
        %v5042 = vadd.f32 %v4955, %v5041
        %5043 = vdwg.mxu0
        %5044 = vmatprep.subr.mxu0 %v4787
        %5045 = vmatpush1.msra.mxu0 %v4786
        %5046 = vmatprep.subr.mxu0 %v4792
        %5047 = vmatpush1.msra.mxu0 %v4791
        %5048 = vmatprep.subr.mxu0 %v4797
        %5049 = vmatpush1.msra.mxu0 %v4796
        %5050 = vmatprep.subr.mxu0 %v4802
        %5051 = vmatpush1.msra.mxu0 %v4801
        %5052 = vmatprep.subr.mxu0 %v4807
        %5053 = vmatpush1.msra.mxu0 %v4806
        %5054 = vmatprep.subr.mxu0 %v4812
        %5055 = vmatpush1.msra.mxu0 %v4811
        %5056 = vmatprep.subr.mxu0 %v4817
        %5057 = vmatpush1.msra.mxu0 %v4816
        %5058 = vmatprep.subr.mxu0 %v4822
        %5059 = vmatpush1.msra.mxu0 %v4821
        %5060 = vmatprep.subr.mxu0 %v4827
        %5061 = vmatpush1.msra.mxu0 %v4826
        %5062 = vmatprep.subr.mxu0 %v4832
        %5063 = vmatpush1.msra.mxu0 %v4831
        %5064 = vmatprep.subr.mxu0 %v4837
        %5065 = vmatpush1.msra.mxu0 %v4836
        %5066 = vmatprep.subr.mxu0 %v4842
        %5067 = vmatpush1.msra.mxu0 %v4841
        %5068 = vmatprep.subr.mxu0 %v4847
        %5069 = vmatpush1.msra.mxu0 %v4846
        %5070 = vmatprep.subr.mxu0 %v4852
        %5071 = vmatpush1.msra.mxu0 %v4851
        %5072 = vmatprep.subr.mxu0 %v4857
        %5073 = vmatpush1.msra.mxu0 %v4856
        %5074 = vmatprep.subr.mxu0 %v4862
        %5075 = vmatpush1.msra.mxu0 %v4861
        %5076 = vmatprep.subr.mxu0 %v4867
        %5077 = vmatpush1.msra.mxu0 %v4866
        %5078 = vmatprep.subr.mxu0 %v4872
        %5079 = vmatpush1.msra.mxu0 %v4871
        %5080 = vmatprep.subr.mxu0 %v4877
        %5081 = vmatpush1.msra.mxu0 %v4876
        %5082 = vmatprep.subr.mxu0 %v4882
        %5083 = vmatpush1.msra.mxu0 %v4881
        %5084 = vmatprep.subr.mxu0 %v4887
        %5085 = vmatpush1.msra.mxu0 %v4886
        %5086 = vmatprep.subr.mxu0 %v4892
        %5087 = vmatpush1.msra.mxu0 %v4891
        %5088 = vmatprep.subr.mxu0 %v4897
        %5089 = vmatpush1.msra.mxu0 %v4896
        %5090 = vmatprep.subr.mxu0 %v4902
        %5091 = vmatpush1.msra.mxu0 %v4901
        %5092 = vmatprep.subr.mxu0 %v4907
        %5093 = vmatpush1.msra.mxu0 %v4906
        %5094 = vmatprep.subr.mxu0 %v4912
        %5095 = vmatpush1.msra.mxu0 %v4911
        %5096 = vmatprep.subr.mxu0 %v4917
        %5097 = vmatpush1.msra.mxu0 %v4916
        %5098 = vmatprep.subr.mxu0 %v4922
        %5099 = vmatpush1.msra.mxu0 %v4921
        %5100 = vmatprep.subr.mxu0 %v4927
        %5101 = vmatpush1.msra.mxu0 %v4926
        %5102 = vmatprep.subr.mxu0 %v4932
        %5103 = vmatpush1.msra.mxu0 %v4931
        %5104 = vmatprep.subr.mxu0 %v4937
        %5105 = vmatpush1.msra.mxu0 %v4936
        %5106 = vmatprep.subr.mxu0 %v4942
        %5107 = vmatpush1.msra.mxu0 %v4941
        %5108 = vmatprep.mubr.f32.mxu0 %v4625
        %5109 = vmatmul.mubr.f32.gmra.mrb[0].mxu0 %v4624
        %v5110 = vpop.f32.mrb[0].mxu0
        %v5111 = vadd.f32 %v5040, %v5110
        %v5112 = vpop.f32.mrb[0].mxu0
        %v5113 = vadd.f32 %v5042, %v5112
        %5114 = vdwg.mxu0
        %5115 = vmatprep.subr.mxu0 %v4629
        %5116 = vmatpush1.msra.mxu0 %v4628
        %5117 = vmatprep.subr.mxu0 %v4634
        %5118 = vmatpush1.msra.mxu0 %v4633
        %5119 = vmatprep.subr.mxu0 %v4639
        %5120 = vmatpush1.msra.mxu0 %v4638
        %5121 = vmatprep.subr.mxu0 %v4644
        %5122 = vmatpush1.msra.mxu0 %v4643
        %5123 = vmatprep.subr.mxu0 %v4649
        %5124 = vmatpush1.msra.mxu0 %v4648
        %5125 = vmatprep.subr.mxu0 %v4654
        %5126 = vmatpush1.msra.mxu0 %v4653
        %5127 = vmatprep.subr.mxu0 %v4659
        %5128 = vmatpush1.msra.mxu0 %v4658
        %5129 = vmatprep.subr.mxu0 %v4664
        %5130 = vmatpush1.msra.mxu0 %v4663
        %5131 = vmatprep.subr.mxu0 %v4669
        %5132 = vmatpush1.msra.mxu0 %v4668
        %5133 = vmatprep.subr.mxu0 %v4674
        %5134 = vmatpush1.msra.mxu0 %v4673
        %5135 = vmatprep.subr.mxu0 %v4679
        %5136 = vmatpush1.msra.mxu0 %v4678
        %5137 = vmatprep.subr.mxu0 %v4684
        %5138 = vmatpush1.msra.mxu0 %v4683
        %5139 = vmatprep.subr.mxu0 %v4689
        %5140 = vmatpush1.msra.mxu0 %v4688
        %5141 = vmatprep.subr.mxu0 %v4694
        %5142 = vmatpush1.msra.mxu0 %v4693
        %5143 = vmatprep.subr.mxu0 %v4699
        %5144 = vmatpush1.msra.mxu0 %v4698
        %5145 = vmatprep.subr.mxu0 %v4704
        %5146 = vmatpush1.msra.mxu0 %v4703
        %5147 = vmatprep.subr.mxu0 %v4709
        %5148 = vmatpush1.msra.mxu0 %v4708
        %5149 = vmatprep.subr.mxu0 %v4714
        %5150 = vmatpush1.msra.mxu0 %v4713
        %5151 = vmatprep.subr.mxu0 %v4719
        %5152 = vmatpush1.msra.mxu0 %v4718
        %5153 = vmatprep.subr.mxu0 %v4724
        %5154 = vmatpush1.msra.mxu0 %v4723
        %5155 = vmatprep.subr.mxu0 %v4729
        %5156 = vmatpush1.msra.mxu0 %v4728
        %5157 = vmatprep.subr.mxu0 %v4734
        %5158 = vmatpush1.msra.mxu0 %v4733
        %5159 = vmatprep.subr.mxu0 %v4739
        %5160 = vmatpush1.msra.mxu0 %v4738
        %5161 = vmatprep.subr.mxu0 %v4744
        %5162 = vmatpush1.msra.mxu0 %v4743
        %5163 = vmatprep.subr.mxu0 %v4749
        %5164 = vmatpush1.msra.mxu0 %v4748
        %5165 = vmatprep.subr.mxu0 %v4754
        %5166 = vmatpush1.msra.mxu0 %v4753
        %5167 = vmatprep.subr.mxu0 %v4759
        %5168 = vmatpush1.msra.mxu0 %v4758
        %5169 = vmatprep.subr.mxu0 %v4764
        %5170 = vmatpush1.msra.mxu0 %v4763
        %5171 = vmatprep.subr.mxu0 %v4769
        %5172 = vmatpush1.msra.mxu0 %v4768
        %5173 = vmatprep.subr.mxu0 %v4774
        %5174 = vmatpush1.msra.mxu0 %v4773
        %5175 = vmatprep.subr.mxu0 %v4779
        %5176 = vmatpush1.msra.mxu0 %v4778
        %5177 = vmatprep.subr.mxu0 %v4784
        %5178 = vmatpush1.msra.mxu0 %v4783
        %5179 = vmatprep.mubr.f32.mxu0 %v4623
        %5180 = vmatmul.mubr.f32.gmra.mrb[0].mxu0 %v4622
        %v5181 = vpop.f32.mrb[0].mxu0
        %v5182 = vadd.f32 %v4959, %v5181
        %v5183 = vpop.f32.mrb[0].mxu0
        %v5184 = vadd.f32 %v4963, %v5183
        %5185 = vdwg.mxu0
        %5186 = vmatprep.subr.mxu0 %v4789
        %5187 = vmatpush1.msra.mxu0 %v4788
        %5188 = vmatprep.subr.mxu0 %v4794
        %5189 = vmatpush1.msra.mxu0 %v4793
        %5190 = vmatprep.subr.mxu0 %v4799
        %5191 = vmatpush1.msra.mxu0 %v4798
        %5192 = vmatprep.subr.mxu0 %v4804
        %5193 = vmatpush1.msra.mxu0 %v4803
        %5194 = vmatprep.subr.mxu0 %v4809
        %5195 = vmatpush1.msra.mxu0 %v4808
        %5196 = vmatprep.subr.mxu0 %v4814
        %5197 = vmatpush1.msra.mxu0 %v4813
        %5198 = vmatprep.subr.mxu0 %v4819
        %5199 = vmatpush1.msra.mxu0 %v4818
        %5200 = vmatprep.subr.mxu0 %v4824
        %5201 = vmatpush1.msra.mxu0 %v4823
        %5202 = vmatprep.subr.mxu0 %v4829
        %5203 = vmatpush1.msra.mxu0 %v4828
        %5204 = vmatprep.subr.mxu0 %v4834
        %5205 = vmatpush1.msra.mxu0 %v4833
        %5206 = vmatprep.subr.mxu0 %v4839
        %5207 = vmatpush1.msra.mxu0 %v4838
        %5208 = vmatprep.subr.mxu0 %v4844
        %5209 = vmatpush1.msra.mxu0 %v4843
        %5210 = vmatprep.subr.mxu0 %v4849
        %5211 = vmatpush1.msra.mxu0 %v4848
        %5212 = vmatprep.subr.mxu0 %v4854
        %5213 = vmatpush1.msra.mxu0 %v4853
        %5214 = vmatprep.subr.mxu0 %v4859
        %5215 = vmatpush1.msra.mxu0 %v4858
        %5216 = vmatprep.subr.mxu0 %v4864
        %5217 = vmatpush1.msra.mxu0 %v4863
        %5218 = vmatprep.subr.mxu0 %v4869
        %5219 = vmatpush1.msra.mxu0 %v4868
        %5220 = vmatprep.subr.mxu0 %v4874
        %5221 = vmatpush1.msra.mxu0 %v4873
        %5222 = vmatprep.subr.mxu0 %v4879
        %5223 = vmatpush1.msra.mxu0 %v4878
        %5224 = vmatprep.subr.mxu0 %v4884
        %5225 = vmatpush1.msra.mxu0 %v4883
        %5226 = vmatprep.subr.mxu0 %v4889
        %5227 = vmatpush1.msra.mxu0 %v4888
        %5228 = vmatprep.subr.mxu0 %v4894
        %5229 = vmatpush1.msra.mxu0 %v4893
        %5230 = vmatprep.subr.mxu0 %v4899
        %5231 = vmatpush1.msra.mxu0 %v4898
        %5232 = vmatprep.subr.mxu0 %v4904
        %5233 = vmatpush1.msra.mxu0 %v4903
        %5234 = vmatprep.subr.mxu0 %v4909
        %5235 = vmatpush1.msra.mxu0 %v4908
        %5236 = vmatprep.subr.mxu0 %v4914
        %5237 = vmatpush1.msra.mxu0 %v4913
        %5238 = vmatprep.subr.mxu0 %v4919
        %5239 = vmatpush1.msra.mxu0 %v4918
        %5240 = vmatprep.subr.mxu0 %v4924
        %5241 = vmatpush1.msra.mxu0 %v4923
        %5242 = vmatprep.subr.mxu0 %v4929
        %5243 = vmatpush1.msra.mxu0 %v4928
        %5244 = vmatprep.subr.mxu0 %v4934
        %5245 = vmatpush1.msra.mxu0 %v4933
        %5246 = vmatprep.subr.mxu0 %v4939
        %5247 = vmatpush1.msra.mxu0 %v4938
        %5248 = vmatprep.subr.mxu0 %v4944
        %5249 = vmatpush1.msra.mxu0 %v4943
        %5250 = vmatprep.mubr.f32.mxu0 %v4625
        %5251 = vmatmul.mubr.f32.gmra.mrb[0].mxu0 %v4624
        %v5252 = vpop.f32.mrb[0].mxu0
        %v5253 = vadd.f32 %v5182, %v5252
        %v5254 = vpop.f32.mrb[0].mxu0
        %v5255 = vadd.f32 %v5184, %v5254
        %5256 = vdwg.mxu0
        %5257 = vmatprep.subr.mxu0 0.0
        %5258 = vmatpush1.msra.mxu0 %v4630
        %5259 = vmatprep.subr.mxu0 0.0
        %5260 = vmatpush1.msra.mxu0 %v4635
        %5261 = vmatprep.subr.mxu0 0.0
        %5262 = vmatpush1.msra.mxu0 %v4640
        %5263 = vmatprep.subr.mxu0 0.0
        %5264 = vmatpush1.msra.mxu0 %v4645
        %5265 = vmatprep.subr.mxu0 0.0
        %5266 = vmatpush1.msra.mxu0 %v4650
        %5267 = vmatprep.subr.mxu0 0.0
        %5268 = vmatpush1.msra.mxu0 %v4655
        %5269 = vmatprep.subr.mxu0 0.0
        %5270 = vmatpush1.msra.mxu0 %v4660
        %5271 = vmatprep.subr.mxu0 0.0
        %5272 = vmatpush1.msra.mxu0 %v4665
        %5273 = vmatprep.subr.mxu0 0.0
        %5274 = vmatpush1.msra.mxu0 %v4670
        %5275 = vmatprep.subr.mxu0 0.0
        %5276 = vmatpush1.msra.mxu0 %v4675
        %5277 = vmatprep.subr.mxu0 0.0
        %5278 = vmatpush1.msra.mxu0 %v4680
        %5279 = vmatprep.subr.mxu0 0.0
        %5280 = vmatpush1.msra.mxu0 %v4685
        %5281 = vmatprep.subr.mxu0 0.0
        %5282 = vmatpush1.msra.mxu0 %v4690
        %5283 = vmatprep.subr.mxu0 0.0
        %5284 = vmatpush1.msra.mxu0 %v4695
        %5285 = vmatprep.subr.mxu0 0.0
        %5286 = vmatpush1.msra.mxu0 %v4700
        %5287 = vmatprep.subr.mxu0 0.0
        %5288 = vmatpush1.msra.mxu0 %v4705
        %5289 = vmatprep.subr.mxu0 0.0
        %5290 = vmatpush1.msra.mxu0 %v4710
        %5291 = vmatprep.subr.mxu0 0.0
        %5292 = vmatpush1.msra.mxu0 %v4715
        %5293 = vmatprep.subr.mxu0 0.0
        %5294 = vmatpush1.msra.mxu0 %v4720
        %5295 = vmatprep.subr.mxu0 0.0
        %5296 = vmatpush1.msra.mxu0 %v4725
        %5297 = vmatprep.subr.mxu0 0.0
        %5298 = vmatpush1.msra.mxu0 %v4730
        %5299 = vmatprep.subr.mxu0 0.0
        %5300 = vmatpush1.msra.mxu0 %v4735
        %5301 = vmatprep.subr.mxu0 0.0
        %5302 = vmatpush1.msra.mxu0 %v4740
        %5303 = vmatprep.subr.mxu0 0.0
        %5304 = vmatpush1.msra.mxu0 %v4745
        %5305 = vmatprep.subr.mxu0 0.0
        %5306 = vmatpush1.msra.mxu0 %v4750
        %5307 = vmatprep.subr.mxu0 0.0
        %5308 = vmatpush1.msra.mxu0 %v4755
        %5309 = vmatprep.subr.mxu0 0.0
        %5310 = vmatpush1.msra.mxu0 %v4760
        %5311 = vmatprep.subr.mxu0 0.0
        %5312 = vmatpush1.msra.mxu0 %v4765
        %5313 = vmatprep.subr.mxu0 0.0
        %5314 = vmatpush1.msra.mxu0 %v4770
        %5315 = vmatprep.subr.mxu0 0.0
        %5316 = vmatpush1.msra.mxu0 %v4775
        %5317 = vmatprep.subr.mxu0 0.0
        %5318 = vmatpush1.msra.mxu0 %v4780
        %5319 = vmatprep.subr.mxu0 0.0
        %5320 = vmatpush1.msra.mxu0 %v4785
        %5321 = vmatprep.mubr.f32.mxu0 %v4623
        %5322 = vmatmul.mubr.f32.gmra.mrb[0].mxu0 %v4622
        %v5323 = vpop.f32.mrb[0].mxu0
        %v5324 = vadd.f32 %v4967, %v5323
        %v5325 = vpop.f32.mrb[0].mxu0
        %5326 = vdwg.mxu0
        %5327 = vmatprep.subr.mxu0 0.0
        %5328 = vmatpush1.msra.mxu0 %v4790
        %5329 = vmatprep.subr.mxu0 0.0
        %5330 = vmatpush1.msra.mxu0 %v4795
        %5331 = vmatprep.subr.mxu0 0.0
        %5332 = vmatpush1.msra.mxu0 %v4800
        %5333 = vmatprep.subr.mxu0 0.0
        %5334 = vmatpush1.msra.mxu0 %v4805
        %5335 = vmatprep.subr.mxu0 0.0
        %5336 = vmatpush1.msra.mxu0 %v4810
        %5337 = vmatprep.subr.mxu0 0.0
        %5338 = vmatpush1.msra.mxu0 %v4815
        %5339 = vmatprep.subr.mxu0 0.0
        %5340 = vmatpush1.msra.mxu0 %v4820
        %5341 = vmatprep.subr.mxu0 0.0
        %5342 = vmatpush1.msra.mxu0 %v4825
        %5343 = vmatprep.subr.mxu0 0.0
        %5344 = vmatpush1.msra.mxu0 %v4830
        %5345 = vmatprep.subr.mxu0 0.0
        %5346 = vmatpush1.msra.mxu0 %v4835
        %5347 = vmatprep.subr.mxu0 0.0
        %5348 = vmatpush1.msra.mxu0 %v4840
        %5349 = vmatprep.subr.mxu0 0.0
        %5350 = vmatpush1.msra.mxu0 %v4845
        %5351 = vmatprep.subr.mxu0 0.0
        %5352 = vmatpush1.msra.mxu0 %v4850
        %5353 = vmatprep.subr.mxu0 0.0
        %5354 = vmatpush1.msra.mxu0 %v4855
        %5355 = vmatprep.subr.mxu0 0.0
        %5356 = vmatpush1.msra.mxu0 %v4860
        %5357 = vmatprep.subr.mxu0 0.0
        %5358 = vmatpush1.msra.mxu0 %v4865
        %5359 = vmatprep.subr.mxu0 0.0
        %5360 = vmatpush1.msra.mxu0 %v4870
        %5361 = vmatprep.subr.mxu0 0.0
        %5362 = vmatpush1.msra.mxu0 %v4875
        %5363 = vmatprep.subr.mxu0 0.0
        %5364 = vmatpush1.msra.mxu0 %v4880
        %5365 = vmatprep.subr.mxu0 0.0
        %5366 = vmatpush1.msra.mxu0 %v4885
        %5367 = vmatprep.subr.mxu0 0.0
        %5368 = vmatpush1.msra.mxu0 %v4890
        %5369 = vmatprep.subr.mxu0 0.0
        %5370 = vmatpush1.msra.mxu0 %v4895
        %5371 = vmatprep.subr.mxu0 0.0
        %5372 = vmatpush1.msra.mxu0 %v4900
        %5373 = vmatprep.subr.mxu0 0.0
        %5374 = vmatpush1.msra.mxu0 %v4905
        %5375 = vmatprep.subr.mxu0 0.0
        %5376 = vmatpush1.msra.mxu0 %v4910
        %5377 = vmatprep.subr.mxu0 0.0
        %5378 = vmatpush1.msra.mxu0 %v4915
        %5379 = vmatprep.subr.mxu0 0.0
        %5380 = vmatpush1.msra.mxu0 %v4920
        %5381 = vmatprep.subr.mxu0 0.0
        %5382 = vmatpush1.msra.mxu0 %v4925
        %5383 = vmatprep.subr.mxu0 0.0
        %5384 = vmatpush1.msra.mxu0 %v4930
        %5385 = vmatprep.subr.mxu0 0.0
        %5386 = vmatpush1.msra.mxu0 %v4935
        %5387 = vmatprep.subr.mxu0 0.0
        %5388 = vmatpush1.msra.mxu0 %v4940
        %5389 = vmatprep.subr.mxu0 0.0
        %5390 = vmatpush1.msra.mxu0 %v4945
        %5391 = vmatprep.mubr.f32.mxu0 %v4625
        %5392 = vmatmul.mubr.f32.gmra.mrb[0].mxu0 %v4624
        %v5393 = vpop.f32.mrb[0].mxu0
        %v5394 = vadd.f32 %v5324, %v5393
        %v5395 = vpop.f32.mrb[0].mxu0
        %5396 = vdwg.mxu0
        %v5397 = vtanh.pop %v5111
        %v5398 = vtanh.pop %v5113
        %v5399 = vtanh.pop %v5253
        %v5400 = vtanh.pop %v5255
        %v5401 = vtanh.pop %v5394
        %v5402 = vld [vmem:[%s19] sm:$0xff]
        %v5403 = vld [vmem:[%s19 + $0x8] sm:$0xff]
        %v5404 = vld [vmem:[%s19 + $0x10] sm:$0xff]
        %v5405 = vld [vmem:[%s19 + $0x18] sm:$0xff]
        %v5406 = vld [vmem:[%s19 + $0x20] sm:$0xff]
        %v5407 = vld [vmem:[%s19 + $0x28] sm:$0xff]
        %v5408 = vld [vmem:[%s19 + $0x30] sm:$0xff]
        %v5409 = vld [vmem:[%s19 + $0x38] sm:$0xff]
        %v5410 = vld [vmem:[%s19 + $0x40] sm:$0xff]
        %v5411 = vld [vmem:[%s19 + $0x48] sm:$0xff]
        %v5412 = vld [vmem:[%s19 + $0x50] sm:$0xff]
        %v5413 = vld [vmem:[%s19 + $0x58] sm:$0xff]
        %v5414 = vld [vmem:[%s19 + $0x60] sm:$0xff]
        %v5415 = vld [vmem:[%s19 + $0x68] sm:$0xff]
        %v5416 = vld [vmem:[%s19 + $0x70] sm:$0xff]
        %v5417 = vld [vmem:[%s19 + $0x78] sm:$0xff]
        %v5418 = vld [vmem:[%s19 + $0x80] sm:$0xff]
        %v5419 = vld [vmem:[%s19 + $0x88] sm:$0xff]
        %v5420 = vld [vmem:[%s19 + $0x90] sm:$0xff]
        %v5421 = vld [vmem:[%s19 + $0x98] sm:$0xff]
        %v5422 = vld [vmem:[%s19 + $0xa0] sm:$0xff]
        %v5423 = vld [vmem:[%s19 + $0xa8] sm:$0xff]
        %v5424 = vld [vmem:[%s19 + $0xb0] sm:$0xff]
        %v5425 = vld [vmem:[%s19 + $0xb8] sm:$0xff]
        %v5426 = vld [vmem:[%s19 + $0xc0] sm:$0xff]
        %v5427 = vld [vmem:[%s19 + $0xc8] sm:$0xff]
        %v5428 = vld [vmem:[%s19 + $0xd0] sm:$0xff]
        %v5429 = vld [vmem:[%s19 + $0xd8] sm:$0xff]
        %v5430 = vld [vmem:[%s19 + $0xe0] sm:$0xff]
        %v5431 = vld [vmem:[%s19 + $0xe8] sm:$0xff]
        %v5432 = vld [vmem:[%s19 + $0xf0] sm:$0xff]
        %v5433 = vld [vmem:[%s19 + $0xf8] sm:$0xff]
        %v5434 = vld [vmem:[%s19 + $0x100] sm:$0xff]
        %v5435 = vld [vmem:[%s19 + $0x108] sm:$0xff]
        %v5436 = vld [vmem:[%s19 + $0x110] sm:$0xff]
        %v5437 = vld [vmem:[%s19 + $0x118] sm:$0xff]
        %v5438 = vld [vmem:[%s19 + $0x120] sm:$0xff]
        %v5439 = vld [vmem:[%s19 + $0x128] sm:$0xff]
        %v5440 = vld [vmem:[%s19 + $0x130] sm:$0xff]
        %v5441 = vld [vmem:[%s19 + $0x138] sm:$0xff]
        %v5442 = vld [vmem:[%s19 + $0x140] sm:$0xff]
        %v5443 = vld [vmem:[%s19 + $0x148] sm:$0xff]
        %v5444 = vld [vmem:[%s19 + $0x150] sm:$0xff]
        %v5445 = vld [vmem:[%s19 + $0x158] sm:$0xff]
        %v5446 = vld [vmem:[%s19 + $0x160] sm:$0xff]
        %v5447 = vld [vmem:[%s19 + $0x168] sm:$0xff]
        %v5448 = vld [vmem:[%s19 + $0x170] sm:$0xff]
        %v5449 = vld [vmem:[%s19 + $0x178] sm:$0xff]
        %v5450 = vld [vmem:[%s19 + $0x180] sm:$0xff]
        %v5451 = vld [vmem:[%s19 + $0x188] sm:$0xff]
        %v5452 = vld [vmem:[%s19 + $0x190] sm:$0xff]
        %v5453 = vld [vmem:[%s19 + $0x198] sm:$0xff]
        %v5454 = vld [vmem:[%s19 + $0x1a0] sm:$0xff]
        %v5455 = vld [vmem:[%s19 + $0x1a8] sm:$0xff]
        %v5456 = vld [vmem:[%s19 + $0x1b0] sm:$0xff]
        %v5457 = vld [vmem:[%s19 + $0x1b8] sm:$0xff]
        %v5458 = vld [vmem:[%s19 + $0x1c0] sm:$0xff]
        %v5459 = vld [vmem:[%s19 + $0x1c8] sm:$0xff]
        %v5460 = vld [vmem:[%s19 + $0x1d0] sm:$0xff]
        %v5461 = vld [vmem:[%s19 + $0x1d8] sm:$0xff]
        %v5462 = vld [vmem:[%s19 + $0x1e0] sm:$0xff]
        %v5463 = vld [vmem:[%s19 + $0x1e8] sm:$0xff]
        %v5464 = vld [vmem:[%s19 + $0x1f0] sm:$0xff]
        %v5465 = vld [vmem:[%s19 + $0x1f8] sm:$0xff]
        %v5466 = vld [vmem:[%s19 + $0x200] sm:$0xff]
        %v5467 = vld [vmem:[%s19 + $0x208] sm:$0xff]
        %v5468 = vld [vmem:[%s19 + $0x210] sm:$0xff]
        %v5469 = vld [vmem:[%s19 + $0x218] sm:$0xff]
        %v5470 = vld [vmem:[%s19 + $0x220] sm:$0xff]
        %v5471 = vld [vmem:[%s19 + $0x228] sm:$0xff]
        %v5472 = vld [vmem:[%s19 + $0x230] sm:$0xff]
        %v5473 = vld [vmem:[%s19 + $0x238] sm:$0xff]
        %v5474 = vld [vmem:[%s19 + $0x240] sm:$0xff]
        %v5475 = vld [vmem:[%s19 + $0x248] sm:$0xff]
        %v5476 = vld [vmem:[%s19 + $0x250] sm:$0xff]
        %v5477 = vld [vmem:[%s19 + $0x258] sm:$0xff]
        %v5478 = vld [vmem:[%s19 + $0x260] sm:$0xff]
        %v5479 = vld [vmem:[%s19 + $0x268] sm:$0xff]
        %v5480 = vld [vmem:[%s19 + $0x270] sm:$0xff]
        %v5481 = vld [vmem:[%s19 + $0x278] sm:$0xff]
        %v5482 = vld [vmem:[%s19 + $0x280] sm:$0xff]
        %v5483 = vld [vmem:[%s19 + $0x288] sm:$0xff]
        %v5484 = vld [vmem:[%s19 + $0x290] sm:$0xff]
        %v5485 = vld [vmem:[%s19 + $0x298] sm:$0xff]
        %v5486 = vld [vmem:[%s19 + $0x2a0] sm:$0xff]
        %v5487 = vld [vmem:[%s19 + $0x2a8] sm:$0xff]
        %v5488 = vld [vmem:[%s19 + $0x2b0] sm:$0xff]
        %v5489 = vld [vmem:[%s19 + $0x2b8] sm:$0xff]
        %v5490 = vld [vmem:[%s19 + $0x2c0] sm:$0xff]
        %v5491 = vld [vmem:[%s19 + $0x2c8] sm:$0xff]
        %v5492 = vld [vmem:[%s19 + $0x2d0] sm:$0xff]
        %v5493 = vld [vmem:[%s19 + $0x2d8] sm:$0xff]
        %v5494 = vld [vmem:[%s19 + $0x2e0] sm:$0xff]
        %v5495 = vld [vmem:[%s19 + $0x2e8] sm:$0xff]
        %v5496 = vld [vmem:[%s19 + $0x2f0] sm:$0xff]
        %v5497 = vld [vmem:[%s19 + $0x2f8] sm:$0xff]
        %v5498 = vld [vmem:[%s19 + $0x300] sm:$0xff]
        %v5499 = vld [vmem:[%s19 + $0x308] sm:$0xff]
        %v5500 = vld [vmem:[%s19 + $0x310] sm:$0xff]
        %v5501 = vld [vmem:[%s19 + $0x318] sm:$0xff]
        %v5502 = vld [vmem:[%s19 + $0x320] sm:$0xff]
        %v5503 = vld [vmem:[%s19 + $0x328] sm:$0xff]
        %v5504 = vld [vmem:[%s19 + $0x330] sm:$0xff]
        %v5505 = vld [vmem:[%s19 + $0x338] sm:$0xff]
        %v5506 = vld [vmem:[%s19 + $0x340] sm:$0xff]
        %v5507 = vld [vmem:[%s19 + $0x348] sm:$0xff]
        %v5508 = vld [vmem:[%s19 + $0x350] sm:$0xff]
        %v5509 = vld [vmem:[%s19 + $0x358] sm:$0xff]
        %v5510 = vld [vmem:[%s19 + $0x360] sm:$0xff]
        %v5511 = vld [vmem:[%s19 + $0x368] sm:$0xff]
        %v5512 = vld [vmem:[%s19 + $0x370] sm:$0xff]
        %v5513 = vld [vmem:[%s19 + $0x378] sm:$0xff]
        %v5514 = vld [vmem:[%s19 + $0x380] sm:$0xff]
        %v5515 = vld [vmem:[%s19 + $0x388] sm:$0xff]
        %v5516 = vld [vmem:[%s19 + $0x390] sm:$0xff]
        %v5517 = vld [vmem:[%s19 + $0x398] sm:$0xff]
        %v5518 = vld [vmem:[%s19 + $0x3a0] sm:$0xff]
        %v5519 = vld [vmem:[%s19 + $0x3a8] sm:$0xff]
        %v5520 = vld [vmem:[%s19 + $0x3b0] sm:$0xff]
        %v5521 = vld [vmem:[%s19 + $0x3b8] sm:$0xff]
        %v5522 = vld [vmem:[%s19 + $0x3c0] sm:$0xff]
        %v5523 = vld [vmem:[%s19 + $0x3c8] sm:$0xff]
        %v5524 = vld [vmem:[%s19 + $0x3d0] sm:$0xff]
        %v5525 = vld [vmem:[%s19 + $0x3d8] sm:$0xff]
        %v5526 = vld [vmem:[%s19 + $0x3e0] sm:$0xff]
        %v5527 = vld [vmem:[%s19 + $0x3e8] sm:$0xff]
        %v5528 = vld [vmem:[%s19 + $0x3f0] sm:$0xff]
        %v5529 = vld [vmem:[%s19 + $0x3f8] sm:$0xff]
        %v5530 = vld [vmem:[%s19 + $0x400] sm:$0xff]
        %v5531 = vld [vmem:[%s19 + $0x408] sm:$0xff]
        %v5532 = vld [vmem:[%s19 + $0x410] sm:$0xff]
        %v5533 = vld [vmem:[%s19 + $0x418] sm:$0xff]
        %v5534 = vld [vmem:[%s19 + $0x420] sm:$0xff]
        %v5535 = vld [vmem:[%s19 + $0x428] sm:$0xff]
        %v5536 = vld [vmem:[%s19 + $0x430] sm:$0xff]
        %v5537 = vld [vmem:[%s19 + $0x438] sm:$0xff]
        %v5538 = vld [vmem:[%s19 + $0x440] sm:$0xff]
        %v5539 = vld [vmem:[%s19 + $0x448] sm:$0xff]
        %v5540 = vld [vmem:[%s19 + $0x450] sm:$0xff]
        %v5541 = vld [vmem:[%s19 + $0x458] sm:$0xff]
        %v5542 = vld [vmem:[%s19 + $0x460] sm:$0xff]
        %v5543 = vld [vmem:[%s19 + $0x468] sm:$0xff]
        %v5544 = vld [vmem:[%s19 + $0x470] sm:$0xff]
        %v5545 = vld [vmem:[%s19 + $0x478] sm:$0xff]
        %v5546 = vld [vmem:[%s20] sm:$0x3]
        %v5548 = vlaneseq
        %v5549 = vshrl.u32 %v5548, 7
        %v5550 = vsub.s32 0, %v5549
        %v5551 = vrot.slane %v5546, %v5550
        %v5552 = vlaneseq
        %v5553 = vshrl.u32 %v5552, 7
        %v5554 = vsub.s32 1, %v5553
        %v5555 = vrot.slane %v5546, %v5554
        %v5559 = vsel %vm1484, %v5401, 0
        %5561 = vmatprep.subr.mxu0 %v5403
        %5562 = vmatpush1.msra.mxu0 %v5402
        %5563 = vmatprep.subr.mxu0 %v5405
        %5564 = vmatpush1.msra.mxu0 %v5404
        %5565 = vmatprep.subr.mxu0 %v5407
        %5566 = vmatpush1.msra.mxu0 %v5406
        %5567 = vmatprep.subr.mxu0 %v5409
        %5568 = vmatpush1.msra.mxu0 %v5408
        %5569 = vmatprep.subr.mxu0 %v5411
        %5570 = vmatpush1.msra.mxu0 %v5410
        %5571 = vmatprep.subr.mxu0 %v5413
        %5572 = vmatpush1.msra.mxu0 %v5412
        %5573 = vmatprep.subr.mxu0 %v5415
        %5574 = vmatpush1.msra.mxu0 %v5414
        %5575 = vmatprep.subr.mxu0 %v5417
        %5576 = vmatpush1.msra.mxu0 %v5416
        %5577 = vmatprep.subr.mxu0 %v5419
        %5578 = vmatpush1.msra.mxu0 %v5418
        %5579 = vmatprep.subr.mxu0 %v5421
        %5580 = vmatpush1.msra.mxu0 %v5420
        %5581 = vmatprep.subr.mxu0 %v5423
        %5582 = vmatpush1.msra.mxu0 %v5422
        %5583 = vmatprep.subr.mxu0 %v5425
        %5584 = vmatpush1.msra.mxu0 %v5424
        %5585 = vmatprep.subr.mxu0 %v5427
        %5586 = vmatpush1.msra.mxu0 %v5426
        %5587 = vmatprep.subr.mxu0 %v5429
        %5588 = vmatpush1.msra.mxu0 %v5428
        %5589 = vmatprep.subr.mxu0 %v5431
        %5590 = vmatpush1.msra.mxu0 %v5430
        %5591 = vmatprep.subr.mxu0 %v5433
        %5592 = vmatpush1.msra.mxu0 %v5432
        %5593 = vmatprep.subr.mxu0 %v5435
        %5594 = vmatpush1.msra.mxu0 %v5434
        %5595 = vmatprep.subr.mxu0 %v5437
        %5596 = vmatpush1.msra.mxu0 %v5436
        %5597 = vmatprep.subr.mxu0 %v5439
        %5598 = vmatpush1.msra.mxu0 %v5438
        %5599 = vmatprep.subr.mxu0 %v5441
        %5600 = vmatpush1.msra.mxu0 %v5440
        %5601 = vmatprep.subr.mxu0 %v5443
        %5602 = vmatpush1.msra.mxu0 %v5442
        %5603 = vmatprep.subr.mxu0 %v5445
        %5604 = vmatpush1.msra.mxu0 %v5444
        %5605 = vmatprep.subr.mxu0 %v5447
        %5606 = vmatpush1.msra.mxu0 %v5446
        %5607 = vmatprep.subr.mxu0 %v5449
        %5608 = vmatpush1.msra.mxu0 %v5448
        %5609 = vmatprep.subr.mxu0 %v5451
        %5610 = vmatpush1.msra.mxu0 %v5450
        %5611 = vmatprep.subr.mxu0 %v5453
        %5612 = vmatpush1.msra.mxu0 %v5452
        %5613 = vmatprep.subr.mxu0 %v5455
        %5614 = vmatpush1.msra.mxu0 %v5454
        %5615 = vmatprep.subr.mxu0 %v5457
        %5616 = vmatpush1.msra.mxu0 %v5456
        %5617 = vmatprep.subr.mxu0 %v5459
        %5618 = vmatpush1.msra.mxu0 %v5458
        %5619 = vmatprep.subr.mxu0 %v5461
        %5620 = vmatpush1.msra.mxu0 %v5460
        %5621 = vmatprep.subr.mxu0 %v5463
        %5622 = vmatpush1.msra.mxu0 %v5462
        %5623 = vmatprep.subr.mxu0 %v5465
        %5624 = vmatpush1.msra.mxu0 %v5464
        %5625 = vmatprep.mubr.f32.mxu0 %v5398
        %5626 = vmatmul.mubr.f32.gmra.mrb[0].mxu0 %v5397
        %v5627 = vpop.f32.mrb[0].mxu0
        %v5628 = vadd.f32 %v5551, %v5627
        %v5629 = vpop.f32.mrb[0].mxu0
        %v5630 = vadd.f32 %v5555, %v5629
        %5631 = vdwg.mxu0
        %5632 = vmatprep.subr.mxu0 %v5467
        %5633 = vmatpush1.msra.mxu0 %v5466
        %5634 = vmatprep.subr.mxu0 %v5469
        %5635 = vmatpush1.msra.mxu0 %v5468
        %5636 = vmatprep.subr.mxu0 %v5471
        %5637 = vmatpush1.msra.mxu0 %v5470
        %5638 = vmatprep.subr.mxu0 %v5473
        %5639 = vmatpush1.msra.mxu0 %v5472
        %5640 = vmatprep.subr.mxu0 %v5475
        %5641 = vmatpush1.msra.mxu0 %v5474
        %5642 = vmatprep.subr.mxu0 %v5477
        %5643 = vmatpush1.msra.mxu0 %v5476
        %5644 = vmatprep.subr.mxu0 %v5479
        %5645 = vmatpush1.msra.mxu0 %v5478
        %5646 = vmatprep.subr.mxu0 %v5481
        %5647 = vmatpush1.msra.mxu0 %v5480
        %5648 = vmatprep.subr.mxu0 %v5483
        %5649 = vmatpush1.msra.mxu0 %v5482
        %5650 = vmatprep.subr.mxu0 %v5485
        %5651 = vmatpush1.msra.mxu0 %v5484
        %5652 = vmatprep.subr.mxu0 %v5487
        %5653 = vmatpush1.msra.mxu0 %v5486
        %5654 = vmatprep.subr.mxu0 %v5489
        %5655 = vmatpush1.msra.mxu0 %v5488
        %5656 = vmatprep.subr.mxu0 %v5491
        %5657 = vmatpush1.msra.mxu0 %v5490
        %5658 = vmatprep.subr.mxu0 %v5493
        %5659 = vmatpush1.msra.mxu0 %v5492
        %5660 = vmatprep.subr.mxu0 %v5495
        %5661 = vmatpush1.msra.mxu0 %v5494
        %5662 = vmatprep.subr.mxu0 %v5497
        %5663 = vmatpush1.msra.mxu0 %v5496
        %5664 = vmatprep.subr.mxu0 %v5499
        %5665 = vmatpush1.msra.mxu0 %v5498
        %5666 = vmatprep.subr.mxu0 %v5501
        %5667 = vmatpush1.msra.mxu0 %v5500
        %5668 = vmatprep.subr.mxu0 %v5503
        %5669 = vmatpush1.msra.mxu0 %v5502
        %5670 = vmatprep.subr.mxu0 %v5505
        %5671 = vmatpush1.msra.mxu0 %v5504
        %5672 = vmatprep.subr.mxu0 %v5507
        %5673 = vmatpush1.msra.mxu0 %v5506
        %5674 = vmatprep.subr.mxu0 %v5509
        %5675 = vmatpush1.msra.mxu0 %v5508
        %5676 = vmatprep.subr.mxu0 %v5511
        %5677 = vmatpush1.msra.mxu0 %v5510
        %5678 = vmatprep.subr.mxu0 %v5513
        %5679 = vmatpush1.msra.mxu0 %v5512
        %5680 = vmatprep.subr.mxu0 %v5515
        %5681 = vmatpush1.msra.mxu0 %v5514
        %5682 = vmatprep.subr.mxu0 %v5517
        %5683 = vmatpush1.msra.mxu0 %v5516
        %5684 = vmatprep.subr.mxu0 %v5519
        %5685 = vmatpush1.msra.mxu0 %v5518
        %5686 = vmatprep.subr.mxu0 %v5521
        %5687 = vmatpush1.msra.mxu0 %v5520
        %5688 = vmatprep.subr.mxu0 %v5523
        %5689 = vmatpush1.msra.mxu0 %v5522
        %5690 = vmatprep.subr.mxu0 %v5525
        %5691 = vmatpush1.msra.mxu0 %v5524
        %5692 = vmatprep.subr.mxu0 %v5527
        %5693 = vmatpush1.msra.mxu0 %v5526
        %5694 = vmatprep.subr.mxu0 %v5529
        %5695 = vmatpush1.msra.mxu0 %v5528
        %5696 = vmatprep.mubr.f32.mxu0 %v5400
        %5697 = vmatmul.mubr.f32.gmra.mrb[0].mxu0 %v5399
        %v5698 = vpop.f32.mrb[0].mxu0
        %v5699 = vadd.f32 %v5628, %v5698
        %v5700 = vpop.f32.mrb[0].mxu0
        %v5701 = vadd.f32 %v5630, %v5700
        %5702 = vdwg.mxu0
        %5703 = vmatprep.subr.mxu0 %v5531
        %5704 = vmatpush1.msra.mxu0 %v5530
        %5705 = vmatprep.subr.mxu0 %v5533
        %5706 = vmatpush1.msra.mxu0 %v5532
        %5707 = vmatprep.subr.mxu0 %v5535
        %5708 = vmatpush1.msra.mxu0 %v5534
        %5709 = vmatprep.subr.mxu0 %v5537
        %5710 = vmatpush1.msra.mxu0 %v5536
        %5711 = vmatprep.subr.mxu0 %v5539
        %5712 = vmatpush1.msra.mxu0 %v5538
        %5713 = vmatprep.subr.mxu0 %v5541
        %5714 = vmatpush1.msra.mxu0 %v5540
        %5715 = vmatprep.subr.mxu0 %v5543
        %5716 = vmatpush1.msra.mxu0 %v5542
        %5717 = vmatprep.subr.mxu0 %v5545
        %5718 = vmatpush1.msra.mxu0 %v5544
        %5719 = vmatprep.subr.mxu0 0.0
        %5720 = vmatpush1.msra.mxu0 0.0
        %5721 = vmatprep.subr.mxu0 0.0
        %5722 = vmatpush1.msra.mxu0 0.0
        %5723 = vmatprep.subr.mxu0 0.0
        %5724 = vmatpush1.msra.mxu0 0.0
        %5725 = vmatprep.subr.mxu0 0.0
        %5726 = vmatpush1.msra.mxu0 0.0
        %5727 = vmatprep.subr.mxu0 0.0
        %5728 = vmatpush1.msra.mxu0 0.0
        %5729 = vmatprep.subr.mxu0 0.0
        %5730 = vmatpush1.msra.mxu0 0.0
        %5731 = vmatprep.subr.mxu0 0.0
        %5732 = vmatpush1.msra.mxu0 0.0
        %5733 = vmatprep.subr.mxu0 0.0
        %5734 = vmatpush1.msra.mxu0 0.0
        %5735 = vmatprep.subr.mxu0 0.0
        %5736 = vmatpush1.msra.mxu0 0.0
        %5737 = vmatprep.subr.mxu0 0.0
        %5738 = vmatpush1.msra.mxu0 0.0
        %5739 = vmatprep.subr.mxu0 0.0
        %5740 = vmatpush1.msra.mxu0 0.0
        %5741 = vmatprep.subr.mxu0 0.0
        %5742 = vmatpush1.msra.mxu0 0.0
        %5743 = vmatprep.subr.mxu0 0.0
        %5744 = vmatpush1.msra.mxu0 0.0
        %5745 = vmatprep.subr.mxu0 0.0
        %5746 = vmatpush1.msra.mxu0 0.0
        %5747 = vmatprep.subr.mxu0 0.0
        %5748 = vmatpush1.msra.mxu0 0.0
        %5749 = vmatprep.subr.mxu0 0.0
        %5750 = vmatpush1.msra.mxu0 0.0
        %5751 = vmatprep.subr.mxu0 0.0
        %5752 = vmatpush1.msra.mxu0 0.0
        %5753 = vmatprep.subr.mxu0 0.0
        %5754 = vmatpush1.msra.mxu0 0.0
        %5755 = vmatprep.subr.mxu0 0.0
        %5756 = vmatpush1.msra.mxu0 0.0
        %5757 = vmatprep.subr.mxu0 0.0
        %5758 = vmatpush1.msra.mxu0 0.0
        %5759 = vmatprep.subr.mxu0 0.0
        %5760 = vmatpush1.msra.mxu0 0.0
        %5761 = vmatprep.subr.mxu0 0.0
        %5762 = vmatpush1.msra.mxu0 0.0
        %5763 = vmatprep.subr.mxu0 0.0
        %5764 = vmatpush1.msra.mxu0 0.0
        %5765 = vmatprep.subr.mxu0 0.0
        %5766 = vmatpush1.msra.mxu0 0.0
        %5767 = vmatprep.mubr.f32.mxu0 0.0
        %5768 = vmatmul.mubr.f32.gmra.mrb[0].mxu0 %v5559
        %v5769 = vpop.f32.mrb[0].mxu0
        %v5770 = vadd.f32 %v5699, %v5769
        %v5771 = vpop.f32.mrb[0].mxu0
        %v5772 = vadd.f32 %v5701, %v5771
        %5773 = vdwg.mxu0
        %5774 = vst [vmem:[%s767] sm:$0xff] %v5770
        %5775 = vst [vmem:[%s767 + $0x8] sm:$0xff] %v5772
        %p5776 = scmp.lt.s32.totalorder %s37, 1
        %s5777 = scalar_select %p5776, %s37, 1
        %s5778 = smul.addr %s5777, 8
        %s5779 = scalar_lea.vmem %s21, %s5778
        %p5780 = scmp.lt.s32.totalorder %s37, 1
        %s5781 = scalar_select %p5780, %s37, 1
        %s5782 = smul.addr %s5781, 2
        %s5783 = smul.addr %s5782, 8
        %s5784 = scalar_lea.vmem %s22, %s5783
        // Predicated region
        $region125: #{_lambda_.1} parent=103 // pred_check
          %p5785 = pneg %p501
        $region126: #{_lambda_.1} parent=103 // pred_check_branch
          %5787 = sbr.rel (%p5785) target = $region128
        $region127: #{_lambda_.1} parent=103 // pred_region
          _
        $region128: #{_lambda_.1} parent=103 // pred_fallthru
          _
        // Predicated region
        $region129: #{_lambda_.1} parent=103 // pred_check
          %p5788 = pneg %p527
        $region130: #{_lambda_.1} parent=103 // pred_check_branch
          %5790 = sbr.rel (%p5788) target = $region132
        $region131: #{_lambda_.1} parent=103 // pred_region
          _
        $region132: #{_lambda_.1} parent=103 // pred_fallthru
          _
      $region104: #{_lambda_.1} parent=5 // pred_fallthru
        _
      %p5791 = scmp.le.s32.totalorder 2, %s32
      // Predicated region
      $region133: #{_lambda_.1} parent=5 // pred_check
        %p5792 = pneg %p5791
      $region134: #{_lambda_.1} parent=5 // pred_check_branch
        %5794 = sbr.rel (%p5792) target = $region136
      $region135: #{_lambda_.1} parent=5 // pred_region
        %s5795 = ssub.s32 %s32, 2
        // Predicated region
        $region137: #{_lambda_.1} parent=135 // pred_check
          %p5796 = pneg %p507
        $region138: #{_lambda_.1} parent=135 // pred_check_branch
          %5798 = sbr.rel (%p5796) target = $region140
        $region139: #{_lambda_.1} parent=135 // pred_region
          %p5799 = scmp.lt.s32.totalorder %s38, 1
          %s5800 = scalar_select %p5799, %s38, 1
          %s5801 = smul.addr %s5800, 8
          %s5802 = scalar_lea.vmem %s21, %s5801
        $region140: #{_lambda_.1} parent=135 // pred_fallthru
          _
        // Predicated region
        $region141: #{_lambda_.1} parent=135 // pred_check
          %p5803 = pneg %p533
        $region142: #{_lambda_.1} parent=135 // pred_check_branch
          %5805 = sbr.rel (%p5803) target = $region144
        $region143: #{_lambda_.1} parent=135 // pred_region
          %p5806 = scmp.lt.s32.totalorder %s38, 1
          %s5807 = scalar_select %p5806, %s38, 1
          %s5808 = smul.addr %s5807, 2
          %s5809 = smul.addr %s5808, 8
          %s5810 = scalar_lea.vmem %s22, %s5809
        $region144: #{_lambda_.1} parent=135 // pred_fallthru
          _
      $region136: #{_lambda_.1} parent=5 // pred_fallthru
        _
    $region6: #{_lambda_.1} parent=1 // loop_footer
      %s36 = sadd.s32 1, %s32
    $region7: #{_lambda_.1} parent=1 // loop_footer_branch
      %31 = sbr.rel target = $region3
    $region8: #{_lambda_.1} parent=1 // loop_exit
      _
    %5811 = vsyncpa [#allocation3], 1
    %s5812 = scalar_lea.sflag [#allocation3], 1
    %5813 = vsyncpa %s5812, 1
    %5814 = vsyncpa [#allocation5], 1
    %5815 = vsyncpa [#allocation8], 1

</llo_original>
